<compile_context>
chip_gen: v7x
topology: tpu7x:2x2x1
jax: 0.10.0
libtpu: 0.0.40
codegen_flags: <defaults>
</compile_context>

<pallas_src>
import functools
import math

import jax
import jax.numpy as jnp
from jax.experimental import pallas as pl
from jax.experimental.pallas import tpu as pltpu

_LANE = 128
_MAX_TM = 2048          # lane-tile bound for very large spatial extents


def _round_up(x, m):
    return (x + m - 1) // m * m


# ---------------------------------------------------------------------------
# Pallas kernel: fused im2col matmul  (Cout,Kdim) x (Kdim,TM) + bias (+ReLU)
# ---------------------------------------------------------------------------
def _conv_mm_kernel(w_ref, p_ref, b_ref, o_ref, *, relu):
    # w_ref: (Cout, Kdim)   p_ref: (Kdim, TM)   b_ref: (Cout, 1)   o_ref: (Cout, TM)
    acc = jnp.dot(w_ref[...], p_ref[...], preferred_element_type=jnp.float32)
    acc = acc + b_ref[...]                     # broadcast over lanes
    if relu:
        acc = jnp.maximum(acc, 0.0)
    o_ref[...] = acc.astype(o_ref.dtype)       # lane-dense store (TM % 128 == 0)


def conv2d_pallas(x_nhwc, w_oihw, bias, *, padding, relu=False):
    """Stride-1 conv (+bias, optional fused ReLU). NHWC in, NHWC out."""
    N, H, W, Cin = x_nhwc.shape
    Cout, Cin_w, KH, KW = w_oihw.shape
    assert Cin_w == Cin, (Cin_w, Cin)
    Ho = H + 2 * padding - KH + 1
    Wo = W + 2 * padding - KW + 1

    xp = x_nhwc
    if padding:
        xp = jnp.pad(x_nhwc, ((0, 0), (padding, padding), (padding, padding), (0, 0)))

    # im2col in the wrapper (XLA fuses it): Kdim on sublanes, M on lanes.
    taps = [xp[:, kh:kh + Ho, kw:kw + Wo, :] for kh in range(KH) for kw in range(KW)]
    patches = jnp.stack(taps, axis=0)                   # (KH*KW, N, Ho, Wo, Cin)
    patches = jnp.transpose(patches, (0, 4, 1, 2, 3))   # (KH*KW, Cin, N, Ho, Wo)
    Kdim = KH * KW * Cin
    M = N * Ho * Wo
    patches = patches.reshape(Kdim, M)

    if M > _MAX_TM:                                     # tile lanes for big images
        tm = _MAX_TM
        Mp = _round_up(M, tm)
    else:                                               # single grid step
        Mp = _round_up(M, _LANE)
        tm = Mp
    if Mp != M:
        patches = jnp.pad(patches, ((0, 0), (0, Mp - M)))

    # 2-D operands: weights (Cout, K*K*Cin) match the (kh, kw, cin) patch order.
    w2 = jnp.transpose(w_oihw, (0, 2, 3, 1)).reshape(Cout, Kdim)
    b2 = bias.reshape(Cout, 1)

    out = pl.pallas_call(
        functools.partial(_conv_mm_kernel, relu=relu),
        out_shape=jax.ShapeDtypeStruct((Cout, Mp), x_nhwc.dtype),
        grid_spec=pltpu.PrefetchScalarGridSpec(
            num_scalar_prefetch=0,
            grid=(Mp // tm,),
            in_specs=[
                pl.BlockSpec((Cout, Kdim), lambda i: (0, 0)),   # weights stay resident
                pl.BlockSpec((Kdim, tm), lambda i: (0, i)),
                pl.BlockSpec((Cout, 1), lambda i: (0, 0)),
            ],
            out_specs=pl.BlockSpec((Cout, tm), lambda i: (0, i)),
        ),
        compiler_params=pltpu.CompilerParams(
            dimension_semantics=("parallel",)),
    )(w2, patches, b2)

    out = out[:, :M]                                    # (Cout, M)
    return jnp.transpose(out, (1, 0)).reshape(N, Ho, Wo, Cout)


def conv_transpose2d_pallas(x_nhwc, w_iohw, bias):
    """ConvTranspose2d(stride=1, padding=0) == conv with the spatially flipped,
    channel-swapped kernel and padding = K-1 (full cross-correlation)."""
    K = w_iohw.shape[2]
    w_conv = jnp.transpose(w_iohw[:, :, ::-1, ::-1], (1, 0, 2, 3))   # -> OIHW
    return conv2d_pallas(x_nhwc, w_conv, bias, padding=K - 1, relu=False)


# ---------------------------------------------------------------------------
# Layout-only glue (wrapper side)
# ---------------------------------------------------------------------------
def pixel_shuffle_nhwc(y, r):
    # PyTorch PixelShuffle: out[n, c, h*r+i, w*r+j] = in[n, c*r^2 + i*r + j, h, w]
    N, H, W, Crr = y.shape
    C = Crr // (r * r)
    y = y.reshape(N, H, W, C, r, r)
    y = jnp.transpose(y, (0, 1, 4, 2, 5, 3))            # (N, H, i, W, j, C)
    return y.reshape(N, H * r, W * r, C)


def resnet_block_pallas(p, x):
    y = conv2d_pallas(x, *p["conv1"], padding=1, relu=True)    # ReLU fused in kernel
    y = conv2d_pallas(y, *p["conv2"], padding=1, relu=False)
    return y + x                                               # residual add (elementwise)


def pixel_shuffle_block_pallas(p, x, r=2):
    y = conv2d_pallas(x, *p, padding=1, relu=False)
    return pixel_shuffle_nhwc(y, r)


# ---------------------------------------------------------------------------
# Full Net forward (Pallas path), NCHW in / NCHW out like the PyTorch module
# ---------------------------------------------------------------------------
def net_forward_pallas(params, x_nchw):
    x = jnp.transpose(x_nchw, (0, 2, 3, 1))                    # NCHW -> NHWC
    x = conv2d_pallas(x, *params["coarse_in"], padding=1)
    residual = x
    for blk in params["coarse_res"]:
        x = resnet_block_pallas(blk, x)
    x = x + residual
    x = conv2d_pallas(x, *params["coarse_mid"], padding=1)
    for p in params["coarse_up"]:
        x = pixel_shuffle_block_pallas(p, x, r=2)
    x = conv2d_pallas(x, *params["coarse_out"], padding=1)
    x = conv2d_pallas(x, *params["fine_in"], padding=1)
    for blk in params["fine_res"]:
        x = resnet_block_pallas(blk, x)
    x = conv2d_pallas(x, *params["fine_out"], padding=0)
    x = conv2d_pallas(x, *params["dec_in"], padding=0)
    x = conv_transpose2d_pallas(x, *params["dec_deconv"])
    for blk in params["dec_res"]:
        x = resnet_block_pallas(blk, x)
    x = conv2d_pallas(x, *params["dec_out"], padding=1)
    return jnp.transpose(x, (0, 3, 1, 2))                      # NHWC -> NCHW


# ---------------------------------------------------------------------------
# Parameter construction (PyTorch Conv2d-style uniform init, shapes match nn.*)
# ---------------------------------------------------------------------------
def _conv_init(key, cout, cin, k):
    kw_, kb_ = jax.random.split(key)
    bound = 1.0 / math.sqrt(cin * k * k)
    w = jax.random.uniform(kw_, (cout, cin, k, k), minval=-bound, maxval=bound,
                           dtype=jnp.float32)
    b = jax.random.uniform(kb_, (cout,), minval=-bound, maxval=bound,
                           dtype=jnp.float32)
    return (w, b)


def _deconv_init(key, cin, cout, k):
    kw_, kb_ = jax.random.split(key)
    bound = 1.0 / math.sqrt(cin * k * k)
    # PyTorch ConvTranspose2d weight layout: (in_channels, out_channels, kH, kW)
    w = jax.random.uniform(kw_, (cin, cout, k, k), minval=-bound, maxval=bound,
                           dtype=jnp.float32)
    b = jax.random.uniform(kb_, (cout,), minval=-bound, maxval=bound,
                           dtype=jnp.float32)
    return (w, b)


def init_net_params(key, num_channels, base_filter, upscale_factor):
    n_up = int(math.log2(upscale_factor))
    keys = iter(jax.random.split(key, 46 + n_up))

    def res_block(ch):
        return {"conv1": _conv_init(next(keys), ch, ch, 3),
                "conv2": _conv_init(next(keys), ch, ch, 3)}

    return {
        "coarse_in": _conv_init(next(keys), base_filter, num_channels, 3),
        "coarse_res": [res_block(base_filter) for _ in range(4)],
        "coarse_mid": _conv_init(next(keys), base_filter, base_filter, 3),
        "coarse_up": [_conv_init(next(keys), base_filter * 4, base_filter, 3)
                      for _ in range(n_up)],
        "coarse_out": _conv_init(next(keys), num_channels, base_filter, 3),
        "fine_in": _conv_init(next(keys), base_filter, num_channels, 3),
        "fine_res": [res_block(base_filter) for _ in range(12)],
        "fine_out": _conv_init(next(keys), num_channels, base_filter, 3),
        "dec_in": _conv_init(next(keys), base_filter, base_filter, 3),
        "dec_deconv": _deconv_init(next(keys), base_filter, base_filter * 2, 4),
        "dec_res": [res_block(base_filter * 2) for _ in range(3)],
        "dec_out": _conv_init(next(keys), num_channels, base_filter * 2, 3),
    }


# ---------------------------------------------------------------------------
# Pure-JAX reference (lax conv) for validation
# ---------------------------------------------------------------------------
def _conv_ref(x, w, b, padding, relu=False):
    y = jax.lax.conv_general_dilated(
        x, w, window_strides=(1, 1),
        padding=((padding, padding), (padding, padding)),
        dimension_numbers=("NCHW", "OIHW", "NCHW"))
    y = y + b[None, :, None, None]
    return jnp.maximum(y, 0.0) if relu else y


def _deconv_ref(x, w_iohw, b):
    k = w_iohw.shape[2]
    w_conv = jnp.transpose(w_iohw[:, :, ::-1, ::-1], (1, 0, 2, 3))
    return _conv_ref(x, w_conv, b, padding=k - 1)


def _pixel_shuffle_ref(x, r):
    N, Crr, H, W = x.shape
    C = Crr // (r * r)
    x = x.reshape(N, C, r, r, H, W)
    x = jnp.transpose(x, (0, 1, 4, 2, 5, 3))
    return x.reshape(N, C, H * r, W * r)


def _resnet_block_ref(p, x):
    y = _conv_ref(x, *p["conv1"], padding=1, relu=True)
    y = _conv_ref(y, *p["conv2"], padding=1)
    return y + x


def net_forward_ref(params, x):
    x = _conv_ref(x, *params["coarse_in"], padding=1)
    residual = x
    for blk in params["coarse_res"]:
        x = _resnet_block_ref(blk, x)
    x = x + residual
    x = _conv_ref(x, *params["coarse_mid"], padding=1)
    for p in params["coarse_up"]:
        x = _pixel_shuffle_ref(_conv_ref(x, *p, padding=1), 2)
    x = _conv_ref(x, *params["coarse_out"], padding=1)
    x = _conv_ref(x, *params["fine_in"], padding=1)
    for blk in params["fine_res"]:
        x = _resnet_block_ref(blk, x)
    x = _conv_ref(x, *params["fine_out"], padding=0)
    x = _conv_ref(x, *params["dec_in"], padding=0)
    x = _deconv_ref(x, *params["dec_deconv"])
    for blk in params["dec_res"]:
        x = _resnet_block_ref(blk, x)
    x = _conv_ref(x, *params["dec_out"], padding=1)
    return x


if __name__ == "__main__":
    # NOTE: the PyTorch forward feeds the num_channels-wide output of
    # Fine_SR_out_conv into Fine_SR_Decoder_input_conv (declared with
    # base_filter input channels), so the model is only well-formed when
    # num_channels == base_filter; we keep that constraint here.
    num_channels, base_filter, upscale_factor = 4, 4, 2
    N, H, W = 2, 16, 16

    key = jax.random.PRNGKey(0)
    k_x, k_p = jax.random.split(key)
    x = jax.random.normal(k_x, (N, num_channels, H, W), dtype=jnp.float32)
    params = init_net_params(k_p, num_channels, base_filter, upscale_factor)

    fwd = jax.jit(net_forward_pallas)
    out = fwd(params, x)
    jax.block_until_ready(out)

    ref = net_forward_ref(params, x)
    # Spatial: H*upscale -> two padding-0 3x3 convs (-4) -> 4x4 s1 deconv (+3).
    expected_hw = H * upscale_factor - 4 + 3
    assert out.shape == (N, num_channels, expected_hw, expected_hw), out.shape
    assert jnp.allclose(out, ref, atol=2e-3, rtol=2e-3), \
        float(jnp.max(jnp.abs(out - ref)))
    print("KERNEL_OK")
</pallas_src>

<mosaic_0001>
module attributes {stable_mosaic.version = 11 : i64} {
  func.func @_conv_mm_kernel(%arg0: i32, %arg1: memref<4x36xf32, #tpu.memory_space<vmem>>, %arg2: memref<36x512xf32, #tpu.memory_space<vmem>>, %arg3: memref<4x1xf32, #tpu.memory_space<vmem>>, %arg4: memref<4x512xf32, #tpu.memory_space<vmem>>) attributes {dimension_semantics = [#tpu.dimension_semantics<parallel>], iteration_bounds = array<i64: 1>, scalar_prefetch = 0 : i64, scratch_operands = 0 : i64, tpu.core_type = #tpu.core_type<tc>, window_params = [{pipeline_mode = #tpu.pipeline_mode<synchronous>, transform_indices = @transform_0, window_bounds = array<i64: 4, 36>}, {transform_indices = @transform_1, window_bounds = array<i64: 36, 512>}, {pipeline_mode = #tpu.pipeline_mode<synchronous>, transform_indices = @transform_2, window_bounds = array<i64: 4, 1>}, {transform_indices = @transform_3, window_bounds = array<i64: 4, 512>}]} {
    %c0 = arith.constant 0 : index
    %c0_0 = arith.constant 0 : index
    %0 = vector.load %arg1[%c0, %c0_0] : memref<4x36xf32, #tpu.memory_space<vmem>>, vector<4x36xf32>
    %c0_1 = arith.constant 0 : index
    %c0_2 = arith.constant 0 : index
    %1 = vector.load %arg2[%c0_1, %c0_2] : memref<36x512xf32, #tpu.memory_space<vmem>>, vector<36x512xf32>
    %cst = arith.constant dense<0.000000e+00> : vector<4x512xf32>
    %2 = tpu.matmul %0, %1, %cst {dimension_numbers = #tpu.dot_dimension_numbers<[1], [0], [0], [1], [0, 0, 1, 1], [], []>} : vector<4x36xf32>, vector<36x512xf32>, vector<4x512xf32> -> vector<4x512xf32>
    %c0_3 = arith.constant 0 : index
    %c0_4 = arith.constant 0 : index
    %3 = vector.load %arg3[%c0_3, %c0_4] : memref<4x1xf32, #tpu.memory_space<vmem>>, vector<4x1xf32>
    %4 = vector.broadcast %3 : vector<4x1xf32> to vector<4x512xf32>
    %5 = arith.addf %2, %4 : vector<4x512xf32>
    %c0_5 = arith.constant 0 : index
    %c0_6 = arith.constant 0 : index
    %6 = vector.load %arg4[%c0_5, %c0_6] : memref<4x512xf32, #tpu.memory_space<vmem>>, vector<4x512xf32>
    tpu.vector_store %arg4[%c0_5, %c0_6], %5 {strides = array<i32>} : memref<4x512xf32, #tpu.memory_space<vmem>>, vector<4x512xf32>,
    return
  }
  func.func @transform_0(%arg0: i32) -> (i32, i32) {
    %c0_i32 = arith.constant 0 : i32
    %c0_i32_0 = arith.constant 0 : i32
    %c0_i32_1 = arith.constant 0 : i32
    return %c0_i32, %c0_i32_0 : i32, i32
  }
  func.func @transform_1(%arg0: i32) -> (i32, i32) {
    %c0_i32 = arith.constant 0 : i32
    %c0_i32_0 = arith.constant 0 : i32
    return %c0_i32, %arg0 : i32, i32
  }
  func.func @transform_2(%arg0: i32) -> (i32, i32) {
    %c0_i32 = arith.constant 0 : i32
    %c0_i32_0 = arith.constant 0 : i32
    %c0_i32_1 = arith.constant 0 : i32
    return %c0_i32, %c0_i32_0 : i32, i32
  }
  func.func @transform_3(%arg0: i32) -> (i32, i32) {
    %c0_i32 = arith.constant 0 : i32
    %c0_i32_0 = arith.constant 0 : i32
    return %c0_i32, %arg0 : i32, i32
  }
}

module attributes {stable_mosaic.version = 11 : i64} {
  func.func @_conv_mm_kernel(%arg0: i32, %arg1: memref<4x36xf32, #tpu.memory_space<vmem>>, %arg2: memref<36x512xf32, #tpu.memory_space<vmem>>, %arg3: memref<4x1xf32, #tpu.memory_space<vmem>>, %arg4: memref<4x512xf32, #tpu.memory_space<vmem>>) attributes {dimension_semantics = [#tpu.dimension_semantics<parallel>], iteration_bounds = array<i64: 1>, scalar_prefetch = 0 : i64, scratch_operands = 0 : i64, tpu.core_type = #tpu.core_type<tc>, window_params = [{pipeline_mode = #tpu.pipeline_mode<synchronous>, transform_indices = @transform_0, window_bounds = array<i64: 4, 36>}, {transform_indices = @transform_1, window_bounds = array<i64: 36, 512>}, {pipeline_mode = #tpu.pipeline_mode<synchronous>, transform_indices = @transform_2, window_bounds = array<i64: 4, 1>}, {transform_indices = @transform_3, window_bounds = array<i64: 4, 512>}]} {
    %c0 = arith.constant 0 : index
    %c0_0 = arith.constant 0 : index
    %0 = vector.load %arg1[%c0, %c0_0] : memref<4x36xf32, #tpu.memory_space<vmem>>, vector<4x36xf32>
    %c0_1 = arith.constant 0 : index
    %c0_2 = arith.constant 0 : index
    %1 = vector.load %arg2[%c0_1, %c0_2] : memref<36x512xf32, #tpu.memory_space<vmem>>, vector<36x512xf32>
    %cst = arith.constant dense<0.000000e+00> : vector<4x512xf32>
    %2 = tpu.matmul %0, %1, %cst {dimension_numbers = #tpu.dot_dimension_numbers<[1], [0], [0], [1], [0, 0, 1, 1], [], []>} : vector<4x36xf32>, vector<36x512xf32>, vector<4x512xf32> -> vector<4x512xf32>
    %c0_3 = arith.constant 0 : index
    %c0_4 = arith.constant 0 : index
    %3 = vector.load %arg3[%c0_3, %c0_4] : memref<4x1xf32, #tpu.memory_space<vmem>>, vector<4x1xf32>
    %4 = vector.broadcast %3 : vector<4x1xf32> to vector<4x512xf32>
    %5 = arith.addf %2, %4 : vector<4x512xf32>
    %cst_5 = arith.constant 0.000000e+00 : f32
    %6 = vector.broadcast %cst_5 : f32 to vector<4x512xf32>
    %7 = arith.maximumf %5, %6 : vector<4x512xf32>
    %c0_6 = arith.constant 0 : index
    %c0_7 = arith.constant 0 : index
    %8 = vector.load %arg4[%c0_6, %c0_7] : memref<4x512xf32, #tpu.memory_space<vmem>>, vector<4x512xf32>
    tpu.vector_store %arg4[%c0_6, %c0_7], %7 {strides = array<i32>} : memref<4x512xf32, #tpu.memory_space<vmem>>, vector<4x512xf32>,
    return
  }
  func.func @transform_0(%arg0: i32) -> (i32, i32) {
    %c0_i32 = arith.constant 0 : i32
    %c0_i32_0 = arith.constant 0 : i32
    %c0_i32_1 = arith.constant 0 : i32
    return %c0_i32, %c0_i32_0 : i32, i32
  }
  func.func @transform_1(%arg0: i32) -> (i32, i32) {
    %c0_i32 = arith.constant 0 : i32
    %c0_i32_0 = arith.constant 0 : i32
    return %c0_i32, %arg0 : i32, i32
  }
  func.func @transform_2(%arg0: i32) -> (i32, i32) {
    %c0_i32 = arith.constant 0 : i32
    %c0_i32_0 = arith.constant 0 : i32
    %c0_i32_1 = arith.constant 0 : i32
    return %c0_i32, %c0_i32_0 : i32, i32
  }
  func.func @transform_3(%arg0: i32) -> (i32, i32) {
    %c0_i32 = arith.constant 0 : i32
    %c0_i32_0 = arith.constant 0 : i32
    return %c0_i32, %arg0 : i32, i32
  }
}

module attributes {stable_mosaic.version = 11 : i64} {
  func.func @_conv_mm_kernel(%arg0: i32, %arg1: memref<16x36xf32, #tpu.memory_space<vmem>>, %arg2: memref<36x512xf32, #tpu.memory_space<vmem>>, %arg3: memref<16x1xf32, #tpu.memory_space<vmem>>, %arg4: memref<16x512xf32, #tpu.memory_space<vmem>>) attributes {dimension_semantics = [#tpu.dimension_semantics<parallel>], iteration_bounds = array<i64: 1>, scalar_prefetch = 0 : i64, scratch_operands = 0 : i64, tpu.core_type = #tpu.core_type<tc>, window_params = [{pipeline_mode = #tpu.pipeline_mode<synchronous>, transform_indices = @transform_0, window_bounds = array<i64: 16, 36>}, {transform_indices = @transform_1, window_bounds = array<i64: 36, 512>}, {pipeline_mode = #tpu.pipeline_mode<synchronous>, transform_indices = @transform_2, window_bounds = array<i64: 16, 1>}, {transform_indices = @transform_3, window_bounds = array<i64: 16, 512>}]} {
    %c0 = arith.constant 0 : index
    %c0_0 = arith.constant 0 : index
    %0 = vector.load %arg1[%c0, %c0_0] : memref<16x36xf32, #tpu.memory_space<vmem>>, vector<16x36xf32>
    %c0_1 = arith.constant 0 : index
    %c0_2 = arith.constant 0 : index
    %1 = vector.load %arg2[%c0_1, %c0_2] : memref<36x512xf32, #tpu.memory_space<vmem>>, vector<36x512xf32>
    %cst = arith.constant dense<0.000000e+00> : vector<16x512xf32>
    %2 = tpu.matmul %0, %1, %cst {dimension_numbers = #tpu.dot_dimension_numbers<[1], [0], [0], [1], [0, 0, 1, 1], [], []>} : vector<16x36xf32>, vector<36x512xf32>, vector<16x512xf32> -> vector<16x512xf32>
    %c0_3 = arith.constant 0 : index
    %c0_4 = arith.constant 0 : index
    %3 = vector.load %arg3[%c0_3, %c0_4] : memref<16x1xf32, #tpu.memory_space<vmem>>, vector<16x1xf32>
    %4 = vector.broadcast %3 : vector<16x1xf32> to vector<16x512xf32>
    %5 = arith.addf %2, %4 : vector<16x512xf32>
    %c0_5 = arith.constant 0 : index
    %c0_6 = arith.constant 0 : index
    %6 = vector.load %arg4[%c0_5, %c0_6] : memref<16x512xf32, #tpu.memory_space<vmem>>, vector<16x512xf32>
    tpu.vector_store %arg4[%c0_5, %c0_6], %5 {strides = array<i32>} : memref<16x512xf32, #tpu.memory_space<vmem>>, vector<16x512xf32>,
    return
  }
  func.func @transform_0(%arg0: i32) -> (i32, i32) {
    %c0_i32 = arith.constant 0 : i32
    %c0_i32_0 = arith.constant 0 : i32
    %c0_i32_1 = arith.constant 0 : i32
    return %c0_i32, %c0_i32_0 : i32, i32
  }
  func.func @transform_1(%arg0: i32) -> (i32, i32) {
    %c0_i32 = arith.constant 0 : i32
    %c0_i32_0 = arith.constant 0 : i32
    return %c0_i32, %arg0 : i32, i32
  }
  func.func @transform_2(%arg0: i32) -> (i32, i32) {
    %c0_i32 = arith.constant 0 : i32
    %c0_i32_0 = arith.constant 0 : i32
    %c0_i32_1 = arith.constant 0 : i32
    return %c0_i32, %c0_i32_0 : i32, i32
  }
  func.func @transform_3(%arg0: i32) -> (i32, i32) {
    %c0_i32 = arith.constant 0 : i32
    %c0_i32_0 = arith.constant 0 : i32
    return %c0_i32, %arg0 : i32, i32
  }
}

module attributes {stable_mosaic.version = 11 : i64} {
  func.func @_conv_mm_kernel(%arg0: i32, %arg1: memref<4x36xf32, #tpu.memory_space<vmem>>, %arg2: memref<36x2048xf32, #tpu.memory_space<vmem>>, %arg3: memref<4x1xf32, #tpu.memory_space<vmem>>, %arg4: memref<4x2048xf32, #tpu.memory_space<vmem>>) attributes {dimension_semantics = [#tpu.dimension_semantics<parallel>], iteration_bounds = array<i64: 1>, scalar_prefetch = 0 : i64, scratch_operands = 0 : i64, tpu.core_type = #tpu.core_type<tc>, window_params = [{pipeline_mode = #tpu.pipeline_mode<synchronous>, transform_indices = @transform_0, window_bounds = array<i64: 4, 36>}, {transform_indices = @transform_1, window_bounds = array<i64: 36, 2048>}, {pipeline_mode = #tpu.pipeline_mode<synchronous>, transform_indices = @transform_2, window_bounds = array<i64: 4, 1>}, {transform_indices = @transform_3, window_bounds = array<i64: 4, 2048>}]} {
    %c0 = arith.constant 0 : index
    %c0_0 = arith.constant 0 : index
    %0 = vector.load %arg1[%c0, %c0_0] : memref<4x36xf32, #tpu.memory_space<vmem>>, vector<4x36xf32>
    %c0_1 = arith.constant 0 : index
    %c0_2 = arith.constant 0 : index
    %1 = vector.load %arg2[%c0_1, %c0_2] : memref<36x2048xf32, #tpu.memory_space<vmem>>, vector<36x2048xf32>
    %cst = arith.constant dense<0.000000e+00> : vector<4x2048xf32>
    %2 = tpu.matmul %0, %1, %cst {dimension_numbers = #tpu.dot_dimension_numbers<[1], [0], [0], [1], [0, 0, 1, 1], [], []>} : vector<4x36xf32>, vector<36x2048xf32>, vector<4x2048xf32> -> vector<4x2048xf32>
    %c0_3 = arith.constant 0 : index
    %c0_4 = arith.constant 0 : index
    %3 = vector.load %arg3[%c0_3, %c0_4] : memref<4x1xf32, #tpu.memory_space<vmem>>, vector<4x1xf32>
    %4 = vector.broadcast %3 : vector<4x1xf32> to vector<4x2048xf32>
    %5 = arith.addf %2, %4 : vector<4x2048xf32>
    %c0_5 = arith.constant 0 : index
    %c0_6 = arith.constant 0 : index
    %6 = vector.load %arg4[%c0_5, %c0_6] : memref<4x2048xf32, #tpu.memory_space<vmem>>, vector<4x2048xf32>
    tpu.vector_store %arg4[%c0_5, %c0_6], %5 {strides = array<i32>} : memref<4x2048xf32, #tpu.memory_space<vmem>>, vector<4x2048xf32>,
    return
  }
  func.func @transform_0(%arg0: i32) -> (i32, i32) {
    %c0_i32 = arith.constant 0 : i32
    %c0_i32_0 = arith.constant 0 : i32
    %c0_i32_1 = arith.constant 0 : i32
    return %c0_i32, %c0_i32_0 : i32, i32
  }
  func.func @transform_1(%arg0: i32) -> (i32, i32) {
    %c0_i32 = arith.constant 0 : i32
    %c0_i32_0 = arith.constant 0 : i32
    return %c0_i32, %arg0 : i32, i32
  }
  func.func @transform_2(%arg0: i32) -> (i32, i32) {
    %c0_i32 = arith.constant 0 : i32
    %c0_i32_0 = arith.constant 0 : i32
    %c0_i32_1 = arith.constant 0 : i32
    return %c0_i32, %c0_i32_0 : i32, i32
  }
  func.func @transform_3(%arg0: i32) -> (i32, i32) {
    %c0_i32 = arith.constant 0 : i32
    %c0_i32_0 = arith.constant 0 : i32
    return %c0_i32, %arg0 : i32, i32
  }
}

module attributes {stable_mosaic.version = 11 : i64} {
  func.func @_conv_mm_kernel(%arg0: i32, %arg1: memref<4x36xf32, #tpu.memory_space<vmem>>, %arg2: memref<36x2048xf32, #tpu.memory_space<vmem>>, %arg3: memref<4x1xf32, #tpu.memory_space<vmem>>, %arg4: memref<4x2048xf32, #tpu.memory_space<vmem>>) attributes {dimension_semantics = [#tpu.dimension_semantics<parallel>], iteration_bounds = array<i64: 1>, scalar_prefetch = 0 : i64, scratch_operands = 0 : i64, tpu.core_type = #tpu.core_type<tc>, window_params = [{pipeline_mode = #tpu.pipeline_mode<synchronous>, transform_indices = @transform_0, window_bounds = array<i64: 4, 36>}, {transform_indices = @transform_1, window_bounds = array<i64: 36, 2048>}, {pipeline_mode = #tpu.pipeline_mode<synchronous>, transform_indices = @transform_2, window_bounds = array<i64: 4, 1>}, {transform_indices = @transform_3, window_bounds = array<i64: 4, 2048>}]} {
    %c0 = arith.constant 0 : index
    %c0_0 = arith.constant 0 : index
    %0 = vector.load %arg1[%c0, %c0_0] : memref<4x36xf32, #tpu.memory_space<vmem>>, vector<4x36xf32>
    %c0_1 = arith.constant 0 : index
    %c0_2 = arith.constant 0 : index
    %1 = vector.load %arg2[%c0_1, %c0_2] : memref<36x2048xf32, #tpu.memory_space<vmem>>, vector<36x2048xf32>
    %cst = arith.constant dense<0.000000e+00> : vector<4x2048xf32>
    %2 = tpu.matmul %0, %1, %cst {dimension_numbers = #tpu.dot_dimension_numbers<[1], [0], [0], [1], [0, 0, 1, 1], [], []>} : vector<4x36xf32>, vector<36x2048xf32>, vector<4x2048xf32> -> vector<4x2048xf32>
    %c0_3 = arith.constant 0 : index
    %c0_4 = arith.constant 0 : index
    %3 = vector.load %arg3[%c0_3, %c0_4] : memref<4x1xf32, #tpu.memory_space<vmem>>, vector<4x1xf32>
    %4 = vector.broadcast %3 : vector<4x1xf32> to vector<4x2048xf32>
    %5 = arith.addf %2, %4 : vector<4x2048xf32>
    %cst_5 = arith.constant 0.000000e+00 : f32
    %6 = vector.broadcast %cst_5 : f32 to vector<4x2048xf32>
    %7 = arith.maximumf %5, %6 : vector<4x2048xf32>
    %c0_6 = arith.constant 0 : index
    %c0_7 = arith.constant 0 : index
    %8 = vector.load %arg4[%c0_6, %c0_7] : memref<4x2048xf32, #tpu.memory_space<vmem>>, vector<4x2048xf32>
    tpu.vector_store %arg4[%c0_6, %c0_7], %7 {strides = array<i32>} : memref<4x2048xf32, #tpu.memory_space<vmem>>, vector<4x2048xf32>,
    return
  }
  func.func @transform_0(%arg0: i32) -> (i32, i32) {
    %c0_i32 = arith.constant 0 : i32
    %c0_i32_0 = arith.constant 0 : i32
    %c0_i32_1 = arith.constant 0 : i32
    return %c0_i32, %c0_i32_0 : i32, i32
  }
  func.func @transform_1(%arg0: i32) -> (i32, i32) {
    %c0_i32 = arith.constant 0 : i32
    %c0_i32_0 = arith.constant 0 : i32
    return %c0_i32, %arg0 : i32, i32
  }
  func.func @transform_2(%arg0: i32) -> (i32, i32) {
    %c0_i32 = arith.constant 0 : i32
    %c0_i32_0 = arith.constant 0 : i32
    %c0_i32_1 = arith.constant 0 : i32
    return %c0_i32, %c0_i32_0 : i32, i32
  }
  func.func @transform_3(%arg0: i32) -> (i32, i32) {
    %c0_i32 = arith.constant 0 : i32
    %c0_i32_0 = arith.constant 0 : i32
    return %c0_i32, %arg0 : i32, i32
  }
}

module attributes {stable_mosaic.version = 11 : i64} {
  func.func @_conv_mm_kernel(%arg0: i32, %arg1: memref<4x36xf32, #tpu.memory_space<vmem>>, %arg2: memref<36x1920xf32, #tpu.memory_space<vmem>>, %arg3: memref<4x1xf32, #tpu.memory_space<vmem>>, %arg4: memref<4x1920xf32, #tpu.memory_space<vmem>>) attributes {dimension_semantics = [#tpu.dimension_semantics<parallel>], iteration_bounds = array<i64: 1>, scalar_prefetch = 0 : i64, scratch_operands = 0 : i64, tpu.core_type = #tpu.core_type<tc>, window_params = [{pipeline_mode = #tpu.pipeline_mode<synchronous>, transform_indices = @transform_0, window_bounds = array<i64: 4, 36>}, {transform_indices = @transform_1, window_bounds = array<i64: 36, 1920>}, {pipeline_mode = #tpu.pipeline_mode<synchronous>, transform_indices = @transform_2, window_bounds = array<i64: 4, 1>}, {transform_indices = @transform_3, window_bounds = array<i64: 4, 1920>}]} {
    %c0 = arith.constant 0 : index
    %c0_0 = arith.constant 0 : index
    %0 = vector.load %arg1[%c0, %c0_0] : memref<4x36xf32, #tpu.memory_space<vmem>>, vector<4x36xf32>
    %c0_1 = arith.constant 0 : index
    %c0_2 = arith.constant 0 : index
    %1 = vector.load %arg2[%c0_1, %c0_2] : memref<36x1920xf32, #tpu.memory_space<vmem>>, vector<36x1920xf32>
    %cst = arith.constant dense<0.000000e+00> : vector<4x1920xf32>
    %2 = tpu.matmul %0, %1, %cst {dimension_numbers = #tpu.dot_dimension_numbers<[1], [0], [0], [1], [0, 0, 1, 1], [], []>} : vector<4x36xf32>, vector<36x1920xf32>, vector<4x1920xf32> -> vector<4x1920xf32>
    %c0_3 = arith.constant 0 : index
    %c0_4 = arith.constant 0 : index
    %3 = vector.load %arg3[%c0_3, %c0_4] : memref<4x1xf32, #tpu.memory_space<vmem>>, vector<4x1xf32>
    %4 = vector.broadcast %3 : vector<4x1xf32> to vector<4x1920xf32>
    %5 = arith.addf %2, %4 : vector<4x1920xf32>
    %c0_5 = arith.constant 0 : index
    %c0_6 = arith.constant 0 : index
    %6 = vector.load %arg4[%c0_5, %c0_6] : memref<4x1920xf32, #tpu.memory_space<vmem>>, vector<4x1920xf32>
    tpu.vector_store %arg4[%c0_5, %c0_6], %5 {strides = array<i32>} : memref<4x1920xf32, #tpu.memory_space<vmem>>, vector<4x1920xf32>,
    return
  }
  func.func @transform_0(%arg0: i32) -> (i32, i32) {
    %c0_i32 = arith.constant 0 : i32
    %c0_i32_0 = arith.constant 0 : i32
    %c0_i32_1 = arith.constant 0 : i32
    return %c0_i32, %c0_i32_0 : i32, i32
  }
  func.func @transform_1(%arg0: i32) -> (i32, i32) {
    %c0_i32 = arith.constant 0 : i32
    %c0_i32_0 = arith.constant 0 : i32
    return %c0_i32, %arg0 : i32, i32
  }
  func.func @transform_2(%arg0: i32) -> (i32, i32) {
    %c0_i32 = arith.constant 0 : i32
    %c0_i32_0 = arith.constant 0 : i32
    %c0_i32_1 = arith.constant 0 : i32
    return %c0_i32, %c0_i32_0 : i32, i32
  }
  func.func @transform_3(%arg0: i32) -> (i32, i32) {
    %c0_i32 = arith.constant 0 : i32
    %c0_i32_0 = arith.constant 0 : i32
    return %c0_i32, %arg0 : i32, i32
  }
}

module attributes {stable_mosaic.version = 11 : i64} {
  func.func @_conv_mm_kernel(%arg0: i32, %arg1: memref<4x36xf32, #tpu.memory_space<vmem>>, %arg2: memref<36x1664xf32, #tpu.memory_space<vmem>>, %arg3: memref<4x1xf32, #tpu.memory_space<vmem>>, %arg4: memref<4x1664xf32, #tpu.memory_space<vmem>>) attributes {dimension_semantics = [#tpu.dimension_semantics<parallel>], iteration_bounds = array<i64: 1>, scalar_prefetch = 0 : i64, scratch_operands = 0 : i64, tpu.core_type = #tpu.core_type<tc>, window_params = [{pipeline_mode = #tpu.pipeline_mode<synchronous>, transform_indices = @transform_0, window_bounds = array<i64: 4, 36>}, {transform_indices = @transform_1, window_bounds = array<i64: 36, 1664>}, {pipeline_mode = #tpu.pipeline_mode<synchronous>, transform_indices = @transform_2, window_bounds = array<i64: 4, 1>}, {transform_indices = @transform_3, window_bounds = array<i64: 4, 1664>}]} {
    %c0 = arith.constant 0 : index
    %c0_0 = arith.constant 0 : index
    %0 = vector.load %arg1[%c0, %c0_0] : memref<4x36xf32, #tpu.memory_space<vmem>>, vector<4x36xf32>
    %c0_1 = arith.constant 0 : index
    %c0_2 = arith.constant 0 : index
    %1 = vector.load %arg2[%c0_1, %c0_2] : memref<36x1664xf32, #tpu.memory_space<vmem>>, vector<36x1664xf32>
    %cst = arith.constant dense<0.000000e+00> : vector<4x1664xf32>
    %2 = tpu.matmul %0, %1, %cst {dimension_numbers = #tpu.dot_dimension_numbers<[1], [0], [0], [1], [0, 0, 1, 1], [], []>} : vector<4x36xf32>, vector<36x1664xf32>, vector<4x1664xf32> -> vector<4x1664xf32>
    %c0_3 = arith.constant 0 : index
    %c0_4 = arith.constant 0 : index
    %3 = vector.load %arg3[%c0_3, %c0_4] : memref<4x1xf32, #tpu.memory_space<vmem>>, vector<4x1xf32>
    %4 = vector.broadcast %3 : vector<4x1xf32> to vector<4x1664xf32>
    %5 = arith.addf %2, %4 : vector<4x1664xf32>
    %c0_5 = arith.constant 0 : index
    %c0_6 = arith.constant 0 : index
    %6 = vector.load %arg4[%c0_5, %c0_6] : memref<4x1664xf32, #tpu.memory_space<vmem>>, vector<4x1664xf32>
    tpu.vector_store %arg4[%c0_5, %c0_6], %5 {strides = array<i32>} : memref<4x1664xf32, #tpu.memory_space<vmem>>, vector<4x1664xf32>,
    return
  }
  func.func @transform_0(%arg0: i32) -> (i32, i32) {
    %c0_i32 = arith.constant 0 : i32
    %c0_i32_0 = arith.constant 0 : i32
    %c0_i32_1 = arith.constant 0 : i32
    return %c0_i32, %c0_i32_0 : i32, i32
  }
  func.func @transform_1(%arg0: i32) -> (i32, i32) {
    %c0_i32 = arith.constant 0 : i32
    %c0_i32_0 = arith.constant 0 : i32
    return %c0_i32, %arg0 : i32, i32
  }
  func.func @transform_2(%arg0: i32) -> (i32, i32) {
    %c0_i32 = arith.constant 0 : i32
    %c0_i32_0 = arith.constant 0 : i32
    %c0_i32_1 = arith.constant 0 : i32
    return %c0_i32, %c0_i32_0 : i32, i32
  }
  func.func @transform_3(%arg0: i32) -> (i32, i32) {
    %c0_i32 = arith.constant 0 : i32
    %c0_i32_0 = arith.constant 0 : i32
    return %c0_i32, %arg0 : i32, i32
  }
}

module attributes {stable_mosaic.version = 11 : i64} {
  func.func @_conv_mm_kernel(%arg0: i32, %arg1: memref<8x64xf32, #tpu.memory_space<vmem>>, %arg2: memref<64x2048xf32, #tpu.memory_space<vmem>>, %arg3: memref<8x1xf32, #tpu.memory_space<vmem>>, %arg4: memref<8x2048xf32, #tpu.memory_space<vmem>>) attributes {dimension_semantics = [#tpu.dimension_semantics<parallel>], iteration_bounds = array<i64: 1>, scalar_prefetch = 0 : i64, scratch_operands = 0 : i64, tpu.core_type = #tpu.core_type<tc>, window_params = [{pipeline_mode = #tpu.pipeline_mode<synchronous>, transform_indices = @transform_0, window_bounds = array<i64: 8, 64>}, {transform_indices = @transform_1, window_bounds = array<i64: 64, 2048>}, {pipeline_mode = #tpu.pipeline_mode<synchronous>, transform_indices = @transform_2, window_bounds = array<i64: 8, 1>}, {transform_indices = @transform_3, window_bounds = array<i64: 8, 2048>}]} {
    %c0 = arith.constant 0 : index
    %c0_0 = arith.constant 0 : index
    %0 = vector.load %arg1[%c0, %c0_0] : memref<8x64xf32, #tpu.memory_space<vmem>>, vector<8x64xf32>
    %c0_1 = arith.constant 0 : index
    %c0_2 = arith.constant 0 : index
    %1 = vector.load %arg2[%c0_1, %c0_2] : memref<64x2048xf32, #tpu.memory_space<vmem>>, vector<64x2048xf32>
    %cst = arith.constant dense<0.000000e+00> : vector<8x2048xf32>
    %2 = tpu.matmul %0, %1, %cst {dimension_numbers = #tpu.dot_dimension_numbers<[1], [0], [0], [1], [0, 0, 1, 1], [], []>} : vector<8x64xf32>, vector<64x2048xf32>, vector<8x2048xf32> -> vector<8x2048xf32>
    %c0_3 = arith.constant 0 : index
    %c0_4 = arith.constant 0 : index
    %3 = vector.load %arg3[%c0_3, %c0_4] : memref<8x1xf32, #tpu.memory_space<vmem>>, vector<8x1xf32>
    %4 = vector.broadcast %3 : vector<8x1xf32> to vector<8x2048xf32>
    %5 = arith.addf %2, %4 : vector<8x2048xf32>
    %c0_5 = arith.constant 0 : index
    %c0_6 = arith.constant 0 : index
    %6 = vector.load %arg4[%c0_5, %c0_6] : memref<8x2048xf32, #tpu.memory_space<vmem>>, vector<8x2048xf32>
    tpu.vector_store %arg4[%c0_5, %c0_6], %5 {strides = array<i32>} : memref<8x2048xf32, #tpu.memory_space<vmem>>, vector<8x2048xf32>,
    return
  }
  func.func @transform_0(%arg0: i32) -> (i32, i32) {
    %c0_i32 = arith.constant 0 : i32
    %c0_i32_0 = arith.constant 0 : i32
    %c0_i32_1 = arith.constant 0 : i32
    return %c0_i32, %c0_i32_0 : i32, i32
  }
  func.func @transform_1(%arg0: i32) -> (i32, i32) {
    %c0_i32 = arith.constant 0 : i32
    %c0_i32_0 = arith.constant 0 : i32
    return %c0_i32, %arg0 : i32, i32
  }
  func.func @transform_2(%arg0: i32) -> (i32, i32) {
    %c0_i32 = arith.constant 0 : i32
    %c0_i32_0 = arith.constant 0 : i32
    %c0_i32_1 = arith.constant 0 : i32
    return %c0_i32, %c0_i32_0 : i32, i32
  }
  func.func @transform_3(%arg0: i32) -> (i32, i32) {
    %c0_i32 = arith.constant 0 : i32
    %c0_i32_0 = arith.constant 0 : i32
    return %c0_i32, %arg0 : i32, i32
  }
}

module attributes {stable_mosaic.version = 11 : i64} {
  func.func @_conv_mm_kernel(%arg0: i32, %arg1: memref<8x72xf32, #tpu.memory_space<vmem>>, %arg2: memref<72x2048xf32, #tpu.memory_space<vmem>>, %arg3: memref<8x1xf32, #tpu.memory_space<vmem>>, %arg4: memref<8x2048xf32, #tpu.memory_space<vmem>>) attributes {dimension_semantics = [#tpu.dimension_semantics<parallel>], iteration_bounds = array<i64: 1>, scalar_prefetch = 0 : i64, scratch_operands = 0 : i64, tpu.core_type = #tpu.core_type<tc>, window_params = [{pipeline_mode = #tpu.pipeline_mode<synchronous>, transform_indices = @transform_0, window_bounds = array<i64: 8, 72>}, {transform_indices = @transform_1, window_bounds = array<i64: 72, 2048>}, {pipeline_mode = #tpu.pipeline_mode<synchronous>, transform_indices = @transform_2, window_bounds = array<i64: 8, 1>}, {transform_indices = @transform_3, window_bounds = array<i64: 8, 2048>}]} {
    %c0 = arith.constant 0 : index
    %c0_0 = arith.constant 0 : index
    %0 = vector.load %arg1[%c0, %c0_0] : memref<8x72xf32, #tpu.memory_space<vmem>>, vector<8x72xf32>
    %c0_1 = arith.constant 0 : index
    %c0_2 = arith.constant 0 : index
    %1 = vector.load %arg2[%c0_1, %c0_2] : memref<72x2048xf32, #tpu.memory_space<vmem>>, vector<72x2048xf32>
    %cst = arith.constant dense<0.000000e+00> : vector<8x2048xf32>
    %2 = tpu.matmul %0, %1, %cst {dimension_numbers = #tpu.dot_dimension_numbers<[1], [0], [0], [1], [0, 0, 1, 1], [], []>} : vector<8x72xf32>, vector<72x2048xf32>, vector<8x2048xf32> -> vector<8x2048xf32>
    %c0_3 = arith.constant 0 : index
    %c0_4 = arith.constant 0 : index
    %3 = vector.load %arg3[%c0_3, %c0_4] : memref<8x1xf32, #tpu.memory_space<vmem>>, vector<8x1xf32>
    %4 = vector.broadcast %3 : vector<8x1xf32> to vector<8x2048xf32>
    %5 = arith.addf %2, %4 : vector<8x2048xf32>
    %cst_5 = arith.constant 0.000000e+00 : f32
    %6 = vector.broadcast %cst_5 : f32 to vector<8x2048xf32>
    %7 = arith.maximumf %5, %6 : vector<8x2048xf32>
    %c0_6 = arith.constant 0 : index
    %c0_7 = arith.constant 0 : index
    %8 = vector.load %arg4[%c0_6, %c0_7] : memref<8x2048xf32, #tpu.memory_space<vmem>>, vector<8x2048xf32>
    tpu.vector_store %arg4[%c0_6, %c0_7], %7 {strides = array<i32>} : memref<8x2048xf32, #tpu.memory_space<vmem>>, vector<8x2048xf32>,
    return
  }
  func.func @transform_0(%arg0: i32) -> (i32, i32) {
    %c0_i32 = arith.constant 0 : i32
    %c0_i32_0 = arith.constant 0 : i32
    %c0_i32_1 = arith.constant 0 : i32
    return %c0_i32, %c0_i32_0 : i32, i32
  }
  func.func @transform_1(%arg0: i32) -> (i32, i32) {
    %c0_i32 = arith.constant 0 : i32
    %c0_i32_0 = arith.constant 0 : i32
    return %c0_i32, %arg0 : i32, i32
  }
  func.func @transform_2(%arg0: i32) -> (i32, i32) {
    %c0_i32 = arith.constant 0 : i32
    %c0_i32_0 = arith.constant 0 : i32
    %c0_i32_1 = arith.constant 0 : i32
    return %c0_i32, %c0_i32_0 : i32, i32
  }
  func.func @transform_3(%arg0: i32) -> (i32, i32) {
    %c0_i32 = arith.constant 0 : i32
    %c0_i32_0 = arith.constant 0 : i32
    return %c0_i32, %arg0 : i32, i32
  }
}

module attributes {stable_mosaic.version = 11 : i64} {
  func.func @_conv_mm_kernel(%arg0: i32, %arg1: memref<8x72xf32, #tpu.memory_space<vmem>>, %arg2: memref<72x2048xf32, #tpu.memory_space<vmem>>, %arg3: memref<8x1xf32, #tpu.memory_space<vmem>>, %arg4: memref<8x2048xf32, #tpu.memory_space<vmem>>) attributes {dimension_semantics = [#tpu.dimension_semantics<parallel>], iteration_bounds = array<i64: 1>, scalar_prefetch = 0 : i64, scratch_operands = 0 : i64, tpu.core_type = #tpu.core_type<tc>, window_params = [{pipeline_mode = #tpu.pipeline_mode<synchronous>, transform_indices = @transform_0, window_bounds = array<i64: 8, 72>}, {transform_indices = @transform_1, window_bounds = array<i64: 72, 2048>}, {pipeline_mode = #tpu.pipeline_mode<synchronous>, transform_indices = @transform_2, window_bounds = array<i64: 8, 1>}, {transform_indices = @transform_3, window_bounds = array<i64: 8, 2048>}]} {
    %c0 = arith.constant 0 : index
    %c0_0 = arith.constant 0 : index
    %0 = vector.load %arg1[%c0, %c0_0] : memref<8x72xf32, #tpu.memory_space<vmem>>, vector<8x72xf32>
    %c0_1 = arith.constant 0 : index
    %c0_2 = arith.constant 0 : index
    %1 = vector.load %arg2[%c0_1, %c0_2] : memref<72x2048xf32, #tpu.memory_space<vmem>>, vector<72x2048xf32>
    %cst = arith.constant dense<0.000000e+00> : vector<8x2048xf32>
    %2 = tpu.matmul %0, %1, %cst {dimension_numbers = #tpu.dot_dimension_numbers<[1], [0], [0], [1], [0, 0, 1, 1], [], []>} : vector<8x72xf32>, vector<72x2048xf32>, vector<8x2048xf32> -> vector<8x2048xf32>
    %c0_3 = arith.constant 0 : index
    %c0_4 = arith.constant 0 : index
    %3 = vector.load %arg3[%c0_3, %c0_4] : memref<8x1xf32, #tpu.memory_space<vmem>>, vector<8x1xf32>
    %4 = vector.broadcast %3 : vector<8x1xf32> to vector<8x2048xf32>
    %5 = arith.addf %2, %4 : vector<8x2048xf32>
    %c0_5 = arith.constant 0 : index
    %c0_6 = arith.constant 0 : index
    %6 = vector.load %arg4[%c0_5, %c0_6] : memref<8x2048xf32, #tpu.memory_space<vmem>>, vector<8x2048xf32>
    tpu.vector_store %arg4[%c0_5, %c0_6], %5 {strides = array<i32>} : memref<8x2048xf32, #tpu.memory_space<vmem>>, vector<8x2048xf32>,
    return
  }
  func.func @transform_0(%arg0: i32) -> (i32, i32) {
    %c0_i32 = arith.constant 0 : i32
    %c0_i32_0 = arith.constant 0 : i32
    %c0_i32_1 = arith.constant 0 : i32
    return %c0_i32, %c0_i32_0 : i32, i32
  }
  func.func @transform_1(%arg0: i32) -> (i32, i32) {
    %c0_i32 = arith.constant 0 : i32
    %c0_i32_0 = arith.constant 0 : i32
    return %c0_i32, %arg0 : i32, i32
  }
  func.func @transform_2(%arg0: i32) -> (i32, i32) {
    %c0_i32 = arith.constant 0 : i32
    %c0_i32_0 = arith.constant 0 : i32
    %c0_i32_1 = arith.constant 0 : i32
    return %c0_i32, %c0_i32_0 : i32, i32
  }
  func.func @transform_3(%arg0: i32) -> (i32, i32) {
    %c0_i32 = arith.constant 0 : i32
    %c0_i32_0 = arith.constant 0 : i32
    return %c0_i32, %arg0 : i32, i32
  }
}

module attributes {stable_mosaic.version = 11 : i64} {
  func.func @_conv_mm_kernel(%arg0: i32, %arg1: memref<4x72xf32, #tpu.memory_space<vmem>>, %arg2: memref<72x2048xf32, #tpu.memory_space<vmem>>, %arg3: memref<4x1xf32, #tpu.memory_space<vmem>>, %arg4: memref<4x2048xf32, #tpu.memory_space<vmem>>) attributes {dimension_semantics = [#tpu.dimension_semantics<parallel>], iteration_bounds = array<i64: 1>, scalar_prefetch = 0 : i64, scratch_operands = 0 : i64, tpu.core_type = #tpu.core_type<tc>, window_params = [{pipeline_mode = #tpu.pipeline_mode<synchronous>, transform_indices = @transform_0, window_bounds = array<i64: 4, 72>}, {transform_indices = @transform_1, window_bounds = array<i64: 72, 2048>}, {pipeline_mode = #tpu.pipeline_mode<synchronous>, transform_indices = @transform_2, window_bounds = array<i64: 4, 1>}, {transform_indices = @transform_3, window_bounds = array<i64: 4, 2048>}]} {
    %c0 = arith.constant 0 : index
    %c0_0 = arith.constant 0 : index
    %0 = vector.load %arg1[%c0, %c0_0] : memref<4x72xf32, #tpu.memory_space<vmem>>, vector<4x72xf32>
    %c0_1 = arith.constant 0 : index
    %c0_2 = arith.constant 0 : index
    %1 = vector.load %arg2[%c0_1, %c0_2] : memref<72x2048xf32, #tpu.memory_space<vmem>>, vector<72x2048xf32>
    %cst = arith.constant dense<0.000000e+00> : vector<4x2048xf32>
    %2 = tpu.matmul %0, %1, %cst {dimension_numbers = #tpu.dot_dimension_numbers<[1], [0], [0], [1], [0, 0, 1, 1], [], []>} : vector<4x72xf32>, vector<72x2048xf32>, vector<4x2048xf32> -> vector<4x2048xf32>
    %c0_3 = arith.constant 0 : index
    %c0_4 = arith.constant 0 : index
    %3 = vector.load %arg3[%c0_3, %c0_4] : memref<4x1xf32, #tpu.memory_space<vmem>>, vector<4x1xf32>
    %4 = vector.broadcast %3 : vector<4x1xf32> to vector<4x2048xf32>
    %5 = arith.addf %2, %4 : vector<4x2048xf32>
    %c0_5 = arith.constant 0 : index
    %c0_6 = arith.constant 0 : index
    %6 = vector.load %arg4[%c0_5, %c0_6] : memref<4x2048xf32, #tpu.memory_space<vmem>>, vector<4x2048xf32>
    tpu.vector_store %arg4[%c0_5, %c0_6], %5 {strides = array<i32>} : memref<4x2048xf32, #tpu.memory_space<vmem>>, vector<4x2048xf32>,
    return
  }
  func.func @transform_0(%arg0: i32) -> (i32, i32) {
    %c0_i32 = arith.constant 0 : i32
    %c0_i32_0 = arith.constant 0 : i32
    %c0_i32_1 = arith.constant 0 : i32
    return %c0_i32, %c0_i32_0 : i32, i32
  }
  func.func @transform_1(%arg0: i32) -> (i32, i32) {
    %c0_i32 = arith.constant 0 : i32
    %c0_i32_0 = arith.constant 0 : i32
    return %c0_i32, %arg0 : i32, i32
  }
  func.func @transform_2(%arg0: i32) -> (i32, i32) {
    %c0_i32 = arith.constant 0 : i32
    %c0_i32_0 = arith.constant 0 : i32
    %c0_i32_1 = arith.constant 0 : i32
    return %c0_i32, %c0_i32_0 : i32, i32
  }
  func.func @transform_3(%arg0: i32) -> (i32, i32) {
    %c0_i32 = arith.constant 0 : i32
    %c0_i32_0 = arith.constant 0 : i32
    return %c0_i32, %arg0 : i32, i32
  }
}

</mosaic_0001>

<llo_original>
// kernel: net_forward_pallas.47
$region0: #{net_forward_pallas.47}
  #allocation0 [shape = 'u32[]', space=smem, size = 0x4, offset = 0x4, fixed_abs, tag = 'smem constant byte address 0x4 - core index']
  #allocation1 [shape = 'u32[144,128]{1,0:T(1,128)}', space=vmem, size = 0x12000, scoped, tag = 'internal scratch']
  %s0 = inlined_call_operand.vmem [shape: f32[4,36], index: 0, kind: input, shape index: {}]
  %s1 = inlined_call_operand.vmem [shape: f32[36,512], index: 1, kind: input, shape index: {}]
  %s2 = inlined_call_operand.vmem [shape: f32[4,1], index: 2, kind: input, shape index: {}]
  %s3 = inlined_call_operand.vmem [shape: f32[4,512], index: 3, kind: output, shape index: {}]
  %s4 = sld [smem:[#allocation0]]
  $region22: #{net_forward_pallas.47} parent=0
    _
  %s6 = ssub.s32 1, %s4
  %s7 = scalar_select 0, %s6, %s4
  // Predicated region
  $region2: #{net_forward_pallas.47} parent=0 // pred_check
    _
  $region3: #{net_forward_pallas.47} parent=0 // pred_check_branch
    %9 = sbr.rel (0) target = $region5
  $region4: #{net_forward_pallas.47} parent=0 // pred_region
    _
  $region5: #{net_forward_pallas.47} parent=0 // pred_fallthru
    _
  // Predicated region
  $region6: #{net_forward_pallas.47} parent=0 // pred_check
    _
  $region7: #{net_forward_pallas.47} parent=0 // pred_check_branch
    %11 = sbr.rel (0) target = $region9
  $region8: #{net_forward_pallas.47} parent=0 // pred_region
    _
  $region9: #{net_forward_pallas.47} parent=0 // pred_fallthru
    _
  // Predicated region
  $region10: #{net_forward_pallas.47} parent=0 // pred_check
    _
  $region11: #{net_forward_pallas.47} parent=0 // pred_check_branch
    %13 = sbr.rel (0) target = $region13
  $region12: #{net_forward_pallas.47} parent=0 // pred_region
    _
  $region13: #{net_forward_pallas.47} parent=0 // pred_fallthru
    _
  %v14 = vld [vmem:[%s0] sm:$0xf]
  %v15 = vld [vmem:[%s1] sm:$0xff]
  %v16 = vld [vmem:[%s1 + $0x8] sm:$0xff]
  %v17 = vld [vmem:[%s1 + $0x10] sm:$0xff]
  %v18 = vld [vmem:[%s1 + $0x18] sm:$0xff]
  %v19 = vld [vmem:[%s1 + $0x20] sm:$0xff]
  %v20 = vld [vmem:[%s1 + $0x28] sm:$0xff]
  %v21 = vld [vmem:[%s1 + $0x30] sm:$0xff]
  %v22 = vld [vmem:[%s1 + $0x38] sm:$0xff]
  %v23 = vld [vmem:[%s1 + $0x40] sm:$0xff]
  %v24 = vld [vmem:[%s1 + $0x48] sm:$0xff]
  %v25 = vld [vmem:[%s1 + $0x50] sm:$0xff]
  %v26 = vld [vmem:[%s1 + $0x58] sm:$0xff]
  %v27 = vld [vmem:[%s1 + $0x60] sm:$0xff]
  %v28 = vld [vmem:[%s1 + $0x68] sm:$0xff]
  %v29 = vld [vmem:[%s1 + $0x70] sm:$0xff]
  %v30 = vld [vmem:[%s1 + $0x78] sm:$0xff]
  %v31 = vld [vmem:[%s1 + $0x80] sm:$0xf]
  %v32 = vld [vmem:[%s1 + $0x88] sm:$0xf]
  %v33 = vld [vmem:[%s1 + $0x90] sm:$0xf]
  %v34 = vld [vmem:[%s1 + $0x98] sm:$0xf]
  %v35 = vld [vmem:[%s2] sm:$0xf]
  %37 = vset.pattern.permute.xlu0 0
  %38 = vperm.xlu0 %37, %v35
  %v39 = vpop.permute.xlu0 %38
  %vm41 = vcmask 293888
  %v43 = vsel %vm41, %v14, 0
  %vm45 = vcmask 1043456
  %v47 = vsel %vm45, %v31, 0
  %v50 = vsel %vm45, %v32, 0
  %v53 = vsel %vm45, %v33, 0
  %v56 = vsel %vm45, %v34, 0
  %58 = vmatprep.subr.mxu0 %v16
  %59 = vmatpush1.msra.mxu0 %v15
  %60 = vmatprep.subr.mxu0 %v20
  %61 = vmatpush1.msra.mxu0 %v19
  %62 = vmatprep.subr.mxu0 %v24
  %63 = vmatpush1.msra.mxu0 %v23
  %64 = vmatprep.subr.mxu0 %v28
  %65 = vmatpush1.msra.mxu0 %v27
  %66 = vmatprep.subr.mxu0 %v50
  %67 = vmatpush1.msra.mxu0 %v47
  %68 = vmatprep.subr.mxu0 0.0
  %69 = vmatpush1.msra.mxu0 0.0
  %70 = vmatprep.subr.mxu0 0.0
  %71 = vmatpush1.msra.mxu0 0.0
  %72 = vmatprep.subr.mxu0 0.0
  %73 = vmatpush1.msra.mxu0 0.0
  %74 = vmatprep.subr.mxu0 0.0
  %75 = vmatpush1.msra.mxu0 0.0
  %76 = vmatprep.subr.mxu0 0.0
  %77 = vmatpush1.msra.mxu0 0.0
  %78 = vmatprep.subr.mxu0 0.0
  %79 = vmatpush1.msra.mxu0 0.0
  %80 = vmatprep.subr.mxu0 0.0
  %81 = vmatpush1.msra.mxu0 0.0
  %82 = vmatprep.subr.mxu0 0.0
  %83 = vmatpush1.msra.mxu0 0.0
  %84 = vmatprep.subr.mxu0 0.0
  %85 = vmatpush1.msra.mxu0 0.0
  %86 = vmatprep.subr.mxu0 0.0
  %87 = vmatpush1.msra.mxu0 0.0
  %88 = vmatprep.subr.mxu0 0.0
  %89 = vmatpush1.msra.mxu0 0.0
  %90 = vmatprep.subr.mxu0 0.0
  %91 = vmatpush1.msra.mxu0 0.0
  %92 = vmatprep.subr.mxu0 0.0
  %93 = vmatpush1.msra.mxu0 0.0
  %94 = vmatprep.subr.mxu0 0.0
  %95 = vmatpush1.msra.mxu0 0.0
  %96 = vmatprep.subr.mxu0 0.0
  %97 = vmatpush1.msra.mxu0 0.0
  %98 = vmatprep.subr.mxu0 0.0
  %99 = vmatpush1.msra.mxu0 0.0
  %100 = vmatprep.subr.mxu0 0.0
  %101 = vmatpush1.msra.mxu0 0.0
  %102 = vmatprep.subr.mxu0 0.0
  %103 = vmatpush1.msra.mxu0 0.0
  %104 = vmatprep.subr.mxu0 0.0
  %105 = vmatpush1.msra.mxu0 0.0
  %106 = vmatprep.subr.mxu0 0.0
  %107 = vmatpush1.msra.mxu0 0.0
  %108 = vmatprep.subr.mxu0 0.0
  %109 = vmatpush1.msra.mxu0 0.0
  %110 = vmatprep.subr.mxu0 0.0
  %111 = vmatpush1.msra.mxu0 0.0
  %112 = vmatprep.subr.mxu0 0.0
  %113 = vmatpush1.msra.mxu0 0.0
  %114 = vmatprep.subr.mxu0 0.0
  %115 = vmatpush1.msra.mxu0 0.0
  %116 = vmatprep.subr.mxu0 0.0
  %117 = vmatpush1.msra.mxu0 0.0
  %118 = vmatprep.subr.mxu0 0.0
  %119 = vmatpush1.msra.mxu0 0.0
  %120 = vmatprep.subr.mxu0 0.0
  %121 = vmatpush1.msra.mxu0 0.0
  %122 = vmatprep.mubr.f32.mxu0 0.0
  %123 = vmatmul.mubr.f32.gmra.mrb[0].mxu0 %v43
  %v124 = vpop.f32.mrb[0].mxu0
  %v125 = vadd.f32 %v39, %v124
  %v126 = vpop.f32.mrb[0].mxu0
  %v127 = vadd.f32 %v39, %v126
  %128 = vdwg.mxu0
  %129 = vmatprep.subr.mxu0 %v18
  %130 = vmatpush1.msra.mxu0 %v17
  %131 = vmatprep.subr.mxu0 %v22
  %132 = vmatpush1.msra.mxu0 %v21
  %133 = vmatprep.subr.mxu0 %v26
  %134 = vmatpush1.msra.mxu0 %v25
  %135 = vmatprep.subr.mxu0 %v30
  %136 = vmatpush1.msra.mxu0 %v29
  %137 = vmatprep.subr.mxu0 %v56
  %138 = vmatpush1.msra.mxu0 %v53
  %139 = vmatprep.subr.mxu0 0.0
  %140 = vmatpush1.msra.mxu0 0.0
  %141 = vmatprep.subr.mxu0 0.0
  %142 = vmatpush1.msra.mxu0 0.0
  %143 = vmatprep.subr.mxu0 0.0
  %144 = vmatpush1.msra.mxu0 0.0
  %145 = vmatprep.subr.mxu0 0.0
  %146 = vmatpush1.msra.mxu0 0.0
  %147 = vmatprep.subr.mxu0 0.0
  %148 = vmatpush1.msra.mxu0 0.0
  %149 = vmatprep.subr.mxu0 0.0
  %150 = vmatpush1.msra.mxu0 0.0
  %151 = vmatprep.subr.mxu0 0.0
  %152 = vmatpush1.msra.mxu0 0.0
  %153 = vmatprep.subr.mxu0 0.0
  %154 = vmatpush1.msra.mxu0 0.0
  %155 = vmatprep.subr.mxu0 0.0
  %156 = vmatpush1.msra.mxu0 0.0
  %157 = vmatprep.subr.mxu0 0.0
  %158 = vmatpush1.msra.mxu0 0.0
  %159 = vmatprep.subr.mxu0 0.0
  %160 = vmatpush1.msra.mxu0 0.0
  %161 = vmatprep.subr.mxu0 0.0
  %162 = vmatpush1.msra.mxu0 0.0
  %163 = vmatprep.subr.mxu0 0.0
  %164 = vmatpush1.msra.mxu0 0.0
  %165 = vmatprep.subr.mxu0 0.0
  %166 = vmatpush1.msra.mxu0 0.0
  %167 = vmatprep.subr.mxu0 0.0
  %168 = vmatpush1.msra.mxu0 0.0
  %169 = vmatprep.subr.mxu0 0.0
  %170 = vmatpush1.msra.mxu0 0.0
  %171 = vmatprep.subr.mxu0 0.0
  %172 = vmatpush1.msra.mxu0 0.0
  %173 = vmatprep.subr.mxu0 0.0
  %174 = vmatpush1.msra.mxu0 0.0
  %175 = vmatprep.subr.mxu0 0.0
  %176 = vmatpush1.msra.mxu0 0.0
  %177 = vmatprep.subr.mxu0 0.0
  %178 = vmatpush1.msra.mxu0 0.0
  %179 = vmatprep.subr.mxu0 0.0
  %180 = vmatpush1.msra.mxu0 0.0
  %181 = vmatprep.subr.mxu0 0.0
  %182 = vmatpush1.msra.mxu0 0.0
  %183 = vmatprep.subr.mxu0 0.0
  %184 = vmatpush1.msra.mxu0 0.0
  %185 = vmatprep.subr.mxu0 0.0
  %186 = vmatpush1.msra.mxu0 0.0
  %187 = vmatprep.subr.mxu0 0.0
  %188 = vmatpush1.msra.mxu0 0.0
  %189 = vmatprep.subr.mxu0 0.0
  %190 = vmatpush1.msra.mxu0 0.0
  %191 = vmatprep.subr.mxu0 0.0
  %192 = vmatpush1.msra.mxu0 0.0
  %193 = vmatprep.mubr.f32.mxu0 0.0
  %194 = vmatmul.mubr.f32.gmra.mrb[0].mxu0 %v43
  %v195 = vpop.f32.mrb[0].mxu0
  %v196 = vadd.f32 %v39, %v195
  %v197 = vpop.f32.mrb[0].mxu0
  %v198 = vadd.f32 %v39, %v197
  %199 = vdwg.mxu0
  %v204 = vcombine.low %v125, %v127
  %v205 = vcombine.low %v196, %v198
  %208 = vst [vmem:[%s3] sm:$0xff] %v204
  %209 = vst [vmem:[%s3 + $0x8] sm:$0xff] %v205
  // Predicated region
  $region14: #{net_forward_pallas.47} parent=0 // pred_check
    _
  $region15: #{net_forward_pallas.47} parent=0 // pred_check_branch
    %211 = sbr.rel (0) target = $region17
  $region16: #{net_forward_pallas.47} parent=0 // pred_region
    _
  $region17: #{net_forward_pallas.47} parent=0 // pred_fallthru
    _
  // Predicated region
  $region18: #{net_forward_pallas.47} parent=0 // pred_check
    _
  $region19: #{net_forward_pallas.47} parent=0 // pred_check_branch
    %213 = sbr.rel (0) target = $region21
  $region20: #{net_forward_pallas.47} parent=0 // pred_region
    _
  $region21: #{net_forward_pallas.47} parent=0 // pred_fallthru
    _

// kernel: net_forward_pallas.48
$region0: #{net_forward_pallas.48}
  #allocation0 [shape = 'u32[]', space=smem, size = 0x4, offset = 0x4, fixed_abs, tag = 'smem constant byte address 0x4 - core index']
  #allocation1 [shape = 'u32[144,128]{1,0:T(1,128)}', space=vmem, size = 0x12000, scoped, tag = 'internal scratch']
  %s0 = inlined_call_operand.vmem [shape: f32[4,36], index: 0, kind: input, shape index: {}]
  %s1 = inlined_call_operand.vmem [shape: f32[36,512], index: 1, kind: input, shape index: {}]
  %s2 = inlined_call_operand.vmem [shape: f32[4,1], index: 2, kind: input, shape index: {}]
  %s3 = inlined_call_operand.vmem [shape: f32[4,512], index: 3, kind: output, shape index: {}]
  %s4 = sld [smem:[#allocation0]]
  $region22: #{net_forward_pallas.48} parent=0
    _
  %s6 = ssub.s32 1, %s4
  %s7 = scalar_select 0, %s6, %s4
  // Predicated region
  $region2: #{net_forward_pallas.48} parent=0 // pred_check
    _
  $region3: #{net_forward_pallas.48} parent=0 // pred_check_branch
    %9 = sbr.rel (0) target = $region5
  $region4: #{net_forward_pallas.48} parent=0 // pred_region
    _
  $region5: #{net_forward_pallas.48} parent=0 // pred_fallthru
    _
  // Predicated region
  $region6: #{net_forward_pallas.48} parent=0 // pred_check
    _
  $region7: #{net_forward_pallas.48} parent=0 // pred_check_branch
    %11 = sbr.rel (0) target = $region9
  $region8: #{net_forward_pallas.48} parent=0 // pred_region
    _
  $region9: #{net_forward_pallas.48} parent=0 // pred_fallthru
    _
  // Predicated region
  $region10: #{net_forward_pallas.48} parent=0 // pred_check
    _
  $region11: #{net_forward_pallas.48} parent=0 // pred_check_branch
    %13 = sbr.rel (0) target = $region13
  $region12: #{net_forward_pallas.48} parent=0 // pred_region
    _
  $region13: #{net_forward_pallas.48} parent=0 // pred_fallthru
    _
  %v14 = vld [vmem:[%s0] sm:$0xf]
  %v15 = vld [vmem:[%s1] sm:$0xff]
  %v16 = vld [vmem:[%s1 + $0x8] sm:$0xff]
  %v17 = vld [vmem:[%s1 + $0x10] sm:$0xff]
  %v18 = vld [vmem:[%s1 + $0x18] sm:$0xff]
  %v19 = vld [vmem:[%s1 + $0x20] sm:$0xff]
  %v20 = vld [vmem:[%s1 + $0x28] sm:$0xff]
  %v21 = vld [vmem:[%s1 + $0x30] sm:$0xff]
  %v22 = vld [vmem:[%s1 + $0x38] sm:$0xff]
  %v23 = vld [vmem:[%s1 + $0x40] sm:$0xff]
  %v24 = vld [vmem:[%s1 + $0x48] sm:$0xff]
  %v25 = vld [vmem:[%s1 + $0x50] sm:$0xff]
  %v26 = vld [vmem:[%s1 + $0x58] sm:$0xff]
  %v27 = vld [vmem:[%s1 + $0x60] sm:$0xff]
  %v28 = vld [vmem:[%s1 + $0x68] sm:$0xff]
  %v29 = vld [vmem:[%s1 + $0x70] sm:$0xff]
  %v30 = vld [vmem:[%s1 + $0x78] sm:$0xff]
  %v31 = vld [vmem:[%s1 + $0x80] sm:$0xf]
  %v32 = vld [vmem:[%s1 + $0x88] sm:$0xf]
  %v33 = vld [vmem:[%s1 + $0x90] sm:$0xf]
  %v34 = vld [vmem:[%s1 + $0x98] sm:$0xf]
  %v35 = vld [vmem:[%s2] sm:$0xf]
  %37 = vset.pattern.permute.xlu0 0
  %38 = vperm.xlu0 %37, %v35
  %v39 = vpop.permute.xlu0 %38
  %vm41 = vcmask 293888
  %v43 = vsel %vm41, %v14, 0
  %vm45 = vcmask 1043456
  %v47 = vsel %vm45, %v31, 0
  %v50 = vsel %vm45, %v32, 0
  %v53 = vsel %vm45, %v33, 0
  %v56 = vsel %vm45, %v34, 0
  %58 = vmatprep.subr.mxu0 %v16
  %59 = vmatpush1.msra.mxu0 %v15
  %60 = vmatprep.subr.mxu0 %v20
  %61 = vmatpush1.msra.mxu0 %v19
  %62 = vmatprep.subr.mxu0 %v24
  %63 = vmatpush1.msra.mxu0 %v23
  %64 = vmatprep.subr.mxu0 %v28
  %65 = vmatpush1.msra.mxu0 %v27
  %66 = vmatprep.subr.mxu0 %v50
  %67 = vmatpush1.msra.mxu0 %v47
  %68 = vmatprep.subr.mxu0 0.0
  %69 = vmatpush1.msra.mxu0 0.0
  %70 = vmatprep.subr.mxu0 0.0
  %71 = vmatpush1.msra.mxu0 0.0
  %72 = vmatprep.subr.mxu0 0.0
  %73 = vmatpush1.msra.mxu0 0.0
  %74 = vmatprep.subr.mxu0 0.0
  %75 = vmatpush1.msra.mxu0 0.0
  %76 = vmatprep.subr.mxu0 0.0
  %77 = vmatpush1.msra.mxu0 0.0
  %78 = vmatprep.subr.mxu0 0.0
  %79 = vmatpush1.msra.mxu0 0.0
  %80 = vmatprep.subr.mxu0 0.0
  %81 = vmatpush1.msra.mxu0 0.0
  %82 = vmatprep.subr.mxu0 0.0
  %83 = vmatpush1.msra.mxu0 0.0
  %84 = vmatprep.subr.mxu0 0.0
  %85 = vmatpush1.msra.mxu0 0.0
  %86 = vmatprep.subr.mxu0 0.0
  %87 = vmatpush1.msra.mxu0 0.0
  %88 = vmatprep.subr.mxu0 0.0
  %89 = vmatpush1.msra.mxu0 0.0
  %90 = vmatprep.subr.mxu0 0.0
  %91 = vmatpush1.msra.mxu0 0.0
  %92 = vmatprep.subr.mxu0 0.0
  %93 = vmatpush1.msra.mxu0 0.0
  %94 = vmatprep.subr.mxu0 0.0
  %95 = vmatpush1.msra.mxu0 0.0
  %96 = vmatprep.subr.mxu0 0.0
  %97 = vmatpush1.msra.mxu0 0.0
  %98 = vmatprep.subr.mxu0 0.0
  %99 = vmatpush1.msra.mxu0 0.0
  %100 = vmatprep.subr.mxu0 0.0
  %101 = vmatpush1.msra.mxu0 0.0
  %102 = vmatprep.subr.mxu0 0.0
  %103 = vmatpush1.msra.mxu0 0.0
  %104 = vmatprep.subr.mxu0 0.0
  %105 = vmatpush1.msra.mxu0 0.0
  %106 = vmatprep.subr.mxu0 0.0
  %107 = vmatpush1.msra.mxu0 0.0
  %108 = vmatprep.subr.mxu0 0.0
  %109 = vmatpush1.msra.mxu0 0.0
  %110 = vmatprep.subr.mxu0 0.0
  %111 = vmatpush1.msra.mxu0 0.0
  %112 = vmatprep.subr.mxu0 0.0
  %113 = vmatpush1.msra.mxu0 0.0
  %114 = vmatprep.subr.mxu0 0.0
  %115 = vmatpush1.msra.mxu0 0.0
  %116 = vmatprep.subr.mxu0 0.0
  %117 = vmatpush1.msra.mxu0 0.0
  %118 = vmatprep.subr.mxu0 0.0
  %119 = vmatpush1.msra.mxu0 0.0
  %120 = vmatprep.subr.mxu0 0.0
  %121 = vmatpush1.msra.mxu0 0.0
  %122 = vmatprep.mubr.f32.mxu0 0.0
  %123 = vmatmul.mubr.f32.gmra.mrb[0].mxu0 %v43
  %v124 = vpop.f32.mrb[0].mxu0
  %v125 = vadd.f32 %v39, %v124
  %v126 = vpop.f32.mrb[0].mxu0
  %v127 = vadd.f32 %v39, %v126
  %128 = vdwg.mxu0
  %129 = vmatprep.subr.mxu0 %v18
  %130 = vmatpush1.msra.mxu0 %v17
  %131 = vmatprep.subr.mxu0 %v22
  %132 = vmatpush1.msra.mxu0 %v21
  %133 = vmatprep.subr.mxu0 %v26
  %134 = vmatpush1.msra.mxu0 %v25
  %135 = vmatprep.subr.mxu0 %v30
  %136 = vmatpush1.msra.mxu0 %v29
  %137 = vmatprep.subr.mxu0 %v56
  %138 = vmatpush1.msra.mxu0 %v53
  %139 = vmatprep.subr.mxu0 0.0
  %140 = vmatpush1.msra.mxu0 0.0
  %141 = vmatprep.subr.mxu0 0.0
  %142 = vmatpush1.msra.mxu0 0.0
  %143 = vmatprep.subr.mxu0 0.0
  %144 = vmatpush1.msra.mxu0 0.0
  %145 = vmatprep.subr.mxu0 0.0
  %146 = vmatpush1.msra.mxu0 0.0
  %147 = vmatprep.subr.mxu0 0.0
  %148 = vmatpush1.msra.mxu0 0.0
  %149 = vmatprep.subr.mxu0 0.0
  %150 = vmatpush1.msra.mxu0 0.0
  %151 = vmatprep.subr.mxu0 0.0
  %152 = vmatpush1.msra.mxu0 0.0
  %153 = vmatprep.subr.mxu0 0.0
  %154 = vmatpush1.msra.mxu0 0.0
  %155 = vmatprep.subr.mxu0 0.0
  %156 = vmatpush1.msra.mxu0 0.0
  %157 = vmatprep.subr.mxu0 0.0
  %158 = vmatpush1.msra.mxu0 0.0
  %159 = vmatprep.subr.mxu0 0.0
  %160 = vmatpush1.msra.mxu0 0.0
  %161 = vmatprep.subr.mxu0 0.0
  %162 = vmatpush1.msra.mxu0 0.0
  %163 = vmatprep.subr.mxu0 0.0
  %164 = vmatpush1.msra.mxu0 0.0
  %165 = vmatprep.subr.mxu0 0.0
  %166 = vmatpush1.msra.mxu0 0.0
  %167 = vmatprep.subr.mxu0 0.0
  %168 = vmatpush1.msra.mxu0 0.0
  %169 = vmatprep.subr.mxu0 0.0
  %170 = vmatpush1.msra.mxu0 0.0
  %171 = vmatprep.subr.mxu0 0.0
  %172 = vmatpush1.msra.mxu0 0.0
  %173 = vmatprep.subr.mxu0 0.0
  %174 = vmatpush1.msra.mxu0 0.0
  %175 = vmatprep.subr.mxu0 0.0
  %176 = vmatpush1.msra.mxu0 0.0
  %177 = vmatprep.subr.mxu0 0.0
  %178 = vmatpush1.msra.mxu0 0.0
  %179 = vmatprep.subr.mxu0 0.0
  %180 = vmatpush1.msra.mxu0 0.0
  %181 = vmatprep.subr.mxu0 0.0
  %182 = vmatpush1.msra.mxu0 0.0
  %183 = vmatprep.subr.mxu0 0.0
  %184 = vmatpush1.msra.mxu0 0.0
  %185 = vmatprep.subr.mxu0 0.0
  %186 = vmatpush1.msra.mxu0 0.0
  %187 = vmatprep.subr.mxu0 0.0
  %188 = vmatpush1.msra.mxu0 0.0
  %189 = vmatprep.subr.mxu0 0.0
  %190 = vmatpush1.msra.mxu0 0.0
  %191 = vmatprep.subr.mxu0 0.0
  %192 = vmatpush1.msra.mxu0 0.0
  %193 = vmatprep.mubr.f32.mxu0 0.0
  %194 = vmatmul.mubr.f32.gmra.mrb[0].mxu0 %v43
  %v195 = vpop.f32.mrb[0].mxu0
  %v196 = vadd.f32 %v39, %v195
  %v197 = vpop.f32.mrb[0].mxu0
  %v198 = vadd.f32 %v39, %v197
  %199 = vdwg.mxu0
  %v200 = vmax.f32 %v125, 0.0
  %v201 = vmax.f32 %v127, 0.0
  %v202 = vmax.f32 %v196, 0.0
  %v203 = vmax.f32 %v198, 0.0
  %v208 = vcombine.low %v200, %v201
  %v209 = vcombine.low %v202, %v203
  %212 = vst [vmem:[%s3] sm:$0xff] %v208
  %213 = vst [vmem:[%s3 + $0x8] sm:$0xff] %v209
  // Predicated region
  $region14: #{net_forward_pallas.48} parent=0 // pred_check
    _
  $region15: #{net_forward_pallas.48} parent=0 // pred_check_branch
    %215 = sbr.rel (0) target = $region17
  $region16: #{net_forward_pallas.48} parent=0 // pred_region
    _
  $region17: #{net_forward_pallas.48} parent=0 // pred_fallthru
    _
  // Predicated region
  $region18: #{net_forward_pallas.48} parent=0 // pred_check
    _
  $region19: #{net_forward_pallas.48} parent=0 // pred_check_branch
    %217 = sbr.rel (0) target = $region21
  $region20: #{net_forward_pallas.48} parent=0 // pred_region
    _
  $region21: #{net_forward_pallas.48} parent=0 // pred_fallthru
    _

// kernel: net_forward_pallas.57
$region0: #{net_forward_pallas.57}
  #allocation0 [shape = 'u32[]', space=smem, size = 0x4, offset = 0x4, fixed_abs, tag = 'smem constant byte address 0x4 - core index']
  #allocation1 [shape = 'u32[144,128]{1,0:T(1,128)}', space=vmem, size = 0x12000, scoped, tag = 'internal scratch']
  %s0 = inlined_call_operand.vmem [shape: f32[16,36], index: 0, kind: input, shape index: {}]
  %s1 = inlined_call_operand.vmem [shape: f32[36,512], index: 1, kind: input, shape index: {}]
  %s2 = inlined_call_operand.vmem [shape: f32[16,1], index: 2, kind: input, shape index: {}]
  %s3 = inlined_call_operand.vmem [shape: f32[16,512], index: 3, kind: output, shape index: {}]
  %s4 = sld [smem:[#allocation0]]
  $region22: #{net_forward_pallas.57} parent=0
    _
  %s6 = ssub.s32 1, %s4
  %s7 = scalar_select 0, %s6, %s4
  // Predicated region
  $region2: #{net_forward_pallas.57} parent=0 // pred_check
    _
  $region3: #{net_forward_pallas.57} parent=0 // pred_check_branch
    %9 = sbr.rel (0) target = $region5
  $region4: #{net_forward_pallas.57} parent=0 // pred_region
    _
  $region5: #{net_forward_pallas.57} parent=0 // pred_fallthru
    _
  // Predicated region
  $region6: #{net_forward_pallas.57} parent=0 // pred_check
    _
  $region7: #{net_forward_pallas.57} parent=0 // pred_check_branch
    %11 = sbr.rel (0) target = $region9
  $region8: #{net_forward_pallas.57} parent=0 // pred_region
    _
  $region9: #{net_forward_pallas.57} parent=0 // pred_fallthru
    _
  // Predicated region
  $region10: #{net_forward_pallas.57} parent=0 // pred_check
    _
  $region11: #{net_forward_pallas.57} parent=0 // pred_check_branch
    %13 = sbr.rel (0) target = $region13
  $region12: #{net_forward_pallas.57} parent=0 // pred_region
    _
  $region13: #{net_forward_pallas.57} parent=0 // pred_fallthru
    _
  %v14 = vld [vmem:[%s0] sm:$0xff]
  %v15 = vld [vmem:[%s0 + $0x8] sm:$0xff]
  %v16 = vld [vmem:[%s1] sm:$0xff]
  %v17 = vld [vmem:[%s1 + $0x8] sm:$0xff]
  %v18 = vld [vmem:[%s1 + $0x10] sm:$0xff]
  %v19 = vld [vmem:[%s1 + $0x18] sm:$0xff]
  %v20 = vld [vmem:[%s1 + $0x20] sm:$0xff]
  %v21 = vld [vmem:[%s1 + $0x28] sm:$0xff]
  %v22 = vld [vmem:[%s1 + $0x30] sm:$0xff]
  %v23 = vld [vmem:[%s1 + $0x38] sm:$0xff]
  %v24 = vld [vmem:[%s1 + $0x40] sm:$0xff]
  %v25 = vld [vmem:[%s1 + $0x48] sm:$0xff]
  %v26 = vld [vmem:[%s1 + $0x50] sm:$0xff]
  %v27 = vld [vmem:[%s1 + $0x58] sm:$0xff]
  %v28 = vld [vmem:[%s1 + $0x60] sm:$0xff]
  %v29 = vld [vmem:[%s1 + $0x68] sm:$0xff]
  %v30 = vld [vmem:[%s1 + $0x70] sm:$0xff]
  %v31 = vld [vmem:[%s1 + $0x78] sm:$0xff]
  %v32 = vld [vmem:[%s1 + $0x80] sm:$0xf]
  %v33 = vld [vmem:[%s1 + $0x88] sm:$0xf]
  %v34 = vld [vmem:[%s1 + $0x90] sm:$0xf]
  %v35 = vld [vmem:[%s1 + $0x98] sm:$0xf]
  %v36 = vld [vmem:[%s2] sm:$0xff]
  %v37 = vld [vmem:[%s2 + $0x8] sm:$0xff]
  %39 = vset.pattern.permute.xlu0 0
  %40 = vperm.xlu0 %39, %v36
  %v41 = vpop.permute.xlu0 %40
  %44 = vset.pattern.permute.xlu0 0
  %45 = vperm.xlu0 %44, %v37
  %v46 = vpop.permute.xlu0 %45
  %vm48 = vcmask 293888
  %v50 = vsel %vm48, %v14, 0
  %v53 = vsel %vm48, %v15, 0
  %vm55 = vcmask 1043456
  %v57 = vsel %vm55, %v32, 0
  %v60 = vsel %vm55, %v33, 0
  %v63 = vsel %vm55, %v34, 0
  %v66 = vsel %vm55, %v35, 0
  %68 = vmatprep.subr.mxu0 %v17
  %69 = vmatpush1.msra.mxu0 %v16
  %70 = vmatprep.subr.mxu0 %v21
  %71 = vmatpush1.msra.mxu0 %v20
  %72 = vmatprep.subr.mxu0 %v25
  %73 = vmatpush1.msra.mxu0 %v24
  %74 = vmatprep.subr.mxu0 %v29
  %75 = vmatpush1.msra.mxu0 %v28
  %76 = vmatprep.subr.mxu0 %v60
  %77 = vmatpush1.msra.mxu0 %v57
  %78 = vmatprep.subr.mxu0 0.0
  %79 = vmatpush1.msra.mxu0 0.0
  %80 = vmatprep.subr.mxu0 0.0
  %81 = vmatpush1.msra.mxu0 0.0
  %82 = vmatprep.subr.mxu0 0.0
  %83 = vmatpush1.msra.mxu0 0.0
  %84 = vmatprep.subr.mxu0 0.0
  %85 = vmatpush1.msra.mxu0 0.0
  %86 = vmatprep.subr.mxu0 0.0
  %87 = vmatpush1.msra.mxu0 0.0
  %88 = vmatprep.subr.mxu0 0.0
  %89 = vmatpush1.msra.mxu0 0.0
  %90 = vmatprep.subr.mxu0 0.0
  %91 = vmatpush1.msra.mxu0 0.0
  %92 = vmatprep.subr.mxu0 0.0
  %93 = vmatpush1.msra.mxu0 0.0
  %94 = vmatprep.subr.mxu0 0.0
  %95 = vmatpush1.msra.mxu0 0.0
  %96 = vmatprep.subr.mxu0 0.0
  %97 = vmatpush1.msra.mxu0 0.0
  %98 = vmatprep.subr.mxu0 0.0
  %99 = vmatpush1.msra.mxu0 0.0
  %100 = vmatprep.subr.mxu0 0.0
  %101 = vmatpush1.msra.mxu0 0.0
  %102 = vmatprep.subr.mxu0 0.0
  %103 = vmatpush1.msra.mxu0 0.0
  %104 = vmatprep.subr.mxu0 0.0
  %105 = vmatpush1.msra.mxu0 0.0
  %106 = vmatprep.subr.mxu0 0.0
  %107 = vmatpush1.msra.mxu0 0.0
  %108 = vmatprep.subr.mxu0 0.0
  %109 = vmatpush1.msra.mxu0 0.0
  %110 = vmatprep.subr.mxu0 0.0
  %111 = vmatpush1.msra.mxu0 0.0
  %112 = vmatprep.subr.mxu0 0.0
  %113 = vmatpush1.msra.mxu0 0.0
  %114 = vmatprep.subr.mxu0 0.0
  %115 = vmatpush1.msra.mxu0 0.0
  %116 = vmatprep.subr.mxu0 0.0
  %117 = vmatpush1.msra.mxu0 0.0
  %118 = vmatprep.subr.mxu0 0.0
  %119 = vmatpush1.msra.mxu0 0.0
  %120 = vmatprep.subr.mxu0 0.0
  %121 = vmatpush1.msra.mxu0 0.0
  %122 = vmatprep.subr.mxu0 0.0
  %123 = vmatpush1.msra.mxu0 0.0
  %124 = vmatprep.subr.mxu0 0.0
  %125 = vmatpush1.msra.mxu0 0.0
  %126 = vmatprep.subr.mxu0 0.0
  %127 = vmatpush1.msra.mxu0 0.0
  %128 = vmatprep.subr.mxu0 0.0
  %129 = vmatpush1.msra.mxu0 0.0
  %130 = vmatprep.subr.mxu0 0.0
  %131 = vmatpush1.msra.mxu0 0.0
  %132 = vmatprep.mubr.f32.mxu0 0.0
  %133 = vmatmul.mubr.f32.gmra.mrb[0].mxu0 %v50
  %v134 = vpop.f32.mrb[0].mxu0
  %v135 = vadd.f32 %v41, %v134
  %v136 = vpop.f32.mrb[0].mxu0
  %v137 = vadd.f32 %v41, %v136
  %138 = vmatprep.mubr.f32.mxu0 0.0
  %139 = vmatmul.mubr.f32.gmra.mrb[0].mxu0 %v53
  %v140 = vpop.f32.mrb[0].mxu0
  %v141 = vadd.f32 %v46, %v140
  %v142 = vpop.f32.mrb[0].mxu0
  %v143 = vadd.f32 %v46, %v142
  %144 = vdwg.mxu0
  %145 = vmatprep.subr.mxu0 %v19
  %146 = vmatpush1.msra.mxu0 %v18
  %147 = vmatprep.subr.mxu0 %v23
  %148 = vmatpush1.msra.mxu0 %v22
  %149 = vmatprep.subr.mxu0 %v27
  %150 = vmatpush1.msra.mxu0 %v26
  %151 = vmatprep.subr.mxu0 %v31
  %152 = vmatpush1.msra.mxu0 %v30
  %153 = vmatprep.subr.mxu0 %v66
  %154 = vmatpush1.msra.mxu0 %v63
  %155 = vmatprep.subr.mxu0 0.0
  %156 = vmatpush1.msra.mxu0 0.0
  %157 = vmatprep.subr.mxu0 0.0
  %158 = vmatpush1.msra.mxu0 0.0
  %159 = vmatprep.subr.mxu0 0.0
  %160 = vmatpush1.msra.mxu0 0.0
  %161 = vmatprep.subr.mxu0 0.0
  %162 = vmatpush1.msra.mxu0 0.0
  %163 = vmatprep.subr.mxu0 0.0
  %164 = vmatpush1.msra.mxu0 0.0
  %165 = vmatprep.subr.mxu0 0.0
  %166 = vmatpush1.msra.mxu0 0.0
  %167 = vmatprep.subr.mxu0 0.0
  %168 = vmatpush1.msra.mxu0 0.0
  %169 = vmatprep.subr.mxu0 0.0
  %170 = vmatpush1.msra.mxu0 0.0
  %171 = vmatprep.subr.mxu0 0.0
  %172 = vmatpush1.msra.mxu0 0.0
  %173 = vmatprep.subr.mxu0 0.0
  %174 = vmatpush1.msra.mxu0 0.0
  %175 = vmatprep.subr.mxu0 0.0
  %176 = vmatpush1.msra.mxu0 0.0
  %177 = vmatprep.subr.mxu0 0.0
  %178 = vmatpush1.msra.mxu0 0.0
  %179 = vmatprep.subr.mxu0 0.0
  %180 = vmatpush1.msra.mxu0 0.0
  %181 = vmatprep.subr.mxu0 0.0
  %182 = vmatpush1.msra.mxu0 0.0
  %183 = vmatprep.subr.mxu0 0.0
  %184 = vmatpush1.msra.mxu0 0.0
  %185 = vmatprep.subr.mxu0 0.0
  %186 = vmatpush1.msra.mxu0 0.0
  %187 = vmatprep.subr.mxu0 0.0
  %188 = vmatpush1.msra.mxu0 0.0
  %189 = vmatprep.subr.mxu0 0.0
  %190 = vmatpush1.msra.mxu0 0.0
  %191 = vmatprep.subr.mxu0 0.0
  %192 = vmatpush1.msra.mxu0 0.0
  %193 = vmatprep.subr.mxu0 0.0
  %194 = vmatpush1.msra.mxu0 0.0
  %195 = vmatprep.subr.mxu0 0.0
  %196 = vmatpush1.msra.mxu0 0.0
  %197 = vmatprep.subr.mxu0 0.0
  %198 = vmatpush1.msra.mxu0 0.0
  %199 = vmatprep.subr.mxu0 0.0
  %200 = vmatpush1.msra.mxu0 0.0
  %201 = vmatprep.subr.mxu0 0.0
  %202 = vmatpush1.msra.mxu0 0.0
  %203 = vmatprep.subr.mxu0 0.0
  %204 = vmatpush1.msra.mxu0 0.0
  %205 = vmatprep.subr.mxu0 0.0
  %206 = vmatpush1.msra.mxu0 0.0
  %207 = vmatprep.subr.mxu0 0.0
  %208 = vmatpush1.msra.mxu0 0.0
  %209 = vmatprep.mubr.f32.mxu0 0.0
  %210 = vmatmul.mubr.f32.gmra.mrb[0].mxu0 %v50
  %v211 = vpop.f32.mrb[0].mxu0
  %v212 = vadd.f32 %v41, %v211
  %v213 = vpop.f32.mrb[0].mxu0
  %v214 = vadd.f32 %v41, %v213
  %215 = vmatprep.mubr.f32.mxu0 0.0
  %216 = vmatmul.mubr.f32.gmra.mrb[0].mxu0 %v53
  %v217 = vpop.f32.mrb[0].mxu0
  %v218 = vadd.f32 %v46, %v217
  %v219 = vpop.f32.mrb[0].mxu0
  %v220 = vadd.f32 %v46, %v219
  %221 = vdwg.mxu0
  %222 = vst [vmem:[%s3] sm:$0xff] %v135
  %223 = vst [vmem:[%s3 + $0x8] sm:$0xff] %v137
  %224 = vst [vmem:[%s3 + $0x10] sm:$0xff] %v212
  %225 = vst [vmem:[%s3 + $0x18] sm:$0xff] %v214
  %226 = vst [vmem:[%s3 + $0x20] sm:$0xff] %v141
  %227 = vst [vmem:[%s3 + $0x28] sm:$0xff] %v143
  %228 = vst [vmem:[%s3 + $0x30] sm:$0xff] %v218
  %229 = vst [vmem:[%s3 + $0x38] sm:$0xff] %v220
  // Predicated region
  $region14: #{net_forward_pallas.57} parent=0 // pred_check
    _
  $region15: #{net_forward_pallas.57} parent=0 // pred_check_branch
    %231 = sbr.rel (0) target = $region17
  $region16: #{net_forward_pallas.57} parent=0 // pred_region
    _
  $region17: #{net_forward_pallas.57} parent=0 // pred_fallthru
    _
  // Predicated region
  $region18: #{net_forward_pallas.57} parent=0 // pred_check
    _
  $region19: #{net_forward_pallas.57} parent=0 // pred_check_branch
    %233 = sbr.rel (0) target = $region21
  $region20: #{net_forward_pallas.57} parent=0 // pred_region
    _
  $region21: #{net_forward_pallas.57} parent=0 // pred_fallthru
    _

// kernel: net_forward_pallas.58
$region0: #{net_forward_pallas.58}
  #allocation0 [shape = 'u32[]', space=smem, size = 0x4, offset = 0x4, fixed_abs, tag = 'smem constant byte address 0x4 - core index']
  #allocation1 [shape = 'u32[144,128]{1,0:T(1,128)}', space=vmem, size = 0x12000, scoped, tag = 'internal scratch']
  %s0 = inlined_call_operand.vmem [shape: f32[4,36], index: 0, kind: input, shape index: {}]
  %s1 = inlined_call_operand.vmem [shape: f32[36,2048], index: 1, kind: input, shape index: {}]
  %s2 = inlined_call_operand.vmem [shape: f32[4,1], index: 2, kind: input, shape index: {}]
  %s3 = inlined_call_operand.vmem [shape: f32[4,2048], index: 3, kind: output, shape index: {}]
  %s4 = sld [smem:[#allocation0]]
  $region22: #{net_forward_pallas.58} parent=0
    _
  %s6 = ssub.s32 1, %s4
  %s7 = scalar_select 0, %s6, %s4
  // Predicated region
  $region2: #{net_forward_pallas.58} parent=0 // pred_check
    _
  $region3: #{net_forward_pallas.58} parent=0 // pred_check_branch
    %9 = sbr.rel (0) target = $region5
  $region4: #{net_forward_pallas.58} parent=0 // pred_region
    _
  $region5: #{net_forward_pallas.58} parent=0 // pred_fallthru
    _
  // Predicated region
  $region6: #{net_forward_pallas.58} parent=0 // pred_check
    _
  $region7: #{net_forward_pallas.58} parent=0 // pred_check_branch
    %11 = sbr.rel (0) target = $region9
  $region8: #{net_forward_pallas.58} parent=0 // pred_region
    _
  $region9: #{net_forward_pallas.58} parent=0 // pred_fallthru
    _
  // Predicated region
  $region10: #{net_forward_pallas.58} parent=0 // pred_check
    _
  $region11: #{net_forward_pallas.58} parent=0 // pred_check_branch
    %13 = sbr.rel (0) target = $region13
  $region12: #{net_forward_pallas.58} parent=0 // pred_region
    _
  $region13: #{net_forward_pallas.58} parent=0 // pred_fallthru
    _
  %v14 = vld [vmem:[%s0] sm:$0xf]
  %v15 = vld [vmem:[%s1] sm:$0xff]
  %v16 = vld [vmem:[%s1 + $0x8] sm:$0xff]
  %v17 = vld [vmem:[%s1 + $0x10] sm:$0xff]
  %v18 = vld [vmem:[%s1 + $0x18] sm:$0xff]
  %v19 = vld [vmem:[%s1 + $0x20] sm:$0xff]
  %v20 = vld [vmem:[%s1 + $0x28] sm:$0xff]
  %v21 = vld [vmem:[%s1 + $0x30] sm:$0xff]
  %v22 = vld [vmem:[%s1 + $0x38] sm:$0xff]
  %v23 = vld [vmem:[%s1 + $0x40] sm:$0xff]
  %v24 = vld [vmem:[%s1 + $0x48] sm:$0xff]
  %v25 = vld [vmem:[%s1 + $0x50] sm:$0xff]
  %v26 = vld [vmem:[%s1 + $0x58] sm:$0xff]
  %v27 = vld [vmem:[%s1 + $0x60] sm:$0xff]
  %v28 = vld [vmem:[%s1 + $0x68] sm:$0xff]
  %v29 = vld [vmem:[%s1 + $0x70] sm:$0xff]
  %v30 = vld [vmem:[%s1 + $0x78] sm:$0xff]
  %v31 = vld [vmem:[%s1 + $0x80] sm:$0xff]
  %v32 = vld [vmem:[%s1 + $0x88] sm:$0xff]
  %v33 = vld [vmem:[%s1 + $0x90] sm:$0xff]
  %v34 = vld [vmem:[%s1 + $0x98] sm:$0xff]
  %v35 = vld [vmem:[%s1 + $0xa0] sm:$0xff]
  %v36 = vld [vmem:[%s1 + $0xa8] sm:$0xff]
  %v37 = vld [vmem:[%s1 + $0xb0] sm:$0xff]
  %v38 = vld [vmem:[%s1 + $0xb8] sm:$0xff]
  %v39 = vld [vmem:[%s1 + $0xc0] sm:$0xff]
  %v40 = vld [vmem:[%s1 + $0xc8] sm:$0xff]
  %v41 = vld [vmem:[%s1 + $0xd0] sm:$0xff]
  %v42 = vld [vmem:[%s1 + $0xd8] sm:$0xff]
  %v43 = vld [vmem:[%s1 + $0xe0] sm:$0xff]
  %v44 = vld [vmem:[%s1 + $0xe8] sm:$0xff]
  %v45 = vld [vmem:[%s1 + $0xf0] sm:$0xff]
  %v46 = vld [vmem:[%s1 + $0xf8] sm:$0xff]
  %v47 = vld [vmem:[%s1 + $0x100] sm:$0xff]
  %v48 = vld [vmem:[%s1 + $0x108] sm:$0xff]
  %v49 = vld [vmem:[%s1 + $0x110] sm:$0xff]
  %v50 = vld [vmem:[%s1 + $0x118] sm:$0xff]
  %v51 = vld [vmem:[%s1 + $0x120] sm:$0xff]
  %v52 = vld [vmem:[%s1 + $0x128] sm:$0xff]
  %v53 = vld [vmem:[%s1 + $0x130] sm:$0xff]
  %v54 = vld [vmem:[%s1 + $0x138] sm:$0xff]
  %v55 = vld [vmem:[%s1 + $0x140] sm:$0xff]
  %v56 = vld [vmem:[%s1 + $0x148] sm:$0xff]
  %v57 = vld [vmem:[%s1 + $0x150] sm:$0xff]
  %v58 = vld [vmem:[%s1 + $0x158] sm:$0xff]
  %v59 = vld [vmem:[%s1 + $0x160] sm:$0xff]
  %v60 = vld [vmem:[%s1 + $0x168] sm:$0xff]
  %v61 = vld [vmem:[%s1 + $0x170] sm:$0xff]
  %v62 = vld [vmem:[%s1 + $0x178] sm:$0xff]
  %v63 = vld [vmem:[%s1 + $0x180] sm:$0xff]
  %v64 = vld [vmem:[%s1 + $0x188] sm:$0xff]
  %v65 = vld [vmem:[%s1 + $0x190] sm:$0xff]
  %v66 = vld [vmem:[%s1 + $0x198] sm:$0xff]
  %v67 = vld [vmem:[%s1 + $0x1a0] sm:$0xff]
  %v68 = vld [vmem:[%s1 + $0x1a8] sm:$0xff]
  %v69 = vld [vmem:[%s1 + $0x1b0] sm:$0xff]
  %v70 = vld [vmem:[%s1 + $0x1b8] sm:$0xff]
  %v71 = vld [vmem:[%s1 + $0x1c0] sm:$0xff]
  %v72 = vld [vmem:[%s1 + $0x1c8] sm:$0xff]
  %v73 = vld [vmem:[%s1 + $0x1d0] sm:$0xff]
  %v74 = vld [vmem:[%s1 + $0x1d8] sm:$0xff]
  %v75 = vld [vmem:[%s1 + $0x1e0] sm:$0xff]
  %v76 = vld [vmem:[%s1 + $0x1e8] sm:$0xff]
  %v77 = vld [vmem:[%s1 + $0x1f0] sm:$0xff]
  %v78 = vld [vmem:[%s1 + $0x1f8] sm:$0xff]
  %v79 = vld [vmem:[%s1 + $0x200] sm:$0xf]
  %v80 = vld [vmem:[%s1 + $0x208] sm:$0xf]
  %v81 = vld [vmem:[%s1 + $0x210] sm:$0xf]
  %v82 = vld [vmem:[%s1 + $0x218] sm:$0xf]
  %v83 = vld [vmem:[%s1 + $0x220] sm:$0xf]
  %v84 = vld [vmem:[%s1 + $0x228] sm:$0xf]
  %v85 = vld [vmem:[%s1 + $0x230] sm:$0xf]
  %v86 = vld [vmem:[%s1 + $0x238] sm:$0xf]
  %v87 = vld [vmem:[%s1 + $0x240] sm:$0xf]
  %v88 = vld [vmem:[%s1 + $0x248] sm:$0xf]
  %v89 = vld [vmem:[%s1 + $0x250] sm:$0xf]
  %v90 = vld [vmem:[%s1 + $0x258] sm:$0xf]
  %v91 = vld [vmem:[%s1 + $0x260] sm:$0xf]
  %v92 = vld [vmem:[%s1 + $0x268] sm:$0xf]
  %v93 = vld [vmem:[%s1 + $0x270] sm:$0xf]
  %v94 = vld [vmem:[%s1 + $0x278] sm:$0xf]
  %v95 = vld [vmem:[%s2] sm:$0xf]
  %97 = vset.pattern.permute.xlu0 0
  %98 = vperm.xlu0 %97, %v95
  %v99 = vpop.permute.xlu0 %98
  %vm101 = vcmask 293888
  %v103 = vsel %vm101, %v14, 0
  %vm105 = vcmask 1043456
  %v107 = vsel %vm105, %v79, 0
  %v110 = vsel %vm105, %v80, 0
  %v113 = vsel %vm105, %v81, 0
  %v116 = vsel %vm105, %v82, 0
  %v119 = vsel %vm105, %v83, 0
  %v122 = vsel %vm105, %v84, 0
  %v125 = vsel %vm105, %v85, 0
  %v128 = vsel %vm105, %v86, 0
  %v131 = vsel %vm105, %v87, 0
  %v134 = vsel %vm105, %v88, 0
  %v137 = vsel %vm105, %v89, 0
  %v140 = vsel %vm105, %v90, 0
  %v143 = vsel %vm105, %v91, 0
  %v146 = vsel %vm105, %v92, 0
  %v149 = vsel %vm105, %v93, 0
  %v152 = vsel %vm105, %v94, 0
  %154 = vmatprep.subr.mxu0 %v16
  %155 = vmatpush1.msra.mxu0 %v15
  %156 = vmatprep.subr.mxu0 %v32
  %157 = vmatpush1.msra.mxu0 %v31
  %158 = vmatprep.subr.mxu0 %v48
  %159 = vmatpush1.msra.mxu0 %v47
  %160 = vmatprep.subr.mxu0 %v64
  %161 = vmatpush1.msra.mxu0 %v63
  %162 = vmatprep.subr.mxu0 %v110
  %163 = vmatpush1.msra.mxu0 %v107
  %164 = vmatprep.subr.mxu0 0.0
  %165 = vmatpush1.msra.mxu0 0.0
  %166 = vmatprep.subr.mxu0 0.0
  %167 = vmatpush1.msra.mxu0 0.0
  %168 = vmatprep.subr.mxu0 0.0
  %169 = vmatpush1.msra.mxu0 0.0
  %170 = vmatprep.subr.mxu0 0.0
  %171 = vmatpush1.msra.mxu0 0.0
  %172 = vmatprep.subr.mxu0 0.0
  %173 = vmatpush1.msra.mxu0 0.0
  %174 = vmatprep.subr.mxu0 0.0
  %175 = vmatpush1.msra.mxu0 0.0
  %176 = vmatprep.subr.mxu0 0.0
  %177 = vmatpush1.msra.mxu0 0.0
  %178 = vmatprep.subr.mxu0 0.0
  %179 = vmatpush1.msra.mxu0 0.0
  %180 = vmatprep.subr.mxu0 0.0
  %181 = vmatpush1.msra.mxu0 0.0
  %182 = vmatprep.subr.mxu0 0.0
  %183 = vmatpush1.msra.mxu0 0.0
  %184 = vmatprep.subr.mxu0 0.0
  %185 = vmatpush1.msra.mxu0 0.0
  %186 = vmatprep.subr.mxu0 0.0
  %187 = vmatpush1.msra.mxu0 0.0
  %188 = vmatprep.subr.mxu0 0.0
  %189 = vmatpush1.msra.mxu0 0.0
  %190 = vmatprep.subr.mxu0 0.0
  %191 = vmatpush1.msra.mxu0 0.0
  %192 = vmatprep.subr.mxu0 0.0
  %193 = vmatpush1.msra.mxu0 0.0
  %194 = vmatprep.subr.mxu0 0.0
  %195 = vmatpush1.msra.mxu0 0.0
  %196 = vmatprep.subr.mxu0 0.0
  %197 = vmatpush1.msra.mxu0 0.0
  %198 = vmatprep.subr.mxu0 0.0
  %199 = vmatpush1.msra.mxu0 0.0
  %200 = vmatprep.subr.mxu0 0.0
  %201 = vmatpush1.msra.mxu0 0.0
  %202 = vmatprep.subr.mxu0 0.0
  %203 = vmatpush1.msra.mxu0 0.0
  %204 = vmatprep.subr.mxu0 0.0
  %205 = vmatpush1.msra.mxu0 0.0
  %206 = vmatprep.subr.mxu0 0.0
  %207 = vmatpush1.msra.mxu0 0.0
  %208 = vmatprep.subr.mxu0 0.0
  %209 = vmatpush1.msra.mxu0 0.0
  %210 = vmatprep.subr.mxu0 0.0
  %211 = vmatpush1.msra.mxu0 0.0
  %212 = vmatprep.subr.mxu0 0.0
  %213 = vmatpush1.msra.mxu0 0.0
  %214 = vmatprep.subr.mxu0 0.0
  %215 = vmatpush1.msra.mxu0 0.0
  %216 = vmatprep.subr.mxu0 0.0
  %217 = vmatpush1.msra.mxu0 0.0
  %218 = vmatprep.mubr.f32.mxu0 0.0
  %219 = vmatmul.mubr.f32.gmra.mrb[0].mxu0 %v103
  %v220 = vpop.f32.mrb[0].mxu0
  %v221 = vadd.f32 %v99, %v220
  %v222 = vpop.f32.mrb[0].mxu0
  %v223 = vadd.f32 %v99, %v222
  %224 = vdwg.mxu0
  %225 = vmatprep.subr.mxu0 %v18
  %226 = vmatpush1.msra.mxu0 %v17
  %227 = vmatprep.subr.mxu0 %v34
  %228 = vmatpush1.msra.mxu0 %v33
  %229 = vmatprep.subr.mxu0 %v50
  %230 = vmatpush1.msra.mxu0 %v49
  %231 = vmatprep.subr.mxu0 %v66
  %232 = vmatpush1.msra.mxu0 %v65
  %233 = vmatprep.subr.mxu0 %v116
  %234 = vmatpush1.msra.mxu0 %v113
  %235 = vmatprep.subr.mxu0 0.0
  %236 = vmatpush1.msra.mxu0 0.0
  %237 = vmatprep.subr.mxu0 0.0
  %238 = vmatpush1.msra.mxu0 0.0
  %239 = vmatprep.subr.mxu0 0.0
  %240 = vmatpush1.msra.mxu0 0.0
  %241 = vmatprep.subr.mxu0 0.0
  %242 = vmatpush1.msra.mxu0 0.0
  %243 = vmatprep.subr.mxu0 0.0
  %244 = vmatpush1.msra.mxu0 0.0
  %245 = vmatprep.subr.mxu0 0.0
  %246 = vmatpush1.msra.mxu0 0.0
  %247 = vmatprep.subr.mxu0 0.0
  %248 = vmatpush1.msra.mxu0 0.0
  %249 = vmatprep.subr.mxu0 0.0
  %250 = vmatpush1.msra.mxu0 0.0
  %251 = vmatprep.subr.mxu0 0.0
  %252 = vmatpush1.msra.mxu0 0.0
  %253 = vmatprep.subr.mxu0 0.0
  %254 = vmatpush1.msra.mxu0 0.0
  %255 = vmatprep.subr.mxu0 0.0
  %256 = vmatpush1.msra.mxu0 0.0
  %257 = vmatprep.subr.mxu0 0.0
  %258 = vmatpush1.msra.mxu0 0.0
  %259 = vmatprep.subr.mxu0 0.0
  %260 = vmatpush1.msra.mxu0 0.0
  %261 = vmatprep.subr.mxu0 0.0
  %262 = vmatpush1.msra.mxu0 0.0
  %263 = vmatprep.subr.mxu0 0.0
  %264 = vmatpush1.msra.mxu0 0.0
  %265 = vmatprep.subr.mxu0 0.0
  %266 = vmatpush1.msra.mxu0 0.0
  %267 = vmatprep.subr.mxu0 0.0
  %268 = vmatpush1.msra.mxu0 0.0
  %269 = vmatprep.subr.mxu0 0.0
  %270 = vmatpush1.msra.mxu0 0.0
  %271 = vmatprep.subr.mxu0 0.0
  %272 = vmatpush1.msra.mxu0 0.0
  %273 = vmatprep.subr.mxu0 0.0
  %274 = vmatpush1.msra.mxu0 0.0
  %275 = vmatprep.subr.mxu0 0.0
  %276 = vmatpush1.msra.mxu0 0.0
  %277 = vmatprep.subr.mxu0 0.0
  %278 = vmatpush1.msra.mxu0 0.0
  %279 = vmatprep.subr.mxu0 0.0
  %280 = vmatpush1.msra.mxu0 0.0
  %281 = vmatprep.subr.mxu0 0.0
  %282 = vmatpush1.msra.mxu0 0.0
  %283 = vmatprep.subr.mxu0 0.0
  %284 = vmatpush1.msra.mxu0 0.0
  %285 = vmatprep.subr.mxu0 0.0
  %286 = vmatpush1.msra.mxu0 0.0
  %287 = vmatprep.subr.mxu0 0.0
  %288 = vmatpush1.msra.mxu0 0.0
  %289 = vmatprep.mubr.f32.mxu0 0.0
  %290 = vmatmul.mubr.f32.gmra.mrb[0].mxu0 %v103
  %v291 = vpop.f32.mrb[0].mxu0
  %v292 = vadd.f32 %v99, %v291
  %v293 = vpop.f32.mrb[0].mxu0
  %v294 = vadd.f32 %v99, %v293
  %295 = vdwg.mxu0
  %296 = vmatprep.subr.mxu0 %v20
  %297 = vmatpush1.msra.mxu0 %v19
  %298 = vmatprep.subr.mxu0 %v36
  %299 = vmatpush1.msra.mxu0 %v35
  %300 = vmatprep.subr.mxu0 %v52
  %301 = vmatpush1.msra.mxu0 %v51
  %302 = vmatprep.subr.mxu0 %v68
  %303 = vmatpush1.msra.mxu0 %v67
  %304 = vmatprep.subr.mxu0 %v122
  %305 = vmatpush1.msra.mxu0 %v119
  %306 = vmatprep.subr.mxu0 0.0
  %307 = vmatpush1.msra.mxu0 0.0
  %308 = vmatprep.subr.mxu0 0.0
  %309 = vmatpush1.msra.mxu0 0.0
  %310 = vmatprep.subr.mxu0 0.0
  %311 = vmatpush1.msra.mxu0 0.0
  %312 = vmatprep.subr.mxu0 0.0
  %313 = vmatpush1.msra.mxu0 0.0
  %314 = vmatprep.subr.mxu0 0.0
  %315 = vmatpush1.msra.mxu0 0.0
  %316 = vmatprep.subr.mxu0 0.0
  %317 = vmatpush1.msra.mxu0 0.0
  %318 = vmatprep.subr.mxu0 0.0
  %319 = vmatpush1.msra.mxu0 0.0
  %320 = vmatprep.subr.mxu0 0.0
  %321 = vmatpush1.msra.mxu0 0.0
  %322 = vmatprep.subr.mxu0 0.0
  %323 = vmatpush1.msra.mxu0 0.0
  %324 = vmatprep.subr.mxu0 0.0
  %325 = vmatpush1.msra.mxu0 0.0
  %326 = vmatprep.subr.mxu0 0.0
  %327 = vmatpush1.msra.mxu0 0.0
  %328 = vmatprep.subr.mxu0 0.0
  %329 = vmatpush1.msra.mxu0 0.0
  %330 = vmatprep.subr.mxu0 0.0
  %331 = vmatpush1.msra.mxu0 0.0
  %332 = vmatprep.subr.mxu0 0.0
  %333 = vmatpush1.msra.mxu0 0.0
  %334 = vmatprep.subr.mxu0 0.0
  %335 = vmatpush1.msra.mxu0 0.0
  %336 = vmatprep.subr.mxu0 0.0
  %337 = vmatpush1.msra.mxu0 0.0
  %338 = vmatprep.subr.mxu0 0.0
  %339 = vmatpush1.msra.mxu0 0.0
  %340 = vmatprep.subr.mxu0 0.0
  %341 = vmatpush1.msra.mxu0 0.0
  %342 = vmatprep.subr.mxu0 0.0
  %343 = vmatpush1.msra.mxu0 0.0
  %344 = vmatprep.subr.mxu0 0.0
  %345 = vmatpush1.msra.mxu0 0.0
  %346 = vmatprep.subr.mxu0 0.0
  %347 = vmatpush1.msra.mxu0 0.0
  %348 = vmatprep.subr.mxu0 0.0
  %349 = vmatpush1.msra.mxu0 0.0
  %350 = vmatprep.subr.mxu0 0.0
  %351 = vmatpush1.msra.mxu0 0.0
  %352 = vmatprep.subr.mxu0 0.0
  %353 = vmatpush1.msra.mxu0 0.0
  %354 = vmatprep.subr.mxu0 0.0
  %355 = vmatpush1.msra.mxu0 0.0
  %356 = vmatprep.subr.mxu0 0.0
  %357 = vmatpush1.msra.mxu0 0.0
  %358 = vmatprep.subr.mxu0 0.0
  %359 = vmatpush1.msra.mxu0 0.0
  %360 = vmatprep.mubr.f32.mxu0 0.0
  %361 = vmatmul.mubr.f32.gmra.mrb[0].mxu0 %v103
  %v362 = vpop.f32.mrb[0].mxu0
  %v363 = vadd.f32 %v99, %v362
  %v364 = vpop.f32.mrb[0].mxu0
  %v365 = vadd.f32 %v99, %v364
  %366 = vdwg.mxu0
  %367 = vmatprep.subr.mxu0 %v22
  %368 = vmatpush1.msra.mxu0 %v21
  %369 = vmatprep.subr.mxu0 %v38
  %370 = vmatpush1.msra.mxu0 %v37
  %371 = vmatprep.subr.mxu0 %v54
  %372 = vmatpush1.msra.mxu0 %v53
  %373 = vmatprep.subr.mxu0 %v70
  %374 = vmatpush1.msra.mxu0 %v69
  %375 = vmatprep.subr.mxu0 %v128
  %376 = vmatpush1.msra.mxu0 %v125
  %377 = vmatprep.subr.mxu0 0.0
  %378 = vmatpush1.msra.mxu0 0.0
  %379 = vmatprep.subr.mxu0 0.0
  %380 = vmatpush1.msra.mxu0 0.0
  %381 = vmatprep.subr.mxu0 0.0
  %382 = vmatpush1.msra.mxu0 0.0
  %383 = vmatprep.subr.mxu0 0.0
  %384 = vmatpush1.msra.mxu0 0.0
  %385 = vmatprep.subr.mxu0 0.0
  %386 = vmatpush1.msra.mxu0 0.0
  %387 = vmatprep.subr.mxu0 0.0
  %388 = vmatpush1.msra.mxu0 0.0
  %389 = vmatprep.subr.mxu0 0.0
  %390 = vmatpush1.msra.mxu0 0.0
  %391 = vmatprep.subr.mxu0 0.0
  %392 = vmatpush1.msra.mxu0 0.0
  %393 = vmatprep.subr.mxu0 0.0
  %394 = vmatpush1.msra.mxu0 0.0
  %395 = vmatprep.subr.mxu0 0.0
  %396 = vmatpush1.msra.mxu0 0.0
  %397 = vmatprep.subr.mxu0 0.0
  %398 = vmatpush1.msra.mxu0 0.0
  %399 = vmatprep.subr.mxu0 0.0
  %400 = vmatpush1.msra.mxu0 0.0
  %401 = vmatprep.subr.mxu0 0.0
  %402 = vmatpush1.msra.mxu0 0.0
  %403 = vmatprep.subr.mxu0 0.0
  %404 = vmatpush1.msra.mxu0 0.0
  %405 = vmatprep.subr.mxu0 0.0
  %406 = vmatpush1.msra.mxu0 0.0
  %407 = vmatprep.subr.mxu0 0.0
  %408 = vmatpush1.msra.mxu0 0.0
  %409 = vmatprep.subr.mxu0 0.0
  %410 = vmatpush1.msra.mxu0 0.0
  %411 = vmatprep.subr.mxu0 0.0
  %412 = vmatpush1.msra.mxu0 0.0
  %413 = vmatprep.subr.mxu0 0.0
  %414 = vmatpush1.msra.mxu0 0.0
  %415 = vmatprep.subr.mxu0 0.0
  %416 = vmatpush1.msra.mxu0 0.0
  %417 = vmatprep.subr.mxu0 0.0
  %418 = vmatpush1.msra.mxu0 0.0
  %419 = vmatprep.subr.mxu0 0.0
  %420 = vmatpush1.msra.mxu0 0.0
  %421 = vmatprep.subr.mxu0 0.0
  %422 = vmatpush1.msra.mxu0 0.0
  %423 = vmatprep.subr.mxu0 0.0
  %424 = vmatpush1.msra.mxu0 0.0
  %425 = vmatprep.subr.mxu0 0.0
  %426 = vmatpush1.msra.mxu0 0.0
  %427 = vmatprep.subr.mxu0 0.0
  %428 = vmatpush1.msra.mxu0 0.0
  %429 = vmatprep.subr.mxu0 0.0
  %430 = vmatpush1.msra.mxu0 0.0
  %431 = vmatprep.mubr.f32.mxu0 0.0
  %432 = vmatmul.mubr.f32.gmra.mrb[0].mxu0 %v103
  %v433 = vpop.f32.mrb[0].mxu0
  %v434 = vadd.f32 %v99, %v433
  %v435 = vpop.f32.mrb[0].mxu0
  %v436 = vadd.f32 %v99, %v435
  %437 = vdwg.mxu0
  %438 = vmatprep.subr.mxu0 %v24
  %439 = vmatpush1.msra.mxu0 %v23
  %440 = vmatprep.subr.mxu0 %v40
  %441 = vmatpush1.msra.mxu0 %v39
  %442 = vmatprep.subr.mxu0 %v56
  %443 = vmatpush1.msra.mxu0 %v55
  %444 = vmatprep.subr.mxu0 %v72
  %445 = vmatpush1.msra.mxu0 %v71
  %446 = vmatprep.subr.mxu0 %v134
  %447 = vmatpush1.msra.mxu0 %v131
  %448 = vmatprep.subr.mxu0 0.0
  %449 = vmatpush1.msra.mxu0 0.0
  %450 = vmatprep.subr.mxu0 0.0
  %451 = vmatpush1.msra.mxu0 0.0
  %452 = vmatprep.subr.mxu0 0.0
  %453 = vmatpush1.msra.mxu0 0.0
  %454 = vmatprep.subr.mxu0 0.0
  %455 = vmatpush1.msra.mxu0 0.0
  %456 = vmatprep.subr.mxu0 0.0
  %457 = vmatpush1.msra.mxu0 0.0
  %458 = vmatprep.subr.mxu0 0.0
  %459 = vmatpush1.msra.mxu0 0.0
  %460 = vmatprep.subr.mxu0 0.0
  %461 = vmatpush1.msra.mxu0 0.0
  %462 = vmatprep.subr.mxu0 0.0
  %463 = vmatpush1.msra.mxu0 0.0
  %464 = vmatprep.subr.mxu0 0.0
  %465 = vmatpush1.msra.mxu0 0.0
  %466 = vmatprep.subr.mxu0 0.0
  %467 = vmatpush1.msra.mxu0 0.0
  %468 = vmatprep.subr.mxu0 0.0
  %469 = vmatpush1.msra.mxu0 0.0
  %470 = vmatprep.subr.mxu0 0.0
  %471 = vmatpush1.msra.mxu0 0.0
  %472 = vmatprep.subr.mxu0 0.0
  %473 = vmatpush1.msra.mxu0 0.0
  %474 = vmatprep.subr.mxu0 0.0
  %475 = vmatpush1.msra.mxu0 0.0
  %476 = vmatprep.subr.mxu0 0.0
  %477 = vmatpush1.msra.mxu0 0.0
  %478 = vmatprep.subr.mxu0 0.0
  %479 = vmatpush1.msra.mxu0 0.0
  %480 = vmatprep.subr.mxu0 0.0
  %481 = vmatpush1.msra.mxu0 0.0
  %482 = vmatprep.subr.mxu0 0.0
  %483 = vmatpush1.msra.mxu0 0.0
  %484 = vmatprep.subr.mxu0 0.0
  %485 = vmatpush1.msra.mxu0 0.0
  %486 = vmatprep.subr.mxu0 0.0
  %487 = vmatpush1.msra.mxu0 0.0
  %488 = vmatprep.subr.mxu0 0.0
  %489 = vmatpush1.msra.mxu0 0.0
  %490 = vmatprep.subr.mxu0 0.0
  %491 = vmatpush1.msra.mxu0 0.0
  %492 = vmatprep.subr.mxu0 0.0
  %493 = vmatpush1.msra.mxu0 0.0
  %494 = vmatprep.subr.mxu0 0.0
  %495 = vmatpush1.msra.mxu0 0.0
  %496 = vmatprep.subr.mxu0 0.0
  %497 = vmatpush1.msra.mxu0 0.0
  %498 = vmatprep.subr.mxu0 0.0
  %499 = vmatpush1.msra.mxu0 0.0
  %500 = vmatprep.subr.mxu0 0.0
  %501 = vmatpush1.msra.mxu0 0.0
  %502 = vmatprep.mubr.f32.mxu0 0.0
  %503 = vmatmul.mubr.f32.gmra.mrb[0].mxu0 %v103
  %v504 = vpop.f32.mrb[0].mxu0
  %v505 = vadd.f32 %v99, %v504
  %v506 = vpop.f32.mrb[0].mxu0
  %v507 = vadd.f32 %v99, %v506
  %508 = vdwg.mxu0
  %509 = vmatprep.subr.mxu0 %v26
  %510 = vmatpush1.msra.mxu0 %v25
  %511 = vmatprep.subr.mxu0 %v42
  %512 = vmatpush1.msra.mxu0 %v41
  %513 = vmatprep.subr.mxu0 %v58
  %514 = vmatpush1.msra.mxu0 %v57
  %515 = vmatprep.subr.mxu0 %v74
  %516 = vmatpush1.msra.mxu0 %v73
  %517 = vmatprep.subr.mxu0 %v140
  %518 = vmatpush1.msra.mxu0 %v137
  %519 = vmatprep.subr.mxu0 0.0
  %520 = vmatpush1.msra.mxu0 0.0
  %521 = vmatprep.subr.mxu0 0.0
  %522 = vmatpush1.msra.mxu0 0.0
  %523 = vmatprep.subr.mxu0 0.0
  %524 = vmatpush1.msra.mxu0 0.0
  %525 = vmatprep.subr.mxu0 0.0
  %526 = vmatpush1.msra.mxu0 0.0
  %527 = vmatprep.subr.mxu0 0.0
  %528 = vmatpush1.msra.mxu0 0.0
  %529 = vmatprep.subr.mxu0 0.0
  %530 = vmatpush1.msra.mxu0 0.0
  %531 = vmatprep.subr.mxu0 0.0
  %532 = vmatpush1.msra.mxu0 0.0
  %533 = vmatprep.subr.mxu0 0.0
  %534 = vmatpush1.msra.mxu0 0.0
  %535 = vmatprep.subr.mxu0 0.0
  %536 = vmatpush1.msra.mxu0 0.0
  %537 = vmatprep.subr.mxu0 0.0
  %538 = vmatpush1.msra.mxu0 0.0
  %539 = vmatprep.subr.mxu0 0.0
  %540 = vmatpush1.msra.mxu0 0.0
  %541 = vmatprep.subr.mxu0 0.0
  %542 = vmatpush1.msra.mxu0 0.0
  %543 = vmatprep.subr.mxu0 0.0
  %544 = vmatpush1.msra.mxu0 0.0
  %545 = vmatprep.subr.mxu0 0.0
  %546 = vmatpush1.msra.mxu0 0.0
  %547 = vmatprep.subr.mxu0 0.0
  %548 = vmatpush1.msra.mxu0 0.0
  %549 = vmatprep.subr.mxu0 0.0
  %550 = vmatpush1.msra.mxu0 0.0
  %551 = vmatprep.subr.mxu0 0.0
  %552 = vmatpush1.msra.mxu0 0.0
  %553 = vmatprep.subr.mxu0 0.0
  %554 = vmatpush1.msra.mxu0 0.0
  %555 = vmatprep.subr.mxu0 0.0
  %556 = vmatpush1.msra.mxu0 0.0
  %557 = vmatprep.subr.mxu0 0.0
  %558 = vmatpush1.msra.mxu0 0.0
  %559 = vmatprep.subr.mxu0 0.0
  %560 = vmatpush1.msra.mxu0 0.0
  %561 = vmatprep.subr.mxu0 0.0
  %562 = vmatpush1.msra.mxu0 0.0
  %563 = vmatprep.subr.mxu0 0.0
  %564 = vmatpush1.msra.mxu0 0.0
  %565 = vmatprep.subr.mxu0 0.0
  %566 = vmatpush1.msra.mxu0 0.0
  %567 = vmatprep.subr.mxu0 0.0
  %568 = vmatpush1.msra.mxu0 0.0
  %569 = vmatprep.subr.mxu0 0.0
  %570 = vmatpush1.msra.mxu0 0.0
  %571 = vmatprep.subr.mxu0 0.0
  %572 = vmatpush1.msra.mxu0 0.0
  %573 = vmatprep.mubr.f32.mxu0 0.0
  %574 = vmatmul.mubr.f32.gmra.mrb[0].mxu0 %v103
  %v575 = vpop.f32.mrb[0].mxu0
  %v576 = vadd.f32 %v99, %v575
  %v577 = vpop.f32.mrb[0].mxu0
  %v578 = vadd.f32 %v99, %v577
  %579 = vdwg.mxu0
  %580 = vmatprep.subr.mxu0 %v28
  %581 = vmatpush1.msra.mxu0 %v27
  %582 = vmatprep.subr.mxu0 %v44
  %583 = vmatpush1.msra.mxu0 %v43
  %584 = vmatprep.subr.mxu0 %v60
  %585 = vmatpush1.msra.mxu0 %v59
  %586 = vmatprep.subr.mxu0 %v76
  %587 = vmatpush1.msra.mxu0 %v75
  %588 = vmatprep.subr.mxu0 %v146
  %589 = vmatpush1.msra.mxu0 %v143
  %590 = vmatprep.subr.mxu0 0.0
  %591 = vmatpush1.msra.mxu0 0.0
  %592 = vmatprep.subr.mxu0 0.0
  %593 = vmatpush1.msra.mxu0 0.0
  %594 = vmatprep.subr.mxu0 0.0
  %595 = vmatpush1.msra.mxu0 0.0
  %596 = vmatprep.subr.mxu0 0.0
  %597 = vmatpush1.msra.mxu0 0.0
  %598 = vmatprep.subr.mxu0 0.0
  %599 = vmatpush1.msra.mxu0 0.0
  %600 = vmatprep.subr.mxu0 0.0
  %601 = vmatpush1.msra.mxu0 0.0
  %602 = vmatprep.subr.mxu0 0.0
  %603 = vmatpush1.msra.mxu0 0.0
  %604 = vmatprep.subr.mxu0 0.0
  %605 = vmatpush1.msra.mxu0 0.0
  %606 = vmatprep.subr.mxu0 0.0
  %607 = vmatpush1.msra.mxu0 0.0
  %608 = vmatprep.subr.mxu0 0.0
  %609 = vmatpush1.msra.mxu0 0.0
  %610 = vmatprep.subr.mxu0 0.0
  %611 = vmatpush1.msra.mxu0 0.0
  %612 = vmatprep.subr.mxu0 0.0
  %613 = vmatpush1.msra.mxu0 0.0
  %614 = vmatprep.subr.mxu0 0.0
  %615 = vmatpush1.msra.mxu0 0.0
  %616 = vmatprep.subr.mxu0 0.0
  %617 = vmatpush1.msra.mxu0 0.0
  %618 = vmatprep.subr.mxu0 0.0
  %619 = vmatpush1.msra.mxu0 0.0
  %620 = vmatprep.subr.mxu0 0.0
  %621 = vmatpush1.msra.mxu0 0.0
  %622 = vmatprep.subr.mxu0 0.0
  %623 = vmatpush1.msra.mxu0 0.0
  %624 = vmatprep.subr.mxu0 0.0
  %625 = vmatpush1.msra.mxu0 0.0
  %626 = vmatprep.subr.mxu0 0.0
  %627 = vmatpush1.msra.mxu0 0.0
  %628 = vmatprep.subr.mxu0 0.0
  %629 = vmatpush1.msra.mxu0 0.0
  %630 = vmatprep.subr.mxu0 0.0
  %631 = vmatpush1.msra.mxu0 0.0
  %632 = vmatprep.subr.mxu0 0.0
  %633 = vmatpush1.msra.mxu0 0.0
  %634 = vmatprep.subr.mxu0 0.0
  %635 = vmatpush1.msra.mxu0 0.0
  %636 = vmatprep.subr.mxu0 0.0
  %637 = vmatpush1.msra.mxu0 0.0
  %638 = vmatprep.subr.mxu0 0.0
  %639 = vmatpush1.msra.mxu0 0.0
  %640 = vmatprep.subr.mxu0 0.0
  %641 = vmatpush1.msra.mxu0 0.0
  %642 = vmatprep.subr.mxu0 0.0
  %643 = vmatpush1.msra.mxu0 0.0
  %644 = vmatprep.mubr.f32.mxu0 0.0
  %645 = vmatmul.mubr.f32.gmra.mrb[0].mxu0 %v103
  %v646 = vpop.f32.mrb[0].mxu0
  %v647 = vadd.f32 %v99, %v646
  %v648 = vpop.f32.mrb[0].mxu0
  %v649 = vadd.f32 %v99, %v648
  %650 = vdwg.mxu0
  %651 = vmatprep.subr.mxu0 %v30
  %652 = vmatpush1.msra.mxu0 %v29
  %653 = vmatprep.subr.mxu0 %v46
  %654 = vmatpush1.msra.mxu0 %v45
  %655 = vmatprep.subr.mxu0 %v62
  %656 = vmatpush1.msra.mxu0 %v61
  %657 = vmatprep.subr.mxu0 %v78
  %658 = vmatpush1.msra.mxu0 %v77
  %659 = vmatprep.subr.mxu0 %v152
  %660 = vmatpush1.msra.mxu0 %v149
  %661 = vmatprep.subr.mxu0 0.0
  %662 = vmatpush1.msra.mxu0 0.0
  %663 = vmatprep.subr.mxu0 0.0
  %664 = vmatpush1.msra.mxu0 0.0
  %665 = vmatprep.subr.mxu0 0.0
  %666 = vmatpush1.msra.mxu0 0.0
  %667 = vmatprep.subr.mxu0 0.0
  %668 = vmatpush1.msra.mxu0 0.0
  %669 = vmatprep.subr.mxu0 0.0
  %670 = vmatpush1.msra.mxu0 0.0
  %671 = vmatprep.subr.mxu0 0.0
  %672 = vmatpush1.msra.mxu0 0.0
  %673 = vmatprep.subr.mxu0 0.0
  %674 = vmatpush1.msra.mxu0 0.0
  %675 = vmatprep.subr.mxu0 0.0
  %676 = vmatpush1.msra.mxu0 0.0
  %677 = vmatprep.subr.mxu0 0.0
  %678 = vmatpush1.msra.mxu0 0.0
  %679 = vmatprep.subr.mxu0 0.0
  %680 = vmatpush1.msra.mxu0 0.0
  %681 = vmatprep.subr.mxu0 0.0
  %682 = vmatpush1.msra.mxu0 0.0
  %683 = vmatprep.subr.mxu0 0.0
  %684 = vmatpush1.msra.mxu0 0.0
  %685 = vmatprep.subr.mxu0 0.0
  %686 = vmatpush1.msra.mxu0 0.0
  %687 = vmatprep.subr.mxu0 0.0
  %688 = vmatpush1.msra.mxu0 0.0
  %689 = vmatprep.subr.mxu0 0.0
  %690 = vmatpush1.msra.mxu0 0.0
  %691 = vmatprep.subr.mxu0 0.0
  %692 = vmatpush1.msra.mxu0 0.0
  %693 = vmatprep.subr.mxu0 0.0
  %694 = vmatpush1.msra.mxu0 0.0
  %695 = vmatprep.subr.mxu0 0.0
  %696 = vmatpush1.msra.mxu0 0.0
  %697 = vmatprep.subr.mxu0 0.0
  %698 = vmatpush1.msra.mxu0 0.0
  %699 = vmatprep.subr.mxu0 0.0
  %700 = vmatpush1.msra.mxu0 0.0
  %701 = vmatprep.subr.mxu0 0.0
  %702 = vmatpush1.msra.mxu0 0.0
  %703 = vmatprep.subr.mxu0 0.0
  %704 = vmatpush1.msra.mxu0 0.0
  %705 = vmatprep.subr.mxu0 0.0
  %706 = vmatpush1.msra.mxu0 0.0
  %707 = vmatprep.subr.mxu0 0.0
  %708 = vmatpush1.msra.mxu0 0.0
  %709 = vmatprep.subr.mxu0 0.0
  %710 = vmatpush1.msra.mxu0 0.0
  %711 = vmatprep.subr.mxu0 0.0
  %712 = vmatpush1.msra.mxu0 0.0
  %713 = vmatprep.subr.mxu0 0.0
  %714 = vmatpush1.msra.mxu0 0.0
  %715 = vmatprep.mubr.f32.mxu0 0.0
  %716 = vmatmul.mubr.f32.gmra.mrb[0].mxu0 %v103
  %v717 = vpop.f32.mrb[0].mxu0
  %v718 = vadd.f32 %v99, %v717
  %v719 = vpop.f32.mrb[0].mxu0
  %v720 = vadd.f32 %v99, %v719
  %721 = vdwg.mxu0
  %v738 = vcombine.low %v221, %v223
  %v739 = vcombine.low %v292, %v294
  %v740 = vcombine.low %v363, %v365
  %v741 = vcombine.low %v434, %v436
  %v742 = vcombine.low %v505, %v507
  %v743 = vcombine.low %v576, %v578
  %v744 = vcombine.low %v647, %v649
  %v745 = vcombine.low %v718, %v720
  %754 = vst [vmem:[%s3] sm:$0xff] %v738
  %755 = vst [vmem:[%s3 + $0x8] sm:$0xff] %v739
  %756 = vst [vmem:[%s3 + $0x10] sm:$0xff] %v740
  %757 = vst [vmem:[%s3 + $0x18] sm:$0xff] %v741
  %758 = vst [vmem:[%s3 + $0x20] sm:$0xff] %v742
  %759 = vst [vmem:[%s3 + $0x28] sm:$0xff] %v743
  %760 = vst [vmem:[%s3 + $0x30] sm:$0xff] %v744
  %761 = vst [vmem:[%s3 + $0x38] sm:$0xff] %v745
  // Predicated region
  $region14: #{net_forward_pallas.58} parent=0 // pred_check
    _
  $region15: #{net_forward_pallas.58} parent=0 // pred_check_branch
    %763 = sbr.rel (0) target = $region17
  $region16: #{net_forward_pallas.58} parent=0 // pred_region
    _
  $region17: #{net_forward_pallas.58} parent=0 // pred_fallthru
    _
  // Predicated region
  $region18: #{net_forward_pallas.58} parent=0 // pred_check
    _
  $region19: #{net_forward_pallas.58} parent=0 // pred_check_branch
    %765 = sbr.rel (0) target = $region21
  $region20: #{net_forward_pallas.58} parent=0 // pred_region
    _
  $region21: #{net_forward_pallas.58} parent=0 // pred_fallthru
    _

// kernel: net_forward_pallas.60
$region0: #{net_forward_pallas.60}
  #allocation0 [shape = 'u32[]', space=smem, size = 0x4, offset = 0x4, fixed_abs, tag = 'smem constant byte address 0x4 - core index']
  #allocation1 [shape = 'u32[144,128]{1,0:T(1,128)}', space=vmem, size = 0x12000, scoped, tag = 'internal scratch']
  %s0 = inlined_call_operand.vmem [shape: f32[4,36], index: 0, kind: input, shape index: {}]
  %s1 = inlined_call_operand.vmem [shape: f32[36,2048], index: 1, kind: input, shape index: {}]
  %s2 = inlined_call_operand.vmem [shape: f32[4,1], index: 2, kind: input, shape index: {}]
  %s3 = inlined_call_operand.vmem [shape: f32[4,2048], index: 3, kind: output, shape index: {}]
  %s4 = sld [smem:[#allocation0]]
  $region22: #{net_forward_pallas.60} parent=0
    _
  %s6 = ssub.s32 1, %s4
  %s7 = scalar_select 0, %s6, %s4
  // Predicated region
  $region2: #{net_forward_pallas.60} parent=0 // pred_check
    _
  $region3: #{net_forward_pallas.60} parent=0 // pred_check_branch
    %9 = sbr.rel (0) target = $region5
  $region4: #{net_forward_pallas.60} parent=0 // pred_region
    _
  $region5: #{net_forward_pallas.60} parent=0 // pred_fallthru
    _
  // Predicated region
  $region6: #{net_forward_pallas.60} parent=0 // pred_check
    _
  $region7: #{net_forward_pallas.60} parent=0 // pred_check_branch
    %11 = sbr.rel (0) target = $region9
  $region8: #{net_forward_pallas.60} parent=0 // pred_region
    _
  $region9: #{net_forward_pallas.60} parent=0 // pred_fallthru
    _
  // Predicated region
  $region10: #{net_forward_pallas.60} parent=0 // pred_check
    _
  $region11: #{net_forward_pallas.60} parent=0 // pred_check_branch
    %13 = sbr.rel (0) target = $region13
  $region12: #{net_forward_pallas.60} parent=0 // pred_region
    _
  $region13: #{net_forward_pallas.60} parent=0 // pred_fallthru
    _
  %v14 = vld [vmem:[%s0] sm:$0xf]
  %v15 = vld [vmem:[%s1] sm:$0xff]
  %v16 = vld [vmem:[%s1 + $0x8] sm:$0xff]
  %v17 = vld [vmem:[%s1 + $0x10] sm:$0xff]
  %v18 = vld [vmem:[%s1 + $0x18] sm:$0xff]
  %v19 = vld [vmem:[%s1 + $0x20] sm:$0xff]
  %v20 = vld [vmem:[%s1 + $0x28] sm:$0xff]
  %v21 = vld [vmem:[%s1 + $0x30] sm:$0xff]
  %v22 = vld [vmem:[%s1 + $0x38] sm:$0xff]
  %v23 = vld [vmem:[%s1 + $0x40] sm:$0xff]
  %v24 = vld [vmem:[%s1 + $0x48] sm:$0xff]
  %v25 = vld [vmem:[%s1 + $0x50] sm:$0xff]
  %v26 = vld [vmem:[%s1 + $0x58] sm:$0xff]
  %v27 = vld [vmem:[%s1 + $0x60] sm:$0xff]
  %v28 = vld [vmem:[%s1 + $0x68] sm:$0xff]
  %v29 = vld [vmem:[%s1 + $0x70] sm:$0xff]
  %v30 = vld [vmem:[%s1 + $0x78] sm:$0xff]
  %v31 = vld [vmem:[%s1 + $0x80] sm:$0xff]
  %v32 = vld [vmem:[%s1 + $0x88] sm:$0xff]
  %v33 = vld [vmem:[%s1 + $0x90] sm:$0xff]
  %v34 = vld [vmem:[%s1 + $0x98] sm:$0xff]
  %v35 = vld [vmem:[%s1 + $0xa0] sm:$0xff]
  %v36 = vld [vmem:[%s1 + $0xa8] sm:$0xff]
  %v37 = vld [vmem:[%s1 + $0xb0] sm:$0xff]
  %v38 = vld [vmem:[%s1 + $0xb8] sm:$0xff]
  %v39 = vld [vmem:[%s1 + $0xc0] sm:$0xff]
  %v40 = vld [vmem:[%s1 + $0xc8] sm:$0xff]
  %v41 = vld [vmem:[%s1 + $0xd0] sm:$0xff]
  %v42 = vld [vmem:[%s1 + $0xd8] sm:$0xff]
  %v43 = vld [vmem:[%s1 + $0xe0] sm:$0xff]
  %v44 = vld [vmem:[%s1 + $0xe8] sm:$0xff]
  %v45 = vld [vmem:[%s1 + $0xf0] sm:$0xff]
  %v46 = vld [vmem:[%s1 + $0xf8] sm:$0xff]
  %v47 = vld [vmem:[%s1 + $0x100] sm:$0xff]
  %v48 = vld [vmem:[%s1 + $0x108] sm:$0xff]
  %v49 = vld [vmem:[%s1 + $0x110] sm:$0xff]
  %v50 = vld [vmem:[%s1 + $0x118] sm:$0xff]
  %v51 = vld [vmem:[%s1 + $0x120] sm:$0xff]
  %v52 = vld [vmem:[%s1 + $0x128] sm:$0xff]
  %v53 = vld [vmem:[%s1 + $0x130] sm:$0xff]
  %v54 = vld [vmem:[%s1 + $0x138] sm:$0xff]
  %v55 = vld [vmem:[%s1 + $0x140] sm:$0xff]
  %v56 = vld [vmem:[%s1 + $0x148] sm:$0xff]
  %v57 = vld [vmem:[%s1 + $0x150] sm:$0xff]
  %v58 = vld [vmem:[%s1 + $0x158] sm:$0xff]
  %v59 = vld [vmem:[%s1 + $0x160] sm:$0xff]
  %v60 = vld [vmem:[%s1 + $0x168] sm:$0xff]
  %v61 = vld [vmem:[%s1 + $0x170] sm:$0xff]
  %v62 = vld [vmem:[%s1 + $0x178] sm:$0xff]
  %v63 = vld [vmem:[%s1 + $0x180] sm:$0xff]
  %v64 = vld [vmem:[%s1 + $0x188] sm:$0xff]
  %v65 = vld [vmem:[%s1 + $0x190] sm:$0xff]
  %v66 = vld [vmem:[%s1 + $0x198] sm:$0xff]
  %v67 = vld [vmem:[%s1 + $0x1a0] sm:$0xff]
  %v68 = vld [vmem:[%s1 + $0x1a8] sm:$0xff]
  %v69 = vld [vmem:[%s1 + $0x1b0] sm:$0xff]
  %v70 = vld [vmem:[%s1 + $0x1b8] sm:$0xff]
  %v71 = vld [vmem:[%s1 + $0x1c0] sm:$0xff]
  %v72 = vld [vmem:[%s1 + $0x1c8] sm:$0xff]
  %v73 = vld [vmem:[%s1 + $0x1d0] sm:$0xff]
  %v74 = vld [vmem:[%s1 + $0x1d8] sm:$0xff]
  %v75 = vld [vmem:[%s1 + $0x1e0] sm:$0xff]
  %v76 = vld [vmem:[%s1 + $0x1e8] sm:$0xff]
  %v77 = vld [vmem:[%s1 + $0x1f0] sm:$0xff]
  %v78 = vld [vmem:[%s1 + $0x1f8] sm:$0xff]
  %v79 = vld [vmem:[%s1 + $0x200] sm:$0xf]
  %v80 = vld [vmem:[%s1 + $0x208] sm:$0xf]
  %v81 = vld [vmem:[%s1 + $0x210] sm:$0xf]
  %v82 = vld [vmem:[%s1 + $0x218] sm:$0xf]
  %v83 = vld [vmem:[%s1 + $0x220] sm:$0xf]
  %v84 = vld [vmem:[%s1 + $0x228] sm:$0xf]
  %v85 = vld [vmem:[%s1 + $0x230] sm:$0xf]
  %v86 = vld [vmem:[%s1 + $0x238] sm:$0xf]
  %v87 = vld [vmem:[%s1 + $0x240] sm:$0xf]
  %v88 = vld [vmem:[%s1 + $0x248] sm:$0xf]
  %v89 = vld [vmem:[%s1 + $0x250] sm:$0xf]
  %v90 = vld [vmem:[%s1 + $0x258] sm:$0xf]
  %v91 = vld [vmem:[%s1 + $0x260] sm:$0xf]
  %v92 = vld [vmem:[%s1 + $0x268] sm:$0xf]
  %v93 = vld [vmem:[%s1 + $0x270] sm:$0xf]
  %v94 = vld [vmem:[%s1 + $0x278] sm:$0xf]
  %v95 = vld [vmem:[%s2] sm:$0xf]
  %97 = vset.pattern.permute.xlu0 0
  %98 = vperm.xlu0 %97, %v95
  %v99 = vpop.permute.xlu0 %98
  %vm101 = vcmask 293888
  %v103 = vsel %vm101, %v14, 0
  %vm105 = vcmask 1043456
  %v107 = vsel %vm105, %v79, 0
  %v110 = vsel %vm105, %v80, 0
  %v113 = vsel %vm105, %v81, 0
  %v116 = vsel %vm105, %v82, 0
  %v119 = vsel %vm105, %v83, 0
  %v122 = vsel %vm105, %v84, 0
  %v125 = vsel %vm105, %v85, 0
  %v128 = vsel %vm105, %v86, 0
  %v131 = vsel %vm105, %v87, 0
  %v134 = vsel %vm105, %v88, 0
  %v137 = vsel %vm105, %v89, 0
  %v140 = vsel %vm105, %v90, 0
  %v143 = vsel %vm105, %v91, 0
  %v146 = vsel %vm105, %v92, 0
  %v149 = vsel %vm105, %v93, 0
  %v152 = vsel %vm105, %v94, 0
  %154 = vmatprep.subr.mxu0 %v16
  %155 = vmatpush1.msra.mxu0 %v15
  %156 = vmatprep.subr.mxu0 %v32
  %157 = vmatpush1.msra.mxu0 %v31
  %158 = vmatprep.subr.mxu0 %v48
  %159 = vmatpush1.msra.mxu0 %v47
  %160 = vmatprep.subr.mxu0 %v64
  %161 = vmatpush1.msra.mxu0 %v63
  %162 = vmatprep.subr.mxu0 %v110
  %163 = vmatpush1.msra.mxu0 %v107
  %164 = vmatprep.subr.mxu0 0.0
  %165 = vmatpush1.msra.mxu0 0.0
  %166 = vmatprep.subr.mxu0 0.0
  %167 = vmatpush1.msra.mxu0 0.0
  %168 = vmatprep.subr.mxu0 0.0
  %169 = vmatpush1.msra.mxu0 0.0
  %170 = vmatprep.subr.mxu0 0.0
  %171 = vmatpush1.msra.mxu0 0.0
  %172 = vmatprep.subr.mxu0 0.0
  %173 = vmatpush1.msra.mxu0 0.0
  %174 = vmatprep.subr.mxu0 0.0
  %175 = vmatpush1.msra.mxu0 0.0
  %176 = vmatprep.subr.mxu0 0.0
  %177 = vmatpush1.msra.mxu0 0.0
  %178 = vmatprep.subr.mxu0 0.0
  %179 = vmatpush1.msra.mxu0 0.0
  %180 = vmatprep.subr.mxu0 0.0
  %181 = vmatpush1.msra.mxu0 0.0
  %182 = vmatprep.subr.mxu0 0.0
  %183 = vmatpush1.msra.mxu0 0.0
  %184 = vmatprep.subr.mxu0 0.0
  %185 = vmatpush1.msra.mxu0 0.0
  %186 = vmatprep.subr.mxu0 0.0
  %187 = vmatpush1.msra.mxu0 0.0
  %188 = vmatprep.subr.mxu0 0.0
  %189 = vmatpush1.msra.mxu0 0.0
  %190 = vmatprep.subr.mxu0 0.0
  %191 = vmatpush1.msra.mxu0 0.0
  %192 = vmatprep.subr.mxu0 0.0
  %193 = vmatpush1.msra.mxu0 0.0
  %194 = vmatprep.subr.mxu0 0.0
  %195 = vmatpush1.msra.mxu0 0.0
  %196 = vmatprep.subr.mxu0 0.0
  %197 = vmatpush1.msra.mxu0 0.0
  %198 = vmatprep.subr.mxu0 0.0
  %199 = vmatpush1.msra.mxu0 0.0
  %200 = vmatprep.subr.mxu0 0.0
  %201 = vmatpush1.msra.mxu0 0.0
  %202 = vmatprep.subr.mxu0 0.0
  %203 = vmatpush1.msra.mxu0 0.0
  %204 = vmatprep.subr.mxu0 0.0
  %205 = vmatpush1.msra.mxu0 0.0
  %206 = vmatprep.subr.mxu0 0.0
  %207 = vmatpush1.msra.mxu0 0.0
  %208 = vmatprep.subr.mxu0 0.0
  %209 = vmatpush1.msra.mxu0 0.0
  %210 = vmatprep.subr.mxu0 0.0
  %211 = vmatpush1.msra.mxu0 0.0
  %212 = vmatprep.subr.mxu0 0.0
  %213 = vmatpush1.msra.mxu0 0.0
  %214 = vmatprep.subr.mxu0 0.0
  %215 = vmatpush1.msra.mxu0 0.0
  %216 = vmatprep.subr.mxu0 0.0
  %217 = vmatpush1.msra.mxu0 0.0
  %218 = vmatprep.mubr.f32.mxu0 0.0
  %219 = vmatmul.mubr.f32.gmra.mrb[0].mxu0 %v103
  %v220 = vpop.f32.mrb[0].mxu0
  %v221 = vadd.f32 %v99, %v220
  %v222 = vpop.f32.mrb[0].mxu0
  %v223 = vadd.f32 %v99, %v222
  %224 = vdwg.mxu0
  %225 = vmatprep.subr.mxu0 %v18
  %226 = vmatpush1.msra.mxu0 %v17
  %227 = vmatprep.subr.mxu0 %v34
  %228 = vmatpush1.msra.mxu0 %v33
  %229 = vmatprep.subr.mxu0 %v50
  %230 = vmatpush1.msra.mxu0 %v49
  %231 = vmatprep.subr.mxu0 %v66
  %232 = vmatpush1.msra.mxu0 %v65
  %233 = vmatprep.subr.mxu0 %v116
  %234 = vmatpush1.msra.mxu0 %v113
  %235 = vmatprep.subr.mxu0 0.0
  %236 = vmatpush1.msra.mxu0 0.0
  %237 = vmatprep.subr.mxu0 0.0
  %238 = vmatpush1.msra.mxu0 0.0
  %239 = vmatprep.subr.mxu0 0.0
  %240 = vmatpush1.msra.mxu0 0.0
  %241 = vmatprep.subr.mxu0 0.0
  %242 = vmatpush1.msra.mxu0 0.0
  %243 = vmatprep.subr.mxu0 0.0
  %244 = vmatpush1.msra.mxu0 0.0
  %245 = vmatprep.subr.mxu0 0.0
  %246 = vmatpush1.msra.mxu0 0.0
  %247 = vmatprep.subr.mxu0 0.0
  %248 = vmatpush1.msra.mxu0 0.0
  %249 = vmatprep.subr.mxu0 0.0
  %250 = vmatpush1.msra.mxu0 0.0
  %251 = vmatprep.subr.mxu0 0.0
  %252 = vmatpush1.msra.mxu0 0.0
  %253 = vmatprep.subr.mxu0 0.0
  %254 = vmatpush1.msra.mxu0 0.0
  %255 = vmatprep.subr.mxu0 0.0
  %256 = vmatpush1.msra.mxu0 0.0
  %257 = vmatprep.subr.mxu0 0.0
  %258 = vmatpush1.msra.mxu0 0.0
  %259 = vmatprep.subr.mxu0 0.0
  %260 = vmatpush1.msra.mxu0 0.0
  %261 = vmatprep.subr.mxu0 0.0
  %262 = vmatpush1.msra.mxu0 0.0
  %263 = vmatprep.subr.mxu0 0.0
  %264 = vmatpush1.msra.mxu0 0.0
  %265 = vmatprep.subr.mxu0 0.0
  %266 = vmatpush1.msra.mxu0 0.0
  %267 = vmatprep.subr.mxu0 0.0
  %268 = vmatpush1.msra.mxu0 0.0
  %269 = vmatprep.subr.mxu0 0.0
  %270 = vmatpush1.msra.mxu0 0.0
  %271 = vmatprep.subr.mxu0 0.0
  %272 = vmatpush1.msra.mxu0 0.0
  %273 = vmatprep.subr.mxu0 0.0
  %274 = vmatpush1.msra.mxu0 0.0
  %275 = vmatprep.subr.mxu0 0.0
  %276 = vmatpush1.msra.mxu0 0.0
  %277 = vmatprep.subr.mxu0 0.0
  %278 = vmatpush1.msra.mxu0 0.0
  %279 = vmatprep.subr.mxu0 0.0
  %280 = vmatpush1.msra.mxu0 0.0
  %281 = vmatprep.subr.mxu0 0.0
  %282 = vmatpush1.msra.mxu0 0.0
  %283 = vmatprep.subr.mxu0 0.0
  %284 = vmatpush1.msra.mxu0 0.0
  %285 = vmatprep.subr.mxu0 0.0
  %286 = vmatpush1.msra.mxu0 0.0
  %287 = vmatprep.subr.mxu0 0.0
  %288 = vmatpush1.msra.mxu0 0.0
  %289 = vmatprep.mubr.f32.mxu0 0.0
  %290 = vmatmul.mubr.f32.gmra.mrb[0].mxu0 %v103
  %v291 = vpop.f32.mrb[0].mxu0
  %v292 = vadd.f32 %v99, %v291
  %v293 = vpop.f32.mrb[0].mxu0
  %v294 = vadd.f32 %v99, %v293
  %295 = vdwg.mxu0
  %296 = vmatprep.subr.mxu0 %v20
  %297 = vmatpush1.msra.mxu0 %v19
  %298 = vmatprep.subr.mxu0 %v36
  %299 = vmatpush1.msra.mxu0 %v35
  %300 = vmatprep.subr.mxu0 %v52
  %301 = vmatpush1.msra.mxu0 %v51
  %302 = vmatprep.subr.mxu0 %v68
  %303 = vmatpush1.msra.mxu0 %v67
  %304 = vmatprep.subr.mxu0 %v122
  %305 = vmatpush1.msra.mxu0 %v119
  %306 = vmatprep.subr.mxu0 0.0
  %307 = vmatpush1.msra.mxu0 0.0
  %308 = vmatprep.subr.mxu0 0.0
  %309 = vmatpush1.msra.mxu0 0.0
  %310 = vmatprep.subr.mxu0 0.0
  %311 = vmatpush1.msra.mxu0 0.0
  %312 = vmatprep.subr.mxu0 0.0
  %313 = vmatpush1.msra.mxu0 0.0
  %314 = vmatprep.subr.mxu0 0.0
  %315 = vmatpush1.msra.mxu0 0.0
  %316 = vmatprep.subr.mxu0 0.0
  %317 = vmatpush1.msra.mxu0 0.0
  %318 = vmatprep.subr.mxu0 0.0
  %319 = vmatpush1.msra.mxu0 0.0
  %320 = vmatprep.subr.mxu0 0.0
  %321 = vmatpush1.msra.mxu0 0.0
  %322 = vmatprep.subr.mxu0 0.0
  %323 = vmatpush1.msra.mxu0 0.0
  %324 = vmatprep.subr.mxu0 0.0
  %325 = vmatpush1.msra.mxu0 0.0
  %326 = vmatprep.subr.mxu0 0.0
  %327 = vmatpush1.msra.mxu0 0.0
  %328 = vmatprep.subr.mxu0 0.0
  %329 = vmatpush1.msra.mxu0 0.0
  %330 = vmatprep.subr.mxu0 0.0
  %331 = vmatpush1.msra.mxu0 0.0
  %332 = vmatprep.subr.mxu0 0.0
  %333 = vmatpush1.msra.mxu0 0.0
  %334 = vmatprep.subr.mxu0 0.0
  %335 = vmatpush1.msra.mxu0 0.0
  %336 = vmatprep.subr.mxu0 0.0
  %337 = vmatpush1.msra.mxu0 0.0
  %338 = vmatprep.subr.mxu0 0.0
  %339 = vmatpush1.msra.mxu0 0.0
  %340 = vmatprep.subr.mxu0 0.0
  %341 = vmatpush1.msra.mxu0 0.0
  %342 = vmatprep.subr.mxu0 0.0
  %343 = vmatpush1.msra.mxu0 0.0
  %344 = vmatprep.subr.mxu0 0.0
  %345 = vmatpush1.msra.mxu0 0.0
  %346 = vmatprep.subr.mxu0 0.0
  %347 = vmatpush1.msra.mxu0 0.0
  %348 = vmatprep.subr.mxu0 0.0
  %349 = vmatpush1.msra.mxu0 0.0
  %350 = vmatprep.subr.mxu0 0.0
  %351 = vmatpush1.msra.mxu0 0.0
  %352 = vmatprep.subr.mxu0 0.0
  %353 = vmatpush1.msra.mxu0 0.0
  %354 = vmatprep.subr.mxu0 0.0
  %355 = vmatpush1.msra.mxu0 0.0
  %356 = vmatprep.subr.mxu0 0.0
  %357 = vmatpush1.msra.mxu0 0.0
  %358 = vmatprep.subr.mxu0 0.0
  %359 = vmatpush1.msra.mxu0 0.0
  %360 = vmatprep.mubr.f32.mxu0 0.0
  %361 = vmatmul.mubr.f32.gmra.mrb[0].mxu0 %v103
  %v362 = vpop.f32.mrb[0].mxu0
  %v363 = vadd.f32 %v99, %v362
  %v364 = vpop.f32.mrb[0].mxu0
  %v365 = vadd.f32 %v99, %v364
  %366 = vdwg.mxu0
  %367 = vmatprep.subr.mxu0 %v22
  %368 = vmatpush1.msra.mxu0 %v21
  %369 = vmatprep.subr.mxu0 %v38
  %370 = vmatpush1.msra.mxu0 %v37
  %371 = vmatprep.subr.mxu0 %v54
  %372 = vmatpush1.msra.mxu0 %v53
  %373 = vmatprep.subr.mxu0 %v70
  %374 = vmatpush1.msra.mxu0 %v69
  %375 = vmatprep.subr.mxu0 %v128
  %376 = vmatpush1.msra.mxu0 %v125
  %377 = vmatprep.subr.mxu0 0.0
  %378 = vmatpush1.msra.mxu0 0.0
  %379 = vmatprep.subr.mxu0 0.0
  %380 = vmatpush1.msra.mxu0 0.0
  %381 = vmatprep.subr.mxu0 0.0
  %382 = vmatpush1.msra.mxu0 0.0
  %383 = vmatprep.subr.mxu0 0.0
  %384 = vmatpush1.msra.mxu0 0.0
  %385 = vmatprep.subr.mxu0 0.0
  %386 = vmatpush1.msra.mxu0 0.0
  %387 = vmatprep.subr.mxu0 0.0
  %388 = vmatpush1.msra.mxu0 0.0
  %389 = vmatprep.subr.mxu0 0.0
  %390 = vmatpush1.msra.mxu0 0.0
  %391 = vmatprep.subr.mxu0 0.0
  %392 = vmatpush1.msra.mxu0 0.0
  %393 = vmatprep.subr.mxu0 0.0
  %394 = vmatpush1.msra.mxu0 0.0
  %395 = vmatprep.subr.mxu0 0.0
  %396 = vmatpush1.msra.mxu0 0.0
  %397 = vmatprep.subr.mxu0 0.0
  %398 = vmatpush1.msra.mxu0 0.0
  %399 = vmatprep.subr.mxu0 0.0
  %400 = vmatpush1.msra.mxu0 0.0
  %401 = vmatprep.subr.mxu0 0.0
  %402 = vmatpush1.msra.mxu0 0.0
  %403 = vmatprep.subr.mxu0 0.0
  %404 = vmatpush1.msra.mxu0 0.0
  %405 = vmatprep.subr.mxu0 0.0
  %406 = vmatpush1.msra.mxu0 0.0
  %407 = vmatprep.subr.mxu0 0.0
  %408 = vmatpush1.msra.mxu0 0.0
  %409 = vmatprep.subr.mxu0 0.0
  %410 = vmatpush1.msra.mxu0 0.0
  %411 = vmatprep.subr.mxu0 0.0
  %412 = vmatpush1.msra.mxu0 0.0
  %413 = vmatprep.subr.mxu0 0.0
  %414 = vmatpush1.msra.mxu0 0.0
  %415 = vmatprep.subr.mxu0 0.0
  %416 = vmatpush1.msra.mxu0 0.0
  %417 = vmatprep.subr.mxu0 0.0
  %418 = vmatpush1.msra.mxu0 0.0
  %419 = vmatprep.subr.mxu0 0.0
  %420 = vmatpush1.msra.mxu0 0.0
  %421 = vmatprep.subr.mxu0 0.0
  %422 = vmatpush1.msra.mxu0 0.0
  %423 = vmatprep.subr.mxu0 0.0
  %424 = vmatpush1.msra.mxu0 0.0
  %425 = vmatprep.subr.mxu0 0.0
  %426 = vmatpush1.msra.mxu0 0.0
  %427 = vmatprep.subr.mxu0 0.0
  %428 = vmatpush1.msra.mxu0 0.0
  %429 = vmatprep.subr.mxu0 0.0
  %430 = vmatpush1.msra.mxu0 0.0
  %431 = vmatprep.mubr.f32.mxu0 0.0
  %432 = vmatmul.mubr.f32.gmra.mrb[0].mxu0 %v103
  %v433 = vpop.f32.mrb[0].mxu0
  %v434 = vadd.f32 %v99, %v433
  %v435 = vpop.f32.mrb[0].mxu0
  %v436 = vadd.f32 %v99, %v435
  %437 = vdwg.mxu0
  %438 = vmatprep.subr.mxu0 %v24
  %439 = vmatpush1.msra.mxu0 %v23
  %440 = vmatprep.subr.mxu0 %v40
  %441 = vmatpush1.msra.mxu0 %v39
  %442 = vmatprep.subr.mxu0 %v56
  %443 = vmatpush1.msra.mxu0 %v55
  %444 = vmatprep.subr.mxu0 %v72
  %445 = vmatpush1.msra.mxu0 %v71
  %446 = vmatprep.subr.mxu0 %v134
  %447 = vmatpush1.msra.mxu0 %v131
  %448 = vmatprep.subr.mxu0 0.0
  %449 = vmatpush1.msra.mxu0 0.0
  %450 = vmatprep.subr.mxu0 0.0
  %451 = vmatpush1.msra.mxu0 0.0
  %452 = vmatprep.subr.mxu0 0.0
  %453 = vmatpush1.msra.mxu0 0.0
  %454 = vmatprep.subr.mxu0 0.0
  %455 = vmatpush1.msra.mxu0 0.0
  %456 = vmatprep.subr.mxu0 0.0
  %457 = vmatpush1.msra.mxu0 0.0
  %458 = vmatprep.subr.mxu0 0.0
  %459 = vmatpush1.msra.mxu0 0.0
  %460 = vmatprep.subr.mxu0 0.0
  %461 = vmatpush1.msra.mxu0 0.0
  %462 = vmatprep.subr.mxu0 0.0
  %463 = vmatpush1.msra.mxu0 0.0
  %464 = vmatprep.subr.mxu0 0.0
  %465 = vmatpush1.msra.mxu0 0.0
  %466 = vmatprep.subr.mxu0 0.0
  %467 = vmatpush1.msra.mxu0 0.0
  %468 = vmatprep.subr.mxu0 0.0
  %469 = vmatpush1.msra.mxu0 0.0
  %470 = vmatprep.subr.mxu0 0.0
  %471 = vmatpush1.msra.mxu0 0.0
  %472 = vmatprep.subr.mxu0 0.0
  %473 = vmatpush1.msra.mxu0 0.0
  %474 = vmatprep.subr.mxu0 0.0
  %475 = vmatpush1.msra.mxu0 0.0
  %476 = vmatprep.subr.mxu0 0.0
  %477 = vmatpush1.msra.mxu0 0.0
  %478 = vmatprep.subr.mxu0 0.0
  %479 = vmatpush1.msra.mxu0 0.0
  %480 = vmatprep.subr.mxu0 0.0
  %481 = vmatpush1.msra.mxu0 0.0
  %482 = vmatprep.subr.mxu0 0.0
  %483 = vmatpush1.msra.mxu0 0.0
  %484 = vmatprep.subr.mxu0 0.0
  %485 = vmatpush1.msra.mxu0 0.0
  %486 = vmatprep.subr.mxu0 0.0
  %487 = vmatpush1.msra.mxu0 0.0
  %488 = vmatprep.subr.mxu0 0.0
  %489 = vmatpush1.msra.mxu0 0.0
  %490 = vmatprep.subr.mxu0 0.0
  %491 = vmatpush1.msra.mxu0 0.0
  %492 = vmatprep.subr.mxu0 0.0
  %493 = vmatpush1.msra.mxu0 0.0
  %494 = vmatprep.subr.mxu0 0.0
  %495 = vmatpush1.msra.mxu0 0.0
  %496 = vmatprep.subr.mxu0 0.0
  %497 = vmatpush1.msra.mxu0 0.0
  %498 = vmatprep.subr.mxu0 0.0
  %499 = vmatpush1.msra.mxu0 0.0
  %500 = vmatprep.subr.mxu0 0.0
  %501 = vmatpush1.msra.mxu0 0.0
  %502 = vmatprep.mubr.f32.mxu0 0.0
  %503 = vmatmul.mubr.f32.gmra.mrb[0].mxu0 %v103
  %v504 = vpop.f32.mrb[0].mxu0
  %v505 = vadd.f32 %v99, %v504
  %v506 = vpop.f32.mrb[0].mxu0
  %v507 = vadd.f32 %v99, %v506
  %508 = vdwg.mxu0
  %509 = vmatprep.subr.mxu0 %v26
  %510 = vmatpush1.msra.mxu0 %v25
  %511 = vmatprep.subr.mxu0 %v42
  %512 = vmatpush1.msra.mxu0 %v41
  %513 = vmatprep.subr.mxu0 %v58
  %514 = vmatpush1.msra.mxu0 %v57
  %515 = vmatprep.subr.mxu0 %v74
  %516 = vmatpush1.msra.mxu0 %v73
  %517 = vmatprep.subr.mxu0 %v140
  %518 = vmatpush1.msra.mxu0 %v137
  %519 = vmatprep.subr.mxu0 0.0
  %520 = vmatpush1.msra.mxu0 0.0
  %521 = vmatprep.subr.mxu0 0.0
  %522 = vmatpush1.msra.mxu0 0.0
  %523 = vmatprep.subr.mxu0 0.0
  %524 = vmatpush1.msra.mxu0 0.0
  %525 = vmatprep.subr.mxu0 0.0
  %526 = vmatpush1.msra.mxu0 0.0
  %527 = vmatprep.subr.mxu0 0.0
  %528 = vmatpush1.msra.mxu0 0.0
  %529 = vmatprep.subr.mxu0 0.0
  %530 = vmatpush1.msra.mxu0 0.0
  %531 = vmatprep.subr.mxu0 0.0
  %532 = vmatpush1.msra.mxu0 0.0
  %533 = vmatprep.subr.mxu0 0.0
  %534 = vmatpush1.msra.mxu0 0.0
  %535 = vmatprep.subr.mxu0 0.0
  %536 = vmatpush1.msra.mxu0 0.0
  %537 = vmatprep.subr.mxu0 0.0
  %538 = vmatpush1.msra.mxu0 0.0
  %539 = vmatprep.subr.mxu0 0.0
  %540 = vmatpush1.msra.mxu0 0.0
  %541 = vmatprep.subr.mxu0 0.0
  %542 = vmatpush1.msra.mxu0 0.0
  %543 = vmatprep.subr.mxu0 0.0
  %544 = vmatpush1.msra.mxu0 0.0
  %545 = vmatprep.subr.mxu0 0.0
  %546 = vmatpush1.msra.mxu0 0.0
  %547 = vmatprep.subr.mxu0 0.0
  %548 = vmatpush1.msra.mxu0 0.0
  %549 = vmatprep.subr.mxu0 0.0
  %550 = vmatpush1.msra.mxu0 0.0
  %551 = vmatprep.subr.mxu0 0.0
  %552 = vmatpush1.msra.mxu0 0.0
  %553 = vmatprep.subr.mxu0 0.0
  %554 = vmatpush1.msra.mxu0 0.0
  %555 = vmatprep.subr.mxu0 0.0
  %556 = vmatpush1.msra.mxu0 0.0
  %557 = vmatprep.subr.mxu0 0.0
  %558 = vmatpush1.msra.mxu0 0.0
  %559 = vmatprep.subr.mxu0 0.0
  %560 = vmatpush1.msra.mxu0 0.0
  %561 = vmatprep.subr.mxu0 0.0
  %562 = vmatpush1.msra.mxu0 0.0
  %563 = vmatprep.subr.mxu0 0.0
  %564 = vmatpush1.msra.mxu0 0.0
  %565 = vmatprep.subr.mxu0 0.0
  %566 = vmatpush1.msra.mxu0 0.0
  %567 = vmatprep.subr.mxu0 0.0
  %568 = vmatpush1.msra.mxu0 0.0
  %569 = vmatprep.subr.mxu0 0.0
  %570 = vmatpush1.msra.mxu0 0.0
  %571 = vmatprep.subr.mxu0 0.0
  %572 = vmatpush1.msra.mxu0 0.0
  %573 = vmatprep.mubr.f32.mxu0 0.0
  %574 = vmatmul.mubr.f32.gmra.mrb[0].mxu0 %v103
  %v575 = vpop.f32.mrb[0].mxu0
  %v576 = vadd.f32 %v99, %v575
  %v577 = vpop.f32.mrb[0].mxu0
  %v578 = vadd.f32 %v99, %v577
  %579 = vdwg.mxu0
  %580 = vmatprep.subr.mxu0 %v28
  %581 = vmatpush1.msra.mxu0 %v27
  %582 = vmatprep.subr.mxu0 %v44
  %583 = vmatpush1.msra.mxu0 %v43
  %584 = vmatprep.subr.mxu0 %v60
  %585 = vmatpush1.msra.mxu0 %v59
  %586 = vmatprep.subr.mxu0 %v76
  %587 = vmatpush1.msra.mxu0 %v75
  %588 = vmatprep.subr.mxu0 %v146
  %589 = vmatpush1.msra.mxu0 %v143
  %590 = vmatprep.subr.mxu0 0.0
  %591 = vmatpush1.msra.mxu0 0.0
  %592 = vmatprep.subr.mxu0 0.0
  %593 = vmatpush1.msra.mxu0 0.0
  %594 = vmatprep.subr.mxu0 0.0
  %595 = vmatpush1.msra.mxu0 0.0
  %596 = vmatprep.subr.mxu0 0.0
  %597 = vmatpush1.msra.mxu0 0.0
  %598 = vmatprep.subr.mxu0 0.0
  %599 = vmatpush1.msra.mxu0 0.0
  %600 = vmatprep.subr.mxu0 0.0
  %601 = vmatpush1.msra.mxu0 0.0
  %602 = vmatprep.subr.mxu0 0.0
  %603 = vmatpush1.msra.mxu0 0.0
  %604 = vmatprep.subr.mxu0 0.0
  %605 = vmatpush1.msra.mxu0 0.0
  %606 = vmatprep.subr.mxu0 0.0
  %607 = vmatpush1.msra.mxu0 0.0
  %608 = vmatprep.subr.mxu0 0.0
  %609 = vmatpush1.msra.mxu0 0.0
  %610 = vmatprep.subr.mxu0 0.0
  %611 = vmatpush1.msra.mxu0 0.0
  %612 = vmatprep.subr.mxu0 0.0
  %613 = vmatpush1.msra.mxu0 0.0
  %614 = vmatprep.subr.mxu0 0.0
  %615 = vmatpush1.msra.mxu0 0.0
  %616 = vmatprep.subr.mxu0 0.0
  %617 = vmatpush1.msra.mxu0 0.0
  %618 = vmatprep.subr.mxu0 0.0
  %619 = vmatpush1.msra.mxu0 0.0
  %620 = vmatprep.subr.mxu0 0.0
  %621 = vmatpush1.msra.mxu0 0.0
  %622 = vmatprep.subr.mxu0 0.0
  %623 = vmatpush1.msra.mxu0 0.0
  %624 = vmatprep.subr.mxu0 0.0
  %625 = vmatpush1.msra.mxu0 0.0
  %626 = vmatprep.subr.mxu0 0.0
  %627 = vmatpush1.msra.mxu0 0.0
  %628 = vmatprep.subr.mxu0 0.0
  %629 = vmatpush1.msra.mxu0 0.0
  %630 = vmatprep.subr.mxu0 0.0
  %631 = vmatpush1.msra.mxu0 0.0
  %632 = vmatprep.subr.mxu0 0.0
  %633 = vmatpush1.msra.mxu0 0.0
  %634 = vmatprep.subr.mxu0 0.0
  %635 = vmatpush1.msra.mxu0 0.0
  %636 = vmatprep.subr.mxu0 0.0
  %637 = vmatpush1.msra.mxu0 0.0
  %638 = vmatprep.subr.mxu0 0.0
  %639 = vmatpush1.msra.mxu0 0.0
  %640 = vmatprep.subr.mxu0 0.0
  %641 = vmatpush1.msra.mxu0 0.0
  %642 = vmatprep.subr.mxu0 0.0
  %643 = vmatpush1.msra.mxu0 0.0
  %644 = vmatprep.mubr.f32.mxu0 0.0
  %645 = vmatmul.mubr.f32.gmra.mrb[0].mxu0 %v103
  %v646 = vpop.f32.mrb[0].mxu0
  %v647 = vadd.f32 %v99, %v646
  %v648 = vpop.f32.mrb[0].mxu0
  %v649 = vadd.f32 %v99, %v648
  %650 = vdwg.mxu0
  %651 = vmatprep.subr.mxu0 %v30
  %652 = vmatpush1.msra.mxu0 %v29
  %653 = vmatprep.subr.mxu0 %v46
  %654 = vmatpush1.msra.mxu0 %v45
  %655 = vmatprep.subr.mxu0 %v62
  %656 = vmatpush1.msra.mxu0 %v61
  %657 = vmatprep.subr.mxu0 %v78
  %658 = vmatpush1.msra.mxu0 %v77
  %659 = vmatprep.subr.mxu0 %v152
  %660 = vmatpush1.msra.mxu0 %v149
  %661 = vmatprep.subr.mxu0 0.0
  %662 = vmatpush1.msra.mxu0 0.0
  %663 = vmatprep.subr.mxu0 0.0
  %664 = vmatpush1.msra.mxu0 0.0
  %665 = vmatprep.subr.mxu0 0.0
  %666 = vmatpush1.msra.mxu0 0.0
  %667 = vmatprep.subr.mxu0 0.0
  %668 = vmatpush1.msra.mxu0 0.0
  %669 = vmatprep.subr.mxu0 0.0
  %670 = vmatpush1.msra.mxu0 0.0
  %671 = vmatprep.subr.mxu0 0.0
  %672 = vmatpush1.msra.mxu0 0.0
  %673 = vmatprep.subr.mxu0 0.0
  %674 = vmatpush1.msra.mxu0 0.0
  %675 = vmatprep.subr.mxu0 0.0
  %676 = vmatpush1.msra.mxu0 0.0
  %677 = vmatprep.subr.mxu0 0.0
  %678 = vmatpush1.msra.mxu0 0.0
  %679 = vmatprep.subr.mxu0 0.0
  %680 = vmatpush1.msra.mxu0 0.0
  %681 = vmatprep.subr.mxu0 0.0
  %682 = vmatpush1.msra.mxu0 0.0
  %683 = vmatprep.subr.mxu0 0.0
  %684 = vmatpush1.msra.mxu0 0.0
  %685 = vmatprep.subr.mxu0 0.0
  %686 = vmatpush1.msra.mxu0 0.0
  %687 = vmatprep.subr.mxu0 0.0
  %688 = vmatpush1.msra.mxu0 0.0
  %689 = vmatprep.subr.mxu0 0.0
  %690 = vmatpush1.msra.mxu0 0.0
  %691 = vmatprep.subr.mxu0 0.0
  %692 = vmatpush1.msra.mxu0 0.0
  %693 = vmatprep.subr.mxu0 0.0
  %694 = vmatpush1.msra.mxu0 0.0
  %695 = vmatprep.subr.mxu0 0.0
  %696 = vmatpush1.msra.mxu0 0.0
  %697 = vmatprep.subr.mxu0 0.0
  %698 = vmatpush1.msra.mxu0 0.0
  %699 = vmatprep.subr.mxu0 0.0
  %700 = vmatpush1.msra.mxu0 0.0
  %701 = vmatprep.subr.mxu0 0.0
  %702 = vmatpush1.msra.mxu0 0.0
  %703 = vmatprep.subr.mxu0 0.0
  %704 = vmatpush1.msra.mxu0 0.0
  %705 = vmatprep.subr.mxu0 0.0
  %706 = vmatpush1.msra.mxu0 0.0
  %707 = vmatprep.subr.mxu0 0.0
  %708 = vmatpush1.msra.mxu0 0.0
  %709 = vmatprep.subr.mxu0 0.0
  %710 = vmatpush1.msra.mxu0 0.0
  %711 = vmatprep.subr.mxu0 0.0
  %712 = vmatpush1.msra.mxu0 0.0
  %713 = vmatprep.subr.mxu0 0.0
  %714 = vmatpush1.msra.mxu0 0.0
  %715 = vmatprep.mubr.f32.mxu0 0.0
  %716 = vmatmul.mubr.f32.gmra.mrb[0].mxu0 %v103
  %v717 = vpop.f32.mrb[0].mxu0
  %v718 = vadd.f32 %v99, %v717
  %v719 = vpop.f32.mrb[0].mxu0
  %v720 = vadd.f32 %v99, %v719
  %721 = vdwg.mxu0
  %v722 = vmax.f32 %v221, 0.0
  %v723 = vmax.f32 %v223, 0.0
  %v724 = vmax.f32 %v292, 0.0
  %v725 = vmax.f32 %v294, 0.0
  %v726 = vmax.f32 %v363, 0.0
  %v727 = vmax.f32 %v365, 0.0
  %v728 = vmax.f32 %v434, 0.0
  %v729 = vmax.f32 %v436, 0.0
  %v730 = vmax.f32 %v505, 0.0
  %v731 = vmax.f32 %v507, 0.0
  %v732 = vmax.f32 %v576, 0.0
  %v733 = vmax.f32 %v578, 0.0
  %v734 = vmax.f32 %v647, 0.0
  %v735 = vmax.f32 %v649, 0.0
  %v736 = vmax.f32 %v718, 0.0
  %v737 = vmax.f32 %v720, 0.0
  %v754 = vcombine.low %v722, %v723
  %v755 = vcombine.low %v724, %v725
  %v756 = vcombine.low %v726, %v727
  %v757 = vcombine.low %v728, %v729
  %v758 = vcombine.low %v730, %v731
  %v759 = vcombine.low %v732, %v733
  %v760 = vcombine.low %v734, %v735
  %v761 = vcombine.low %v736, %v737
  %770 = vst [vmem:[%s3] sm:$0xff] %v754
  %771 = vst [vmem:[%s3 + $0x8] sm:$0xff] %v755
  %772 = vst [vmem:[%s3 + $0x10] sm:$0xff] %v756
  %773 = vst [vmem:[%s3 + $0x18] sm:$0xff] %v757
  %774 = vst [vmem:[%s3 + $0x20] sm:$0xff] %v758
  %775 = vst [vmem:[%s3 + $0x28] sm:$0xff] %v759
  %776 = vst [vmem:[%s3 + $0x30] sm:$0xff] %v760
  %777 = vst [vmem:[%s3 + $0x38] sm:$0xff] %v761
  // Predicated region
  $region14: #{net_forward_pallas.60} parent=0 // pred_check
    _
  $region15: #{net_forward_pallas.60} parent=0 // pred_check_branch
    %779 = sbr.rel (0) target = $region17
  $region16: #{net_forward_pallas.60} parent=0 // pred_region
    _
  $region17: #{net_forward_pallas.60} parent=0 // pred_fallthru
    _
  // Predicated region
  $region18: #{net_forward_pallas.60} parent=0 // pred_check
    _
  $region19: #{net_forward_pallas.60} parent=0 // pred_check_branch
    %781 = sbr.rel (0) target = $region21
  $region20: #{net_forward_pallas.60} parent=0 // pred_region
    _
  $region21: #{net_forward_pallas.60} parent=0 // pred_fallthru
    _

// kernel: net_forward_pallas.84
$region0: #{net_forward_pallas.84}
  #allocation0 [shape = 'u32[]', space=smem, size = 0x4, offset = 0x4, fixed_abs, tag = 'smem constant byte address 0x4 - core index']
  #allocation1 [shape = 'u32[144,128]{1,0:T(1,128)}', space=vmem, size = 0x12000, scoped, tag = 'internal scratch']
  %s0 = inlined_call_operand.vmem [shape: f32[4,36], index: 0, kind: input, shape index: {}]
  %s1 = inlined_call_operand.vmem [shape: f32[36,1920], index: 1, kind: input, shape index: {}]
  %s2 = inlined_call_operand.vmem [shape: f32[4,1], index: 2, kind: input, shape index: {}]
  %s3 = inlined_call_operand.vmem [shape: f32[4,1920], index: 3, kind: output, shape index: {}]
  %s4 = sld [smem:[#allocation0]]
  $region22: #{net_forward_pallas.84} parent=0
    _
  %s6 = ssub.s32 1, %s4
  %s7 = scalar_select 0, %s6, %s4
  // Predicated region
  $region2: #{net_forward_pallas.84} parent=0 // pred_check
    _
  $region3: #{net_forward_pallas.84} parent=0 // pred_check_branch
    %9 = sbr.rel (0) target = $region5
  $region4: #{net_forward_pallas.84} parent=0 // pred_region
    _
  $region5: #{net_forward_pallas.84} parent=0 // pred_fallthru
    _
  // Predicated region
  $region6: #{net_forward_pallas.84} parent=0 // pred_check
    _
  $region7: #{net_forward_pallas.84} parent=0 // pred_check_branch
    %11 = sbr.rel (0) target = $region9
  $region8: #{net_forward_pallas.84} parent=0 // pred_region
    _
  $region9: #{net_forward_pallas.84} parent=0 // pred_fallthru
    _
  // Predicated region
  $region10: #{net_forward_pallas.84} parent=0 // pred_check
    _
  $region11: #{net_forward_pallas.84} parent=0 // pred_check_branch
    %13 = sbr.rel (0) target = $region13
  $region12: #{net_forward_pallas.84} parent=0 // pred_region
    _
  $region13: #{net_forward_pallas.84} parent=0 // pred_fallthru
    _
  %v14 = vld [vmem:[%s0] sm:$0xf]
  %v15 = vld [vmem:[%s1] sm:$0xff]
  %v16 = vld [vmem:[%s1 + $0x8] sm:$0xff]
  %v17 = vld [vmem:[%s1 + $0x10] sm:$0xff]
  %v18 = vld [vmem:[%s1 + $0x18] sm:$0xff]
  %v19 = vld [vmem:[%s1 + $0x20] sm:$0xff]
  %v20 = vld [vmem:[%s1 + $0x28] sm:$0xff]
  %v21 = vld [vmem:[%s1 + $0x30] sm:$0xff]
  %v22 = vld [vmem:[%s1 + $0x38] sm:$0xff]
  %v23 = vld [vmem:[%s1 + $0x40] sm:$0xff]
  %v24 = vld [vmem:[%s1 + $0x48] sm:$0xff]
  %v25 = vld [vmem:[%s1 + $0x50] sm:$0xff]
  %v26 = vld [vmem:[%s1 + $0x58] sm:$0xff]
  %v27 = vld [vmem:[%s1 + $0x60] sm:$0xff]
  %v28 = vld [vmem:[%s1 + $0x68] sm:$0xff]
  %v29 = vld [vmem:[%s1 + $0x70] sm:$0xff]
  %v30 = vld [vmem:[%s1 + $0x78] sm:$0xff]
  %v31 = vld [vmem:[%s1 + $0x80] sm:$0xff]
  %v32 = vld [vmem:[%s1 + $0x88] sm:$0xff]
  %v33 = vld [vmem:[%s1 + $0x90] sm:$0xff]
  %v34 = vld [vmem:[%s1 + $0x98] sm:$0xff]
  %v35 = vld [vmem:[%s1 + $0xa0] sm:$0xff]
  %v36 = vld [vmem:[%s1 + $0xa8] sm:$0xff]
  %v37 = vld [vmem:[%s1 + $0xb0] sm:$0xff]
  %v38 = vld [vmem:[%s1 + $0xb8] sm:$0xff]
  %v39 = vld [vmem:[%s1 + $0xc0] sm:$0xff]
  %v40 = vld [vmem:[%s1 + $0xc8] sm:$0xff]
  %v41 = vld [vmem:[%s1 + $0xd0] sm:$0xff]
  %v42 = vld [vmem:[%s1 + $0xd8] sm:$0xff]
  %v43 = vld [vmem:[%s1 + $0xe0] sm:$0xff]
  %v44 = vld [vmem:[%s1 + $0xe8] sm:$0xff]
  %v45 = vld [vmem:[%s1 + $0xf0] sm:$0xff]
  %v46 = vld [vmem:[%s1 + $0xf8] sm:$0xff]
  %v47 = vld [vmem:[%s1 + $0x100] sm:$0xff]
  %v48 = vld [vmem:[%s1 + $0x108] sm:$0xff]
  %v49 = vld [vmem:[%s1 + $0x110] sm:$0xff]
  %v50 = vld [vmem:[%s1 + $0x118] sm:$0xff]
  %v51 = vld [vmem:[%s1 + $0x120] sm:$0xff]
  %v52 = vld [vmem:[%s1 + $0x128] sm:$0xff]
  %v53 = vld [vmem:[%s1 + $0x130] sm:$0xff]
  %v54 = vld [vmem:[%s1 + $0x138] sm:$0xff]
  %v55 = vld [vmem:[%s1 + $0x140] sm:$0xff]
  %v56 = vld [vmem:[%s1 + $0x148] sm:$0xff]
  %v57 = vld [vmem:[%s1 + $0x150] sm:$0xff]
  %v58 = vld [vmem:[%s1 + $0x158] sm:$0xff]
  %v59 = vld [vmem:[%s1 + $0x160] sm:$0xff]
  %v60 = vld [vmem:[%s1 + $0x168] sm:$0xff]
  %v61 = vld [vmem:[%s1 + $0x170] sm:$0xff]
  %v62 = vld [vmem:[%s1 + $0x178] sm:$0xff]
  %v63 = vld [vmem:[%s1 + $0x180] sm:$0xff]
  %v64 = vld [vmem:[%s1 + $0x188] sm:$0xff]
  %v65 = vld [vmem:[%s1 + $0x190] sm:$0xff]
  %v66 = vld [vmem:[%s1 + $0x198] sm:$0xff]
  %v67 = vld [vmem:[%s1 + $0x1a0] sm:$0xff]
  %v68 = vld [vmem:[%s1 + $0x1a8] sm:$0xff]
  %v69 = vld [vmem:[%s1 + $0x1b0] sm:$0xff]
  %v70 = vld [vmem:[%s1 + $0x1b8] sm:$0xff]
  %v71 = vld [vmem:[%s1 + $0x1c0] sm:$0xff]
  %v72 = vld [vmem:[%s1 + $0x1c8] sm:$0xff]
  %v73 = vld [vmem:[%s1 + $0x1d0] sm:$0xff]
  %v74 = vld [vmem:[%s1 + $0x1d8] sm:$0xff]
  %v75 = vld [vmem:[%s1 + $0x1e0] sm:$0xf]
  %v76 = vld [vmem:[%s1 + $0x1e8] sm:$0xf]
  %v77 = vld [vmem:[%s1 + $0x1f0] sm:$0xf]
  %v78 = vld [vmem:[%s1 + $0x1f8] sm:$0xf]
  %v79 = vld [vmem:[%s1 + $0x200] sm:$0xf]
  %v80 = vld [vmem:[%s1 + $0x208] sm:$0xf]
  %v81 = vld [vmem:[%s1 + $0x210] sm:$0xf]
  %v82 = vld [vmem:[%s1 + $0x218] sm:$0xf]
  %v83 = vld [vmem:[%s1 + $0x220] sm:$0xf]
  %v84 = vld [vmem:[%s1 + $0x228] sm:$0xf]
  %v85 = vld [vmem:[%s1 + $0x230] sm:$0xf]
  %v86 = vld [vmem:[%s1 + $0x238] sm:$0xf]
  %v87 = vld [vmem:[%s1 + $0x240] sm:$0xf]
  %v88 = vld [vmem:[%s1 + $0x248] sm:$0xf]
  %v89 = vld [vmem:[%s1 + $0x250] sm:$0xf]
  %v90 = vld [vmem:[%s2] sm:$0xf]
  %92 = vset.pattern.permute.xlu0 0
  %93 = vperm.xlu0 %92, %v90
  %v94 = vpop.permute.xlu0 %93
  %vm96 = vcmask 293888
  %v98 = vsel %vm96, %v14, 0
  %vm100 = vcmask 1043456
  %v102 = vsel %vm100, %v75, 0
  %v105 = vsel %vm100, %v76, 0
  %v108 = vsel %vm100, %v77, 0
  %v111 = vsel %vm100, %v78, 0
  %v114 = vsel %vm100, %v79, 0
  %v117 = vsel %vm100, %v80, 0
  %v120 = vsel %vm100, %v81, 0
  %v123 = vsel %vm100, %v82, 0
  %v126 = vsel %vm100, %v83, 0
  %v129 = vsel %vm100, %v84, 0
  %v132 = vsel %vm100, %v85, 0
  %v135 = vsel %vm100, %v86, 0
  %v138 = vsel %vm100, %v87, 0
  %v141 = vsel %vm100, %v88, 0
  %v144 = vsel %vm100, %v89, 0
  %146 = vmatprep.subr.mxu0 %v16
  %147 = vmatpush1.msra.mxu0 %v15
  %148 = vmatprep.subr.mxu0 %v31
  %149 = vmatpush1.msra.mxu0 %v30
  %150 = vmatprep.subr.mxu0 %v46
  %151 = vmatpush1.msra.mxu0 %v45
  %152 = vmatprep.subr.mxu0 %v61
  %153 = vmatpush1.msra.mxu0 %v60
  %154 = vmatprep.subr.mxu0 %v105
  %155 = vmatpush1.msra.mxu0 %v102
  %156 = vmatprep.subr.mxu0 0.0
  %157 = vmatpush1.msra.mxu0 0.0
  %158 = vmatprep.subr.mxu0 0.0
  %159 = vmatpush1.msra.mxu0 0.0
  %160 = vmatprep.subr.mxu0 0.0
  %161 = vmatpush1.msra.mxu0 0.0
  %162 = vmatprep.subr.mxu0 0.0
  %163 = vmatpush1.msra.mxu0 0.0
  %164 = vmatprep.subr.mxu0 0.0
  %165 = vmatpush1.msra.mxu0 0.0
  %166 = vmatprep.subr.mxu0 0.0
  %167 = vmatpush1.msra.mxu0 0.0
  %168 = vmatprep.subr.mxu0 0.0
  %169 = vmatpush1.msra.mxu0 0.0
  %170 = vmatprep.subr.mxu0 0.0
  %171 = vmatpush1.msra.mxu0 0.0
  %172 = vmatprep.subr.mxu0 0.0
  %173 = vmatpush1.msra.mxu0 0.0
  %174 = vmatprep.subr.mxu0 0.0
  %175 = vmatpush1.msra.mxu0 0.0
  %176 = vmatprep.subr.mxu0 0.0
  %177 = vmatpush1.msra.mxu0 0.0
  %178 = vmatprep.subr.mxu0 0.0
  %179 = vmatpush1.msra.mxu0 0.0
  %180 = vmatprep.subr.mxu0 0.0
  %181 = vmatpush1.msra.mxu0 0.0
  %182 = vmatprep.subr.mxu0 0.0
  %183 = vmatpush1.msra.mxu0 0.0
  %184 = vmatprep.subr.mxu0 0.0
  %185 = vmatpush1.msra.mxu0 0.0
  %186 = vmatprep.subr.mxu0 0.0
  %187 = vmatpush1.msra.mxu0 0.0
  %188 = vmatprep.subr.mxu0 0.0
  %189 = vmatpush1.msra.mxu0 0.0
  %190 = vmatprep.subr.mxu0 0.0
  %191 = vmatpush1.msra.mxu0 0.0
  %192 = vmatprep.subr.mxu0 0.0
  %193 = vmatpush1.msra.mxu0 0.0
  %194 = vmatprep.subr.mxu0 0.0
  %195 = vmatpush1.msra.mxu0 0.0
  %196 = vmatprep.subr.mxu0 0.0
  %197 = vmatpush1.msra.mxu0 0.0
  %198 = vmatprep.subr.mxu0 0.0
  %199 = vmatpush1.msra.mxu0 0.0
  %200 = vmatprep.subr.mxu0 0.0
  %201 = vmatpush1.msra.mxu0 0.0
  %202 = vmatprep.subr.mxu0 0.0
  %203 = vmatpush1.msra.mxu0 0.0
  %204 = vmatprep.subr.mxu0 0.0
  %205 = vmatpush1.msra.mxu0 0.0
  %206 = vmatprep.subr.mxu0 0.0
  %207 = vmatpush1.msra.mxu0 0.0
  %208 = vmatprep.subr.mxu0 0.0
  %209 = vmatpush1.msra.mxu0 0.0
  %210 = vmatprep.mubr.f32.mxu0 0.0
  %211 = vmatmul.mubr.f32.gmra.mrb[0].mxu0 %v98
  %v212 = vpop.f32.mrb[0].mxu0
  %v213 = vadd.f32 %v94, %v212
  %v214 = vpop.f32.mrb[0].mxu0
  %v215 = vadd.f32 %v94, %v214
  %216 = vdwg.mxu0
  %217 = vmatprep.subr.mxu0 %v18
  %218 = vmatpush1.msra.mxu0 %v17
  %219 = vmatprep.subr.mxu0 %v33
  %220 = vmatpush1.msra.mxu0 %v32
  %221 = vmatprep.subr.mxu0 %v48
  %222 = vmatpush1.msra.mxu0 %v47
  %223 = vmatprep.subr.mxu0 %v63
  %224 = vmatpush1.msra.mxu0 %v62
  %225 = vmatprep.subr.mxu0 %v111
  %226 = vmatpush1.msra.mxu0 %v108
  %227 = vmatprep.subr.mxu0 0.0
  %228 = vmatpush1.msra.mxu0 0.0
  %229 = vmatprep.subr.mxu0 0.0
  %230 = vmatpush1.msra.mxu0 0.0
  %231 = vmatprep.subr.mxu0 0.0
  %232 = vmatpush1.msra.mxu0 0.0
  %233 = vmatprep.subr.mxu0 0.0
  %234 = vmatpush1.msra.mxu0 0.0
  %235 = vmatprep.subr.mxu0 0.0
  %236 = vmatpush1.msra.mxu0 0.0
  %237 = vmatprep.subr.mxu0 0.0
  %238 = vmatpush1.msra.mxu0 0.0
  %239 = vmatprep.subr.mxu0 0.0
  %240 = vmatpush1.msra.mxu0 0.0
  %241 = vmatprep.subr.mxu0 0.0
  %242 = vmatpush1.msra.mxu0 0.0
  %243 = vmatprep.subr.mxu0 0.0
  %244 = vmatpush1.msra.mxu0 0.0
  %245 = vmatprep.subr.mxu0 0.0
  %246 = vmatpush1.msra.mxu0 0.0
  %247 = vmatprep.subr.mxu0 0.0
  %248 = vmatpush1.msra.mxu0 0.0
  %249 = vmatprep.subr.mxu0 0.0
  %250 = vmatpush1.msra.mxu0 0.0
  %251 = vmatprep.subr.mxu0 0.0
  %252 = vmatpush1.msra.mxu0 0.0
  %253 = vmatprep.subr.mxu0 0.0
  %254 = vmatpush1.msra.mxu0 0.0
  %255 = vmatprep.subr.mxu0 0.0
  %256 = vmatpush1.msra.mxu0 0.0
  %257 = vmatprep.subr.mxu0 0.0
  %258 = vmatpush1.msra.mxu0 0.0
  %259 = vmatprep.subr.mxu0 0.0
  %260 = vmatpush1.msra.mxu0 0.0
  %261 = vmatprep.subr.mxu0 0.0
  %262 = vmatpush1.msra.mxu0 0.0
  %263 = vmatprep.subr.mxu0 0.0
  %264 = vmatpush1.msra.mxu0 0.0
  %265 = vmatprep.subr.mxu0 0.0
  %266 = vmatpush1.msra.mxu0 0.0
  %267 = vmatprep.subr.mxu0 0.0
  %268 = vmatpush1.msra.mxu0 0.0
  %269 = vmatprep.subr.mxu0 0.0
  %270 = vmatpush1.msra.mxu0 0.0
  %271 = vmatprep.subr.mxu0 0.0
  %272 = vmatpush1.msra.mxu0 0.0
  %273 = vmatprep.subr.mxu0 0.0
  %274 = vmatpush1.msra.mxu0 0.0
  %275 = vmatprep.subr.mxu0 0.0
  %276 = vmatpush1.msra.mxu0 0.0
  %277 = vmatprep.subr.mxu0 0.0
  %278 = vmatpush1.msra.mxu0 0.0
  %279 = vmatprep.subr.mxu0 0.0
  %280 = vmatpush1.msra.mxu0 0.0
  %281 = vmatprep.mubr.f32.mxu0 0.0
  %282 = vmatmul.mubr.f32.gmra.mrb[0].mxu0 %v98
  %v283 = vpop.f32.mrb[0].mxu0
  %v284 = vadd.f32 %v94, %v283
  %v285 = vpop.f32.mrb[0].mxu0
  %v286 = vadd.f32 %v94, %v285
  %287 = vdwg.mxu0
  %288 = vmatprep.subr.mxu0 %v20
  %289 = vmatpush1.msra.mxu0 %v19
  %290 = vmatprep.subr.mxu0 %v35
  %291 = vmatpush1.msra.mxu0 %v34
  %292 = vmatprep.subr.mxu0 %v50
  %293 = vmatpush1.msra.mxu0 %v49
  %294 = vmatprep.subr.mxu0 %v65
  %295 = vmatpush1.msra.mxu0 %v64
  %296 = vmatprep.subr.mxu0 %v117
  %297 = vmatpush1.msra.mxu0 %v114
  %298 = vmatprep.subr.mxu0 0.0
  %299 = vmatpush1.msra.mxu0 0.0
  %300 = vmatprep.subr.mxu0 0.0
  %301 = vmatpush1.msra.mxu0 0.0
  %302 = vmatprep.subr.mxu0 0.0
  %303 = vmatpush1.msra.mxu0 0.0
  %304 = vmatprep.subr.mxu0 0.0
  %305 = vmatpush1.msra.mxu0 0.0
  %306 = vmatprep.subr.mxu0 0.0
  %307 = vmatpush1.msra.mxu0 0.0
  %308 = vmatprep.subr.mxu0 0.0
  %309 = vmatpush1.msra.mxu0 0.0
  %310 = vmatprep.subr.mxu0 0.0
  %311 = vmatpush1.msra.mxu0 0.0
  %312 = vmatprep.subr.mxu0 0.0
  %313 = vmatpush1.msra.mxu0 0.0
  %314 = vmatprep.subr.mxu0 0.0
  %315 = vmatpush1.msra.mxu0 0.0
  %316 = vmatprep.subr.mxu0 0.0
  %317 = vmatpush1.msra.mxu0 0.0
  %318 = vmatprep.subr.mxu0 0.0
  %319 = vmatpush1.msra.mxu0 0.0
  %320 = vmatprep.subr.mxu0 0.0
  %321 = vmatpush1.msra.mxu0 0.0
  %322 = vmatprep.subr.mxu0 0.0
  %323 = vmatpush1.msra.mxu0 0.0
  %324 = vmatprep.subr.mxu0 0.0
  %325 = vmatpush1.msra.mxu0 0.0
  %326 = vmatprep.subr.mxu0 0.0
  %327 = vmatpush1.msra.mxu0 0.0
  %328 = vmatprep.subr.mxu0 0.0
  %329 = vmatpush1.msra.mxu0 0.0
  %330 = vmatprep.subr.mxu0 0.0
  %331 = vmatpush1.msra.mxu0 0.0
  %332 = vmatprep.subr.mxu0 0.0
  %333 = vmatpush1.msra.mxu0 0.0
  %334 = vmatprep.subr.mxu0 0.0
  %335 = vmatpush1.msra.mxu0 0.0
  %336 = vmatprep.subr.mxu0 0.0
  %337 = vmatpush1.msra.mxu0 0.0
  %338 = vmatprep.subr.mxu0 0.0
  %339 = vmatpush1.msra.mxu0 0.0
  %340 = vmatprep.subr.mxu0 0.0
  %341 = vmatpush1.msra.mxu0 0.0
  %342 = vmatprep.subr.mxu0 0.0
  %343 = vmatpush1.msra.mxu0 0.0
  %344 = vmatprep.subr.mxu0 0.0
  %345 = vmatpush1.msra.mxu0 0.0
  %346 = vmatprep.subr.mxu0 0.0
  %347 = vmatpush1.msra.mxu0 0.0
  %348 = vmatprep.subr.mxu0 0.0
  %349 = vmatpush1.msra.mxu0 0.0
  %350 = vmatprep.subr.mxu0 0.0
  %351 = vmatpush1.msra.mxu0 0.0
  %352 = vmatprep.mubr.f32.mxu0 0.0
  %353 = vmatmul.mubr.f32.gmra.mrb[0].mxu0 %v98
  %v354 = vpop.f32.mrb[0].mxu0
  %v355 = vadd.f32 %v94, %v354
  %v356 = vpop.f32.mrb[0].mxu0
  %v357 = vadd.f32 %v94, %v356
  %358 = vdwg.mxu0
  %359 = vmatprep.subr.mxu0 %v22
  %360 = vmatpush1.msra.mxu0 %v21
  %361 = vmatprep.subr.mxu0 %v37
  %362 = vmatpush1.msra.mxu0 %v36
  %363 = vmatprep.subr.mxu0 %v52
  %364 = vmatpush1.msra.mxu0 %v51
  %365 = vmatprep.subr.mxu0 %v67
  %366 = vmatpush1.msra.mxu0 %v66
  %367 = vmatprep.subr.mxu0 %v123
  %368 = vmatpush1.msra.mxu0 %v120
  %369 = vmatprep.subr.mxu0 0.0
  %370 = vmatpush1.msra.mxu0 0.0
  %371 = vmatprep.subr.mxu0 0.0
  %372 = vmatpush1.msra.mxu0 0.0
  %373 = vmatprep.subr.mxu0 0.0
  %374 = vmatpush1.msra.mxu0 0.0
  %375 = vmatprep.subr.mxu0 0.0
  %376 = vmatpush1.msra.mxu0 0.0
  %377 = vmatprep.subr.mxu0 0.0
  %378 = vmatpush1.msra.mxu0 0.0
  %379 = vmatprep.subr.mxu0 0.0
  %380 = vmatpush1.msra.mxu0 0.0
  %381 = vmatprep.subr.mxu0 0.0
  %382 = vmatpush1.msra.mxu0 0.0
  %383 = vmatprep.subr.mxu0 0.0
  %384 = vmatpush1.msra.mxu0 0.0
  %385 = vmatprep.subr.mxu0 0.0
  %386 = vmatpush1.msra.mxu0 0.0
  %387 = vmatprep.subr.mxu0 0.0
  %388 = vmatpush1.msra.mxu0 0.0
  %389 = vmatprep.subr.mxu0 0.0
  %390 = vmatpush1.msra.mxu0 0.0
  %391 = vmatprep.subr.mxu0 0.0
  %392 = vmatpush1.msra.mxu0 0.0
  %393 = vmatprep.subr.mxu0 0.0
  %394 = vmatpush1.msra.mxu0 0.0
  %395 = vmatprep.subr.mxu0 0.0
  %396 = vmatpush1.msra.mxu0 0.0
  %397 = vmatprep.subr.mxu0 0.0
  %398 = vmatpush1.msra.mxu0 0.0
  %399 = vmatprep.subr.mxu0 0.0
  %400 = vmatpush1.msra.mxu0 0.0
  %401 = vmatprep.subr.mxu0 0.0
  %402 = vmatpush1.msra.mxu0 0.0
  %403 = vmatprep.subr.mxu0 0.0
  %404 = vmatpush1.msra.mxu0 0.0
  %405 = vmatprep.subr.mxu0 0.0
  %406 = vmatpush1.msra.mxu0 0.0
  %407 = vmatprep.subr.mxu0 0.0
  %408 = vmatpush1.msra.mxu0 0.0
  %409 = vmatprep.subr.mxu0 0.0
  %410 = vmatpush1.msra.mxu0 0.0
  %411 = vmatprep.subr.mxu0 0.0
  %412 = vmatpush1.msra.mxu0 0.0
  %413 = vmatprep.subr.mxu0 0.0
  %414 = vmatpush1.msra.mxu0 0.0
  %415 = vmatprep.subr.mxu0 0.0
  %416 = vmatpush1.msra.mxu0 0.0
  %417 = vmatprep.subr.mxu0 0.0
  %418 = vmatpush1.msra.mxu0 0.0
  %419 = vmatprep.subr.mxu0 0.0
  %420 = vmatpush1.msra.mxu0 0.0
  %421 = vmatprep.subr.mxu0 0.0
  %422 = vmatpush1.msra.mxu0 0.0
  %423 = vmatprep.mubr.f32.mxu0 0.0
  %424 = vmatmul.mubr.f32.gmra.mrb[0].mxu0 %v98
  %v425 = vpop.f32.mrb[0].mxu0
  %v426 = vadd.f32 %v94, %v425
  %v427 = vpop.f32.mrb[0].mxu0
  %v428 = vadd.f32 %v94, %v427
  %429 = vdwg.mxu0
  %430 = vmatprep.subr.mxu0 %v24
  %431 = vmatpush1.msra.mxu0 %v23
  %432 = vmatprep.subr.mxu0 %v39
  %433 = vmatpush1.msra.mxu0 %v38
  %434 = vmatprep.subr.mxu0 %v54
  %435 = vmatpush1.msra.mxu0 %v53
  %436 = vmatprep.subr.mxu0 %v69
  %437 = vmatpush1.msra.mxu0 %v68
  %438 = vmatprep.subr.mxu0 %v129
  %439 = vmatpush1.msra.mxu0 %v126
  %440 = vmatprep.subr.mxu0 0.0
  %441 = vmatpush1.msra.mxu0 0.0
  %442 = vmatprep.subr.mxu0 0.0
  %443 = vmatpush1.msra.mxu0 0.0
  %444 = vmatprep.subr.mxu0 0.0
  %445 = vmatpush1.msra.mxu0 0.0
  %446 = vmatprep.subr.mxu0 0.0
  %447 = vmatpush1.msra.mxu0 0.0
  %448 = vmatprep.subr.mxu0 0.0
  %449 = vmatpush1.msra.mxu0 0.0
  %450 = vmatprep.subr.mxu0 0.0
  %451 = vmatpush1.msra.mxu0 0.0
  %452 = vmatprep.subr.mxu0 0.0
  %453 = vmatpush1.msra.mxu0 0.0
  %454 = vmatprep.subr.mxu0 0.0
  %455 = vmatpush1.msra.mxu0 0.0
  %456 = vmatprep.subr.mxu0 0.0
  %457 = vmatpush1.msra.mxu0 0.0
  %458 = vmatprep.subr.mxu0 0.0
  %459 = vmatpush1.msra.mxu0 0.0
  %460 = vmatprep.subr.mxu0 0.0
  %461 = vmatpush1.msra.mxu0 0.0
  %462 = vmatprep.subr.mxu0 0.0
  %463 = vmatpush1.msra.mxu0 0.0
  %464 = vmatprep.subr.mxu0 0.0
  %465 = vmatpush1.msra.mxu0 0.0
  %466 = vmatprep.subr.mxu0 0.0
  %467 = vmatpush1.msra.mxu0 0.0
  %468 = vmatprep.subr.mxu0 0.0
  %469 = vmatpush1.msra.mxu0 0.0
  %470 = vmatprep.subr.mxu0 0.0
  %471 = vmatpush1.msra.mxu0 0.0
  %472 = vmatprep.subr.mxu0 0.0
  %473 = vmatpush1.msra.mxu0 0.0
  %474 = vmatprep.subr.mxu0 0.0
  %475 = vmatpush1.msra.mxu0 0.0
  %476 = vmatprep.subr.mxu0 0.0
  %477 = vmatpush1.msra.mxu0 0.0
  %478 = vmatprep.subr.mxu0 0.0
  %479 = vmatpush1.msra.mxu0 0.0
  %480 = vmatprep.subr.mxu0 0.0
  %481 = vmatpush1.msra.mxu0 0.0
  %482 = vmatprep.subr.mxu0 0.0
  %483 = vmatpush1.msra.mxu0 0.0
  %484 = vmatprep.subr.mxu0 0.0
  %485 = vmatpush1.msra.mxu0 0.0
  %486 = vmatprep.subr.mxu0 0.0
  %487 = vmatpush1.msra.mxu0 0.0
  %488 = vmatprep.subr.mxu0 0.0
  %489 = vmatpush1.msra.mxu0 0.0
  %490 = vmatprep.subr.mxu0 0.0
  %491 = vmatpush1.msra.mxu0 0.0
  %492 = vmatprep.subr.mxu0 0.0
  %493 = vmatpush1.msra.mxu0 0.0
  %494 = vmatprep.mubr.f32.mxu0 0.0
  %495 = vmatmul.mubr.f32.gmra.mrb[0].mxu0 %v98
  %v496 = vpop.f32.mrb[0].mxu0
  %v497 = vadd.f32 %v94, %v496
  %v498 = vpop.f32.mrb[0].mxu0
  %v499 = vadd.f32 %v94, %v498
  %500 = vdwg.mxu0
  %501 = vmatprep.subr.mxu0 %v26
  %502 = vmatpush1.msra.mxu0 %v25
  %503 = vmatprep.subr.mxu0 %v41
  %504 = vmatpush1.msra.mxu0 %v40
  %505 = vmatprep.subr.mxu0 %v56
  %506 = vmatpush1.msra.mxu0 %v55
  %507 = vmatprep.subr.mxu0 %v71
  %508 = vmatpush1.msra.mxu0 %v70
  %509 = vmatprep.subr.mxu0 %v135
  %510 = vmatpush1.msra.mxu0 %v132
  %511 = vmatprep.subr.mxu0 0.0
  %512 = vmatpush1.msra.mxu0 0.0
  %513 = vmatprep.subr.mxu0 0.0
  %514 = vmatpush1.msra.mxu0 0.0
  %515 = vmatprep.subr.mxu0 0.0
  %516 = vmatpush1.msra.mxu0 0.0
  %517 = vmatprep.subr.mxu0 0.0
  %518 = vmatpush1.msra.mxu0 0.0
  %519 = vmatprep.subr.mxu0 0.0
  %520 = vmatpush1.msra.mxu0 0.0
  %521 = vmatprep.subr.mxu0 0.0
  %522 = vmatpush1.msra.mxu0 0.0
  %523 = vmatprep.subr.mxu0 0.0
  %524 = vmatpush1.msra.mxu0 0.0
  %525 = vmatprep.subr.mxu0 0.0
  %526 = vmatpush1.msra.mxu0 0.0
  %527 = vmatprep.subr.mxu0 0.0
  %528 = vmatpush1.msra.mxu0 0.0
  %529 = vmatprep.subr.mxu0 0.0
  %530 = vmatpush1.msra.mxu0 0.0
  %531 = vmatprep.subr.mxu0 0.0
  %532 = vmatpush1.msra.mxu0 0.0
  %533 = vmatprep.subr.mxu0 0.0
  %534 = vmatpush1.msra.mxu0 0.0
  %535 = vmatprep.subr.mxu0 0.0
  %536 = vmatpush1.msra.mxu0 0.0
  %537 = vmatprep.subr.mxu0 0.0
  %538 = vmatpush1.msra.mxu0 0.0
  %539 = vmatprep.subr.mxu0 0.0
  %540 = vmatpush1.msra.mxu0 0.0
  %541 = vmatprep.subr.mxu0 0.0
  %542 = vmatpush1.msra.mxu0 0.0
  %543 = vmatprep.subr.mxu0 0.0
  %544 = vmatpush1.msra.mxu0 0.0
  %545 = vmatprep.subr.mxu0 0.0
  %546 = vmatpush1.msra.mxu0 0.0
  %547 = vmatprep.subr.mxu0 0.0
  %548 = vmatpush1.msra.mxu0 0.0
  %549 = vmatprep.subr.mxu0 0.0
  %550 = vmatpush1.msra.mxu0 0.0
  %551 = vmatprep.subr.mxu0 0.0
  %552 = vmatpush1.msra.mxu0 0.0
  %553 = vmatprep.subr.mxu0 0.0
  %554 = vmatpush1.msra.mxu0 0.0
  %555 = vmatprep.subr.mxu0 0.0
  %556 = vmatpush1.msra.mxu0 0.0
  %557 = vmatprep.subr.mxu0 0.0
  %558 = vmatpush1.msra.mxu0 0.0
  %559 = vmatprep.subr.mxu0 0.0
  %560 = vmatpush1.msra.mxu0 0.0
  %561 = vmatprep.subr.mxu0 0.0
  %562 = vmatpush1.msra.mxu0 0.0
  %563 = vmatprep.subr.mxu0 0.0
  %564 = vmatpush1.msra.mxu0 0.0
  %565 = vmatprep.mubr.f32.mxu0 0.0
  %566 = vmatmul.mubr.f32.gmra.mrb[0].mxu0 %v98
  %v567 = vpop.f32.mrb[0].mxu0
  %v568 = vadd.f32 %v94, %v567
  %v569 = vpop.f32.mrb[0].mxu0
  %v570 = vadd.f32 %v94, %v569
  %571 = vdwg.mxu0
  %572 = vmatprep.subr.mxu0 %v28
  %573 = vmatpush1.msra.mxu0 %v27
  %574 = vmatprep.subr.mxu0 %v43
  %575 = vmatpush1.msra.mxu0 %v42
  %576 = vmatprep.subr.mxu0 %v58
  %577 = vmatpush1.msra.mxu0 %v57
  %578 = vmatprep.subr.mxu0 %v73
  %579 = vmatpush1.msra.mxu0 %v72
  %580 = vmatprep.subr.mxu0 %v141
  %581 = vmatpush1.msra.mxu0 %v138
  %582 = vmatprep.subr.mxu0 0.0
  %583 = vmatpush1.msra.mxu0 0.0
  %584 = vmatprep.subr.mxu0 0.0
  %585 = vmatpush1.msra.mxu0 0.0
  %586 = vmatprep.subr.mxu0 0.0
  %587 = vmatpush1.msra.mxu0 0.0
  %588 = vmatprep.subr.mxu0 0.0
  %589 = vmatpush1.msra.mxu0 0.0
  %590 = vmatprep.subr.mxu0 0.0
  %591 = vmatpush1.msra.mxu0 0.0
  %592 = vmatprep.subr.mxu0 0.0
  %593 = vmatpush1.msra.mxu0 0.0
  %594 = vmatprep.subr.mxu0 0.0
  %595 = vmatpush1.msra.mxu0 0.0
  %596 = vmatprep.subr.mxu0 0.0
  %597 = vmatpush1.msra.mxu0 0.0
  %598 = vmatprep.subr.mxu0 0.0
  %599 = vmatpush1.msra.mxu0 0.0
  %600 = vmatprep.subr.mxu0 0.0
  %601 = vmatpush1.msra.mxu0 0.0
  %602 = vmatprep.subr.mxu0 0.0
  %603 = vmatpush1.msra.mxu0 0.0
  %604 = vmatprep.subr.mxu0 0.0
  %605 = vmatpush1.msra.mxu0 0.0
  %606 = vmatprep.subr.mxu0 0.0
  %607 = vmatpush1.msra.mxu0 0.0
  %608 = vmatprep.subr.mxu0 0.0
  %609 = vmatpush1.msra.mxu0 0.0
  %610 = vmatprep.subr.mxu0 0.0
  %611 = vmatpush1.msra.mxu0 0.0
  %612 = vmatprep.subr.mxu0 0.0
  %613 = vmatpush1.msra.mxu0 0.0
  %614 = vmatprep.subr.mxu0 0.0
  %615 = vmatpush1.msra.mxu0 0.0
  %616 = vmatprep.subr.mxu0 0.0
  %617 = vmatpush1.msra.mxu0 0.0
  %618 = vmatprep.subr.mxu0 0.0
  %619 = vmatpush1.msra.mxu0 0.0
  %620 = vmatprep.subr.mxu0 0.0
  %621 = vmatpush1.msra.mxu0 0.0
  %622 = vmatprep.subr.mxu0 0.0
  %623 = vmatpush1.msra.mxu0 0.0
  %624 = vmatprep.subr.mxu0 0.0
  %625 = vmatpush1.msra.mxu0 0.0
  %626 = vmatprep.subr.mxu0 0.0
  %627 = vmatpush1.msra.mxu0 0.0
  %628 = vmatprep.subr.mxu0 0.0
  %629 = vmatpush1.msra.mxu0 0.0
  %630 = vmatprep.subr.mxu0 0.0
  %631 = vmatpush1.msra.mxu0 0.0
  %632 = vmatprep.subr.mxu0 0.0
  %633 = vmatpush1.msra.mxu0 0.0
  %634 = vmatprep.subr.mxu0 0.0
  %635 = vmatpush1.msra.mxu0 0.0
  %636 = vmatprep.mubr.f32.mxu0 0.0
  %637 = vmatmul.mubr.f32.gmra.mrb[0].mxu0 %v98
  %v638 = vpop.f32.mrb[0].mxu0
  %v639 = vadd.f32 %v94, %v638
  %v640 = vpop.f32.mrb[0].mxu0
  %v641 = vadd.f32 %v94, %v640
  %642 = vdwg.mxu0
  %643 = vmatprep.subr.mxu0 0.0
  %644 = vmatpush1.msra.mxu0 %v29
  %645 = vmatprep.subr.mxu0 0.0
  %646 = vmatpush1.msra.mxu0 %v44
  %647 = vmatprep.subr.mxu0 0.0
  %648 = vmatpush1.msra.mxu0 %v59
  %649 = vmatprep.subr.mxu0 0.0
  %650 = vmatpush1.msra.mxu0 %v74
  %651 = vmatprep.subr.mxu0 0.0
  %652 = vmatpush1.msra.mxu0 %v144
  %653 = vmatprep.subr.mxu0 0.0
  %654 = vmatpush1.msra.mxu0 0.0
  %655 = vmatprep.subr.mxu0 0.0
  %656 = vmatpush1.msra.mxu0 0.0
  %657 = vmatprep.subr.mxu0 0.0
  %658 = vmatpush1.msra.mxu0 0.0
  %659 = vmatprep.subr.mxu0 0.0
  %660 = vmatpush1.msra.mxu0 0.0
  %661 = vmatprep.subr.mxu0 0.0
  %662 = vmatpush1.msra.mxu0 0.0
  %663 = vmatprep.subr.mxu0 0.0
  %664 = vmatpush1.msra.mxu0 0.0
  %665 = vmatprep.subr.mxu0 0.0
  %666 = vmatpush1.msra.mxu0 0.0
  %667 = vmatprep.subr.mxu0 0.0
  %668 = vmatpush1.msra.mxu0 0.0
  %669 = vmatprep.subr.mxu0 0.0
  %670 = vmatpush1.msra.mxu0 0.0
  %671 = vmatprep.subr.mxu0 0.0
  %672 = vmatpush1.msra.mxu0 0.0
  %673 = vmatprep.subr.mxu0 0.0
  %674 = vmatpush1.msra.mxu0 0.0
  %675 = vmatprep.subr.mxu0 0.0
  %676 = vmatpush1.msra.mxu0 0.0
  %677 = vmatprep.subr.mxu0 0.0
  %678 = vmatpush1.msra.mxu0 0.0
  %679 = vmatprep.subr.mxu0 0.0
  %680 = vmatpush1.msra.mxu0 0.0
  %681 = vmatprep.subr.mxu0 0.0
  %682 = vmatpush1.msra.mxu0 0.0
  %683 = vmatprep.subr.mxu0 0.0
  %684 = vmatpush1.msra.mxu0 0.0
  %685 = vmatprep.subr.mxu0 0.0
  %686 = vmatpush1.msra.mxu0 0.0
  %687 = vmatprep.subr.mxu0 0.0
  %688 = vmatpush1.msra.mxu0 0.0
  %689 = vmatprep.subr.mxu0 0.0
  %690 = vmatpush1.msra.mxu0 0.0
  %691 = vmatprep.subr.mxu0 0.0
  %692 = vmatpush1.msra.mxu0 0.0
  %693 = vmatprep.subr.mxu0 0.0
  %694 = vmatpush1.msra.mxu0 0.0
  %695 = vmatprep.subr.mxu0 0.0
  %696 = vmatpush1.msra.mxu0 0.0
  %697 = vmatprep.subr.mxu0 0.0
  %698 = vmatpush1.msra.mxu0 0.0
  %699 = vmatprep.subr.mxu0 0.0
  %700 = vmatpush1.msra.mxu0 0.0
  %701 = vmatprep.subr.mxu0 0.0
  %702 = vmatpush1.msra.mxu0 0.0
  %703 = vmatprep.subr.mxu0 0.0
  %704 = vmatpush1.msra.mxu0 0.0
  %705 = vmatprep.subr.mxu0 0.0
  %706 = vmatpush1.msra.mxu0 0.0
  %707 = vmatprep.mubr.f32.mxu0 0.0
  %708 = vmatmul.mubr.f32.gmra.mrb[0].mxu0 %v98
  %v709 = vpop.f32.mrb[0].mxu0
  %v710 = vadd.f32 %v94, %v709
  %v711 = vpop.f32.mrb[0].mxu0
  %712 = vdwg.mxu0
  %v727 = vcombine.low %v213, %v215
  %v728 = vcombine.low %v284, %v286
  %v729 = vcombine.low %v355, %v357
  %v730 = vcombine.low %v426, %v428
  %v731 = vcombine.low %v497, %v499
  %v732 = vcombine.low %v568, %v570
  %v733 = vcombine.low %v639, %v641
  %741 = vst [vmem:[%s3] sm:$0xff] %v727
  %742 = vst [vmem:[%s3 + $0x8] sm:$0xff] %v728
  %743 = vst [vmem:[%s3 + $0x10] sm:$0xff] %v729
  %744 = vst [vmem:[%s3 + $0x18] sm:$0xff] %v730
  %745 = vst [vmem:[%s3 + $0x20] sm:$0xff] %v731
  %746 = vst [vmem:[%s3 + $0x28] sm:$0xff] %v732
  %747 = vst [vmem:[%s3 + $0x30] sm:$0xff] %v733
  %748 = vst [vmem:[%s3 + $0x38] sm:$0xf] %v710
  // Predicated region
  $region14: #{net_forward_pallas.84} parent=0 // pred_check
    _
  $region15: #{net_forward_pallas.84} parent=0 // pred_check_branch
    %750 = sbr.rel (0) target = $region17
  $region16: #{net_forward_pallas.84} parent=0 // pred_region
    _
  $region17: #{net_forward_pallas.84} parent=0 // pred_fallthru
    _
  // Predicated region
  $region18: #{net_forward_pallas.84} parent=0 // pred_check
    _
  $region19: #{net_forward_pallas.84} parent=0 // pred_check_branch
    %752 = sbr.rel (0) target = $region21
  $region20: #{net_forward_pallas.84} parent=0 // pred_region
    _
  $region21: #{net_forward_pallas.84} parent=0 // pred_fallthru
    _

// kernel: net_forward_pallas.85
$region0: #{net_forward_pallas.85}
  #allocation0 [shape = 'u32[]', space=smem, size = 0x4, offset = 0x4, fixed_abs, tag = 'smem constant byte address 0x4 - core index']
  #allocation1 [shape = 'u32[144,128]{1,0:T(1,128)}', space=vmem, size = 0x12000, scoped, tag = 'internal scratch']
  %s0 = inlined_call_operand.vmem [shape: f32[4,36], index: 0, kind: input, shape index: {}]
  %s1 = inlined_call_operand.vmem [shape: f32[36,1664], index: 1, kind: input, shape index: {}]
  %s2 = inlined_call_operand.vmem [shape: f32[4,1], index: 2, kind: input, shape index: {}]
  %s3 = inlined_call_operand.vmem [shape: f32[4,1664], index: 3, kind: output, shape index: {}]
  %s4 = sld [smem:[#allocation0]]
  $region22: #{net_forward_pallas.85} parent=0
    _
  %s6 = ssub.s32 1, %s4
  %s7 = scalar_select 0, %s6, %s4
  // Predicated region
  $region2: #{net_forward_pallas.85} parent=0 // pred_check
    _
  $region3: #{net_forward_pallas.85} parent=0 // pred_check_branch
    %9 = sbr.rel (0) target = $region5
  $region4: #{net_forward_pallas.85} parent=0 // pred_region
    _
  $region5: #{net_forward_pallas.85} parent=0 // pred_fallthru
    _
  // Predicated region
  $region6: #{net_forward_pallas.85} parent=0 // pred_check
    _
  $region7: #{net_forward_pallas.85} parent=0 // pred_check_branch
    %11 = sbr.rel (0) target = $region9
  $region8: #{net_forward_pallas.85} parent=0 // pred_region
    _
  $region9: #{net_forward_pallas.85} parent=0 // pred_fallthru
    _
  // Predicated region
  $region10: #{net_forward_pallas.85} parent=0 // pred_check
    _
  $region11: #{net_forward_pallas.85} parent=0 // pred_check_branch
    %13 = sbr.rel (0) target = $region13
  $region12: #{net_forward_pallas.85} parent=0 // pred_region
    _
  $region13: #{net_forward_pallas.85} parent=0 // pred_fallthru
    _
  %v14 = vld [vmem:[%s0] sm:$0xf]
  %v15 = vld [vmem:[%s1] sm:$0xff]
  %v16 = vld [vmem:[%s1 + $0x8] sm:$0xff]
  %v17 = vld [vmem:[%s1 + $0x10] sm:$0xff]
  %v18 = vld [vmem:[%s1 + $0x18] sm:$0xff]
  %v19 = vld [vmem:[%s1 + $0x20] sm:$0xff]
  %v20 = vld [vmem:[%s1 + $0x28] sm:$0xff]
  %v21 = vld [vmem:[%s1 + $0x30] sm:$0xff]
  %v22 = vld [vmem:[%s1 + $0x38] sm:$0xff]
  %v23 = vld [vmem:[%s1 + $0x40] sm:$0xff]
  %v24 = vld [vmem:[%s1 + $0x48] sm:$0xff]
  %v25 = vld [vmem:[%s1 + $0x50] sm:$0xff]
  %v26 = vld [vmem:[%s1 + $0x58] sm:$0xff]
  %v27 = vld [vmem:[%s1 + $0x60] sm:$0xff]
  %v28 = vld [vmem:[%s1 + $0x68] sm:$0xff]
  %v29 = vld [vmem:[%s1 + $0x70] sm:$0xff]
  %v30 = vld [vmem:[%s1 + $0x78] sm:$0xff]
  %v31 = vld [vmem:[%s1 + $0x80] sm:$0xff]
  %v32 = vld [vmem:[%s1 + $0x88] sm:$0xff]
  %v33 = vld [vmem:[%s1 + $0x90] sm:$0xff]
  %v34 = vld [vmem:[%s1 + $0x98] sm:$0xff]
  %v35 = vld [vmem:[%s1 + $0xa0] sm:$0xff]
  %v36 = vld [vmem:[%s1 + $0xa8] sm:$0xff]
  %v37 = vld [vmem:[%s1 + $0xb0] sm:$0xff]
  %v38 = vld [vmem:[%s1 + $0xb8] sm:$0xff]
  %v39 = vld [vmem:[%s1 + $0xc0] sm:$0xff]
  %v40 = vld [vmem:[%s1 + $0xc8] sm:$0xff]
  %v41 = vld [vmem:[%s1 + $0xd0] sm:$0xff]
  %v42 = vld [vmem:[%s1 + $0xd8] sm:$0xff]
  %v43 = vld [vmem:[%s1 + $0xe0] sm:$0xff]
  %v44 = vld [vmem:[%s1 + $0xe8] sm:$0xff]
  %v45 = vld [vmem:[%s1 + $0xf0] sm:$0xff]
  %v46 = vld [vmem:[%s1 + $0xf8] sm:$0xff]
  %v47 = vld [vmem:[%s1 + $0x100] sm:$0xff]
  %v48 = vld [vmem:[%s1 + $0x108] sm:$0xff]
  %v49 = vld [vmem:[%s1 + $0x110] sm:$0xff]
  %v50 = vld [vmem:[%s1 + $0x118] sm:$0xff]
  %v51 = vld [vmem:[%s1 + $0x120] sm:$0xff]
  %v52 = vld [vmem:[%s1 + $0x128] sm:$0xff]
  %v53 = vld [vmem:[%s1 + $0x130] sm:$0xff]
  %v54 = vld [vmem:[%s1 + $0x138] sm:$0xff]
  %v55 = vld [vmem:[%s1 + $0x140] sm:$0xff]
  %v56 = vld [vmem:[%s1 + $0x148] sm:$0xff]
  %v57 = vld [vmem:[%s1 + $0x150] sm:$0xff]
  %v58 = vld [vmem:[%s1 + $0x158] sm:$0xff]
  %v59 = vld [vmem:[%s1 + $0x160] sm:$0xff]
  %v60 = vld [vmem:[%s1 + $0x168] sm:$0xff]
  %v61 = vld [vmem:[%s1 + $0x170] sm:$0xff]
  %v62 = vld [vmem:[%s1 + $0x178] sm:$0xff]
  %v63 = vld [vmem:[%s1 + $0x180] sm:$0xff]
  %v64 = vld [vmem:[%s1 + $0x188] sm:$0xff]
  %v65 = vld [vmem:[%s1 + $0x190] sm:$0xff]
  %v66 = vld [vmem:[%s1 + $0x198] sm:$0xff]
  %v67 = vld [vmem:[%s1 + $0x1a0] sm:$0xf]
  %v68 = vld [vmem:[%s1 + $0x1a8] sm:$0xf]
  %v69 = vld [vmem:[%s1 + $0x1b0] sm:$0xf]
  %v70 = vld [vmem:[%s1 + $0x1b8] sm:$0xf]
  %v71 = vld [vmem:[%s1 + $0x1c0] sm:$0xf]
  %v72 = vld [vmem:[%s1 + $0x1c8] sm:$0xf]
  %v73 = vld [vmem:[%s1 + $0x1d0] sm:$0xf]
  %v74 = vld [vmem:[%s1 + $0x1d8] sm:$0xf]
  %v75 = vld [vmem:[%s1 + $0x1e0] sm:$0xf]
  %v76 = vld [vmem:[%s1 + $0x1e8] sm:$0xf]
  %v77 = vld [vmem:[%s1 + $0x1f0] sm:$0xf]
  %v78 = vld [vmem:[%s1 + $0x1f8] sm:$0xf]
  %v79 = vld [vmem:[%s1 + $0x200] sm:$0xf]
  %v80 = vld [vmem:[%s2] sm:$0xf]
  %82 = vset.pattern.permute.xlu0 0
  %83 = vperm.xlu0 %82, %v80
  %v84 = vpop.permute.xlu0 %83
  %vm86 = vcmask 293888
  %v88 = vsel %vm86, %v14, 0
  %vm90 = vcmask 1043456
  %v92 = vsel %vm90, %v67, 0
  %v95 = vsel %vm90, %v68, 0
  %v98 = vsel %vm90, %v69, 0
  %v101 = vsel %vm90, %v70, 0
  %v104 = vsel %vm90, %v71, 0
  %v107 = vsel %vm90, %v72, 0
  %v110 = vsel %vm90, %v73, 0
  %v113 = vsel %vm90, %v74, 0
  %v116 = vsel %vm90, %v75, 0
  %v119 = vsel %vm90, %v76, 0
  %v122 = vsel %vm90, %v77, 0
  %v125 = vsel %vm90, %v78, 0
  %v128 = vsel %vm90, %v79, 0
  %130 = vmatprep.subr.mxu0 %v16
  %131 = vmatpush1.msra.mxu0 %v15
  %132 = vmatprep.subr.mxu0 %v29
  %133 = vmatpush1.msra.mxu0 %v28
  %134 = vmatprep.subr.mxu0 %v42
  %135 = vmatpush1.msra.mxu0 %v41
  %136 = vmatprep.subr.mxu0 %v55
  %137 = vmatpush1.msra.mxu0 %v54
  %138 = vmatprep.subr.mxu0 %v95
  %139 = vmatpush1.msra.mxu0 %v92
  %140 = vmatprep.subr.mxu0 0.0
  %141 = vmatpush1.msra.mxu0 0.0
  %142 = vmatprep.subr.mxu0 0.0
  %143 = vmatpush1.msra.mxu0 0.0
  %144 = vmatprep.subr.mxu0 0.0
  %145 = vmatpush1.msra.mxu0 0.0
  %146 = vmatprep.subr.mxu0 0.0
  %147 = vmatpush1.msra.mxu0 0.0
  %148 = vmatprep.subr.mxu0 0.0
  %149 = vmatpush1.msra.mxu0 0.0
  %150 = vmatprep.subr.mxu0 0.0
  %151 = vmatpush1.msra.mxu0 0.0
  %152 = vmatprep.subr.mxu0 0.0
  %153 = vmatpush1.msra.mxu0 0.0
  %154 = vmatprep.subr.mxu0 0.0
  %155 = vmatpush1.msra.mxu0 0.0
  %156 = vmatprep.subr.mxu0 0.0
  %157 = vmatpush1.msra.mxu0 0.0
  %158 = vmatprep.subr.mxu0 0.0
  %159 = vmatpush1.msra.mxu0 0.0
  %160 = vmatprep.subr.mxu0 0.0
  %161 = vmatpush1.msra.mxu0 0.0
  %162 = vmatprep.subr.mxu0 0.0
  %163 = vmatpush1.msra.mxu0 0.0
  %164 = vmatprep.subr.mxu0 0.0
  %165 = vmatpush1.msra.mxu0 0.0
  %166 = vmatprep.subr.mxu0 0.0
  %167 = vmatpush1.msra.mxu0 0.0
  %168 = vmatprep.subr.mxu0 0.0
  %169 = vmatpush1.msra.mxu0 0.0
  %170 = vmatprep.subr.mxu0 0.0
  %171 = vmatpush1.msra.mxu0 0.0
  %172 = vmatprep.subr.mxu0 0.0
  %173 = vmatpush1.msra.mxu0 0.0
  %174 = vmatprep.subr.mxu0 0.0
  %175 = vmatpush1.msra.mxu0 0.0
  %176 = vmatprep.subr.mxu0 0.0
  %177 = vmatpush1.msra.mxu0 0.0
  %178 = vmatprep.subr.mxu0 0.0
  %179 = vmatpush1.msra.mxu0 0.0
  %180 = vmatprep.subr.mxu0 0.0
  %181 = vmatpush1.msra.mxu0 0.0
  %182 = vmatprep.subr.mxu0 0.0
  %183 = vmatpush1.msra.mxu0 0.0
  %184 = vmatprep.subr.mxu0 0.0
  %185 = vmatpush1.msra.mxu0 0.0
  %186 = vmatprep.subr.mxu0 0.0
  %187 = vmatpush1.msra.mxu0 0.0
  %188 = vmatprep.subr.mxu0 0.0
  %189 = vmatpush1.msra.mxu0 0.0
  %190 = vmatprep.subr.mxu0 0.0
  %191 = vmatpush1.msra.mxu0 0.0
  %192 = vmatprep.subr.mxu0 0.0
  %193 = vmatpush1.msra.mxu0 0.0
  %194 = vmatprep.mubr.f32.mxu0 0.0
  %195 = vmatmul.mubr.f32.gmra.mrb[0].mxu0 %v88
  %v196 = vpop.f32.mrb[0].mxu0
  %v197 = vadd.f32 %v84, %v196
  %v198 = vpop.f32.mrb[0].mxu0
  %v199 = vadd.f32 %v84, %v198
  %200 = vdwg.mxu0
  %201 = vmatprep.subr.mxu0 %v18
  %202 = vmatpush1.msra.mxu0 %v17
  %203 = vmatprep.subr.mxu0 %v31
  %204 = vmatpush1.msra.mxu0 %v30
  %205 = vmatprep.subr.mxu0 %v44
  %206 = vmatpush1.msra.mxu0 %v43
  %207 = vmatprep.subr.mxu0 %v57
  %208 = vmatpush1.msra.mxu0 %v56
  %209 = vmatprep.subr.mxu0 %v101
  %210 = vmatpush1.msra.mxu0 %v98
  %211 = vmatprep.subr.mxu0 0.0
  %212 = vmatpush1.msra.mxu0 0.0
  %213 = vmatprep.subr.mxu0 0.0
  %214 = vmatpush1.msra.mxu0 0.0
  %215 = vmatprep.subr.mxu0 0.0
  %216 = vmatpush1.msra.mxu0 0.0
  %217 = vmatprep.subr.mxu0 0.0
  %218 = vmatpush1.msra.mxu0 0.0
  %219 = vmatprep.subr.mxu0 0.0
  %220 = vmatpush1.msra.mxu0 0.0
  %221 = vmatprep.subr.mxu0 0.0
  %222 = vmatpush1.msra.mxu0 0.0
  %223 = vmatprep.subr.mxu0 0.0
  %224 = vmatpush1.msra.mxu0 0.0
  %225 = vmatprep.subr.mxu0 0.0
  %226 = vmatpush1.msra.mxu0 0.0
  %227 = vmatprep.subr.mxu0 0.0
  %228 = vmatpush1.msra.mxu0 0.0
  %229 = vmatprep.subr.mxu0 0.0
  %230 = vmatpush1.msra.mxu0 0.0
  %231 = vmatprep.subr.mxu0 0.0
  %232 = vmatpush1.msra.mxu0 0.0
  %233 = vmatprep.subr.mxu0 0.0
  %234 = vmatpush1.msra.mxu0 0.0
  %235 = vmatprep.subr.mxu0 0.0
  %236 = vmatpush1.msra.mxu0 0.0
  %237 = vmatprep.subr.mxu0 0.0
  %238 = vmatpush1.msra.mxu0 0.0
  %239 = vmatprep.subr.mxu0 0.0
  %240 = vmatpush1.msra.mxu0 0.0
  %241 = vmatprep.subr.mxu0 0.0
  %242 = vmatpush1.msra.mxu0 0.0
  %243 = vmatprep.subr.mxu0 0.0
  %244 = vmatpush1.msra.mxu0 0.0
  %245 = vmatprep.subr.mxu0 0.0
  %246 = vmatpush1.msra.mxu0 0.0
  %247 = vmatprep.subr.mxu0 0.0
  %248 = vmatpush1.msra.mxu0 0.0
  %249 = vmatprep.subr.mxu0 0.0
  %250 = vmatpush1.msra.mxu0 0.0
  %251 = vmatprep.subr.mxu0 0.0
  %252 = vmatpush1.msra.mxu0 0.0
  %253 = vmatprep.subr.mxu0 0.0
  %254 = vmatpush1.msra.mxu0 0.0
  %255 = vmatprep.subr.mxu0 0.0
  %256 = vmatpush1.msra.mxu0 0.0
  %257 = vmatprep.subr.mxu0 0.0
  %258 = vmatpush1.msra.mxu0 0.0
  %259 = vmatprep.subr.mxu0 0.0
  %260 = vmatpush1.msra.mxu0 0.0
  %261 = vmatprep.subr.mxu0 0.0
  %262 = vmatpush1.msra.mxu0 0.0
  %263 = vmatprep.subr.mxu0 0.0
  %264 = vmatpush1.msra.mxu0 0.0
  %265 = vmatprep.mubr.f32.mxu0 0.0
  %266 = vmatmul.mubr.f32.gmra.mrb[0].mxu0 %v88
  %v267 = vpop.f32.mrb[0].mxu0
  %v268 = vadd.f32 %v84, %v267
  %v269 = vpop.f32.mrb[0].mxu0
  %v270 = vadd.f32 %v84, %v269
  %271 = vdwg.mxu0
  %272 = vmatprep.subr.mxu0 %v20
  %273 = vmatpush1.msra.mxu0 %v19
  %274 = vmatprep.subr.mxu0 %v33
  %275 = vmatpush1.msra.mxu0 %v32
  %276 = vmatprep.subr.mxu0 %v46
  %277 = vmatpush1.msra.mxu0 %v45
  %278 = vmatprep.subr.mxu0 %v59
  %279 = vmatpush1.msra.mxu0 %v58
  %280 = vmatprep.subr.mxu0 %v107
  %281 = vmatpush1.msra.mxu0 %v104
  %282 = vmatprep.subr.mxu0 0.0
  %283 = vmatpush1.msra.mxu0 0.0
  %284 = vmatprep.subr.mxu0 0.0
  %285 = vmatpush1.msra.mxu0 0.0
  %286 = vmatprep.subr.mxu0 0.0
  %287 = vmatpush1.msra.mxu0 0.0
  %288 = vmatprep.subr.mxu0 0.0
  %289 = vmatpush1.msra.mxu0 0.0
  %290 = vmatprep.subr.mxu0 0.0
  %291 = vmatpush1.msra.mxu0 0.0
  %292 = vmatprep.subr.mxu0 0.0
  %293 = vmatpush1.msra.mxu0 0.0
  %294 = vmatprep.subr.mxu0 0.0
  %295 = vmatpush1.msra.mxu0 0.0
  %296 = vmatprep.subr.mxu0 0.0
  %297 = vmatpush1.msra.mxu0 0.0
  %298 = vmatprep.subr.mxu0 0.0
  %299 = vmatpush1.msra.mxu0 0.0
  %300 = vmatprep.subr.mxu0 0.0
  %301 = vmatpush1.msra.mxu0 0.0
  %302 = vmatprep.subr.mxu0 0.0
  %303 = vmatpush1.msra.mxu0 0.0
  %304 = vmatprep.subr.mxu0 0.0
  %305 = vmatpush1.msra.mxu0 0.0
  %306 = vmatprep.subr.mxu0 0.0
  %307 = vmatpush1.msra.mxu0 0.0
  %308 = vmatprep.subr.mxu0 0.0
  %309 = vmatpush1.msra.mxu0 0.0
  %310 = vmatprep.subr.mxu0 0.0
  %311 = vmatpush1.msra.mxu0 0.0
  %312 = vmatprep.subr.mxu0 0.0
  %313 = vmatpush1.msra.mxu0 0.0
  %314 = vmatprep.subr.mxu0 0.0
  %315 = vmatpush1.msra.mxu0 0.0
  %316 = vmatprep.subr.mxu0 0.0
  %317 = vmatpush1.msra.mxu0 0.0
  %318 = vmatprep.subr.mxu0 0.0
  %319 = vmatpush1.msra.mxu0 0.0
  %320 = vmatprep.subr.mxu0 0.0
  %321 = vmatpush1.msra.mxu0 0.0
  %322 = vmatprep.subr.mxu0 0.0
  %323 = vmatpush1.msra.mxu0 0.0
  %324 = vmatprep.subr.mxu0 0.0
  %325 = vmatpush1.msra.mxu0 0.0
  %326 = vmatprep.subr.mxu0 0.0
  %327 = vmatpush1.msra.mxu0 0.0
  %328 = vmatprep.subr.mxu0 0.0
  %329 = vmatpush1.msra.mxu0 0.0
  %330 = vmatprep.subr.mxu0 0.0
  %331 = vmatpush1.msra.mxu0 0.0
  %332 = vmatprep.subr.mxu0 0.0
  %333 = vmatpush1.msra.mxu0 0.0
  %334 = vmatprep.subr.mxu0 0.0
  %335 = vmatpush1.msra.mxu0 0.0
  %336 = vmatprep.mubr.f32.mxu0 0.0
  %337 = vmatmul.mubr.f32.gmra.mrb[0].mxu0 %v88
  %v338 = vpop.f32.mrb[0].mxu0
  %v339 = vadd.f32 %v84, %v338
  %v340 = vpop.f32.mrb[0].mxu0
  %v341 = vadd.f32 %v84, %v340
  %342 = vdwg.mxu0
  %343 = vmatprep.subr.mxu0 %v22
  %344 = vmatpush1.msra.mxu0 %v21
  %345 = vmatprep.subr.mxu0 %v35
  %346 = vmatpush1.msra.mxu0 %v34
  %347 = vmatprep.subr.mxu0 %v48
  %348 = vmatpush1.msra.mxu0 %v47
  %349 = vmatprep.subr.mxu0 %v61
  %350 = vmatpush1.msra.mxu0 %v60
  %351 = vmatprep.subr.mxu0 %v113
  %352 = vmatpush1.msra.mxu0 %v110
  %353 = vmatprep.subr.mxu0 0.0
  %354 = vmatpush1.msra.mxu0 0.0
  %355 = vmatprep.subr.mxu0 0.0
  %356 = vmatpush1.msra.mxu0 0.0
  %357 = vmatprep.subr.mxu0 0.0
  %358 = vmatpush1.msra.mxu0 0.0
  %359 = vmatprep.subr.mxu0 0.0
  %360 = vmatpush1.msra.mxu0 0.0
  %361 = vmatprep.subr.mxu0 0.0
  %362 = vmatpush1.msra.mxu0 0.0
  %363 = vmatprep.subr.mxu0 0.0
  %364 = vmatpush1.msra.mxu0 0.0
  %365 = vmatprep.subr.mxu0 0.0
  %366 = vmatpush1.msra.mxu0 0.0
  %367 = vmatprep.subr.mxu0 0.0
  %368 = vmatpush1.msra.mxu0 0.0
  %369 = vmatprep.subr.mxu0 0.0
  %370 = vmatpush1.msra.mxu0 0.0
  %371 = vmatprep.subr.mxu0 0.0
  %372 = vmatpush1.msra.mxu0 0.0
  %373 = vmatprep.subr.mxu0 0.0
  %374 = vmatpush1.msra.mxu0 0.0
  %375 = vmatprep.subr.mxu0 0.0
  %376 = vmatpush1.msra.mxu0 0.0
  %377 = vmatprep.subr.mxu0 0.0
  %378 = vmatpush1.msra.mxu0 0.0
  %379 = vmatprep.subr.mxu0 0.0
  %380 = vmatpush1.msra.mxu0 0.0
  %381 = vmatprep.subr.mxu0 0.0
  %382 = vmatpush1.msra.mxu0 0.0
  %383 = vmatprep.subr.mxu0 0.0
  %384 = vmatpush1.msra.mxu0 0.0
  %385 = vmatprep.subr.mxu0 0.0
  %386 = vmatpush1.msra.mxu0 0.0
  %387 = vmatprep.subr.mxu0 0.0
  %388 = vmatpush1.msra.mxu0 0.0
  %389 = vmatprep.subr.mxu0 0.0
  %390 = vmatpush1.msra.mxu0 0.0
  %391 = vmatprep.subr.mxu0 0.0
  %392 = vmatpush1.msra.mxu0 0.0
  %393 = vmatprep.subr.mxu0 0.0
  %394 = vmatpush1.msra.mxu0 0.0
  %395 = vmatprep.subr.mxu0 0.0
  %396 = vmatpush1.msra.mxu0 0.0
  %397 = vmatprep.subr.mxu0 0.0
  %398 = vmatpush1.msra.mxu0 0.0
  %399 = vmatprep.subr.mxu0 0.0
  %400 = vmatpush1.msra.mxu0 0.0
  %401 = vmatprep.subr.mxu0 0.0
  %402 = vmatpush1.msra.mxu0 0.0
  %403 = vmatprep.subr.mxu0 0.0
  %404 = vmatpush1.msra.mxu0 0.0
  %405 = vmatprep.subr.mxu0 0.0
  %406 = vmatpush1.msra.mxu0 0.0
  %407 = vmatprep.mubr.f32.mxu0 0.0
  %408 = vmatmul.mubr.f32.gmra.mrb[0].mxu0 %v88
  %v409 = vpop.f32.mrb[0].mxu0
  %v410 = vadd.f32 %v84, %v409
  %v411 = vpop.f32.mrb[0].mxu0
  %v412 = vadd.f32 %v84, %v411
  %413 = vdwg.mxu0
  %414 = vmatprep.subr.mxu0 %v24
  %415 = vmatpush1.msra.mxu0 %v23
  %416 = vmatprep.subr.mxu0 %v37
  %417 = vmatpush1.msra.mxu0 %v36
  %418 = vmatprep.subr.mxu0 %v50
  %419 = vmatpush1.msra.mxu0 %v49
  %420 = vmatprep.subr.mxu0 %v63
  %421 = vmatpush1.msra.mxu0 %v62
  %422 = vmatprep.subr.mxu0 %v119
  %423 = vmatpush1.msra.mxu0 %v116
  %424 = vmatprep.subr.mxu0 0.0
  %425 = vmatpush1.msra.mxu0 0.0
  %426 = vmatprep.subr.mxu0 0.0
  %427 = vmatpush1.msra.mxu0 0.0
  %428 = vmatprep.subr.mxu0 0.0
  %429 = vmatpush1.msra.mxu0 0.0
  %430 = vmatprep.subr.mxu0 0.0
  %431 = vmatpush1.msra.mxu0 0.0
  %432 = vmatprep.subr.mxu0 0.0
  %433 = vmatpush1.msra.mxu0 0.0
  %434 = vmatprep.subr.mxu0 0.0
  %435 = vmatpush1.msra.mxu0 0.0
  %436 = vmatprep.subr.mxu0 0.0
  %437 = vmatpush1.msra.mxu0 0.0
  %438 = vmatprep.subr.mxu0 0.0
  %439 = vmatpush1.msra.mxu0 0.0
  %440 = vmatprep.subr.mxu0 0.0
  %441 = vmatpush1.msra.mxu0 0.0
  %442 = vmatprep.subr.mxu0 0.0
  %443 = vmatpush1.msra.mxu0 0.0
  %444 = vmatprep.subr.mxu0 0.0
  %445 = vmatpush1.msra.mxu0 0.0
  %446 = vmatprep.subr.mxu0 0.0
  %447 = vmatpush1.msra.mxu0 0.0
  %448 = vmatprep.subr.mxu0 0.0
  %449 = vmatpush1.msra.mxu0 0.0
  %450 = vmatprep.subr.mxu0 0.0
  %451 = vmatpush1.msra.mxu0 0.0
  %452 = vmatprep.subr.mxu0 0.0
  %453 = vmatpush1.msra.mxu0 0.0
  %454 = vmatprep.subr.mxu0 0.0
  %455 = vmatpush1.msra.mxu0 0.0
  %456 = vmatprep.subr.mxu0 0.0
  %457 = vmatpush1.msra.mxu0 0.0
  %458 = vmatprep.subr.mxu0 0.0
  %459 = vmatpush1.msra.mxu0 0.0
  %460 = vmatprep.subr.mxu0 0.0
  %461 = vmatpush1.msra.mxu0 0.0
  %462 = vmatprep.subr.mxu0 0.0
  %463 = vmatpush1.msra.mxu0 0.0
  %464 = vmatprep.subr.mxu0 0.0
  %465 = vmatpush1.msra.mxu0 0.0
  %466 = vmatprep.subr.mxu0 0.0
  %467 = vmatpush1.msra.mxu0 0.0
  %468 = vmatprep.subr.mxu0 0.0
  %469 = vmatpush1.msra.mxu0 0.0
  %470 = vmatprep.subr.mxu0 0.0
  %471 = vmatpush1.msra.mxu0 0.0
  %472 = vmatprep.subr.mxu0 0.0
  %473 = vmatpush1.msra.mxu0 0.0
  %474 = vmatprep.subr.mxu0 0.0
  %475 = vmatpush1.msra.mxu0 0.0
  %476 = vmatprep.subr.mxu0 0.0
  %477 = vmatpush1.msra.mxu0 0.0
  %478 = vmatprep.mubr.f32.mxu0 0.0
  %479 = vmatmul.mubr.f32.gmra.mrb[0].mxu0 %v88
  %v480 = vpop.f32.mrb[0].mxu0
  %v481 = vadd.f32 %v84, %v480
  %v482 = vpop.f32.mrb[0].mxu0
  %v483 = vadd.f32 %v84, %v482
  %484 = vdwg.mxu0
  %485 = vmatprep.subr.mxu0 %v26
  %486 = vmatpush1.msra.mxu0 %v25
  %487 = vmatprep.subr.mxu0 %v39
  %488 = vmatpush1.msra.mxu0 %v38
  %489 = vmatprep.subr.mxu0 %v52
  %490 = vmatpush1.msra.mxu0 %v51
  %491 = vmatprep.subr.mxu0 %v65
  %492 = vmatpush1.msra.mxu0 %v64
  %493 = vmatprep.subr.mxu0 %v125
  %494 = vmatpush1.msra.mxu0 %v122
  %495 = vmatprep.subr.mxu0 0.0
  %496 = vmatpush1.msra.mxu0 0.0
  %497 = vmatprep.subr.mxu0 0.0
  %498 = vmatpush1.msra.mxu0 0.0
  %499 = vmatprep.subr.mxu0 0.0
  %500 = vmatpush1.msra.mxu0 0.0
  %501 = vmatprep.subr.mxu0 0.0
  %502 = vmatpush1.msra.mxu0 0.0
  %503 = vmatprep.subr.mxu0 0.0
  %504 = vmatpush1.msra.mxu0 0.0
  %505 = vmatprep.subr.mxu0 0.0
  %506 = vmatpush1.msra.mxu0 0.0
  %507 = vmatprep.subr.mxu0 0.0
  %508 = vmatpush1.msra.mxu0 0.0
  %509 = vmatprep.subr.mxu0 0.0
  %510 = vmatpush1.msra.mxu0 0.0
  %511 = vmatprep.subr.mxu0 0.0
  %512 = vmatpush1.msra.mxu0 0.0
  %513 = vmatprep.subr.mxu0 0.0
  %514 = vmatpush1.msra.mxu0 0.0
  %515 = vmatprep.subr.mxu0 0.0
  %516 = vmatpush1.msra.mxu0 0.0
  %517 = vmatprep.subr.mxu0 0.0
  %518 = vmatpush1.msra.mxu0 0.0
  %519 = vmatprep.subr.mxu0 0.0
  %520 = vmatpush1.msra.mxu0 0.0
  %521 = vmatprep.subr.mxu0 0.0
  %522 = vmatpush1.msra.mxu0 0.0
  %523 = vmatprep.subr.mxu0 0.0
  %524 = vmatpush1.msra.mxu0 0.0
  %525 = vmatprep.subr.mxu0 0.0
  %526 = vmatpush1.msra.mxu0 0.0
  %527 = vmatprep.subr.mxu0 0.0
  %528 = vmatpush1.msra.mxu0 0.0
  %529 = vmatprep.subr.mxu0 0.0
  %530 = vmatpush1.msra.mxu0 0.0
  %531 = vmatprep.subr.mxu0 0.0
  %532 = vmatpush1.msra.mxu0 0.0
  %533 = vmatprep.subr.mxu0 0.0
  %534 = vmatpush1.msra.mxu0 0.0
  %535 = vmatprep.subr.mxu0 0.0
  %536 = vmatpush1.msra.mxu0 0.0
  %537 = vmatprep.subr.mxu0 0.0
  %538 = vmatpush1.msra.mxu0 0.0
  %539 = vmatprep.subr.mxu0 0.0
  %540 = vmatpush1.msra.mxu0 0.0
  %541 = vmatprep.subr.mxu0 0.0
  %542 = vmatpush1.msra.mxu0 0.0
  %543 = vmatprep.subr.mxu0 0.0
  %544 = vmatpush1.msra.mxu0 0.0
  %545 = vmatprep.subr.mxu0 0.0
  %546 = vmatpush1.msra.mxu0 0.0
  %547 = vmatprep.subr.mxu0 0.0
  %548 = vmatpush1.msra.mxu0 0.0
  %549 = vmatprep.mubr.f32.mxu0 0.0
  %550 = vmatmul.mubr.f32.gmra.mrb[0].mxu0 %v88
  %v551 = vpop.f32.mrb[0].mxu0
  %v552 = vadd.f32 %v84, %v551
  %v553 = vpop.f32.mrb[0].mxu0
  %v554 = vadd.f32 %v84, %v553
  %555 = vdwg.mxu0
  %556 = vmatprep.subr.mxu0 0.0
  %557 = vmatpush1.msra.mxu0 %v27
  %558 = vmatprep.subr.mxu0 0.0
  %559 = vmatpush1.msra.mxu0 %v40
  %560 = vmatprep.subr.mxu0 0.0
  %561 = vmatpush1.msra.mxu0 %v53
  %562 = vmatprep.subr.mxu0 0.0
  %563 = vmatpush1.msra.mxu0 %v66
  %564 = vmatprep.subr.mxu0 0.0
  %565 = vmatpush1.msra.mxu0 %v128
  %566 = vmatprep.subr.mxu0 0.0
  %567 = vmatpush1.msra.mxu0 0.0
  %568 = vmatprep.subr.mxu0 0.0
  %569 = vmatpush1.msra.mxu0 0.0
  %570 = vmatprep.subr.mxu0 0.0
  %571 = vmatpush1.msra.mxu0 0.0
  %572 = vmatprep.subr.mxu0 0.0
  %573 = vmatpush1.msra.mxu0 0.0
  %574 = vmatprep.subr.mxu0 0.0
  %575 = vmatpush1.msra.mxu0 0.0
  %576 = vmatprep.subr.mxu0 0.0
  %577 = vmatpush1.msra.mxu0 0.0
  %578 = vmatprep.subr.mxu0 0.0
  %579 = vmatpush1.msra.mxu0 0.0
  %580 = vmatprep.subr.mxu0 0.0
  %581 = vmatpush1.msra.mxu0 0.0
  %582 = vmatprep.subr.mxu0 0.0
  %583 = vmatpush1.msra.mxu0 0.0
  %584 = vmatprep.subr.mxu0 0.0
  %585 = vmatpush1.msra.mxu0 0.0
  %586 = vmatprep.subr.mxu0 0.0
  %587 = vmatpush1.msra.mxu0 0.0
  %588 = vmatprep.subr.mxu0 0.0
  %589 = vmatpush1.msra.mxu0 0.0
  %590 = vmatprep.subr.mxu0 0.0
  %591 = vmatpush1.msra.mxu0 0.0
  %592 = vmatprep.subr.mxu0 0.0
  %593 = vmatpush1.msra.mxu0 0.0
  %594 = vmatprep.subr.mxu0 0.0
  %595 = vmatpush1.msra.mxu0 0.0
  %596 = vmatprep.subr.mxu0 0.0
  %597 = vmatpush1.msra.mxu0 0.0
  %598 = vmatprep.subr.mxu0 0.0
  %599 = vmatpush1.msra.mxu0 0.0
  %600 = vmatprep.subr.mxu0 0.0
  %601 = vmatpush1.msra.mxu0 0.0
  %602 = vmatprep.subr.mxu0 0.0
  %603 = vmatpush1.msra.mxu0 0.0
  %604 = vmatprep.subr.mxu0 0.0
  %605 = vmatpush1.msra.mxu0 0.0
  %606 = vmatprep.subr.mxu0 0.0
  %607 = vmatpush1.msra.mxu0 0.0
  %608 = vmatprep.subr.mxu0 0.0
  %609 = vmatpush1.msra.mxu0 0.0
  %610 = vmatprep.subr.mxu0 0.0
  %611 = vmatpush1.msra.mxu0 0.0
  %612 = vmatprep.subr.mxu0 0.0
  %613 = vmatpush1.msra.mxu0 0.0
  %614 = vmatprep.subr.mxu0 0.0
  %615 = vmatpush1.msra.mxu0 0.0
  %616 = vmatprep.subr.mxu0 0.0
  %617 = vmatpush1.msra.mxu0 0.0
  %618 = vmatprep.subr.mxu0 0.0
  %619 = vmatpush1.msra.mxu0 0.0
  %620 = vmatprep.mubr.f32.mxu0 0.0
  %621 = vmatmul.mubr.f32.gmra.mrb[0].mxu0 %v88
  %v622 = vpop.f32.mrb[0].mxu0
  %v623 = vadd.f32 %v84, %v622
  %v624 = vpop.f32.mrb[0].mxu0
  %625 = vdwg.mxu0
  %v638 = vcombine.low %v197, %v199
  %v639 = vcombine.low %v268, %v270
  %v640 = vcombine.low %v339, %v341
  %v641 = vcombine.low %v410, %v412
  %v642 = vcombine.low %v481, %v483
  %v643 = vcombine.low %v552, %v554
  %650 = vst [vmem:[%s3] sm:$0xff] %v638
  %651 = vst [vmem:[%s3 + $0x8] sm:$0xff] %v639
  %652 = vst [vmem:[%s3 + $0x10] sm:$0xff] %v640
  %653 = vst [vmem:[%s3 + $0x18] sm:$0xff] %v641
  %654 = vst [vmem:[%s3 + $0x20] sm:$0xff] %v642
  %655 = vst [vmem:[%s3 + $0x28] sm:$0xff] %v643
  %656 = vst [vmem:[%s3 + $0x30] sm:$0xf] %v623
  // Predicated region
  $region14: #{net_forward_pallas.85} parent=0 // pred_check
    _
  $region15: #{net_forward_pallas.85} parent=0 // pred_check_branch
    %658 = sbr.rel (0) target = $region17
  $region16: #{net_forward_pallas.85} parent=0 // pred_region
    _
  $region17: #{net_forward_pallas.85} parent=0 // pred_fallthru
    _
  // Predicated region
  $region18: #{net_forward_pallas.85} parent=0 // pred_check
    _
  $region19: #{net_forward_pallas.85} parent=0 // pred_check_branch
    %660 = sbr.rel (0) target = $region21
  $region20: #{net_forward_pallas.85} parent=0 // pred_region
    _
  $region21: #{net_forward_pallas.85} parent=0 // pred_fallthru
    _

// kernel: net_forward_pallas.86
$region0: #{net_forward_pallas.86}
  #allocation0 [shape = 'u32[]', space=smem, size = 0x4, offset = 0x4, fixed_abs, tag = 'smem constant byte address 0x4 - core index']
  #allocation1 [shape = 'u32[144,128]{1,0:T(1,128)}', space=vmem, size = 0x12000, scoped, tag = 'internal scratch']
  %s0 = inlined_call_operand.vmem [shape: f32[8,64], index: 0, kind: input, shape index: {}]
  %s1 = inlined_call_operand.vmem [shape: f32[64,2048], index: 1, kind: input, shape index: {}]
  %s2 = inlined_call_operand.vmem [shape: f32[8,1], index: 2, kind: input, shape index: {}]
  %s3 = inlined_call_operand.vmem [shape: f32[8,2048], index: 3, kind: output, shape index: {}]
  %s4 = sld [smem:[#allocation0]]
  $region22: #{net_forward_pallas.86} parent=0
    _
  %s6 = ssub.s32 1, %s4
  %s7 = scalar_select 0, %s6, %s4
  // Predicated region
  $region2: #{net_forward_pallas.86} parent=0 // pred_check
    _
  $region3: #{net_forward_pallas.86} parent=0 // pred_check_branch
    %9 = sbr.rel (0) target = $region5
  $region4: #{net_forward_pallas.86} parent=0 // pred_region
    _
  $region5: #{net_forward_pallas.86} parent=0 // pred_fallthru
    _
  // Predicated region
  $region6: #{net_forward_pallas.86} parent=0 // pred_check
    _
  $region7: #{net_forward_pallas.86} parent=0 // pred_check_branch
    %11 = sbr.rel (0) target = $region9
  $region8: #{net_forward_pallas.86} parent=0 // pred_region
    _
  $region9: #{net_forward_pallas.86} parent=0 // pred_fallthru
    _
  // Predicated region
  $region10: #{net_forward_pallas.86} parent=0 // pred_check
    _
  $region11: #{net_forward_pallas.86} parent=0 // pred_check_branch
    %13 = sbr.rel (0) target = $region13
  $region12: #{net_forward_pallas.86} parent=0 // pred_region
    _
  $region13: #{net_forward_pallas.86} parent=0 // pred_fallthru
    _
  %v14 = vld [vmem:[%s0] sm:$0xff]
  %v15 = vld [vmem:[%s1] sm:$0xff]
  %v16 = vld [vmem:[%s1 + $0x8] sm:$0xff]
  %v17 = vld [vmem:[%s1 + $0x10] sm:$0xff]
  %v18 = vld [vmem:[%s1 + $0x18] sm:$0xff]
  %v19 = vld [vmem:[%s1 + $0x20] sm:$0xff]
  %v20 = vld [vmem:[%s1 + $0x28] sm:$0xff]
  %v21 = vld [vmem:[%s1 + $0x30] sm:$0xff]
  %v22 = vld [vmem:[%s1 + $0x38] sm:$0xff]
  %v23 = vld [vmem:[%s1 + $0x40] sm:$0xff]
  %v24 = vld [vmem:[%s1 + $0x48] sm:$0xff]
  %v25 = vld [vmem:[%s1 + $0x50] sm:$0xff]
  %v26 = vld [vmem:[%s1 + $0x58] sm:$0xff]
  %v27 = vld [vmem:[%s1 + $0x60] sm:$0xff]
  %v28 = vld [vmem:[%s1 + $0x68] sm:$0xff]
  %v29 = vld [vmem:[%s1 + $0x70] sm:$0xff]
  %v30 = vld [vmem:[%s1 + $0x78] sm:$0xff]
  %v31 = vld [vmem:[%s1 + $0x80] sm:$0xff]
  %v32 = vld [vmem:[%s1 + $0x88] sm:$0xff]
  %v33 = vld [vmem:[%s1 + $0x90] sm:$0xff]
  %v34 = vld [vmem:[%s1 + $0x98] sm:$0xff]
  %v35 = vld [vmem:[%s1 + $0xa0] sm:$0xff]
  %v36 = vld [vmem:[%s1 + $0xa8] sm:$0xff]
  %v37 = vld [vmem:[%s1 + $0xb0] sm:$0xff]
  %v38 = vld [vmem:[%s1 + $0xb8] sm:$0xff]
  %v39 = vld [vmem:[%s1 + $0xc0] sm:$0xff]
  %v40 = vld [vmem:[%s1 + $0xc8] sm:$0xff]
  %v41 = vld [vmem:[%s1 + $0xd0] sm:$0xff]
  %v42 = vld [vmem:[%s1 + $0xd8] sm:$0xff]
  %v43 = vld [vmem:[%s1 + $0xe0] sm:$0xff]
  %v44 = vld [vmem:[%s1 + $0xe8] sm:$0xff]
  %v45 = vld [vmem:[%s1 + $0xf0] sm:$0xff]
  %v46 = vld [vmem:[%s1 + $0xf8] sm:$0xff]
  %v47 = vld [vmem:[%s1 + $0x100] sm:$0xff]
  %v48 = vld [vmem:[%s1 + $0x108] sm:$0xff]
  %v49 = vld [vmem:[%s1 + $0x110] sm:$0xff]
  %v50 = vld [vmem:[%s1 + $0x118] sm:$0xff]
  %v51 = vld [vmem:[%s1 + $0x120] sm:$0xff]
  %v52 = vld [vmem:[%s1 + $0x128] sm:$0xff]
  %v53 = vld [vmem:[%s1 + $0x130] sm:$0xff]
  %v54 = vld [vmem:[%s1 + $0x138] sm:$0xff]
  %v55 = vld [vmem:[%s1 + $0x140] sm:$0xff]
  %v56 = vld [vmem:[%s1 + $0x148] sm:$0xff]
  %v57 = vld [vmem:[%s1 + $0x150] sm:$0xff]
  %v58 = vld [vmem:[%s1 + $0x158] sm:$0xff]
  %v59 = vld [vmem:[%s1 + $0x160] sm:$0xff]
  %v60 = vld [vmem:[%s1 + $0x168] sm:$0xff]
  %v61 = vld [vmem:[%s1 + $0x170] sm:$0xff]
  %v62 = vld [vmem:[%s1 + $0x178] sm:$0xff]
  %v63 = vld [vmem:[%s1 + $0x180] sm:$0xff]
  %v64 = vld [vmem:[%s1 + $0x188] sm:$0xff]
  %v65 = vld [vmem:[%s1 + $0x190] sm:$0xff]
  %v66 = vld [vmem:[%s1 + $0x198] sm:$0xff]
  %v67 = vld [vmem:[%s1 + $0x1a0] sm:$0xff]
  %v68 = vld [vmem:[%s1 + $0x1a8] sm:$0xff]
  %v69 = vld [vmem:[%s1 + $0x1b0] sm:$0xff]
  %v70 = vld [vmem:[%s1 + $0x1b8] sm:$0xff]
  %v71 = vld [vmem:[%s1 + $0x1c0] sm:$0xff]
  %v72 = vld [vmem:[%s1 + $0x1c8] sm:$0xff]
  %v73 = vld [vmem:[%s1 + $0x1d0] sm:$0xff]
  %v74 = vld [vmem:[%s1 + $0x1d8] sm:$0xff]
  %v75 = vld [vmem:[%s1 + $0x1e0] sm:$0xff]
  %v76 = vld [vmem:[%s1 + $0x1e8] sm:$0xff]
  %v77 = vld [vmem:[%s1 + $0x1f0] sm:$0xff]
  %v78 = vld [vmem:[%s1 + $0x1f8] sm:$0xff]
  %v79 = vld [vmem:[%s1 + $0x200] sm:$0xff]
  %v80 = vld [vmem:[%s1 + $0x208] sm:$0xff]
  %v81 = vld [vmem:[%s1 + $0x210] sm:$0xff]
  %v82 = vld [vmem:[%s1 + $0x218] sm:$0xff]
  %v83 = vld [vmem:[%s1 + $0x220] sm:$0xff]
  %v84 = vld [vmem:[%s1 + $0x228] sm:$0xff]
  %v85 = vld [vmem:[%s1 + $0x230] sm:$0xff]
  %v86 = vld [vmem:[%s1 + $0x238] sm:$0xff]
  %v87 = vld [vmem:[%s1 + $0x240] sm:$0xff]
  %v88 = vld [vmem:[%s1 + $0x248] sm:$0xff]
  %v89 = vld [vmem:[%s1 + $0x250] sm:$0xff]
  %v90 = vld [vmem:[%s1 + $0x258] sm:$0xff]
  %v91 = vld [vmem:[%s1 + $0x260] sm:$0xff]
  %v92 = vld [vmem:[%s1 + $0x268] sm:$0xff]
  %v93 = vld [vmem:[%s1 + $0x270] sm:$0xff]
  %v94 = vld [vmem:[%s1 + $0x278] sm:$0xff]
  %v95 = vld [vmem:[%s1 + $0x280] sm:$0xff]
  %v96 = vld [vmem:[%s1 + $0x288] sm:$0xff]
  %v97 = vld [vmem:[%s1 + $0x290] sm:$0xff]
  %v98 = vld [vmem:[%s1 + $0x298] sm:$0xff]
  %v99 = vld [vmem:[%s1 + $0x2a0] sm:$0xff]
  %v100 = vld [vmem:[%s1 + $0x2a8] sm:$0xff]
  %v101 = vld [vmem:[%s1 + $0x2b0] sm:$0xff]
  %v102 = vld [vmem:[%s1 + $0x2b8] sm:$0xff]
  %v103 = vld [vmem:[%s1 + $0x2c0] sm:$0xff]
  %v104 = vld [vmem:[%s1 + $0x2c8] sm:$0xff]
  %v105 = vld [vmem:[%s1 + $0x2d0] sm:$0xff]
  %v106 = vld [vmem:[%s1 + $0x2d8] sm:$0xff]
  %v107 = vld [vmem:[%s1 + $0x2e0] sm:$0xff]
  %v108 = vld [vmem:[%s1 + $0x2e8] sm:$0xff]
  %v109 = vld [vmem:[%s1 + $0x2f0] sm:$0xff]
  %v110 = vld [vmem:[%s1 + $0x2f8] sm:$0xff]
  %v111 = vld [vmem:[%s1 + $0x300] sm:$0xff]
  %v112 = vld [vmem:[%s1 + $0x308] sm:$0xff]
  %v113 = vld [vmem:[%s1 + $0x310] sm:$0xff]
  %v114 = vld [vmem:[%s1 + $0x318] sm:$0xff]
  %v115 = vld [vmem:[%s1 + $0x320] sm:$0xff]
  %v116 = vld [vmem:[%s1 + $0x328] sm:$0xff]
  %v117 = vld [vmem:[%s1 + $0x330] sm:$0xff]
  %v118 = vld [vmem:[%s1 + $0x338] sm:$0xff]
  %v119 = vld [vmem:[%s1 + $0x340] sm:$0xff]
  %v120 = vld [vmem:[%s1 + $0x348] sm:$0xff]
  %v121 = vld [vmem:[%s1 + $0x350] sm:$0xff]
  %v122 = vld [vmem:[%s1 + $0x358] sm:$0xff]
  %v123 = vld [vmem:[%s1 + $0x360] sm:$0xff]
  %v124 = vld [vmem:[%s1 + $0x368] sm:$0xff]
  %v125 = vld [vmem:[%s1 + $0x370] sm:$0xff]
  %v126 = vld [vmem:[%s1 + $0x378] sm:$0xff]
  %v127 = vld [vmem:[%s1 + $0x380] sm:$0xff]
  %v128 = vld [vmem:[%s1 + $0x388] sm:$0xff]
  %v129 = vld [vmem:[%s1 + $0x390] sm:$0xff]
  %v130 = vld [vmem:[%s1 + $0x398] sm:$0xff]
  %v131 = vld [vmem:[%s1 + $0x3a0] sm:$0xff]
  %v132 = vld [vmem:[%s1 + $0x3a8] sm:$0xff]
  %v133 = vld [vmem:[%s1 + $0x3b0] sm:$0xff]
  %v134 = vld [vmem:[%s1 + $0x3b8] sm:$0xff]
  %v135 = vld [vmem:[%s1 + $0x3c0] sm:$0xff]
  %v136 = vld [vmem:[%s1 + $0x3c8] sm:$0xff]
  %v137 = vld [vmem:[%s1 + $0x3d0] sm:$0xff]
  %v138 = vld [vmem:[%s1 + $0x3d8] sm:$0xff]
  %v139 = vld [vmem:[%s1 + $0x3e0] sm:$0xff]
  %v140 = vld [vmem:[%s1 + $0x3e8] sm:$0xff]
  %v141 = vld [vmem:[%s1 + $0x3f0] sm:$0xff]
  %v142 = vld [vmem:[%s1 + $0x3f8] sm:$0xff]
  %v143 = vld [vmem:[%s2] sm:$0xff]
  %145 = vset.pattern.permute.xlu0 0
  %146 = vperm.xlu0 %145, %v143
  %v147 = vpop.permute.xlu0 %146
  %vm149 = vcmask 523264
  %v151 = vsel %vm149, %v14, 0
  %153 = vmatprep.subr.mxu0 %v16
  %154 = vmatpush1.msra.mxu0 %v15
  %155 = vmatprep.subr.mxu0 %v32
  %156 = vmatpush1.msra.mxu0 %v31
  %157 = vmatprep.subr.mxu0 %v48
  %158 = vmatpush1.msra.mxu0 %v47
  %159 = vmatprep.subr.mxu0 %v64
  %160 = vmatpush1.msra.mxu0 %v63
  %161 = vmatprep.subr.mxu0 %v80
  %162 = vmatpush1.msra.mxu0 %v79
  %163 = vmatprep.subr.mxu0 %v96
  %164 = vmatpush1.msra.mxu0 %v95
  %165 = vmatprep.subr.mxu0 %v112
  %166 = vmatpush1.msra.mxu0 %v111
  %167 = vmatprep.subr.mxu0 %v128
  %168 = vmatpush1.msra.mxu0 %v127
  %169 = vmatprep.subr.mxu0 0.0
  %170 = vmatpush1.msra.mxu0 0.0
  %171 = vmatprep.subr.mxu0 0.0
  %172 = vmatpush1.msra.mxu0 0.0
  %173 = vmatprep.subr.mxu0 0.0
  %174 = vmatpush1.msra.mxu0 0.0
  %175 = vmatprep.subr.mxu0 0.0
  %176 = vmatpush1.msra.mxu0 0.0
  %177 = vmatprep.subr.mxu0 0.0
  %178 = vmatpush1.msra.mxu0 0.0
  %179 = vmatprep.subr.mxu0 0.0
  %180 = vmatpush1.msra.mxu0 0.0
  %181 = vmatprep.subr.mxu0 0.0
  %182 = vmatpush1.msra.mxu0 0.0
  %183 = vmatprep.subr.mxu0 0.0
  %184 = vmatpush1.msra.mxu0 0.0
  %185 = vmatprep.subr.mxu0 0.0
  %186 = vmatpush1.msra.mxu0 0.0
  %187 = vmatprep.subr.mxu0 0.0
  %188 = vmatpush1.msra.mxu0 0.0
  %189 = vmatprep.subr.mxu0 0.0
  %190 = vmatpush1.msra.mxu0 0.0
  %191 = vmatprep.subr.mxu0 0.0
  %192 = vmatpush1.msra.mxu0 0.0
  %193 = vmatprep.subr.mxu0 0.0
  %194 = vmatpush1.msra.mxu0 0.0
  %195 = vmatprep.subr.mxu0 0.0
  %196 = vmatpush1.msra.mxu0 0.0
  %197 = vmatprep.subr.mxu0 0.0
  %198 = vmatpush1.msra.mxu0 0.0
  %199 = vmatprep.subr.mxu0 0.0
  %200 = vmatpush1.msra.mxu0 0.0
  %201 = vmatprep.subr.mxu0 0.0
  %202 = vmatpush1.msra.mxu0 0.0
  %203 = vmatprep.subr.mxu0 0.0
  %204 = vmatpush1.msra.mxu0 0.0
  %205 = vmatprep.subr.mxu0 0.0
  %206 = vmatpush1.msra.mxu0 0.0
  %207 = vmatprep.subr.mxu0 0.0
  %208 = vmatpush1.msra.mxu0 0.0
  %209 = vmatprep.subr.mxu0 0.0
  %210 = vmatpush1.msra.mxu0 0.0
  %211 = vmatprep.subr.mxu0 0.0
  %212 = vmatpush1.msra.mxu0 0.0
  %213 = vmatprep.subr.mxu0 0.0
  %214 = vmatpush1.msra.mxu0 0.0
  %215 = vmatprep.subr.mxu0 0.0
  %216 = vmatpush1.msra.mxu0 0.0
  %217 = vmatprep.mubr.f32.mxu0 0.0
  %218 = vmatmul.mubr.f32.gmra.mrb[0].mxu0 %v151
  %v219 = vpop.f32.mrb[0].mxu0
  %v220 = vadd.f32 %v147, %v219
  %v221 = vpop.f32.mrb[0].mxu0
  %v222 = vadd.f32 %v147, %v221
  %223 = vdwg.mxu0
  %224 = vmatprep.subr.mxu0 %v18
  %225 = vmatpush1.msra.mxu0 %v17
  %226 = vmatprep.subr.mxu0 %v34
  %227 = vmatpush1.msra.mxu0 %v33
  %228 = vmatprep.subr.mxu0 %v50
  %229 = vmatpush1.msra.mxu0 %v49
  %230 = vmatprep.subr.mxu0 %v66
  %231 = vmatpush1.msra.mxu0 %v65
  %232 = vmatprep.subr.mxu0 %v82
  %233 = vmatpush1.msra.mxu0 %v81
  %234 = vmatprep.subr.mxu0 %v98
  %235 = vmatpush1.msra.mxu0 %v97
  %236 = vmatprep.subr.mxu0 %v114
  %237 = vmatpush1.msra.mxu0 %v113
  %238 = vmatprep.subr.mxu0 %v130
  %239 = vmatpush1.msra.mxu0 %v129
  %240 = vmatprep.subr.mxu0 0.0
  %241 = vmatpush1.msra.mxu0 0.0
  %242 = vmatprep.subr.mxu0 0.0
  %243 = vmatpush1.msra.mxu0 0.0
  %244 = vmatprep.subr.mxu0 0.0
  %245 = vmatpush1.msra.mxu0 0.0
  %246 = vmatprep.subr.mxu0 0.0
  %247 = vmatpush1.msra.mxu0 0.0
  %248 = vmatprep.subr.mxu0 0.0
  %249 = vmatpush1.msra.mxu0 0.0
  %250 = vmatprep.subr.mxu0 0.0
  %251 = vmatpush1.msra.mxu0 0.0
  %252 = vmatprep.subr.mxu0 0.0
  %253 = vmatpush1.msra.mxu0 0.0
  %254 = vmatprep.subr.mxu0 0.0
  %255 = vmatpush1.msra.mxu0 0.0
  %256 = vmatprep.subr.mxu0 0.0
  %257 = vmatpush1.msra.mxu0 0.0
  %258 = vmatprep.subr.mxu0 0.0
  %259 = vmatpush1.msra.mxu0 0.0
  %260 = vmatprep.subr.mxu0 0.0
  %261 = vmatpush1.msra.mxu0 0.0
  %262 = vmatprep.subr.mxu0 0.0
  %263 = vmatpush1.msra.mxu0 0.0
  %264 = vmatprep.subr.mxu0 0.0
  %265 = vmatpush1.msra.mxu0 0.0
  %266 = vmatprep.subr.mxu0 0.0
  %267 = vmatpush1.msra.mxu0 0.0
  %268 = vmatprep.subr.mxu0 0.0
  %269 = vmatpush1.msra.mxu0 0.0
  %270 = vmatprep.subr.mxu0 0.0
  %271 = vmatpush1.msra.mxu0 0.0
  %272 = vmatprep.subr.mxu0 0.0
  %273 = vmatpush1.msra.mxu0 0.0
  %274 = vmatprep.subr.mxu0 0.0
  %275 = vmatpush1.msra.mxu0 0.0
  %276 = vmatprep.subr.mxu0 0.0
  %277 = vmatpush1.msra.mxu0 0.0
  %278 = vmatprep.subr.mxu0 0.0
  %279 = vmatpush1.msra.mxu0 0.0
  %280 = vmatprep.subr.mxu0 0.0
  %281 = vmatpush1.msra.mxu0 0.0
  %282 = vmatprep.subr.mxu0 0.0
  %283 = vmatpush1.msra.mxu0 0.0
  %284 = vmatprep.subr.mxu0 0.0
  %285 = vmatpush1.msra.mxu0 0.0
  %286 = vmatprep.subr.mxu0 0.0
  %287 = vmatpush1.msra.mxu0 0.0
  %288 = vmatprep.mubr.f32.mxu0 0.0
  %289 = vmatmul.mubr.f32.gmra.mrb[0].mxu0 %v151
  %v290 = vpop.f32.mrb[0].mxu0
  %v291 = vadd.f32 %v147, %v290
  %v292 = vpop.f32.mrb[0].mxu0
  %v293 = vadd.f32 %v147, %v292
  %294 = vdwg.mxu0
  %295 = vmatprep.subr.mxu0 %v20
  %296 = vmatpush1.msra.mxu0 %v19
  %297 = vmatprep.subr.mxu0 %v36
  %298 = vmatpush1.msra.mxu0 %v35
  %299 = vmatprep.subr.mxu0 %v52
  %300 = vmatpush1.msra.mxu0 %v51
  %301 = vmatprep.subr.mxu0 %v68
  %302 = vmatpush1.msra.mxu0 %v67
  %303 = vmatprep.subr.mxu0 %v84
  %304 = vmatpush1.msra.mxu0 %v83
  %305 = vmatprep.subr.mxu0 %v100
  %306 = vmatpush1.msra.mxu0 %v99
  %307 = vmatprep.subr.mxu0 %v116
  %308 = vmatpush1.msra.mxu0 %v115
  %309 = vmatprep.subr.mxu0 %v132
  %310 = vmatpush1.msra.mxu0 %v131
  %311 = vmatprep.subr.mxu0 0.0
  %312 = vmatpush1.msra.mxu0 0.0
  %313 = vmatprep.subr.mxu0 0.0
  %314 = vmatpush1.msra.mxu0 0.0
  %315 = vmatprep.subr.mxu0 0.0
  %316 = vmatpush1.msra.mxu0 0.0
  %317 = vmatprep.subr.mxu0 0.0
  %318 = vmatpush1.msra.mxu0 0.0
  %319 = vmatprep.subr.mxu0 0.0
  %320 = vmatpush1.msra.mxu0 0.0
  %321 = vmatprep.subr.mxu0 0.0
  %322 = vmatpush1.msra.mxu0 0.0
  %323 = vmatprep.subr.mxu0 0.0
  %324 = vmatpush1.msra.mxu0 0.0
  %325 = vmatprep.subr.mxu0 0.0
  %326 = vmatpush1.msra.mxu0 0.0
  %327 = vmatprep.subr.mxu0 0.0
  %328 = vmatpush1.msra.mxu0 0.0
  %329 = vmatprep.subr.mxu0 0.0
  %330 = vmatpush1.msra.mxu0 0.0
  %331 = vmatprep.subr.mxu0 0.0
  %332 = vmatpush1.msra.mxu0 0.0
  %333 = vmatprep.subr.mxu0 0.0
  %334 = vmatpush1.msra.mxu0 0.0
  %335 = vmatprep.subr.mxu0 0.0
  %336 = vmatpush1.msra.mxu0 0.0
  %337 = vmatprep.subr.mxu0 0.0
  %338 = vmatpush1.msra.mxu0 0.0
  %339 = vmatprep.subr.mxu0 0.0
  %340 = vmatpush1.msra.mxu0 0.0
  %341 = vmatprep.subr.mxu0 0.0
  %342 = vmatpush1.msra.mxu0 0.0
  %343 = vmatprep.subr.mxu0 0.0
  %344 = vmatpush1.msra.mxu0 0.0
  %345 = vmatprep.subr.mxu0 0.0
  %346 = vmatpush1.msra.mxu0 0.0
  %347 = vmatprep.subr.mxu0 0.0
  %348 = vmatpush1.msra.mxu0 0.0
  %349 = vmatprep.subr.mxu0 0.0
  %350 = vmatpush1.msra.mxu0 0.0
  %351 = vmatprep.subr.mxu0 0.0
  %352 = vmatpush1.msra.mxu0 0.0
  %353 = vmatprep.subr.mxu0 0.0
  %354 = vmatpush1.msra.mxu0 0.0
  %355 = vmatprep.subr.mxu0 0.0
  %356 = vmatpush1.msra.mxu0 0.0
  %357 = vmatprep.subr.mxu0 0.0
  %358 = vmatpush1.msra.mxu0 0.0
  %359 = vmatprep.mubr.f32.mxu0 0.0
  %360 = vmatmul.mubr.f32.gmra.mrb[0].mxu0 %v151
  %v361 = vpop.f32.mrb[0].mxu0
  %v362 = vadd.f32 %v147, %v361
  %v363 = vpop.f32.mrb[0].mxu0
  %v364 = vadd.f32 %v147, %v363
  %365 = vdwg.mxu0
  %366 = vmatprep.subr.mxu0 %v22
  %367 = vmatpush1.msra.mxu0 %v21
  %368 = vmatprep.subr.mxu0 %v38
  %369 = vmatpush1.msra.mxu0 %v37
  %370 = vmatprep.subr.mxu0 %v54
  %371 = vmatpush1.msra.mxu0 %v53
  %372 = vmatprep.subr.mxu0 %v70
  %373 = vmatpush1.msra.mxu0 %v69
  %374 = vmatprep.subr.mxu0 %v86
  %375 = vmatpush1.msra.mxu0 %v85
  %376 = vmatprep.subr.mxu0 %v102
  %377 = vmatpush1.msra.mxu0 %v101
  %378 = vmatprep.subr.mxu0 %v118
  %379 = vmatpush1.msra.mxu0 %v117
  %380 = vmatprep.subr.mxu0 %v134
  %381 = vmatpush1.msra.mxu0 %v133
  %382 = vmatprep.subr.mxu0 0.0
  %383 = vmatpush1.msra.mxu0 0.0
  %384 = vmatprep.subr.mxu0 0.0
  %385 = vmatpush1.msra.mxu0 0.0
  %386 = vmatprep.subr.mxu0 0.0
  %387 = vmatpush1.msra.mxu0 0.0
  %388 = vmatprep.subr.mxu0 0.0
  %389 = vmatpush1.msra.mxu0 0.0
  %390 = vmatprep.subr.mxu0 0.0
  %391 = vmatpush1.msra.mxu0 0.0
  %392 = vmatprep.subr.mxu0 0.0
  %393 = vmatpush1.msra.mxu0 0.0
  %394 = vmatprep.subr.mxu0 0.0
  %395 = vmatpush1.msra.mxu0 0.0
  %396 = vmatprep.subr.mxu0 0.0
  %397 = vmatpush1.msra.mxu0 0.0
  %398 = vmatprep.subr.mxu0 0.0
  %399 = vmatpush1.msra.mxu0 0.0
  %400 = vmatprep.subr.mxu0 0.0
  %401 = vmatpush1.msra.mxu0 0.0
  %402 = vmatprep.subr.mxu0 0.0
  %403 = vmatpush1.msra.mxu0 0.0
  %404 = vmatprep.subr.mxu0 0.0
  %405 = vmatpush1.msra.mxu0 0.0
  %406 = vmatprep.subr.mxu0 0.0
  %407 = vmatpush1.msra.mxu0 0.0
  %408 = vmatprep.subr.mxu0 0.0
  %409 = vmatpush1.msra.mxu0 0.0
  %410 = vmatprep.subr.mxu0 0.0
  %411 = vmatpush1.msra.mxu0 0.0
  %412 = vmatprep.subr.mxu0 0.0
  %413 = vmatpush1.msra.mxu0 0.0
  %414 = vmatprep.subr.mxu0 0.0
  %415 = vmatpush1.msra.mxu0 0.0
  %416 = vmatprep.subr.mxu0 0.0
  %417 = vmatpush1.msra.mxu0 0.0
  %418 = vmatprep.subr.mxu0 0.0
  %419 = vmatpush1.msra.mxu0 0.0
  %420 = vmatprep.subr.mxu0 0.0
  %421 = vmatpush1.msra.mxu0 0.0
  %422 = vmatprep.subr.mxu0 0.0
  %423 = vmatpush1.msra.mxu0 0.0
  %424 = vmatprep.subr.mxu0 0.0
  %425 = vmatpush1.msra.mxu0 0.0
  %426 = vmatprep.subr.mxu0 0.0
  %427 = vmatpush1.msra.mxu0 0.0
  %428 = vmatprep.subr.mxu0 0.0
  %429 = vmatpush1.msra.mxu0 0.0
  %430 = vmatprep.mubr.f32.mxu0 0.0
  %431 = vmatmul.mubr.f32.gmra.mrb[0].mxu0 %v151
  %v432 = vpop.f32.mrb[0].mxu0
  %v433 = vadd.f32 %v147, %v432
  %v434 = vpop.f32.mrb[0].mxu0
  %v435 = vadd.f32 %v147, %v434
  %436 = vdwg.mxu0
  %437 = vmatprep.subr.mxu0 %v24
  %438 = vmatpush1.msra.mxu0 %v23
  %439 = vmatprep.subr.mxu0 %v40
  %440 = vmatpush1.msra.mxu0 %v39
  %441 = vmatprep.subr.mxu0 %v56
  %442 = vmatpush1.msra.mxu0 %v55
  %443 = vmatprep.subr.mxu0 %v72
  %444 = vmatpush1.msra.mxu0 %v71
  %445 = vmatprep.subr.mxu0 %v88
  %446 = vmatpush1.msra.mxu0 %v87
  %447 = vmatprep.subr.mxu0 %v104
  %448 = vmatpush1.msra.mxu0 %v103
  %449 = vmatprep.subr.mxu0 %v120
  %450 = vmatpush1.msra.mxu0 %v119
  %451 = vmatprep.subr.mxu0 %v136
  %452 = vmatpush1.msra.mxu0 %v135
  %453 = vmatprep.subr.mxu0 0.0
  %454 = vmatpush1.msra.mxu0 0.0
  %455 = vmatprep.subr.mxu0 0.0
  %456 = vmatpush1.msra.mxu0 0.0
  %457 = vmatprep.subr.mxu0 0.0
  %458 = vmatpush1.msra.mxu0 0.0
  %459 = vmatprep.subr.mxu0 0.0
  %460 = vmatpush1.msra.mxu0 0.0
  %461 = vmatprep.subr.mxu0 0.0
  %462 = vmatpush1.msra.mxu0 0.0
  %463 = vmatprep.subr.mxu0 0.0
  %464 = vmatpush1.msra.mxu0 0.0
  %465 = vmatprep.subr.mxu0 0.0
  %466 = vmatpush1.msra.mxu0 0.0
  %467 = vmatprep.subr.mxu0 0.0
  %468 = vmatpush1.msra.mxu0 0.0
  %469 = vmatprep.subr.mxu0 0.0
  %470 = vmatpush1.msra.mxu0 0.0
  %471 = vmatprep.subr.mxu0 0.0
  %472 = vmatpush1.msra.mxu0 0.0
  %473 = vmatprep.subr.mxu0 0.0
  %474 = vmatpush1.msra.mxu0 0.0
  %475 = vmatprep.subr.mxu0 0.0
  %476 = vmatpush1.msra.mxu0 0.0
  %477 = vmatprep.subr.mxu0 0.0
  %478 = vmatpush1.msra.mxu0 0.0
  %479 = vmatprep.subr.mxu0 0.0
  %480 = vmatpush1.msra.mxu0 0.0
  %481 = vmatprep.subr.mxu0 0.0
  %482 = vmatpush1.msra.mxu0 0.0
  %483 = vmatprep.subr.mxu0 0.0
  %484 = vmatpush1.msra.mxu0 0.0
  %485 = vmatprep.subr.mxu0 0.0
  %486 = vmatpush1.msra.mxu0 0.0
  %487 = vmatprep.subr.mxu0 0.0
  %488 = vmatpush1.msra.mxu0 0.0
  %489 = vmatprep.subr.mxu0 0.0
  %490 = vmatpush1.msra.mxu0 0.0
  %491 = vmatprep.subr.mxu0 0.0
  %492 = vmatpush1.msra.mxu0 0.0
  %493 = vmatprep.subr.mxu0 0.0
  %494 = vmatpush1.msra.mxu0 0.0
  %495 = vmatprep.subr.mxu0 0.0
  %496 = vmatpush1.msra.mxu0 0.0
  %497 = vmatprep.subr.mxu0 0.0
  %498 = vmatpush1.msra.mxu0 0.0
  %499 = vmatprep.subr.mxu0 0.0
  %500 = vmatpush1.msra.mxu0 0.0
  %501 = vmatprep.mubr.f32.mxu0 0.0
  %502 = vmatmul.mubr.f32.gmra.mrb[0].mxu0 %v151
  %v503 = vpop.f32.mrb[0].mxu0
  %v504 = vadd.f32 %v147, %v503
  %v505 = vpop.f32.mrb[0].mxu0
  %v506 = vadd.f32 %v147, %v505
  %507 = vdwg.mxu0
  %508 = vmatprep.subr.mxu0 %v26
  %509 = vmatpush1.msra.mxu0 %v25
  %510 = vmatprep.subr.mxu0 %v42
  %511 = vmatpush1.msra.mxu0 %v41
  %512 = vmatprep.subr.mxu0 %v58
  %513 = vmatpush1.msra.mxu0 %v57
  %514 = vmatprep.subr.mxu0 %v74
  %515 = vmatpush1.msra.mxu0 %v73
  %516 = vmatprep.subr.mxu0 %v90
  %517 = vmatpush1.msra.mxu0 %v89
  %518 = vmatprep.subr.mxu0 %v106
  %519 = vmatpush1.msra.mxu0 %v105
  %520 = vmatprep.subr.mxu0 %v122
  %521 = vmatpush1.msra.mxu0 %v121
  %522 = vmatprep.subr.mxu0 %v138
  %523 = vmatpush1.msra.mxu0 %v137
  %524 = vmatprep.subr.mxu0 0.0
  %525 = vmatpush1.msra.mxu0 0.0
  %526 = vmatprep.subr.mxu0 0.0
  %527 = vmatpush1.msra.mxu0 0.0
  %528 = vmatprep.subr.mxu0 0.0
  %529 = vmatpush1.msra.mxu0 0.0
  %530 = vmatprep.subr.mxu0 0.0
  %531 = vmatpush1.msra.mxu0 0.0
  %532 = vmatprep.subr.mxu0 0.0
  %533 = vmatpush1.msra.mxu0 0.0
  %534 = vmatprep.subr.mxu0 0.0
  %535 = vmatpush1.msra.mxu0 0.0
  %536 = vmatprep.subr.mxu0 0.0
  %537 = vmatpush1.msra.mxu0 0.0
  %538 = vmatprep.subr.mxu0 0.0
  %539 = vmatpush1.msra.mxu0 0.0
  %540 = vmatprep.subr.mxu0 0.0
  %541 = vmatpush1.msra.mxu0 0.0
  %542 = vmatprep.subr.mxu0 0.0
  %543 = vmatpush1.msra.mxu0 0.0
  %544 = vmatprep.subr.mxu0 0.0
  %545 = vmatpush1.msra.mxu0 0.0
  %546 = vmatprep.subr.mxu0 0.0
  %547 = vmatpush1.msra.mxu0 0.0
  %548 = vmatprep.subr.mxu0 0.0
  %549 = vmatpush1.msra.mxu0 0.0
  %550 = vmatprep.subr.mxu0 0.0
  %551 = vmatpush1.msra.mxu0 0.0
  %552 = vmatprep.subr.mxu0 0.0
  %553 = vmatpush1.msra.mxu0 0.0
  %554 = vmatprep.subr.mxu0 0.0
  %555 = vmatpush1.msra.mxu0 0.0
  %556 = vmatprep.subr.mxu0 0.0
  %557 = vmatpush1.msra.mxu0 0.0
  %558 = vmatprep.subr.mxu0 0.0
  %559 = vmatpush1.msra.mxu0 0.0
  %560 = vmatprep.subr.mxu0 0.0
  %561 = vmatpush1.msra.mxu0 0.0
  %562 = vmatprep.subr.mxu0 0.0
  %563 = vmatpush1.msra.mxu0 0.0
  %564 = vmatprep.subr.mxu0 0.0
  %565 = vmatpush1.msra.mxu0 0.0
  %566 = vmatprep.subr.mxu0 0.0
  %567 = vmatpush1.msra.mxu0 0.0
  %568 = vmatprep.subr.mxu0 0.0
  %569 = vmatpush1.msra.mxu0 0.0
  %570 = vmatprep.subr.mxu0 0.0
  %571 = vmatpush1.msra.mxu0 0.0
  %572 = vmatprep.mubr.f32.mxu0 0.0
  %573 = vmatmul.mubr.f32.gmra.mrb[0].mxu0 %v151
  %v574 = vpop.f32.mrb[0].mxu0
  %v575 = vadd.f32 %v147, %v574
  %v576 = vpop.f32.mrb[0].mxu0
  %v577 = vadd.f32 %v147, %v576
  %578 = vdwg.mxu0
  %579 = vmatprep.subr.mxu0 %v28
  %580 = vmatpush1.msra.mxu0 %v27
  %581 = vmatprep.subr.mxu0 %v44
  %582 = vmatpush1.msra.mxu0 %v43
  %583 = vmatprep.subr.mxu0 %v60
  %584 = vmatpush1.msra.mxu0 %v59
  %585 = vmatprep.subr.mxu0 %v76
  %586 = vmatpush1.msra.mxu0 %v75
  %587 = vmatprep.subr.mxu0 %v92
  %588 = vmatpush1.msra.mxu0 %v91
  %589 = vmatprep.subr.mxu0 %v108
  %590 = vmatpush1.msra.mxu0 %v107
  %591 = vmatprep.subr.mxu0 %v124
  %592 = vmatpush1.msra.mxu0 %v123
  %593 = vmatprep.subr.mxu0 %v140
  %594 = vmatpush1.msra.mxu0 %v139
  %595 = vmatprep.subr.mxu0 0.0
  %596 = vmatpush1.msra.mxu0 0.0
  %597 = vmatprep.subr.mxu0 0.0
  %598 = vmatpush1.msra.mxu0 0.0
  %599 = vmatprep.subr.mxu0 0.0
  %600 = vmatpush1.msra.mxu0 0.0
  %601 = vmatprep.subr.mxu0 0.0
  %602 = vmatpush1.msra.mxu0 0.0
  %603 = vmatprep.subr.mxu0 0.0
  %604 = vmatpush1.msra.mxu0 0.0
  %605 = vmatprep.subr.mxu0 0.0
  %606 = vmatpush1.msra.mxu0 0.0
  %607 = vmatprep.subr.mxu0 0.0
  %608 = vmatpush1.msra.mxu0 0.0
  %609 = vmatprep.subr.mxu0 0.0
  %610 = vmatpush1.msra.mxu0 0.0
  %611 = vmatprep.subr.mxu0 0.0
  %612 = vmatpush1.msra.mxu0 0.0
  %613 = vmatprep.subr.mxu0 0.0
  %614 = vmatpush1.msra.mxu0 0.0
  %615 = vmatprep.subr.mxu0 0.0
  %616 = vmatpush1.msra.mxu0 0.0
  %617 = vmatprep.subr.mxu0 0.0
  %618 = vmatpush1.msra.mxu0 0.0
  %619 = vmatprep.subr.mxu0 0.0
  %620 = vmatpush1.msra.mxu0 0.0
  %621 = vmatprep.subr.mxu0 0.0
  %622 = vmatpush1.msra.mxu0 0.0
  %623 = vmatprep.subr.mxu0 0.0
  %624 = vmatpush1.msra.mxu0 0.0
  %625 = vmatprep.subr.mxu0 0.0
  %626 = vmatpush1.msra.mxu0 0.0
  %627 = vmatprep.subr.mxu0 0.0
  %628 = vmatpush1.msra.mxu0 0.0
  %629 = vmatprep.subr.mxu0 0.0
  %630 = vmatpush1.msra.mxu0 0.0
  %631 = vmatprep.subr.mxu0 0.0
  %632 = vmatpush1.msra.mxu0 0.0
  %633 = vmatprep.subr.mxu0 0.0
  %634 = vmatpush1.msra.mxu0 0.0
  %635 = vmatprep.subr.mxu0 0.0
  %636 = vmatpush1.msra.mxu0 0.0
  %637 = vmatprep.subr.mxu0 0.0
  %638 = vmatpush1.msra.mxu0 0.0
  %639 = vmatprep.subr.mxu0 0.0
  %640 = vmatpush1.msra.mxu0 0.0
  %641 = vmatprep.subr.mxu0 0.0
  %642 = vmatpush1.msra.mxu0 0.0
  %643 = vmatprep.mubr.f32.mxu0 0.0
  %644 = vmatmul.mubr.f32.gmra.mrb[0].mxu0 %v151
  %v645 = vpop.f32.mrb[0].mxu0
  %v646 = vadd.f32 %v147, %v645
  %v647 = vpop.f32.mrb[0].mxu0
  %v648 = vadd.f32 %v147, %v647
  %649 = vdwg.mxu0
  %650 = vmatprep.subr.mxu0 %v30
  %651 = vmatpush1.msra.mxu0 %v29
  %652 = vmatprep.subr.mxu0 %v46
  %653 = vmatpush1.msra.mxu0 %v45
  %654 = vmatprep.subr.mxu0 %v62
  %655 = vmatpush1.msra.mxu0 %v61
  %656 = vmatprep.subr.mxu0 %v78
  %657 = vmatpush1.msra.mxu0 %v77
  %658 = vmatprep.subr.mxu0 %v94
  %659 = vmatpush1.msra.mxu0 %v93
  %660 = vmatprep.subr.mxu0 %v110
  %661 = vmatpush1.msra.mxu0 %v109
  %662 = vmatprep.subr.mxu0 %v126
  %663 = vmatpush1.msra.mxu0 %v125
  %664 = vmatprep.subr.mxu0 %v142
  %665 = vmatpush1.msra.mxu0 %v141
  %666 = vmatprep.subr.mxu0 0.0
  %667 = vmatpush1.msra.mxu0 0.0
  %668 = vmatprep.subr.mxu0 0.0
  %669 = vmatpush1.msra.mxu0 0.0
  %670 = vmatprep.subr.mxu0 0.0
  %671 = vmatpush1.msra.mxu0 0.0
  %672 = vmatprep.subr.mxu0 0.0
  %673 = vmatpush1.msra.mxu0 0.0
  %674 = vmatprep.subr.mxu0 0.0
  %675 = vmatpush1.msra.mxu0 0.0
  %676 = vmatprep.subr.mxu0 0.0
  %677 = vmatpush1.msra.mxu0 0.0
  %678 = vmatprep.subr.mxu0 0.0
  %679 = vmatpush1.msra.mxu0 0.0
  %680 = vmatprep.subr.mxu0 0.0
  %681 = vmatpush1.msra.mxu0 0.0
  %682 = vmatprep.subr.mxu0 0.0
  %683 = vmatpush1.msra.mxu0 0.0
  %684 = vmatprep.subr.mxu0 0.0
  %685 = vmatpush1.msra.mxu0 0.0
  %686 = vmatprep.subr.mxu0 0.0
  %687 = vmatpush1.msra.mxu0 0.0
  %688 = vmatprep.subr.mxu0 0.0
  %689 = vmatpush1.msra.mxu0 0.0
  %690 = vmatprep.subr.mxu0 0.0
  %691 = vmatpush1.msra.mxu0 0.0
  %692 = vmatprep.subr.mxu0 0.0
  %693 = vmatpush1.msra.mxu0 0.0
  %694 = vmatprep.subr.mxu0 0.0
  %695 = vmatpush1.msra.mxu0 0.0
  %696 = vmatprep.subr.mxu0 0.0
  %697 = vmatpush1.msra.mxu0 0.0
  %698 = vmatprep.subr.mxu0 0.0
  %699 = vmatpush1.msra.mxu0 0.0
  %700 = vmatprep.subr.mxu0 0.0
  %701 = vmatpush1.msra.mxu0 0.0
  %702 = vmatprep.subr.mxu0 0.0
  %703 = vmatpush1.msra.mxu0 0.0
  %704 = vmatprep.subr.mxu0 0.0
  %705 = vmatpush1.msra.mxu0 0.0
  %706 = vmatprep.subr.mxu0 0.0
  %707 = vmatpush1.msra.mxu0 0.0
  %708 = vmatprep.subr.mxu0 0.0
  %709 = vmatpush1.msra.mxu0 0.0
  %710 = vmatprep.subr.mxu0 0.0
  %711 = vmatpush1.msra.mxu0 0.0
  %712 = vmatprep.subr.mxu0 0.0
  %713 = vmatpush1.msra.mxu0 0.0
  %714 = vmatprep.mubr.f32.mxu0 0.0
  %715 = vmatmul.mubr.f32.gmra.mrb[0].mxu0 %v151
  %v716 = vpop.f32.mrb[0].mxu0
  %v717 = vadd.f32 %v147, %v716
  %v718 = vpop.f32.mrb[0].mxu0
  %v719 = vadd.f32 %v147, %v718
  %720 = vdwg.mxu0
  %721 = vst [vmem:[%s3] sm:$0xff] %v220
  %722 = vst [vmem:[%s3 + $0x8] sm:$0xff] %v222
  %723 = vst [vmem:[%s3 + $0x10] sm:$0xff] %v291
  %724 = vst [vmem:[%s3 + $0x18] sm:$0xff] %v293
  %725 = vst [vmem:[%s3 + $0x20] sm:$0xff] %v362
  %726 = vst [vmem:[%s3 + $0x28] sm:$0xff] %v364
  %727 = vst [vmem:[%s3 + $0x30] sm:$0xff] %v433
  %728 = vst [vmem:[%s3 + $0x38] sm:$0xff] %v435
  %729 = vst [vmem:[%s3 + $0x40] sm:$0xff] %v504
  %730 = vst [vmem:[%s3 + $0x48] sm:$0xff] %v506
  %731 = vst [vmem:[%s3 + $0x50] sm:$0xff] %v575
  %732 = vst [vmem:[%s3 + $0x58] sm:$0xff] %v577
  %733 = vst [vmem:[%s3 + $0x60] sm:$0xff] %v646
  %734 = vst [vmem:[%s3 + $0x68] sm:$0xff] %v648
  %735 = vst [vmem:[%s3 + $0x70] sm:$0xff] %v717
  %736 = vst [vmem:[%s3 + $0x78] sm:$0xff] %v719
  // Predicated region
  $region14: #{net_forward_pallas.86} parent=0 // pred_check
    _
  $region15: #{net_forward_pallas.86} parent=0 // pred_check_branch
    %738 = sbr.rel (0) target = $region17
  $region16: #{net_forward_pallas.86} parent=0 // pred_region
    _
  $region17: #{net_forward_pallas.86} parent=0 // pred_fallthru
    _
  // Predicated region
  $region18: #{net_forward_pallas.86} parent=0 // pred_check
    _
  $region19: #{net_forward_pallas.86} parent=0 // pred_check_branch
    %740 = sbr.rel (0) target = $region21
  $region20: #{net_forward_pallas.86} parent=0 // pred_region
    _
  $region21: #{net_forward_pallas.86} parent=0 // pred_fallthru
    _

// kernel: net_forward_pallas.87
$region0: #{net_forward_pallas.87}
  #allocation0 [shape = 'u32[]', space=smem, size = 0x4, offset = 0x4, fixed_abs, tag = 'smem constant byte address 0x4 - core index']
  #allocation1 [shape = 'u32[144,128]{1,0:T(1,128)}', space=vmem, size = 0x12000, scoped, tag = 'internal scratch']
  %s0 = inlined_call_operand.vmem [shape: f32[8,72], index: 0, kind: input, shape index: {}]
  %s1 = inlined_call_operand.vmem [shape: f32[72,2048], index: 1, kind: input, shape index: {}]
  %s2 = inlined_call_operand.vmem [shape: f32[8,1], index: 2, kind: input, shape index: {}]
  %s3 = inlined_call_operand.vmem [shape: f32[8,2048], index: 3, kind: output, shape index: {}]
  %s4 = sld [smem:[#allocation0]]
  $region22: #{net_forward_pallas.87} parent=0
    _
  %s6 = ssub.s32 1, %s4
  %s7 = scalar_select 0, %s6, %s4
  // Predicated region
  $region2: #{net_forward_pallas.87} parent=0 // pred_check
    _
  $region3: #{net_forward_pallas.87} parent=0 // pred_check_branch
    %9 = sbr.rel (0) target = $region5
  $region4: #{net_forward_pallas.87} parent=0 // pred_region
    _
  $region5: #{net_forward_pallas.87} parent=0 // pred_fallthru
    _
  // Predicated region
  $region6: #{net_forward_pallas.87} parent=0 // pred_check
    _
  $region7: #{net_forward_pallas.87} parent=0 // pred_check_branch
    %11 = sbr.rel (0) target = $region9
  $region8: #{net_forward_pallas.87} parent=0 // pred_region
    _
  $region9: #{net_forward_pallas.87} parent=0 // pred_fallthru
    _
  // Predicated region
  $region10: #{net_forward_pallas.87} parent=0 // pred_check
    _
  $region11: #{net_forward_pallas.87} parent=0 // pred_check_branch
    %13 = sbr.rel (0) target = $region13
  $region12: #{net_forward_pallas.87} parent=0 // pred_region
    _
  $region13: #{net_forward_pallas.87} parent=0 // pred_fallthru
    _
  %v14 = vld [vmem:[%s0] sm:$0xff]
  %v15 = vld [vmem:[%s1] sm:$0xff]
  %v16 = vld [vmem:[%s1 + $0x8] sm:$0xff]
  %v17 = vld [vmem:[%s1 + $0x10] sm:$0xff]
  %v18 = vld [vmem:[%s1 + $0x18] sm:$0xff]
  %v19 = vld [vmem:[%s1 + $0x20] sm:$0xff]
  %v20 = vld [vmem:[%s1 + $0x28] sm:$0xff]
  %v21 = vld [vmem:[%s1 + $0x30] sm:$0xff]
  %v22 = vld [vmem:[%s1 + $0x38] sm:$0xff]
  %v23 = vld [vmem:[%s1 + $0x40] sm:$0xff]
  %v24 = vld [vmem:[%s1 + $0x48] sm:$0xff]
  %v25 = vld [vmem:[%s1 + $0x50] sm:$0xff]
  %v26 = vld [vmem:[%s1 + $0x58] sm:$0xff]
  %v27 = vld [vmem:[%s1 + $0x60] sm:$0xff]
  %v28 = vld [vmem:[%s1 + $0x68] sm:$0xff]
  %v29 = vld [vmem:[%s1 + $0x70] sm:$0xff]
  %v30 = vld [vmem:[%s1 + $0x78] sm:$0xff]
  %v31 = vld [vmem:[%s1 + $0x80] sm:$0xff]
  %v32 = vld [vmem:[%s1 + $0x88] sm:$0xff]
  %v33 = vld [vmem:[%s1 + $0x90] sm:$0xff]
  %v34 = vld [vmem:[%s1 + $0x98] sm:$0xff]
  %v35 = vld [vmem:[%s1 + $0xa0] sm:$0xff]
  %v36 = vld [vmem:[%s1 + $0xa8] sm:$0xff]
  %v37 = vld [vmem:[%s1 + $0xb0] sm:$0xff]
  %v38 = vld [vmem:[%s1 + $0xb8] sm:$0xff]
  %v39 = vld [vmem:[%s1 + $0xc0] sm:$0xff]
  %v40 = vld [vmem:[%s1 + $0xc8] sm:$0xff]
  %v41 = vld [vmem:[%s1 + $0xd0] sm:$0xff]
  %v42 = vld [vmem:[%s1 + $0xd8] sm:$0xff]
  %v43 = vld [vmem:[%s1 + $0xe0] sm:$0xff]
  %v44 = vld [vmem:[%s1 + $0xe8] sm:$0xff]
  %v45 = vld [vmem:[%s1 + $0xf0] sm:$0xff]
  %v46 = vld [vmem:[%s1 + $0xf8] sm:$0xff]
  %v47 = vld [vmem:[%s1 + $0x100] sm:$0xff]
  %v48 = vld [vmem:[%s1 + $0x108] sm:$0xff]
  %v49 = vld [vmem:[%s1 + $0x110] sm:$0xff]
  %v50 = vld [vmem:[%s1 + $0x118] sm:$0xff]
  %v51 = vld [vmem:[%s1 + $0x120] sm:$0xff]
  %v52 = vld [vmem:[%s1 + $0x128] sm:$0xff]
  %v53 = vld [vmem:[%s1 + $0x130] sm:$0xff]
  %v54 = vld [vmem:[%s1 + $0x138] sm:$0xff]
  %v55 = vld [vmem:[%s1 + $0x140] sm:$0xff]
  %v56 = vld [vmem:[%s1 + $0x148] sm:$0xff]
  %v57 = vld [vmem:[%s1 + $0x150] sm:$0xff]
  %v58 = vld [vmem:[%s1 + $0x158] sm:$0xff]
  %v59 = vld [vmem:[%s1 + $0x160] sm:$0xff]
  %v60 = vld [vmem:[%s1 + $0x168] sm:$0xff]
  %v61 = vld [vmem:[%s1 + $0x170] sm:$0xff]
  %v62 = vld [vmem:[%s1 + $0x178] sm:$0xff]
  %v63 = vld [vmem:[%s1 + $0x180] sm:$0xff]
  %v64 = vld [vmem:[%s1 + $0x188] sm:$0xff]
  %v65 = vld [vmem:[%s1 + $0x190] sm:$0xff]
  %v66 = vld [vmem:[%s1 + $0x198] sm:$0xff]
  %v67 = vld [vmem:[%s1 + $0x1a0] sm:$0xff]
  %v68 = vld [vmem:[%s1 + $0x1a8] sm:$0xff]
  %v69 = vld [vmem:[%s1 + $0x1b0] sm:$0xff]
  %v70 = vld [vmem:[%s1 + $0x1b8] sm:$0xff]
  %v71 = vld [vmem:[%s1 + $0x1c0] sm:$0xff]
  %v72 = vld [vmem:[%s1 + $0x1c8] sm:$0xff]
  %v73 = vld [vmem:[%s1 + $0x1d0] sm:$0xff]
  %v74 = vld [vmem:[%s1 + $0x1d8] sm:$0xff]
  %v75 = vld [vmem:[%s1 + $0x1e0] sm:$0xff]
  %v76 = vld [vmem:[%s1 + $0x1e8] sm:$0xff]
  %v77 = vld [vmem:[%s1 + $0x1f0] sm:$0xff]
  %v78 = vld [vmem:[%s1 + $0x1f8] sm:$0xff]
  %v79 = vld [vmem:[%s1 + $0x200] sm:$0xff]
  %v80 = vld [vmem:[%s1 + $0x208] sm:$0xff]
  %v81 = vld [vmem:[%s1 + $0x210] sm:$0xff]
  %v82 = vld [vmem:[%s1 + $0x218] sm:$0xff]
  %v83 = vld [vmem:[%s1 + $0x220] sm:$0xff]
  %v84 = vld [vmem:[%s1 + $0x228] sm:$0xff]
  %v85 = vld [vmem:[%s1 + $0x230] sm:$0xff]
  %v86 = vld [vmem:[%s1 + $0x238] sm:$0xff]
  %v87 = vld [vmem:[%s1 + $0x240] sm:$0xff]
  %v88 = vld [vmem:[%s1 + $0x248] sm:$0xff]
  %v89 = vld [vmem:[%s1 + $0x250] sm:$0xff]
  %v90 = vld [vmem:[%s1 + $0x258] sm:$0xff]
  %v91 = vld [vmem:[%s1 + $0x260] sm:$0xff]
  %v92 = vld [vmem:[%s1 + $0x268] sm:$0xff]
  %v93 = vld [vmem:[%s1 + $0x270] sm:$0xff]
  %v94 = vld [vmem:[%s1 + $0x278] sm:$0xff]
  %v95 = vld [vmem:[%s1 + $0x280] sm:$0xff]
  %v96 = vld [vmem:[%s1 + $0x288] sm:$0xff]
  %v97 = vld [vmem:[%s1 + $0x290] sm:$0xff]
  %v98 = vld [vmem:[%s1 + $0x298] sm:$0xff]
  %v99 = vld [vmem:[%s1 + $0x2a0] sm:$0xff]
  %v100 = vld [vmem:[%s1 + $0x2a8] sm:$0xff]
  %v101 = vld [vmem:[%s1 + $0x2b0] sm:$0xff]
  %v102 = vld [vmem:[%s1 + $0x2b8] sm:$0xff]
  %v103 = vld [vmem:[%s1 + $0x2c0] sm:$0xff]
  %v104 = vld [vmem:[%s1 + $0x2c8] sm:$0xff]
  %v105 = vld [vmem:[%s1 + $0x2d0] sm:$0xff]
  %v106 = vld [vmem:[%s1 + $0x2d8] sm:$0xff]
  %v107 = vld [vmem:[%s1 + $0x2e0] sm:$0xff]
  %v108 = vld [vmem:[%s1 + $0x2e8] sm:$0xff]
  %v109 = vld [vmem:[%s1 + $0x2f0] sm:$0xff]
  %v110 = vld [vmem:[%s1 + $0x2f8] sm:$0xff]
  %v111 = vld [vmem:[%s1 + $0x300] sm:$0xff]
  %v112 = vld [vmem:[%s1 + $0x308] sm:$0xff]
  %v113 = vld [vmem:[%s1 + $0x310] sm:$0xff]
  %v114 = vld [vmem:[%s1 + $0x318] sm:$0xff]
  %v115 = vld [vmem:[%s1 + $0x320] sm:$0xff]
  %v116 = vld [vmem:[%s1 + $0x328] sm:$0xff]
  %v117 = vld [vmem:[%s1 + $0x330] sm:$0xff]
  %v118 = vld [vmem:[%s1 + $0x338] sm:$0xff]
  %v119 = vld [vmem:[%s1 + $0x340] sm:$0xff]
  %v120 = vld [vmem:[%s1 + $0x348] sm:$0xff]
  %v121 = vld [vmem:[%s1 + $0x350] sm:$0xff]
  %v122 = vld [vmem:[%s1 + $0x358] sm:$0xff]
  %v123 = vld [vmem:[%s1 + $0x360] sm:$0xff]
  %v124 = vld [vmem:[%s1 + $0x368] sm:$0xff]
  %v125 = vld [vmem:[%s1 + $0x370] sm:$0xff]
  %v126 = vld [vmem:[%s1 + $0x378] sm:$0xff]
  %v127 = vld [vmem:[%s1 + $0x380] sm:$0xff]
  %v128 = vld [vmem:[%s1 + $0x388] sm:$0xff]
  %v129 = vld [vmem:[%s1 + $0x390] sm:$0xff]
  %v130 = vld [vmem:[%s1 + $0x398] sm:$0xff]
  %v131 = vld [vmem:[%s1 + $0x3a0] sm:$0xff]
  %v132 = vld [vmem:[%s1 + $0x3a8] sm:$0xff]
  %v133 = vld [vmem:[%s1 + $0x3b0] sm:$0xff]
  %v134 = vld [vmem:[%s1 + $0x3b8] sm:$0xff]
  %v135 = vld [vmem:[%s1 + $0x3c0] sm:$0xff]
  %v136 = vld [vmem:[%s1 + $0x3c8] sm:$0xff]
  %v137 = vld [vmem:[%s1 + $0x3d0] sm:$0xff]
  %v138 = vld [vmem:[%s1 + $0x3d8] sm:$0xff]
  %v139 = vld [vmem:[%s1 + $0x3e0] sm:$0xff]
  %v140 = vld [vmem:[%s1 + $0x3e8] sm:$0xff]
  %v141 = vld [vmem:[%s1 + $0x3f0] sm:$0xff]
  %v142 = vld [vmem:[%s1 + $0x3f8] sm:$0xff]
  %v143 = vld [vmem:[%s1 + $0x400] sm:$0xff]
  %v144 = vld [vmem:[%s1 + $0x408] sm:$0xff]
  %v145 = vld [vmem:[%s1 + $0x410] sm:$0xff]
  %v146 = vld [vmem:[%s1 + $0x418] sm:$0xff]
  %v147 = vld [vmem:[%s1 + $0x420] sm:$0xff]
  %v148 = vld [vmem:[%s1 + $0x428] sm:$0xff]
  %v149 = vld [vmem:[%s1 + $0x430] sm:$0xff]
  %v150 = vld [vmem:[%s1 + $0x438] sm:$0xff]
  %v151 = vld [vmem:[%s1 + $0x440] sm:$0xff]
  %v152 = vld [vmem:[%s1 + $0x448] sm:$0xff]
  %v153 = vld [vmem:[%s1 + $0x450] sm:$0xff]
  %v154 = vld [vmem:[%s1 + $0x458] sm:$0xff]
  %v155 = vld [vmem:[%s1 + $0x460] sm:$0xff]
  %v156 = vld [vmem:[%s1 + $0x468] sm:$0xff]
  %v157 = vld [vmem:[%s1 + $0x470] sm:$0xff]
  %v158 = vld [vmem:[%s1 + $0x478] sm:$0xff]
  %v159 = vld [vmem:[%s2] sm:$0xff]
  %161 = vset.pattern.permute.xlu0 0
  %162 = vperm.xlu0 %161, %v159
  %v163 = vpop.permute.xlu0 %162
  %vm165 = vcmask 588800
  %v167 = vsel %vm165, %v14, 0
  %169 = vmatprep.subr.mxu0 %v16
  %170 = vmatpush1.msra.mxu0 %v15
  %171 = vmatprep.subr.mxu0 %v32
  %172 = vmatpush1.msra.mxu0 %v31
  %173 = vmatprep.subr.mxu0 %v48
  %174 = vmatpush1.msra.mxu0 %v47
  %175 = vmatprep.subr.mxu0 %v64
  %176 = vmatpush1.msra.mxu0 %v63
  %177 = vmatprep.subr.mxu0 %v80
  %178 = vmatpush1.msra.mxu0 %v79
  %179 = vmatprep.subr.mxu0 %v96
  %180 = vmatpush1.msra.mxu0 %v95
  %181 = vmatprep.subr.mxu0 %v112
  %182 = vmatpush1.msra.mxu0 %v111
  %183 = vmatprep.subr.mxu0 %v128
  %184 = vmatpush1.msra.mxu0 %v127
  %185 = vmatprep.subr.mxu0 %v144
  %186 = vmatpush1.msra.mxu0 %v143
  %187 = vmatprep.subr.mxu0 0.0
  %188 = vmatpush1.msra.mxu0 0.0
  %189 = vmatprep.subr.mxu0 0.0
  %190 = vmatpush1.msra.mxu0 0.0
  %191 = vmatprep.subr.mxu0 0.0
  %192 = vmatpush1.msra.mxu0 0.0
  %193 = vmatprep.subr.mxu0 0.0
  %194 = vmatpush1.msra.mxu0 0.0
  %195 = vmatprep.subr.mxu0 0.0
  %196 = vmatpush1.msra.mxu0 0.0
  %197 = vmatprep.subr.mxu0 0.0
  %198 = vmatpush1.msra.mxu0 0.0
  %199 = vmatprep.subr.mxu0 0.0
  %200 = vmatpush1.msra.mxu0 0.0
  %201 = vmatprep.subr.mxu0 0.0
  %202 = vmatpush1.msra.mxu0 0.0
  %203 = vmatprep.subr.mxu0 0.0
  %204 = vmatpush1.msra.mxu0 0.0
  %205 = vmatprep.subr.mxu0 0.0
  %206 = vmatpush1.msra.mxu0 0.0
  %207 = vmatprep.subr.mxu0 0.0
  %208 = vmatpush1.msra.mxu0 0.0
  %209 = vmatprep.subr.mxu0 0.0
  %210 = vmatpush1.msra.mxu0 0.0
  %211 = vmatprep.subr.mxu0 0.0
  %212 = vmatpush1.msra.mxu0 0.0
  %213 = vmatprep.subr.mxu0 0.0
  %214 = vmatpush1.msra.mxu0 0.0
  %215 = vmatprep.subr.mxu0 0.0
  %216 = vmatpush1.msra.mxu0 0.0
  %217 = vmatprep.subr.mxu0 0.0
  %218 = vmatpush1.msra.mxu0 0.0
  %219 = vmatprep.subr.mxu0 0.0
  %220 = vmatpush1.msra.mxu0 0.0
  %221 = vmatprep.subr.mxu0 0.0
  %222 = vmatpush1.msra.mxu0 0.0
  %223 = vmatprep.subr.mxu0 0.0
  %224 = vmatpush1.msra.mxu0 0.0
  %225 = vmatprep.subr.mxu0 0.0
  %226 = vmatpush1.msra.mxu0 0.0
  %227 = vmatprep.subr.mxu0 0.0
  %228 = vmatpush1.msra.mxu0 0.0
  %229 = vmatprep.subr.mxu0 0.0
  %230 = vmatpush1.msra.mxu0 0.0
  %231 = vmatprep.subr.mxu0 0.0
  %232 = vmatpush1.msra.mxu0 0.0
  %233 = vmatprep.mubr.f32.mxu0 0.0
  %234 = vmatmul.mubr.f32.gmra.mrb[0].mxu0 %v167
  %v235 = vpop.f32.mrb[0].mxu0
  %v236 = vadd.f32 %v163, %v235
  %v237 = vpop.f32.mrb[0].mxu0
  %v238 = vadd.f32 %v163, %v237
  %239 = vdwg.mxu0
  %240 = vmatprep.subr.mxu0 %v18
  %241 = vmatpush1.msra.mxu0 %v17
  %242 = vmatprep.subr.mxu0 %v34
  %243 = vmatpush1.msra.mxu0 %v33
  %244 = vmatprep.subr.mxu0 %v50
  %245 = vmatpush1.msra.mxu0 %v49
  %246 = vmatprep.subr.mxu0 %v66
  %247 = vmatpush1.msra.mxu0 %v65
  %248 = vmatprep.subr.mxu0 %v82
  %249 = vmatpush1.msra.mxu0 %v81
  %250 = vmatprep.subr.mxu0 %v98
  %251 = vmatpush1.msra.mxu0 %v97
  %252 = vmatprep.subr.mxu0 %v114
  %253 = vmatpush1.msra.mxu0 %v113
  %254 = vmatprep.subr.mxu0 %v130
  %255 = vmatpush1.msra.mxu0 %v129
  %256 = vmatprep.subr.mxu0 %v146
  %257 = vmatpush1.msra.mxu0 %v145
  %258 = vmatprep.subr.mxu0 0.0
  %259 = vmatpush1.msra.mxu0 0.0
  %260 = vmatprep.subr.mxu0 0.0
  %261 = vmatpush1.msra.mxu0 0.0
  %262 = vmatprep.subr.mxu0 0.0
  %263 = vmatpush1.msra.mxu0 0.0
  %264 = vmatprep.subr.mxu0 0.0
  %265 = vmatpush1.msra.mxu0 0.0
  %266 = vmatprep.subr.mxu0 0.0
  %267 = vmatpush1.msra.mxu0 0.0
  %268 = vmatprep.subr.mxu0 0.0
  %269 = vmatpush1.msra.mxu0 0.0
  %270 = vmatprep.subr.mxu0 0.0
  %271 = vmatpush1.msra.mxu0 0.0
  %272 = vmatprep.subr.mxu0 0.0
  %273 = vmatpush1.msra.mxu0 0.0
  %274 = vmatprep.subr.mxu0 0.0
  %275 = vmatpush1.msra.mxu0 0.0
  %276 = vmatprep.subr.mxu0 0.0
  %277 = vmatpush1.msra.mxu0 0.0
  %278 = vmatprep.subr.mxu0 0.0
  %279 = vmatpush1.msra.mxu0 0.0
  %280 = vmatprep.subr.mxu0 0.0
  %281 = vmatpush1.msra.mxu0 0.0
  %282 = vmatprep.subr.mxu0 0.0
  %283 = vmatpush1.msra.mxu0 0.0
  %284 = vmatprep.subr.mxu0 0.0
  %285 = vmatpush1.msra.mxu0 0.0
  %286 = vmatprep.subr.mxu0 0.0
  %287 = vmatpush1.msra.mxu0 0.0
  %288 = vmatprep.subr.mxu0 0.0
  %289 = vmatpush1.msra.mxu0 0.0
  %290 = vmatprep.subr.mxu0 0.0
  %291 = vmatpush1.msra.mxu0 0.0
  %292 = vmatprep.subr.mxu0 0.0
  %293 = vmatpush1.msra.mxu0 0.0
  %294 = vmatprep.subr.mxu0 0.0
  %295 = vmatpush1.msra.mxu0 0.0
  %296 = vmatprep.subr.mxu0 0.0
  %297 = vmatpush1.msra.mxu0 0.0
  %298 = vmatprep.subr.mxu0 0.0
  %299 = vmatpush1.msra.mxu0 0.0
  %300 = vmatprep.subr.mxu0 0.0
  %301 = vmatpush1.msra.mxu0 0.0
  %302 = vmatprep.subr.mxu0 0.0
  %303 = vmatpush1.msra.mxu0 0.0
  %304 = vmatprep.mubr.f32.mxu0 0.0
  %305 = vmatmul.mubr.f32.gmra.mrb[0].mxu0 %v167
  %v306 = vpop.f32.mrb[0].mxu0
  %v307 = vadd.f32 %v163, %v306
  %v308 = vpop.f32.mrb[0].mxu0
  %v309 = vadd.f32 %v163, %v308
  %310 = vdwg.mxu0
  %311 = vmatprep.subr.mxu0 %v20
  %312 = vmatpush1.msra.mxu0 %v19
  %313 = vmatprep.subr.mxu0 %v36
  %314 = vmatpush1.msra.mxu0 %v35
  %315 = vmatprep.subr.mxu0 %v52
  %316 = vmatpush1.msra.mxu0 %v51
  %317 = vmatprep.subr.mxu0 %v68
  %318 = vmatpush1.msra.mxu0 %v67
  %319 = vmatprep.subr.mxu0 %v84
  %320 = vmatpush1.msra.mxu0 %v83
  %321 = vmatprep.subr.mxu0 %v100
  %322 = vmatpush1.msra.mxu0 %v99
  %323 = vmatprep.subr.mxu0 %v116
  %324 = vmatpush1.msra.mxu0 %v115
  %325 = vmatprep.subr.mxu0 %v132
  %326 = vmatpush1.msra.mxu0 %v131
  %327 = vmatprep.subr.mxu0 %v148
  %328 = vmatpush1.msra.mxu0 %v147
  %329 = vmatprep.subr.mxu0 0.0
  %330 = vmatpush1.msra.mxu0 0.0
  %331 = vmatprep.subr.mxu0 0.0
  %332 = vmatpush1.msra.mxu0 0.0
  %333 = vmatprep.subr.mxu0 0.0
  %334 = vmatpush1.msra.mxu0 0.0
  %335 = vmatprep.subr.mxu0 0.0
  %336 = vmatpush1.msra.mxu0 0.0
  %337 = vmatprep.subr.mxu0 0.0
  %338 = vmatpush1.msra.mxu0 0.0
  %339 = vmatprep.subr.mxu0 0.0
  %340 = vmatpush1.msra.mxu0 0.0
  %341 = vmatprep.subr.mxu0 0.0
  %342 = vmatpush1.msra.mxu0 0.0
  %343 = vmatprep.subr.mxu0 0.0
  %344 = vmatpush1.msra.mxu0 0.0
  %345 = vmatprep.subr.mxu0 0.0
  %346 = vmatpush1.msra.mxu0 0.0
  %347 = vmatprep.subr.mxu0 0.0
  %348 = vmatpush1.msra.mxu0 0.0
  %349 = vmatprep.subr.mxu0 0.0
  %350 = vmatpush1.msra.mxu0 0.0
  %351 = vmatprep.subr.mxu0 0.0
  %352 = vmatpush1.msra.mxu0 0.0
  %353 = vmatprep.subr.mxu0 0.0
  %354 = vmatpush1.msra.mxu0 0.0
  %355 = vmatprep.subr.mxu0 0.0
  %356 = vmatpush1.msra.mxu0 0.0
  %357 = vmatprep.subr.mxu0 0.0
  %358 = vmatpush1.msra.mxu0 0.0
  %359 = vmatprep.subr.mxu0 0.0
  %360 = vmatpush1.msra.mxu0 0.0
  %361 = vmatprep.subr.mxu0 0.0
  %362 = vmatpush1.msra.mxu0 0.0
  %363 = vmatprep.subr.mxu0 0.0
  %364 = vmatpush1.msra.mxu0 0.0
  %365 = vmatprep.subr.mxu0 0.0
  %366 = vmatpush1.msra.mxu0 0.0
  %367 = vmatprep.subr.mxu0 0.0
  %368 = vmatpush1.msra.mxu0 0.0
  %369 = vmatprep.subr.mxu0 0.0
  %370 = vmatpush1.msra.mxu0 0.0
  %371 = vmatprep.subr.mxu0 0.0
  %372 = vmatpush1.msra.mxu0 0.0
  %373 = vmatprep.subr.mxu0 0.0
  %374 = vmatpush1.msra.mxu0 0.0
  %375 = vmatprep.mubr.f32.mxu0 0.0
  %376 = vmatmul.mubr.f32.gmra.mrb[0].mxu0 %v167
  %v377 = vpop.f32.mrb[0].mxu0
  %v378 = vadd.f32 %v163, %v377
  %v379 = vpop.f32.mrb[0].mxu0
  %v380 = vadd.f32 %v163, %v379
  %381 = vdwg.mxu0
  %382 = vmatprep.subr.mxu0 %v22
  %383 = vmatpush1.msra.mxu0 %v21
  %384 = vmatprep.subr.mxu0 %v38
  %385 = vmatpush1.msra.mxu0 %v37
  %386 = vmatprep.subr.mxu0 %v54
  %387 = vmatpush1.msra.mxu0 %v53
  %388 = vmatprep.subr.mxu0 %v70
  %389 = vmatpush1.msra.mxu0 %v69
  %390 = vmatprep.subr.mxu0 %v86
  %391 = vmatpush1.msra.mxu0 %v85
  %392 = vmatprep.subr.mxu0 %v102
  %393 = vmatpush1.msra.mxu0 %v101
  %394 = vmatprep.subr.mxu0 %v118
  %395 = vmatpush1.msra.mxu0 %v117
  %396 = vmatprep.subr.mxu0 %v134
  %397 = vmatpush1.msra.mxu0 %v133
  %398 = vmatprep.subr.mxu0 %v150
  %399 = vmatpush1.msra.mxu0 %v149
  %400 = vmatprep.subr.mxu0 0.0
  %401 = vmatpush1.msra.mxu0 0.0
  %402 = vmatprep.subr.mxu0 0.0
  %403 = vmatpush1.msra.mxu0 0.0
  %404 = vmatprep.subr.mxu0 0.0
  %405 = vmatpush1.msra.mxu0 0.0
  %406 = vmatprep.subr.mxu0 0.0
  %407 = vmatpush1.msra.mxu0 0.0
  %408 = vmatprep.subr.mxu0 0.0
  %409 = vmatpush1.msra.mxu0 0.0
  %410 = vmatprep.subr.mxu0 0.0
  %411 = vmatpush1.msra.mxu0 0.0
  %412 = vmatprep.subr.mxu0 0.0
  %413 = vmatpush1.msra.mxu0 0.0
  %414 = vmatprep.subr.mxu0 0.0
  %415 = vmatpush1.msra.mxu0 0.0
  %416 = vmatprep.subr.mxu0 0.0
  %417 = vmatpush1.msra.mxu0 0.0
  %418 = vmatprep.subr.mxu0 0.0
  %419 = vmatpush1.msra.mxu0 0.0
  %420 = vmatprep.subr.mxu0 0.0
  %421 = vmatpush1.msra.mxu0 0.0
  %422 = vmatprep.subr.mxu0 0.0
  %423 = vmatpush1.msra.mxu0 0.0
  %424 = vmatprep.subr.mxu0 0.0
  %425 = vmatpush1.msra.mxu0 0.0
  %426 = vmatprep.subr.mxu0 0.0
  %427 = vmatpush1.msra.mxu0 0.0
  %428 = vmatprep.subr.mxu0 0.0
  %429 = vmatpush1.msra.mxu0 0.0
  %430 = vmatprep.subr.mxu0 0.0
  %431 = vmatpush1.msra.mxu0 0.0
  %432 = vmatprep.subr.mxu0 0.0
  %433 = vmatpush1.msra.mxu0 0.0
  %434 = vmatprep.subr.mxu0 0.0
  %435 = vmatpush1.msra.mxu0 0.0
  %436 = vmatprep.subr.mxu0 0.0
  %437 = vmatpush1.msra.mxu0 0.0
  %438 = vmatprep.subr.mxu0 0.0
  %439 = vmatpush1.msra.mxu0 0.0
  %440 = vmatprep.subr.mxu0 0.0
  %441 = vmatpush1.msra.mxu0 0.0
  %442 = vmatprep.subr.mxu0 0.0
  %443 = vmatpush1.msra.mxu0 0.0
  %444 = vmatprep.subr.mxu0 0.0
  %445 = vmatpush1.msra.mxu0 0.0
  %446 = vmatprep.mubr.f32.mxu0 0.0
  %447 = vmatmul.mubr.f32.gmra.mrb[0].mxu0 %v167
  %v448 = vpop.f32.mrb[0].mxu0
  %v449 = vadd.f32 %v163, %v448
  %v450 = vpop.f32.mrb[0].mxu0
  %v451 = vadd.f32 %v163, %v450
  %452 = vdwg.mxu0
  %453 = vmatprep.subr.mxu0 %v24
  %454 = vmatpush1.msra.mxu0 %v23
  %455 = vmatprep.subr.mxu0 %v40
  %456 = vmatpush1.msra.mxu0 %v39
  %457 = vmatprep.subr.mxu0 %v56
  %458 = vmatpush1.msra.mxu0 %v55
  %459 = vmatprep.subr.mxu0 %v72
  %460 = vmatpush1.msra.mxu0 %v71
  %461 = vmatprep.subr.mxu0 %v88
  %462 = vmatpush1.msra.mxu0 %v87
  %463 = vmatprep.subr.mxu0 %v104
  %464 = vmatpush1.msra.mxu0 %v103
  %465 = vmatprep.subr.mxu0 %v120
  %466 = vmatpush1.msra.mxu0 %v119
  %467 = vmatprep.subr.mxu0 %v136
  %468 = vmatpush1.msra.mxu0 %v135
  %469 = vmatprep.subr.mxu0 %v152
  %470 = vmatpush1.msra.mxu0 %v151
  %471 = vmatprep.subr.mxu0 0.0
  %472 = vmatpush1.msra.mxu0 0.0
  %473 = vmatprep.subr.mxu0 0.0
  %474 = vmatpush1.msra.mxu0 0.0
  %475 = vmatprep.subr.mxu0 0.0
  %476 = vmatpush1.msra.mxu0 0.0
  %477 = vmatprep.subr.mxu0 0.0
  %478 = vmatpush1.msra.mxu0 0.0
  %479 = vmatprep.subr.mxu0 0.0
  %480 = vmatpush1.msra.mxu0 0.0
  %481 = vmatprep.subr.mxu0 0.0
  %482 = vmatpush1.msra.mxu0 0.0
  %483 = vmatprep.subr.mxu0 0.0
  %484 = vmatpush1.msra.mxu0 0.0
  %485 = vmatprep.subr.mxu0 0.0
  %486 = vmatpush1.msra.mxu0 0.0
  %487 = vmatprep.subr.mxu0 0.0
  %488 = vmatpush1.msra.mxu0 0.0
  %489 = vmatprep.subr.mxu0 0.0
  %490 = vmatpush1.msra.mxu0 0.0
  %491 = vmatprep.subr.mxu0 0.0
  %492 = vmatpush1.msra.mxu0 0.0
  %493 = vmatprep.subr.mxu0 0.0
  %494 = vmatpush1.msra.mxu0 0.0
  %495 = vmatprep.subr.mxu0 0.0
  %496 = vmatpush1.msra.mxu0 0.0
  %497 = vmatprep.subr.mxu0 0.0
  %498 = vmatpush1.msra.mxu0 0.0
  %499 = vmatprep.subr.mxu0 0.0
  %500 = vmatpush1.msra.mxu0 0.0
  %501 = vmatprep.subr.mxu0 0.0
  %502 = vmatpush1.msra.mxu0 0.0
  %503 = vmatprep.subr.mxu0 0.0
  %504 = vmatpush1.msra.mxu0 0.0
  %505 = vmatprep.subr.mxu0 0.0
  %506 = vmatpush1.msra.mxu0 0.0
  %507 = vmatprep.subr.mxu0 0.0
  %508 = vmatpush1.msra.mxu0 0.0
  %509 = vmatprep.subr.mxu0 0.0
  %510 = vmatpush1.msra.mxu0 0.0
  %511 = vmatprep.subr.mxu0 0.0
  %512 = vmatpush1.msra.mxu0 0.0
  %513 = vmatprep.subr.mxu0 0.0
  %514 = vmatpush1.msra.mxu0 0.0
  %515 = vmatprep.subr.mxu0 0.0
  %516 = vmatpush1.msra.mxu0 0.0
  %517 = vmatprep.mubr.f32.mxu0 0.0
  %518 = vmatmul.mubr.f32.gmra.mrb[0].mxu0 %v167
  %v519 = vpop.f32.mrb[0].mxu0
  %v520 = vadd.f32 %v163, %v519
  %v521 = vpop.f32.mrb[0].mxu0
  %v522 = vadd.f32 %v163, %v521
  %523 = vdwg.mxu0
  %524 = vmatprep.subr.mxu0 %v26
  %525 = vmatpush1.msra.mxu0 %v25
  %526 = vmatprep.subr.mxu0 %v42
  %527 = vmatpush1.msra.mxu0 %v41
  %528 = vmatprep.subr.mxu0 %v58
  %529 = vmatpush1.msra.mxu0 %v57
  %530 = vmatprep.subr.mxu0 %v74
  %531 = vmatpush1.msra.mxu0 %v73
  %532 = vmatprep.subr.mxu0 %v90
  %533 = vmatpush1.msra.mxu0 %v89
  %534 = vmatprep.subr.mxu0 %v106
  %535 = vmatpush1.msra.mxu0 %v105
  %536 = vmatprep.subr.mxu0 %v122
  %537 = vmatpush1.msra.mxu0 %v121
  %538 = vmatprep.subr.mxu0 %v138
  %539 = vmatpush1.msra.mxu0 %v137
  %540 = vmatprep.subr.mxu0 %v154
  %541 = vmatpush1.msra.mxu0 %v153
  %542 = vmatprep.subr.mxu0 0.0
  %543 = vmatpush1.msra.mxu0 0.0
  %544 = vmatprep.subr.mxu0 0.0
  %545 = vmatpush1.msra.mxu0 0.0
  %546 = vmatprep.subr.mxu0 0.0
  %547 = vmatpush1.msra.mxu0 0.0
  %548 = vmatprep.subr.mxu0 0.0
  %549 = vmatpush1.msra.mxu0 0.0
  %550 = vmatprep.subr.mxu0 0.0
  %551 = vmatpush1.msra.mxu0 0.0
  %552 = vmatprep.subr.mxu0 0.0
  %553 = vmatpush1.msra.mxu0 0.0
  %554 = vmatprep.subr.mxu0 0.0
  %555 = vmatpush1.msra.mxu0 0.0
  %556 = vmatprep.subr.mxu0 0.0
  %557 = vmatpush1.msra.mxu0 0.0
  %558 = vmatprep.subr.mxu0 0.0
  %559 = vmatpush1.msra.mxu0 0.0
  %560 = vmatprep.subr.mxu0 0.0
  %561 = vmatpush1.msra.mxu0 0.0
  %562 = vmatprep.subr.mxu0 0.0
  %563 = vmatpush1.msra.mxu0 0.0
  %564 = vmatprep.subr.mxu0 0.0
  %565 = vmatpush1.msra.mxu0 0.0
  %566 = vmatprep.subr.mxu0 0.0
  %567 = vmatpush1.msra.mxu0 0.0
  %568 = vmatprep.subr.mxu0 0.0
  %569 = vmatpush1.msra.mxu0 0.0
  %570 = vmatprep.subr.mxu0 0.0
  %571 = vmatpush1.msra.mxu0 0.0
  %572 = vmatprep.subr.mxu0 0.0
  %573 = vmatpush1.msra.mxu0 0.0
  %574 = vmatprep.subr.mxu0 0.0
  %575 = vmatpush1.msra.mxu0 0.0
  %576 = vmatprep.subr.mxu0 0.0
  %577 = vmatpush1.msra.mxu0 0.0
  %578 = vmatprep.subr.mxu0 0.0
  %579 = vmatpush1.msra.mxu0 0.0
  %580 = vmatprep.subr.mxu0 0.0
  %581 = vmatpush1.msra.mxu0 0.0
  %582 = vmatprep.subr.mxu0 0.0
  %583 = vmatpush1.msra.mxu0 0.0
  %584 = vmatprep.subr.mxu0 0.0
  %585 = vmatpush1.msra.mxu0 0.0
  %586 = vmatprep.subr.mxu0 0.0
  %587 = vmatpush1.msra.mxu0 0.0
  %588 = vmatprep.mubr.f32.mxu0 0.0
  %589 = vmatmul.mubr.f32.gmra.mrb[0].mxu0 %v167
  %v590 = vpop.f32.mrb[0].mxu0
  %v591 = vadd.f32 %v163, %v590
  %v592 = vpop.f32.mrb[0].mxu0
  %v593 = vadd.f32 %v163, %v592
  %594 = vdwg.mxu0
  %595 = vmatprep.subr.mxu0 %v28
  %596 = vmatpush1.msra.mxu0 %v27
  %597 = vmatprep.subr.mxu0 %v44
  %598 = vmatpush1.msra.mxu0 %v43
  %599 = vmatprep.subr.mxu0 %v60
  %600 = vmatpush1.msra.mxu0 %v59
  %601 = vmatprep.subr.mxu0 %v76
  %602 = vmatpush1.msra.mxu0 %v75
  %603 = vmatprep.subr.mxu0 %v92
  %604 = vmatpush1.msra.mxu0 %v91
  %605 = vmatprep.subr.mxu0 %v108
  %606 = vmatpush1.msra.mxu0 %v107
  %607 = vmatprep.subr.mxu0 %v124
  %608 = vmatpush1.msra.mxu0 %v123
  %609 = vmatprep.subr.mxu0 %v140
  %610 = vmatpush1.msra.mxu0 %v139
  %611 = vmatprep.subr.mxu0 %v156
  %612 = vmatpush1.msra.mxu0 %v155
  %613 = vmatprep.subr.mxu0 0.0
  %614 = vmatpush1.msra.mxu0 0.0
  %615 = vmatprep.subr.mxu0 0.0
  %616 = vmatpush1.msra.mxu0 0.0
  %617 = vmatprep.subr.mxu0 0.0
  %618 = vmatpush1.msra.mxu0 0.0
  %619 = vmatprep.subr.mxu0 0.0
  %620 = vmatpush1.msra.mxu0 0.0
  %621 = vmatprep.subr.mxu0 0.0
  %622 = vmatpush1.msra.mxu0 0.0
  %623 = vmatprep.subr.mxu0 0.0
  %624 = vmatpush1.msra.mxu0 0.0
  %625 = vmatprep.subr.mxu0 0.0
  %626 = vmatpush1.msra.mxu0 0.0
  %627 = vmatprep.subr.mxu0 0.0
  %628 = vmatpush1.msra.mxu0 0.0
  %629 = vmatprep.subr.mxu0 0.0
  %630 = vmatpush1.msra.mxu0 0.0
  %631 = vmatprep.subr.mxu0 0.0
  %632 = vmatpush1.msra.mxu0 0.0
  %633 = vmatprep.subr.mxu0 0.0
  %634 = vmatpush1.msra.mxu0 0.0
  %635 = vmatprep.subr.mxu0 0.0
  %636 = vmatpush1.msra.mxu0 0.0
  %637 = vmatprep.subr.mxu0 0.0
  %638 = vmatpush1.msra.mxu0 0.0
  %639 = vmatprep.subr.mxu0 0.0
  %640 = vmatpush1.msra.mxu0 0.0
  %641 = vmatprep.subr.mxu0 0.0
  %642 = vmatpush1.msra.mxu0 0.0
  %643 = vmatprep.subr.mxu0 0.0
  %644 = vmatpush1.msra.mxu0 0.0
  %645 = vmatprep.subr.mxu0 0.0
  %646 = vmatpush1.msra.mxu0 0.0
  %647 = vmatprep.subr.mxu0 0.0
  %648 = vmatpush1.msra.mxu0 0.0
  %649 = vmatprep.subr.mxu0 0.0
  %650 = vmatpush1.msra.mxu0 0.0
  %651 = vmatprep.subr.mxu0 0.0
  %652 = vmatpush1.msra.mxu0 0.0
  %653 = vmatprep.subr.mxu0 0.0
  %654 = vmatpush1.msra.mxu0 0.0
  %655 = vmatprep.subr.mxu0 0.0
  %656 = vmatpush1.msra.mxu0 0.0
  %657 = vmatprep.subr.mxu0 0.0
  %658 = vmatpush1.msra.mxu0 0.0
  %659 = vmatprep.mubr.f32.mxu0 0.0
  %660 = vmatmul.mubr.f32.gmra.mrb[0].mxu0 %v167
  %v661 = vpop.f32.mrb[0].mxu0
  %v662 = vadd.f32 %v163, %v661
  %v663 = vpop.f32.mrb[0].mxu0
  %v664 = vadd.f32 %v163, %v663
  %665 = vdwg.mxu0
  %666 = vmatprep.subr.mxu0 %v30
  %667 = vmatpush1.msra.mxu0 %v29
  %668 = vmatprep.subr.mxu0 %v46
  %669 = vmatpush1.msra.mxu0 %v45
  %670 = vmatprep.subr.mxu0 %v62
  %671 = vmatpush1.msra.mxu0 %v61
  %672 = vmatprep.subr.mxu0 %v78
  %673 = vmatpush1.msra.mxu0 %v77
  %674 = vmatprep.subr.mxu0 %v94
  %675 = vmatpush1.msra.mxu0 %v93
  %676 = vmatprep.subr.mxu0 %v110
  %677 = vmatpush1.msra.mxu0 %v109
  %678 = vmatprep.subr.mxu0 %v126
  %679 = vmatpush1.msra.mxu0 %v125
  %680 = vmatprep.subr.mxu0 %v142
  %681 = vmatpush1.msra.mxu0 %v141
  %682 = vmatprep.subr.mxu0 %v158
  %683 = vmatpush1.msra.mxu0 %v157
  %684 = vmatprep.subr.mxu0 0.0
  %685 = vmatpush1.msra.mxu0 0.0
  %686 = vmatprep.subr.mxu0 0.0
  %687 = vmatpush1.msra.mxu0 0.0
  %688 = vmatprep.subr.mxu0 0.0
  %689 = vmatpush1.msra.mxu0 0.0
  %690 = vmatprep.subr.mxu0 0.0
  %691 = vmatpush1.msra.mxu0 0.0
  %692 = vmatprep.subr.mxu0 0.0
  %693 = vmatpush1.msra.mxu0 0.0
  %694 = vmatprep.subr.mxu0 0.0
  %695 = vmatpush1.msra.mxu0 0.0
  %696 = vmatprep.subr.mxu0 0.0
  %697 = vmatpush1.msra.mxu0 0.0
  %698 = vmatprep.subr.mxu0 0.0
  %699 = vmatpush1.msra.mxu0 0.0
  %700 = vmatprep.subr.mxu0 0.0
  %701 = vmatpush1.msra.mxu0 0.0
  %702 = vmatprep.subr.mxu0 0.0
  %703 = vmatpush1.msra.mxu0 0.0
  %704 = vmatprep.subr.mxu0 0.0
  %705 = vmatpush1.msra.mxu0 0.0
  %706 = vmatprep.subr.mxu0 0.0
  %707 = vmatpush1.msra.mxu0 0.0
  %708 = vmatprep.subr.mxu0 0.0
  %709 = vmatpush1.msra.mxu0 0.0
  %710 = vmatprep.subr.mxu0 0.0
  %711 = vmatpush1.msra.mxu0 0.0
  %712 = vmatprep.subr.mxu0 0.0
  %713 = vmatpush1.msra.mxu0 0.0
  %714 = vmatprep.subr.mxu0 0.0
  %715 = vmatpush1.msra.mxu0 0.0
  %716 = vmatprep.subr.mxu0 0.0
  %717 = vmatpush1.msra.mxu0 0.0
  %718 = vmatprep.subr.mxu0 0.0
  %719 = vmatpush1.msra.mxu0 0.0
  %720 = vmatprep.subr.mxu0 0.0
  %721 = vmatpush1.msra.mxu0 0.0
  %722 = vmatprep.subr.mxu0 0.0
  %723 = vmatpush1.msra.mxu0 0.0
  %724 = vmatprep.subr.mxu0 0.0
  %725 = vmatpush1.msra.mxu0 0.0
  %726 = vmatprep.subr.mxu0 0.0
  %727 = vmatpush1.msra.mxu0 0.0
  %728 = vmatprep.subr.mxu0 0.0
  %729 = vmatpush1.msra.mxu0 0.0
  %730 = vmatprep.mubr.f32.mxu0 0.0
  %731 = vmatmul.mubr.f32.gmra.mrb[0].mxu0 %v167
  %v732 = vpop.f32.mrb[0].mxu0
  %v733 = vadd.f32 %v163, %v732
  %v734 = vpop.f32.mrb[0].mxu0
  %v735 = vadd.f32 %v163, %v734
  %736 = vdwg.mxu0
  %v737 = vmax.f32 %v236, 0.0
  %v738 = vmax.f32 %v238, 0.0
  %v739 = vmax.f32 %v307, 0.0
  %v740 = vmax.f32 %v309, 0.0
  %v741 = vmax.f32 %v378, 0.0
  %v742 = vmax.f32 %v380, 0.0
  %v743 = vmax.f32 %v449, 0.0
  %v744 = vmax.f32 %v451, 0.0
  %v745 = vmax.f32 %v520, 0.0
  %v746 = vmax.f32 %v522, 0.0
  %v747 = vmax.f32 %v591, 0.0
  %v748 = vmax.f32 %v593, 0.0
  %v749 = vmax.f32 %v662, 0.0
  %v750 = vmax.f32 %v664, 0.0
  %v751 = vmax.f32 %v733, 0.0
  %v752 = vmax.f32 %v735, 0.0
  %753 = vst [vmem:[%s3] sm:$0xff] %v737
  %754 = vst [vmem:[%s3 + $0x8] sm:$0xff] %v738
  %755 = vst [vmem:[%s3 + $0x10] sm:$0xff] %v739
  %756 = vst [vmem:[%s3 + $0x18] sm:$0xff] %v740
  %757 = vst [vmem:[%s3 + $0x20] sm:$0xff] %v741
  %758 = vst [vmem:[%s3 + $0x28] sm:$0xff] %v742
  %759 = vst [vmem:[%s3 + $0x30] sm:$0xff] %v743
  %760 = vst [vmem:[%s3 + $0x38] sm:$0xff] %v744
  %761 = vst [vmem:[%s3 + $0x40] sm:$0xff] %v745
  %762 = vst [vmem:[%s3 + $0x48] sm:$0xff] %v746
  %763 = vst [vmem:[%s3 + $0x50] sm:$0xff] %v747
  %764 = vst [vmem:[%s3 + $0x58] sm:$0xff] %v748
  %765 = vst [vmem:[%s3 + $0x60] sm:$0xff] %v749
  %766 = vst [vmem:[%s3 + $0x68] sm:$0xff] %v750
  %767 = vst [vmem:[%s3 + $0x70] sm:$0xff] %v751
  %768 = vst [vmem:[%s3 + $0x78] sm:$0xff] %v752
  // Predicated region
  $region14: #{net_forward_pallas.87} parent=0 // pred_check
    _
  $region15: #{net_forward_pallas.87} parent=0 // pred_check_branch
    %770 = sbr.rel (0) target = $region17
  $region16: #{net_forward_pallas.87} parent=0 // pred_region
    _
  $region17: #{net_forward_pallas.87} parent=0 // pred_fallthru
    _
  // Predicated region
  $region18: #{net_forward_pallas.87} parent=0 // pred_check
    _
  $region19: #{net_forward_pallas.87} parent=0 // pred_check_branch
    %772 = sbr.rel (0) target = $region21
  $region20: #{net_forward_pallas.87} parent=0 // pred_region
    _
  $region21: #{net_forward_pallas.87} parent=0 // pred_fallthru
    _

// kernel: net_forward_pallas.88
$region0: #{net_forward_pallas.88}
  #allocation0 [shape = 'u32[]', space=smem, size = 0x4, offset = 0x4, fixed_abs, tag = 'smem constant byte address 0x4 - core index']
  #allocation1 [shape = 'u32[144,128]{1,0:T(1,128)}', space=vmem, size = 0x12000, scoped, tag = 'internal scratch']
  %s0 = inlined_call_operand.vmem [shape: f32[8,72], index: 0, kind: input, shape index: {}]
  %s1 = inlined_call_operand.vmem [shape: f32[72,2048], index: 1, kind: input, shape index: {}]
  %s2 = inlined_call_operand.vmem [shape: f32[8,1], index: 2, kind: input, shape index: {}]
  %s3 = inlined_call_operand.vmem [shape: f32[8,2048], index: 3, kind: output, shape index: {}]
  %s4 = sld [smem:[#allocation0]]
  $region22: #{net_forward_pallas.88} parent=0
    _
  %s6 = ssub.s32 1, %s4
  %s7 = scalar_select 0, %s6, %s4
  // Predicated region
  $region2: #{net_forward_pallas.88} parent=0 // pred_check
    _
  $region3: #{net_forward_pallas.88} parent=0 // pred_check_branch
    %9 = sbr.rel (0) target = $region5
  $region4: #{net_forward_pallas.88} parent=0 // pred_region
    _
  $region5: #{net_forward_pallas.88} parent=0 // pred_fallthru
    _
  // Predicated region
  $region6: #{net_forward_pallas.88} parent=0 // pred_check
    _
  $region7: #{net_forward_pallas.88} parent=0 // pred_check_branch
    %11 = sbr.rel (0) target = $region9
  $region8: #{net_forward_pallas.88} parent=0 // pred_region
    _
  $region9: #{net_forward_pallas.88} parent=0 // pred_fallthru
    _
  // Predicated region
  $region10: #{net_forward_pallas.88} parent=0 // pred_check
    _
  $region11: #{net_forward_pallas.88} parent=0 // pred_check_branch
    %13 = sbr.rel (0) target = $region13
  $region12: #{net_forward_pallas.88} parent=0 // pred_region
    _
  $region13: #{net_forward_pallas.88} parent=0 // pred_fallthru
    _
  %v14 = vld [vmem:[%s0] sm:$0xff]
  %v15 = vld [vmem:[%s1] sm:$0xff]
  %v16 = vld [vmem:[%s1 + $0x8] sm:$0xff]
  %v17 = vld [vmem:[%s1 + $0x10] sm:$0xff]
  %v18 = vld [vmem:[%s1 + $0x18] sm:$0xff]
  %v19 = vld [vmem:[%s1 + $0x20] sm:$0xff]
  %v20 = vld [vmem:[%s1 + $0x28] sm:$0xff]
  %v21 = vld [vmem:[%s1 + $0x30] sm:$0xff]
  %v22 = vld [vmem:[%s1 + $0x38] sm:$0xff]
  %v23 = vld [vmem:[%s1 + $0x40] sm:$0xff]
  %v24 = vld [vmem:[%s1 + $0x48] sm:$0xff]
  %v25 = vld [vmem:[%s1 + $0x50] sm:$0xff]
  %v26 = vld [vmem:[%s1 + $0x58] sm:$0xff]
  %v27 = vld [vmem:[%s1 + $0x60] sm:$0xff]
  %v28 = vld [vmem:[%s1 + $0x68] sm:$0xff]
  %v29 = vld [vmem:[%s1 + $0x70] sm:$0xff]
  %v30 = vld [vmem:[%s1 + $0x78] sm:$0xff]
  %v31 = vld [vmem:[%s1 + $0x80] sm:$0xff]
  %v32 = vld [vmem:[%s1 + $0x88] sm:$0xff]
  %v33 = vld [vmem:[%s1 + $0x90] sm:$0xff]
  %v34 = vld [vmem:[%s1 + $0x98] sm:$0xff]
  %v35 = vld [vmem:[%s1 + $0xa0] sm:$0xff]
  %v36 = vld [vmem:[%s1 + $0xa8] sm:$0xff]
  %v37 = vld [vmem:[%s1 + $0xb0] sm:$0xff]
  %v38 = vld [vmem:[%s1 + $0xb8] sm:$0xff]
  %v39 = vld [vmem:[%s1 + $0xc0] sm:$0xff]
  %v40 = vld [vmem:[%s1 + $0xc8] sm:$0xff]
  %v41 = vld [vmem:[%s1 + $0xd0] sm:$0xff]
  %v42 = vld [vmem:[%s1 + $0xd8] sm:$0xff]
  %v43 = vld [vmem:[%s1 + $0xe0] sm:$0xff]
  %v44 = vld [vmem:[%s1 + $0xe8] sm:$0xff]
  %v45 = vld [vmem:[%s1 + $0xf0] sm:$0xff]
  %v46 = vld [vmem:[%s1 + $0xf8] sm:$0xff]
  %v47 = vld [vmem:[%s1 + $0x100] sm:$0xff]
  %v48 = vld [vmem:[%s1 + $0x108] sm:$0xff]
  %v49 = vld [vmem:[%s1 + $0x110] sm:$0xff]
  %v50 = vld [vmem:[%s1 + $0x118] sm:$0xff]
  %v51 = vld [vmem:[%s1 + $0x120] sm:$0xff]
  %v52 = vld [vmem:[%s1 + $0x128] sm:$0xff]
  %v53 = vld [vmem:[%s1 + $0x130] sm:$0xff]
  %v54 = vld [vmem:[%s1 + $0x138] sm:$0xff]
  %v55 = vld [vmem:[%s1 + $0x140] sm:$0xff]
  %v56 = vld [vmem:[%s1 + $0x148] sm:$0xff]
  %v57 = vld [vmem:[%s1 + $0x150] sm:$0xff]
  %v58 = vld [vmem:[%s1 + $0x158] sm:$0xff]
  %v59 = vld [vmem:[%s1 + $0x160] sm:$0xff]
  %v60 = vld [vmem:[%s1 + $0x168] sm:$0xff]
  %v61 = vld [vmem:[%s1 + $0x170] sm:$0xff]
  %v62 = vld [vmem:[%s1 + $0x178] sm:$0xff]
  %v63 = vld [vmem:[%s1 + $0x180] sm:$0xff]
  %v64 = vld [vmem:[%s1 + $0x188] sm:$0xff]
  %v65 = vld [vmem:[%s1 + $0x190] sm:$0xff]
  %v66 = vld [vmem:[%s1 + $0x198] sm:$0xff]
  %v67 = vld [vmem:[%s1 + $0x1a0] sm:$0xff]
  %v68 = vld [vmem:[%s1 + $0x1a8] sm:$0xff]
  %v69 = vld [vmem:[%s1 + $0x1b0] sm:$0xff]
  %v70 = vld [vmem:[%s1 + $0x1b8] sm:$0xff]
  %v71 = vld [vmem:[%s1 + $0x1c0] sm:$0xff]
  %v72 = vld [vmem:[%s1 + $0x1c8] sm:$0xff]
  %v73 = vld [vmem:[%s1 + $0x1d0] sm:$0xff]
  %v74 = vld [vmem:[%s1 + $0x1d8] sm:$0xff]
  %v75 = vld [vmem:[%s1 + $0x1e0] sm:$0xff]
  %v76 = vld [vmem:[%s1 + $0x1e8] sm:$0xff]
  %v77 = vld [vmem:[%s1 + $0x1f0] sm:$0xff]
  %v78 = vld [vmem:[%s1 + $0x1f8] sm:$0xff]
  %v79 = vld [vmem:[%s1 + $0x200] sm:$0xff]
  %v80 = vld [vmem:[%s1 + $0x208] sm:$0xff]
  %v81 = vld [vmem:[%s1 + $0x210] sm:$0xff]
  %v82 = vld [vmem:[%s1 + $0x218] sm:$0xff]
  %v83 = vld [vmem:[%s1 + $0x220] sm:$0xff]
  %v84 = vld [vmem:[%s1 + $0x228] sm:$0xff]
  %v85 = vld [vmem:[%s1 + $0x230] sm:$0xff]
  %v86 = vld [vmem:[%s1 + $0x238] sm:$0xff]
  %v87 = vld [vmem:[%s1 + $0x240] sm:$0xff]
  %v88 = vld [vmem:[%s1 + $0x248] sm:$0xff]
  %v89 = vld [vmem:[%s1 + $0x250] sm:$0xff]
  %v90 = vld [vmem:[%s1 + $0x258] sm:$0xff]
  %v91 = vld [vmem:[%s1 + $0x260] sm:$0xff]
  %v92 = vld [vmem:[%s1 + $0x268] sm:$0xff]
  %v93 = vld [vmem:[%s1 + $0x270] sm:$0xff]
  %v94 = vld [vmem:[%s1 + $0x278] sm:$0xff]
  %v95 = vld [vmem:[%s1 + $0x280] sm:$0xff]
  %v96 = vld [vmem:[%s1 + $0x288] sm:$0xff]
  %v97 = vld [vmem:[%s1 + $0x290] sm:$0xff]
  %v98 = vld [vmem:[%s1 + $0x298] sm:$0xff]
  %v99 = vld [vmem:[%s1 + $0x2a0] sm:$0xff]
  %v100 = vld [vmem:[%s1 + $0x2a8] sm:$0xff]
  %v101 = vld [vmem:[%s1 + $0x2b0] sm:$0xff]
  %v102 = vld [vmem:[%s1 + $0x2b8] sm:$0xff]
  %v103 = vld [vmem:[%s1 + $0x2c0] sm:$0xff]
  %v104 = vld [vmem:[%s1 + $0x2c8] sm:$0xff]
  %v105 = vld [vmem:[%s1 + $0x2d0] sm:$0xff]
  %v106 = vld [vmem:[%s1 + $0x2d8] sm:$0xff]
  %v107 = vld [vmem:[%s1 + $0x2e0] sm:$0xff]
  %v108 = vld [vmem:[%s1 + $0x2e8] sm:$0xff]
  %v109 = vld [vmem:[%s1 + $0x2f0] sm:$0xff]
  %v110 = vld [vmem:[%s1 + $0x2f8] sm:$0xff]
  %v111 = vld [vmem:[%s1 + $0x300] sm:$0xff]
  %v112 = vld [vmem:[%s1 + $0x308] sm:$0xff]
  %v113 = vld [vmem:[%s1 + $0x310] sm:$0xff]
  %v114 = vld [vmem:[%s1 + $0x318] sm:$0xff]
  %v115 = vld [vmem:[%s1 + $0x320] sm:$0xff]
  %v116 = vld [vmem:[%s1 + $0x328] sm:$0xff]
  %v117 = vld [vmem:[%s1 + $0x330] sm:$0xff]
  %v118 = vld [vmem:[%s1 + $0x338] sm:$0xff]
  %v119 = vld [vmem:[%s1 + $0x340] sm:$0xff]
  %v120 = vld [vmem:[%s1 + $0x348] sm:$0xff]
  %v121 = vld [vmem:[%s1 + $0x350] sm:$0xff]
  %v122 = vld [vmem:[%s1 + $0x358] sm:$0xff]
  %v123 = vld [vmem:[%s1 + $0x360] sm:$0xff]
  %v124 = vld [vmem:[%s1 + $0x368] sm:$0xff]
  %v125 = vld [vmem:[%s1 + $0x370] sm:$0xff]
  %v126 = vld [vmem:[%s1 + $0x378] sm:$0xff]
  %v127 = vld [vmem:[%s1 + $0x380] sm:$0xff]
  %v128 = vld [vmem:[%s1 + $0x388] sm:$0xff]
  %v129 = vld [vmem:[%s1 + $0x390] sm:$0xff]
  %v130 = vld [vmem:[%s1 + $0x398] sm:$0xff]
  %v131 = vld [vmem:[%s1 + $0x3a0] sm:$0xff]
  %v132 = vld [vmem:[%s1 + $0x3a8] sm:$0xff]
  %v133 = vld [vmem:[%s1 + $0x3b0] sm:$0xff]
  %v134 = vld [vmem:[%s1 + $0x3b8] sm:$0xff]
  %v135 = vld [vmem:[%s1 + $0x3c0] sm:$0xff]
  %v136 = vld [vmem:[%s1 + $0x3c8] sm:$0xff]
  %v137 = vld [vmem:[%s1 + $0x3d0] sm:$0xff]
  %v138 = vld [vmem:[%s1 + $0x3d8] sm:$0xff]
  %v139 = vld [vmem:[%s1 + $0x3e0] sm:$0xff]
  %v140 = vld [vmem:[%s1 + $0x3e8] sm:$0xff]
  %v141 = vld [vmem:[%s1 + $0x3f0] sm:$0xff]
  %v142 = vld [vmem:[%s1 + $0x3f8] sm:$0xff]
  %v143 = vld [vmem:[%s1 + $0x400] sm:$0xff]
  %v144 = vld [vmem:[%s1 + $0x408] sm:$0xff]
  %v145 = vld [vmem:[%s1 + $0x410] sm:$0xff]
  %v146 = vld [vmem:[%s1 + $0x418] sm:$0xff]
  %v147 = vld [vmem:[%s1 + $0x420] sm:$0xff]
  %v148 = vld [vmem:[%s1 + $0x428] sm:$0xff]
  %v149 = vld [vmem:[%s1 + $0x430] sm:$0xff]
  %v150 = vld [vmem:[%s1 + $0x438] sm:$0xff]
  %v151 = vld [vmem:[%s1 + $0x440] sm:$0xff]
  %v152 = vld [vmem:[%s1 + $0x448] sm:$0xff]
  %v153 = vld [vmem:[%s1 + $0x450] sm:$0xff]
  %v154 = vld [vmem:[%s1 + $0x458] sm:$0xff]
  %v155 = vld [vmem:[%s1 + $0x460] sm:$0xff]
  %v156 = vld [vmem:[%s1 + $0x468] sm:$0xff]
  %v157 = vld [vmem:[%s1 + $0x470] sm:$0xff]
  %v158 = vld [vmem:[%s1 + $0x478] sm:$0xff]
  %v159 = vld [vmem:[%s2] sm:$0xff]
  %161 = vset.pattern.permute.xlu0 0
  %162 = vperm.xlu0 %161, %v159
  %v163 = vpop.permute.xlu0 %162
  %vm165 = vcmask 588800
  %v167 = vsel %vm165, %v14, 0
  %169 = vmatprep.subr.mxu0 %v16
  %170 = vmatpush1.msra.mxu0 %v15
  %171 = vmatprep.subr.mxu0 %v32
  %172 = vmatpush1.msra.mxu0 %v31
  %173 = vmatprep.subr.mxu0 %v48
  %174 = vmatpush1.msra.mxu0 %v47
  %175 = vmatprep.subr.mxu0 %v64
  %176 = vmatpush1.msra.mxu0 %v63
  %177 = vmatprep.subr.mxu0 %v80
  %178 = vmatpush1.msra.mxu0 %v79
  %179 = vmatprep.subr.mxu0 %v96
  %180 = vmatpush1.msra.mxu0 %v95
  %181 = vmatprep.subr.mxu0 %v112
  %182 = vmatpush1.msra.mxu0 %v111
  %183 = vmatprep.subr.mxu0 %v128
  %184 = vmatpush1.msra.mxu0 %v127
  %185 = vmatprep.subr.mxu0 %v144
  %186 = vmatpush1.msra.mxu0 %v143
  %187 = vmatprep.subr.mxu0 0.0
  %188 = vmatpush1.msra.mxu0 0.0
  %189 = vmatprep.subr.mxu0 0.0
  %190 = vmatpush1.msra.mxu0 0.0
  %191 = vmatprep.subr.mxu0 0.0
  %192 = vmatpush1.msra.mxu0 0.0
  %193 = vmatprep.subr.mxu0 0.0
  %194 = vmatpush1.msra.mxu0 0.0
  %195 = vmatprep.subr.mxu0 0.0
  %196 = vmatpush1.msra.mxu0 0.0
  %197 = vmatprep.subr.mxu0 0.0
  %198 = vmatpush1.msra.mxu0 0.0
  %199 = vmatprep.subr.mxu0 0.0
  %200 = vmatpush1.msra.mxu0 0.0
  %201 = vmatprep.subr.mxu0 0.0
  %202 = vmatpush1.msra.mxu0 0.0
  %203 = vmatprep.subr.mxu0 0.0
  %204 = vmatpush1.msra.mxu0 0.0
  %205 = vmatprep.subr.mxu0 0.0
  %206 = vmatpush1.msra.mxu0 0.0
  %207 = vmatprep.subr.mxu0 0.0
  %208 = vmatpush1.msra.mxu0 0.0
  %209 = vmatprep.subr.mxu0 0.0
  %210 = vmatpush1.msra.mxu0 0.0
  %211 = vmatprep.subr.mxu0 0.0
  %212 = vmatpush1.msra.mxu0 0.0
  %213 = vmatprep.subr.mxu0 0.0
  %214 = vmatpush1.msra.mxu0 0.0
  %215 = vmatprep.subr.mxu0 0.0
  %216 = vmatpush1.msra.mxu0 0.0
  %217 = vmatprep.subr.mxu0 0.0
  %218 = vmatpush1.msra.mxu0 0.0
  %219 = vmatprep.subr.mxu0 0.0
  %220 = vmatpush1.msra.mxu0 0.0
  %221 = vmatprep.subr.mxu0 0.0
  %222 = vmatpush1.msra.mxu0 0.0
  %223 = vmatprep.subr.mxu0 0.0
  %224 = vmatpush1.msra.mxu0 0.0
  %225 = vmatprep.subr.mxu0 0.0
  %226 = vmatpush1.msra.mxu0 0.0
  %227 = vmatprep.subr.mxu0 0.0
  %228 = vmatpush1.msra.mxu0 0.0
  %229 = vmatprep.subr.mxu0 0.0
  %230 = vmatpush1.msra.mxu0 0.0
  %231 = vmatprep.subr.mxu0 0.0
  %232 = vmatpush1.msra.mxu0 0.0
  %233 = vmatprep.mubr.f32.mxu0 0.0
  %234 = vmatmul.mubr.f32.gmra.mrb[0].mxu0 %v167
  %v235 = vpop.f32.mrb[0].mxu0
  %v236 = vadd.f32 %v163, %v235
  %v237 = vpop.f32.mrb[0].mxu0
  %v238 = vadd.f32 %v163, %v237
  %239 = vdwg.mxu0
  %240 = vmatprep.subr.mxu0 %v18
  %241 = vmatpush1.msra.mxu0 %v17
  %242 = vmatprep.subr.mxu0 %v34
  %243 = vmatpush1.msra.mxu0 %v33
  %244 = vmatprep.subr.mxu0 %v50
  %245 = vmatpush1.msra.mxu0 %v49
  %246 = vmatprep.subr.mxu0 %v66
  %247 = vmatpush1.msra.mxu0 %v65
  %248 = vmatprep.subr.mxu0 %v82
  %249 = vmatpush1.msra.mxu0 %v81
  %250 = vmatprep.subr.mxu0 %v98
  %251 = vmatpush1.msra.mxu0 %v97
  %252 = vmatprep.subr.mxu0 %v114
  %253 = vmatpush1.msra.mxu0 %v113
  %254 = vmatprep.subr.mxu0 %v130
  %255 = vmatpush1.msra.mxu0 %v129
  %256 = vmatprep.subr.mxu0 %v146
  %257 = vmatpush1.msra.mxu0 %v145
  %258 = vmatprep.subr.mxu0 0.0
  %259 = vmatpush1.msra.mxu0 0.0
  %260 = vmatprep.subr.mxu0 0.0
  %261 = vmatpush1.msra.mxu0 0.0
  %262 = vmatprep.subr.mxu0 0.0
  %263 = vmatpush1.msra.mxu0 0.0
  %264 = vmatprep.subr.mxu0 0.0
  %265 = vmatpush1.msra.mxu0 0.0
  %266 = vmatprep.subr.mxu0 0.0
  %267 = vmatpush1.msra.mxu0 0.0
  %268 = vmatprep.subr.mxu0 0.0
  %269 = vmatpush1.msra.mxu0 0.0
  %270 = vmatprep.subr.mxu0 0.0
  %271 = vmatpush1.msra.mxu0 0.0
  %272 = vmatprep.subr.mxu0 0.0
  %273 = vmatpush1.msra.mxu0 0.0
  %274 = vmatprep.subr.mxu0 0.0
  %275 = vmatpush1.msra.mxu0 0.0
  %276 = vmatprep.subr.mxu0 0.0
  %277 = vmatpush1.msra.mxu0 0.0
  %278 = vmatprep.subr.mxu0 0.0
  %279 = vmatpush1.msra.mxu0 0.0
  %280 = vmatprep.subr.mxu0 0.0
  %281 = vmatpush1.msra.mxu0 0.0
  %282 = vmatprep.subr.mxu0 0.0
  %283 = vmatpush1.msra.mxu0 0.0
  %284 = vmatprep.subr.mxu0 0.0
  %285 = vmatpush1.msra.mxu0 0.0
  %286 = vmatprep.subr.mxu0 0.0
  %287 = vmatpush1.msra.mxu0 0.0
  %288 = vmatprep.subr.mxu0 0.0
  %289 = vmatpush1.msra.mxu0 0.0
  %290 = vmatprep.subr.mxu0 0.0
  %291 = vmatpush1.msra.mxu0 0.0
  %292 = vmatprep.subr.mxu0 0.0
  %293 = vmatpush1.msra.mxu0 0.0
  %294 = vmatprep.subr.mxu0 0.0
  %295 = vmatpush1.msra.mxu0 0.0
  %296 = vmatprep.subr.mxu0 0.0
  %297 = vmatpush1.msra.mxu0 0.0
  %298 = vmatprep.subr.mxu0 0.0
  %299 = vmatpush1.msra.mxu0 0.0
  %300 = vmatprep.subr.mxu0 0.0
  %301 = vmatpush1.msra.mxu0 0.0
  %302 = vmatprep.subr.mxu0 0.0
  %303 = vmatpush1.msra.mxu0 0.0
  %304 = vmatprep.mubr.f32.mxu0 0.0
  %305 = vmatmul.mubr.f32.gmra.mrb[0].mxu0 %v167
  %v306 = vpop.f32.mrb[0].mxu0
  %v307 = vadd.f32 %v163, %v306
  %v308 = vpop.f32.mrb[0].mxu0
  %v309 = vadd.f32 %v163, %v308
  %310 = vdwg.mxu0
  %311 = vmatprep.subr.mxu0 %v20
  %312 = vmatpush1.msra.mxu0 %v19
  %313 = vmatprep.subr.mxu0 %v36
  %314 = vmatpush1.msra.mxu0 %v35
  %315 = vmatprep.subr.mxu0 %v52
  %316 = vmatpush1.msra.mxu0 %v51
  %317 = vmatprep.subr.mxu0 %v68
  %318 = vmatpush1.msra.mxu0 %v67
  %319 = vmatprep.subr.mxu0 %v84
  %320 = vmatpush1.msra.mxu0 %v83
  %321 = vmatprep.subr.mxu0 %v100
  %322 = vmatpush1.msra.mxu0 %v99
  %323 = vmatprep.subr.mxu0 %v116
  %324 = vmatpush1.msra.mxu0 %v115
  %325 = vmatprep.subr.mxu0 %v132
  %326 = vmatpush1.msra.mxu0 %v131
  %327 = vmatprep.subr.mxu0 %v148
  %328 = vmatpush1.msra.mxu0 %v147
  %329 = vmatprep.subr.mxu0 0.0
  %330 = vmatpush1.msra.mxu0 0.0
  %331 = vmatprep.subr.mxu0 0.0
  %332 = vmatpush1.msra.mxu0 0.0
  %333 = vmatprep.subr.mxu0 0.0
  %334 = vmatpush1.msra.mxu0 0.0
  %335 = vmatprep.subr.mxu0 0.0
  %336 = vmatpush1.msra.mxu0 0.0
  %337 = vmatprep.subr.mxu0 0.0
  %338 = vmatpush1.msra.mxu0 0.0
  %339 = vmatprep.subr.mxu0 0.0
  %340 = vmatpush1.msra.mxu0 0.0
  %341 = vmatprep.subr.mxu0 0.0
  %342 = vmatpush1.msra.mxu0 0.0
  %343 = vmatprep.subr.mxu0 0.0
  %344 = vmatpush1.msra.mxu0 0.0
  %345 = vmatprep.subr.mxu0 0.0
  %346 = vmatpush1.msra.mxu0 0.0
  %347 = vmatprep.subr.mxu0 0.0
  %348 = vmatpush1.msra.mxu0 0.0
  %349 = vmatprep.subr.mxu0 0.0
  %350 = vmatpush1.msra.mxu0 0.0
  %351 = vmatprep.subr.mxu0 0.0
  %352 = vmatpush1.msra.mxu0 0.0
  %353 = vmatprep.subr.mxu0 0.0
  %354 = vmatpush1.msra.mxu0 0.0
  %355 = vmatprep.subr.mxu0 0.0
  %356 = vmatpush1.msra.mxu0 0.0
  %357 = vmatprep.subr.mxu0 0.0
  %358 = vmatpush1.msra.mxu0 0.0
  %359 = vmatprep.subr.mxu0 0.0
  %360 = vmatpush1.msra.mxu0 0.0
  %361 = vmatprep.subr.mxu0 0.0
  %362 = vmatpush1.msra.mxu0 0.0
  %363 = vmatprep.subr.mxu0 0.0
  %364 = vmatpush1.msra.mxu0 0.0
  %365 = vmatprep.subr.mxu0 0.0
  %366 = vmatpush1.msra.mxu0 0.0
  %367 = vmatprep.subr.mxu0 0.0
  %368 = vmatpush1.msra.mxu0 0.0
  %369 = vmatprep.subr.mxu0 0.0
  %370 = vmatpush1.msra.mxu0 0.0
  %371 = vmatprep.subr.mxu0 0.0
  %372 = vmatpush1.msra.mxu0 0.0
  %373 = vmatprep.subr.mxu0 0.0
  %374 = vmatpush1.msra.mxu0 0.0
  %375 = vmatprep.mubr.f32.mxu0 0.0
  %376 = vmatmul.mubr.f32.gmra.mrb[0].mxu0 %v167
  %v377 = vpop.f32.mrb[0].mxu0
  %v378 = vadd.f32 %v163, %v377
  %v379 = vpop.f32.mrb[0].mxu0
  %v380 = vadd.f32 %v163, %v379
  %381 = vdwg.mxu0
  %382 = vmatprep.subr.mxu0 %v22
  %383 = vmatpush1.msra.mxu0 %v21
  %384 = vmatprep.subr.mxu0 %v38
  %385 = vmatpush1.msra.mxu0 %v37
  %386 = vmatprep.subr.mxu0 %v54
  %387 = vmatpush1.msra.mxu0 %v53
  %388 = vmatprep.subr.mxu0 %v70
  %389 = vmatpush1.msra.mxu0 %v69
  %390 = vmatprep.subr.mxu0 %v86
  %391 = vmatpush1.msra.mxu0 %v85
  %392 = vmatprep.subr.mxu0 %v102
  %393 = vmatpush1.msra.mxu0 %v101
  %394 = vmatprep.subr.mxu0 %v118
  %395 = vmatpush1.msra.mxu0 %v117
  %396 = vmatprep.subr.mxu0 %v134
  %397 = vmatpush1.msra.mxu0 %v133
  %398 = vmatprep.subr.mxu0 %v150
  %399 = vmatpush1.msra.mxu0 %v149
  %400 = vmatprep.subr.mxu0 0.0
  %401 = vmatpush1.msra.mxu0 0.0
  %402 = vmatprep.subr.mxu0 0.0
  %403 = vmatpush1.msra.mxu0 0.0
  %404 = vmatprep.subr.mxu0 0.0
  %405 = vmatpush1.msra.mxu0 0.0
  %406 = vmatprep.subr.mxu0 0.0
  %407 = vmatpush1.msra.mxu0 0.0
  %408 = vmatprep.subr.mxu0 0.0
  %409 = vmatpush1.msra.mxu0 0.0
  %410 = vmatprep.subr.mxu0 0.0
  %411 = vmatpush1.msra.mxu0 0.0
  %412 = vmatprep.subr.mxu0 0.0
  %413 = vmatpush1.msra.mxu0 0.0
  %414 = vmatprep.subr.mxu0 0.0
  %415 = vmatpush1.msra.mxu0 0.0
  %416 = vmatprep.subr.mxu0 0.0
  %417 = vmatpush1.msra.mxu0 0.0
  %418 = vmatprep.subr.mxu0 0.0
  %419 = vmatpush1.msra.mxu0 0.0
  %420 = vmatprep.subr.mxu0 0.0
  %421 = vmatpush1.msra.mxu0 0.0
  %422 = vmatprep.subr.mxu0 0.0
  %423 = vmatpush1.msra.mxu0 0.0
  %424 = vmatprep.subr.mxu0 0.0
  %425 = vmatpush1.msra.mxu0 0.0
  %426 = vmatprep.subr.mxu0 0.0
  %427 = vmatpush1.msra.mxu0 0.0
  %428 = vmatprep.subr.mxu0 0.0
  %429 = vmatpush1.msra.mxu0 0.0
  %430 = vmatprep.subr.mxu0 0.0
  %431 = vmatpush1.msra.mxu0 0.0
  %432 = vmatprep.subr.mxu0 0.0
  %433 = vmatpush1.msra.mxu0 0.0
  %434 = vmatprep.subr.mxu0 0.0
  %435 = vmatpush1.msra.mxu0 0.0
  %436 = vmatprep.subr.mxu0 0.0
  %437 = vmatpush1.msra.mxu0 0.0
  %438 = vmatprep.subr.mxu0 0.0
  %439 = vmatpush1.msra.mxu0 0.0
  %440 = vmatprep.subr.mxu0 0.0
  %441 = vmatpush1.msra.mxu0 0.0
  %442 = vmatprep.subr.mxu0 0.0
  %443 = vmatpush1.msra.mxu0 0.0
  %444 = vmatprep.subr.mxu0 0.0
  %445 = vmatpush1.msra.mxu0 0.0
  %446 = vmatprep.mubr.f32.mxu0 0.0
  %447 = vmatmul.mubr.f32.gmra.mrb[0].mxu0 %v167
  %v448 = vpop.f32.mrb[0].mxu0
  %v449 = vadd.f32 %v163, %v448
  %v450 = vpop.f32.mrb[0].mxu0
  %v451 = vadd.f32 %v163, %v450
  %452 = vdwg.mxu0
  %453 = vmatprep.subr.mxu0 %v24
  %454 = vmatpush1.msra.mxu0 %v23
  %455 = vmatprep.subr.mxu0 %v40
  %456 = vmatpush1.msra.mxu0 %v39
  %457 = vmatprep.subr.mxu0 %v56
  %458 = vmatpush1.msra.mxu0 %v55
  %459 = vmatprep.subr.mxu0 %v72
  %460 = vmatpush1.msra.mxu0 %v71
  %461 = vmatprep.subr.mxu0 %v88
  %462 = vmatpush1.msra.mxu0 %v87
  %463 = vmatprep.subr.mxu0 %v104
  %464 = vmatpush1.msra.mxu0 %v103
  %465 = vmatprep.subr.mxu0 %v120
  %466 = vmatpush1.msra.mxu0 %v119
  %467 = vmatprep.subr.mxu0 %v136
  %468 = vmatpush1.msra.mxu0 %v135
  %469 = vmatprep.subr.mxu0 %v152
  %470 = vmatpush1.msra.mxu0 %v151
  %471 = vmatprep.subr.mxu0 0.0
  %472 = vmatpush1.msra.mxu0 0.0
  %473 = vmatprep.subr.mxu0 0.0
  %474 = vmatpush1.msra.mxu0 0.0
  %475 = vmatprep.subr.mxu0 0.0
  %476 = vmatpush1.msra.mxu0 0.0
  %477 = vmatprep.subr.mxu0 0.0
  %478 = vmatpush1.msra.mxu0 0.0
  %479 = vmatprep.subr.mxu0 0.0
  %480 = vmatpush1.msra.mxu0 0.0
  %481 = vmatprep.subr.mxu0 0.0
  %482 = vmatpush1.msra.mxu0 0.0
  %483 = vmatprep.subr.mxu0 0.0
  %484 = vmatpush1.msra.mxu0 0.0
  %485 = vmatprep.subr.mxu0 0.0
  %486 = vmatpush1.msra.mxu0 0.0
  %487 = vmatprep.subr.mxu0 0.0
  %488 = vmatpush1.msra.mxu0 0.0
  %489 = vmatprep.subr.mxu0 0.0
  %490 = vmatpush1.msra.mxu0 0.0
  %491 = vmatprep.subr.mxu0 0.0
  %492 = vmatpush1.msra.mxu0 0.0
  %493 = vmatprep.subr.mxu0 0.0
  %494 = vmatpush1.msra.mxu0 0.0
  %495 = vmatprep.subr.mxu0 0.0
  %496 = vmatpush1.msra.mxu0 0.0
  %497 = vmatprep.subr.mxu0 0.0
  %498 = vmatpush1.msra.mxu0 0.0
  %499 = vmatprep.subr.mxu0 0.0
  %500 = vmatpush1.msra.mxu0 0.0
  %501 = vmatprep.subr.mxu0 0.0
  %502 = vmatpush1.msra.mxu0 0.0
  %503 = vmatprep.subr.mxu0 0.0
  %504 = vmatpush1.msra.mxu0 0.0
  %505 = vmatprep.subr.mxu0 0.0
  %506 = vmatpush1.msra.mxu0 0.0
  %507 = vmatprep.subr.mxu0 0.0
  %508 = vmatpush1.msra.mxu0 0.0
  %509 = vmatprep.subr.mxu0 0.0
  %510 = vmatpush1.msra.mxu0 0.0
  %511 = vmatprep.subr.mxu0 0.0
  %512 = vmatpush1.msra.mxu0 0.0
  %513 = vmatprep.subr.mxu0 0.0
  %514 = vmatpush1.msra.mxu0 0.0
  %515 = vmatprep.subr.mxu0 0.0
  %516 = vmatpush1.msra.mxu0 0.0
  %517 = vmatprep.mubr.f32.mxu0 0.0
  %518 = vmatmul.mubr.f32.gmra.mrb[0].mxu0 %v167
  %v519 = vpop.f32.mrb[0].mxu0
  %v520 = vadd.f32 %v163, %v519
  %v521 = vpop.f32.mrb[0].mxu0
  %v522 = vadd.f32 %v163, %v521
  %523 = vdwg.mxu0
  %524 = vmatprep.subr.mxu0 %v26
  %525 = vmatpush1.msra.mxu0 %v25
  %526 = vmatprep.subr.mxu0 %v42
  %527 = vmatpush1.msra.mxu0 %v41
  %528 = vmatprep.subr.mxu0 %v58
  %529 = vmatpush1.msra.mxu0 %v57
  %530 = vmatprep.subr.mxu0 %v74
  %531 = vmatpush1.msra.mxu0 %v73
  %532 = vmatprep.subr.mxu0 %v90
  %533 = vmatpush1.msra.mxu0 %v89
  %534 = vmatprep.subr.mxu0 %v106
  %535 = vmatpush1.msra.mxu0 %v105
  %536 = vmatprep.subr.mxu0 %v122
  %537 = vmatpush1.msra.mxu0 %v121
  %538 = vmatprep.subr.mxu0 %v138
  %539 = vmatpush1.msra.mxu0 %v137
  %540 = vmatprep.subr.mxu0 %v154
  %541 = vmatpush1.msra.mxu0 %v153
  %542 = vmatprep.subr.mxu0 0.0
  %543 = vmatpush1.msra.mxu0 0.0
  %544 = vmatprep.subr.mxu0 0.0
  %545 = vmatpush1.msra.mxu0 0.0
  %546 = vmatprep.subr.mxu0 0.0
  %547 = vmatpush1.msra.mxu0 0.0
  %548 = vmatprep.subr.mxu0 0.0
  %549 = vmatpush1.msra.mxu0 0.0
  %550 = vmatprep.subr.mxu0 0.0
  %551 = vmatpush1.msra.mxu0 0.0
  %552 = vmatprep.subr.mxu0 0.0
  %553 = vmatpush1.msra.mxu0 0.0
  %554 = vmatprep.subr.mxu0 0.0
  %555 = vmatpush1.msra.mxu0 0.0
  %556 = vmatprep.subr.mxu0 0.0
  %557 = vmatpush1.msra.mxu0 0.0
  %558 = vmatprep.subr.mxu0 0.0
  %559 = vmatpush1.msra.mxu0 0.0
  %560 = vmatprep.subr.mxu0 0.0
  %561 = vmatpush1.msra.mxu0 0.0
  %562 = vmatprep.subr.mxu0 0.0
  %563 = vmatpush1.msra.mxu0 0.0
  %564 = vmatprep.subr.mxu0 0.0
  %565 = vmatpush1.msra.mxu0 0.0
  %566 = vmatprep.subr.mxu0 0.0
  %567 = vmatpush1.msra.mxu0 0.0
  %568 = vmatprep.subr.mxu0 0.0
  %569 = vmatpush1.msra.mxu0 0.0
  %570 = vmatprep.subr.mxu0 0.0
  %571 = vmatpush1.msra.mxu0 0.0
  %572 = vmatprep.subr.mxu0 0.0
  %573 = vmatpush1.msra.mxu0 0.0
  %574 = vmatprep.subr.mxu0 0.0
  %575 = vmatpush1.msra.mxu0 0.0
  %576 = vmatprep.subr.mxu0 0.0
  %577 = vmatpush1.msra.mxu0 0.0
  %578 = vmatprep.subr.mxu0 0.0
  %579 = vmatpush1.msra.mxu0 0.0
  %580 = vmatprep.subr.mxu0 0.0
  %581 = vmatpush1.msra.mxu0 0.0
  %582 = vmatprep.subr.mxu0 0.0
  %583 = vmatpush1.msra.mxu0 0.0
  %584 = vmatprep.subr.mxu0 0.0
  %585 = vmatpush1.msra.mxu0 0.0
  %586 = vmatprep.subr.mxu0 0.0
  %587 = vmatpush1.msra.mxu0 0.0
  %588 = vmatprep.mubr.f32.mxu0 0.0
  %589 = vmatmul.mubr.f32.gmra.mrb[0].mxu0 %v167
  %v590 = vpop.f32.mrb[0].mxu0
  %v591 = vadd.f32 %v163, %v590
  %v592 = vpop.f32.mrb[0].mxu0
  %v593 = vadd.f32 %v163, %v592
  %594 = vdwg.mxu0
  %595 = vmatprep.subr.mxu0 %v28
  %596 = vmatpush1.msra.mxu0 %v27
  %597 = vmatprep.subr.mxu0 %v44
  %598 = vmatpush1.msra.mxu0 %v43
  %599 = vmatprep.subr.mxu0 %v60
  %600 = vmatpush1.msra.mxu0 %v59
  %601 = vmatprep.subr.mxu0 %v76
  %602 = vmatpush1.msra.mxu0 %v75
  %603 = vmatprep.subr.mxu0 %v92
  %604 = vmatpush1.msra.mxu0 %v91
  %605 = vmatprep.subr.mxu0 %v108
  %606 = vmatpush1.msra.mxu0 %v107
  %607 = vmatprep.subr.mxu0 %v124
  %608 = vmatpush1.msra.mxu0 %v123
  %609 = vmatprep.subr.mxu0 %v140
  %610 = vmatpush1.msra.mxu0 %v139
  %611 = vmatprep.subr.mxu0 %v156
  %612 = vmatpush1.msra.mxu0 %v155
  %613 = vmatprep.subr.mxu0 0.0
  %614 = vmatpush1.msra.mxu0 0.0
  %615 = vmatprep.subr.mxu0 0.0
  %616 = vmatpush1.msra.mxu0 0.0
  %617 = vmatprep.subr.mxu0 0.0
  %618 = vmatpush1.msra.mxu0 0.0
  %619 = vmatprep.subr.mxu0 0.0
  %620 = vmatpush1.msra.mxu0 0.0
  %621 = vmatprep.subr.mxu0 0.0
  %622 = vmatpush1.msra.mxu0 0.0
  %623 = vmatprep.subr.mxu0 0.0
  %624 = vmatpush1.msra.mxu0 0.0
  %625 = vmatprep.subr.mxu0 0.0
  %626 = vmatpush1.msra.mxu0 0.0
  %627 = vmatprep.subr.mxu0 0.0
  %628 = vmatpush1.msra.mxu0 0.0
  %629 = vmatprep.subr.mxu0 0.0
  %630 = vmatpush1.msra.mxu0 0.0
  %631 = vmatprep.subr.mxu0 0.0
  %632 = vmatpush1.msra.mxu0 0.0
  %633 = vmatprep.subr.mxu0 0.0
  %634 = vmatpush1.msra.mxu0 0.0
  %635 = vmatprep.subr.mxu0 0.0
  %636 = vmatpush1.msra.mxu0 0.0
  %637 = vmatprep.subr.mxu0 0.0
  %638 = vmatpush1.msra.mxu0 0.0
  %639 = vmatprep.subr.mxu0 0.0
  %640 = vmatpush1.msra.mxu0 0.0
  %641 = vmatprep.subr.mxu0 0.0
  %642 = vmatpush1.msra.mxu0 0.0
  %643 = vmatprep.subr.mxu0 0.0
  %644 = vmatpush1.msra.mxu0 0.0
  %645 = vmatprep.subr.mxu0 0.0
  %646 = vmatpush1.msra.mxu0 0.0
  %647 = vmatprep.subr.mxu0 0.0
  %648 = vmatpush1.msra.mxu0 0.0
  %649 = vmatprep.subr.mxu0 0.0
  %650 = vmatpush1.msra.mxu0 0.0
  %651 = vmatprep.subr.mxu0 0.0
  %652 = vmatpush1.msra.mxu0 0.0
  %653 = vmatprep.subr.mxu0 0.0
  %654 = vmatpush1.msra.mxu0 0.0
  %655 = vmatprep.subr.mxu0 0.0
  %656 = vmatpush1.msra.mxu0 0.0
  %657 = vmatprep.subr.mxu0 0.0
  %658 = vmatpush1.msra.mxu0 0.0
  %659 = vmatprep.mubr.f32.mxu0 0.0
  %660 = vmatmul.mubr.f32.gmra.mrb[0].mxu0 %v167
  %v661 = vpop.f32.mrb[0].mxu0
  %v662 = vadd.f32 %v163, %v661
  %v663 = vpop.f32.mrb[0].mxu0
  %v664 = vadd.f32 %v163, %v663
  %665 = vdwg.mxu0
  %666 = vmatprep.subr.mxu0 %v30
  %667 = vmatpush1.msra.mxu0 %v29
  %668 = vmatprep.subr.mxu0 %v46
  %669 = vmatpush1.msra.mxu0 %v45
  %670 = vmatprep.subr.mxu0 %v62
  %671 = vmatpush1.msra.mxu0 %v61
  %672 = vmatprep.subr.mxu0 %v78
  %673 = vmatpush1.msra.mxu0 %v77
  %674 = vmatprep.subr.mxu0 %v94
  %675 = vmatpush1.msra.mxu0 %v93
  %676 = vmatprep.subr.mxu0 %v110
  %677 = vmatpush1.msra.mxu0 %v109
  %678 = vmatprep.subr.mxu0 %v126
  %679 = vmatpush1.msra.mxu0 %v125
  %680 = vmatprep.subr.mxu0 %v142
  %681 = vmatpush1.msra.mxu0 %v141
  %682 = vmatprep.subr.mxu0 %v158
  %683 = vmatpush1.msra.mxu0 %v157
  %684 = vmatprep.subr.mxu0 0.0
  %685 = vmatpush1.msra.mxu0 0.0
  %686 = vmatprep.subr.mxu0 0.0
  %687 = vmatpush1.msra.mxu0 0.0
  %688 = vmatprep.subr.mxu0 0.0
  %689 = vmatpush1.msra.mxu0 0.0
  %690 = vmatprep.subr.mxu0 0.0
  %691 = vmatpush1.msra.mxu0 0.0
  %692 = vmatprep.subr.mxu0 0.0
  %693 = vmatpush1.msra.mxu0 0.0
  %694 = vmatprep.subr.mxu0 0.0
  %695 = vmatpush1.msra.mxu0 0.0
  %696 = vmatprep.subr.mxu0 0.0
  %697 = vmatpush1.msra.mxu0 0.0
  %698 = vmatprep.subr.mxu0 0.0
  %699 = vmatpush1.msra.mxu0 0.0
  %700 = vmatprep.subr.mxu0 0.0
  %701 = vmatpush1.msra.mxu0 0.0
  %702 = vmatprep.subr.mxu0 0.0
  %703 = vmatpush1.msra.mxu0 0.0
  %704 = vmatprep.subr.mxu0 0.0
  %705 = vmatpush1.msra.mxu0 0.0
  %706 = vmatprep.subr.mxu0 0.0
  %707 = vmatpush1.msra.mxu0 0.0
  %708 = vmatprep.subr.mxu0 0.0
  %709 = vmatpush1.msra.mxu0 0.0
  %710 = vmatprep.subr.mxu0 0.0
  %711 = vmatpush1.msra.mxu0 0.0
  %712 = vmatprep.subr.mxu0 0.0
  %713 = vmatpush1.msra.mxu0 0.0
  %714 = vmatprep.subr.mxu0 0.0
  %715 = vmatpush1.msra.mxu0 0.0
  %716 = vmatprep.subr.mxu0 0.0
  %717 = vmatpush1.msra.mxu0 0.0
  %718 = vmatprep.subr.mxu0 0.0
  %719 = vmatpush1.msra.mxu0 0.0
  %720 = vmatprep.subr.mxu0 0.0
  %721 = vmatpush1.msra.mxu0 0.0
  %722 = vmatprep.subr.mxu0 0.0
  %723 = vmatpush1.msra.mxu0 0.0
  %724 = vmatprep.subr.mxu0 0.0
  %725 = vmatpush1.msra.mxu0 0.0
  %726 = vmatprep.subr.mxu0 0.0
  %727 = vmatpush1.msra.mxu0 0.0
  %728 = vmatprep.subr.mxu0 0.0
  %729 = vmatpush1.msra.mxu0 0.0
  %730 = vmatprep.mubr.f32.mxu0 0.0
  %731 = vmatmul.mubr.f32.gmra.mrb[0].mxu0 %v167
  %v732 = vpop.f32.mrb[0].mxu0
  %v733 = vadd.f32 %v163, %v732
  %v734 = vpop.f32.mrb[0].mxu0
  %v735 = vadd.f32 %v163, %v734
  %736 = vdwg.mxu0
  %737 = vst [vmem:[%s3] sm:$0xff] %v236
  %738 = vst [vmem:[%s3 + $0x8] sm:$0xff] %v238
  %739 = vst [vmem:[%s3 + $0x10] sm:$0xff] %v307
  %740 = vst [vmem:[%s3 + $0x18] sm:$0xff] %v309
  %741 = vst [vmem:[%s3 + $0x20] sm:$0xff] %v378
  %742 = vst [vmem:[%s3 + $0x28] sm:$0xff] %v380
  %743 = vst [vmem:[%s3 + $0x30] sm:$0xff] %v449
  %744 = vst [vmem:[%s3 + $0x38] sm:$0xff] %v451
  %745 = vst [vmem:[%s3 + $0x40] sm:$0xff] %v520
  %746 = vst [vmem:[%s3 + $0x48] sm:$0xff] %v522
  %747 = vst [vmem:[%s3 + $0x50] sm:$0xff] %v591
  %748 = vst [vmem:[%s3 + $0x58] sm:$0xff] %v593
  %749 = vst [vmem:[%s3 + $0x60] sm:$0xff] %v662
  %750 = vst [vmem:[%s3 + $0x68] sm:$0xff] %v664
  %751 = vst [vmem:[%s3 + $0x70] sm:$0xff] %v733
  %752 = vst [vmem:[%s3 + $0x78] sm:$0xff] %v735
  // Predicated region
  $region14: #{net_forward_pallas.88} parent=0 // pred_check
    _
  $region15: #{net_forward_pallas.88} parent=0 // pred_check_branch
    %754 = sbr.rel (0) target = $region17
  $region16: #{net_forward_pallas.88} parent=0 // pred_region
    _
  $region17: #{net_forward_pallas.88} parent=0 // pred_fallthru
    _
  // Predicated region
  $region18: #{net_forward_pallas.88} parent=0 // pred_check
    _
  $region19: #{net_forward_pallas.88} parent=0 // pred_check_branch
    %756 = sbr.rel (0) target = $region21
  $region20: #{net_forward_pallas.88} parent=0 // pred_region
    _
  $region21: #{net_forward_pallas.88} parent=0 // pred_fallthru
    _

// kernel: net_forward_pallas.93
$region0: #{net_forward_pallas.93}
  #allocation0 [shape = 'u32[]', space=smem, size = 0x4, offset = 0x4, fixed_abs, tag = 'smem constant byte address 0x4 - core index']
  #allocation1 [shape = 'u32[144,128]{1,0:T(1,128)}', space=vmem, size = 0x12000, scoped, tag = 'internal scratch']
  %s0 = inlined_call_operand.vmem [shape: f32[4,72], index: 0, kind: input, shape index: {}]
  %s1 = inlined_call_operand.vmem [shape: f32[72,2048], index: 1, kind: input, shape index: {}]
  %s2 = inlined_call_operand.vmem [shape: f32[4,1], index: 2, kind: input, shape index: {}]
  %s3 = inlined_call_operand.vmem [shape: f32[4,2048], index: 3, kind: output, shape index: {}]
  %s4 = sld [smem:[#allocation0]]
  $region22: #{net_forward_pallas.93} parent=0
    _
  %s6 = ssub.s32 1, %s4
  %s7 = scalar_select 0, %s6, %s4
  // Predicated region
  $region2: #{net_forward_pallas.93} parent=0 // pred_check
    _
  $region3: #{net_forward_pallas.93} parent=0 // pred_check_branch
    %9 = sbr.rel (0) target = $region5
  $region4: #{net_forward_pallas.93} parent=0 // pred_region
    _
  $region5: #{net_forward_pallas.93} parent=0 // pred_fallthru
    _
  // Predicated region
  $region6: #{net_forward_pallas.93} parent=0 // pred_check
    _
  $region7: #{net_forward_pallas.93} parent=0 // pred_check_branch
    %11 = sbr.rel (0) target = $region9
  $region8: #{net_forward_pallas.93} parent=0 // pred_region
    _
  $region9: #{net_forward_pallas.93} parent=0 // pred_fallthru
    _
  // Predicated region
  $region10: #{net_forward_pallas.93} parent=0 // pred_check
    _
  $region11: #{net_forward_pallas.93} parent=0 // pred_check_branch
    %13 = sbr.rel (0) target = $region13
  $region12: #{net_forward_pallas.93} parent=0 // pred_region
    _
  $region13: #{net_forward_pallas.93} parent=0 // pred_fallthru
    _
  %v14 = vld [vmem:[%s0] sm:$0xf]
  %v15 = vld [vmem:[%s1] sm:$0xff]
  %v16 = vld [vmem:[%s1 + $0x8] sm:$0xff]
  %v17 = vld [vmem:[%s1 + $0x10] sm:$0xff]
  %v18 = vld [vmem:[%s1 + $0x18] sm:$0xff]
  %v19 = vld [vmem:[%s1 + $0x20] sm:$0xff]
  %v20 = vld [vmem:[%s1 + $0x28] sm:$0xff]
  %v21 = vld [vmem:[%s1 + $0x30] sm:$0xff]
  %v22 = vld [vmem:[%s1 + $0x38] sm:$0xff]
  %v23 = vld [vmem:[%s1 + $0x40] sm:$0xff]
  %v24 = vld [vmem:[%s1 + $0x48] sm:$0xff]
  %v25 = vld [vmem:[%s1 + $0x50] sm:$0xff]
  %v26 = vld [vmem:[%s1 + $0x58] sm:$0xff]
  %v27 = vld [vmem:[%s1 + $0x60] sm:$0xff]
  %v28 = vld [vmem:[%s1 + $0x68] sm:$0xff]
  %v29 = vld [vmem:[%s1 + $0x70] sm:$0xff]
  %v30 = vld [vmem:[%s1 + $0x78] sm:$0xff]
  %v31 = vld [vmem:[%s1 + $0x80] sm:$0xff]
  %v32 = vld [vmem:[%s1 + $0x88] sm:$0xff]
  %v33 = vld [vmem:[%s1 + $0x90] sm:$0xff]
  %v34 = vld [vmem:[%s1 + $0x98] sm:$0xff]
  %v35 = vld [vmem:[%s1 + $0xa0] sm:$0xff]
  %v36 = vld [vmem:[%s1 + $0xa8] sm:$0xff]
  %v37 = vld [vmem:[%s1 + $0xb0] sm:$0xff]
  %v38 = vld [vmem:[%s1 + $0xb8] sm:$0xff]
  %v39 = vld [vmem:[%s1 + $0xc0] sm:$0xff]
  %v40 = vld [vmem:[%s1 + $0xc8] sm:$0xff]
  %v41 = vld [vmem:[%s1 + $0xd0] sm:$0xff]
  %v42 = vld [vmem:[%s1 + $0xd8] sm:$0xff]
  %v43 = vld [vmem:[%s1 + $0xe0] sm:$0xff]
  %v44 = vld [vmem:[%s1 + $0xe8] sm:$0xff]
  %v45 = vld [vmem:[%s1 + $0xf0] sm:$0xff]
  %v46 = vld [vmem:[%s1 + $0xf8] sm:$0xff]
  %v47 = vld [vmem:[%s1 + $0x100] sm:$0xff]
  %v48 = vld [vmem:[%s1 + $0x108] sm:$0xff]
  %v49 = vld [vmem:[%s1 + $0x110] sm:$0xff]
  %v50 = vld [vmem:[%s1 + $0x118] sm:$0xff]
  %v51 = vld [vmem:[%s1 + $0x120] sm:$0xff]
  %v52 = vld [vmem:[%s1 + $0x128] sm:$0xff]
  %v53 = vld [vmem:[%s1 + $0x130] sm:$0xff]
  %v54 = vld [vmem:[%s1 + $0x138] sm:$0xff]
  %v55 = vld [vmem:[%s1 + $0x140] sm:$0xff]
  %v56 = vld [vmem:[%s1 + $0x148] sm:$0xff]
  %v57 = vld [vmem:[%s1 + $0x150] sm:$0xff]
  %v58 = vld [vmem:[%s1 + $0x158] sm:$0xff]
  %v59 = vld [vmem:[%s1 + $0x160] sm:$0xff]
  %v60 = vld [vmem:[%s1 + $0x168] sm:$0xff]
  %v61 = vld [vmem:[%s1 + $0x170] sm:$0xff]
  %v62 = vld [vmem:[%s1 + $0x178] sm:$0xff]
  %v63 = vld [vmem:[%s1 + $0x180] sm:$0xff]
  %v64 = vld [vmem:[%s1 + $0x188] sm:$0xff]
  %v65 = vld [vmem:[%s1 + $0x190] sm:$0xff]
  %v66 = vld [vmem:[%s1 + $0x198] sm:$0xff]
  %v67 = vld [vmem:[%s1 + $0x1a0] sm:$0xff]
  %v68 = vld [vmem:[%s1 + $0x1a8] sm:$0xff]
  %v69 = vld [vmem:[%s1 + $0x1b0] sm:$0xff]
  %v70 = vld [vmem:[%s1 + $0x1b8] sm:$0xff]
  %v71 = vld [vmem:[%s1 + $0x1c0] sm:$0xff]
  %v72 = vld [vmem:[%s1 + $0x1c8] sm:$0xff]
  %v73 = vld [vmem:[%s1 + $0x1d0] sm:$0xff]
  %v74 = vld [vmem:[%s1 + $0x1d8] sm:$0xff]
  %v75 = vld [vmem:[%s1 + $0x1e0] sm:$0xff]
  %v76 = vld [vmem:[%s1 + $0x1e8] sm:$0xff]
  %v77 = vld [vmem:[%s1 + $0x1f0] sm:$0xff]
  %v78 = vld [vmem:[%s1 + $0x1f8] sm:$0xff]
  %v79 = vld [vmem:[%s1 + $0x200] sm:$0xff]
  %v80 = vld [vmem:[%s1 + $0x208] sm:$0xff]
  %v81 = vld [vmem:[%s1 + $0x210] sm:$0xff]
  %v82 = vld [vmem:[%s1 + $0x218] sm:$0xff]
  %v83 = vld [vmem:[%s1 + $0x220] sm:$0xff]
  %v84 = vld [vmem:[%s1 + $0x228] sm:$0xff]
  %v85 = vld [vmem:[%s1 + $0x230] sm:$0xff]
  %v86 = vld [vmem:[%s1 + $0x238] sm:$0xff]
  %v87 = vld [vmem:[%s1 + $0x240] sm:$0xff]
  %v88 = vld [vmem:[%s1 + $0x248] sm:$0xff]
  %v89 = vld [vmem:[%s1 + $0x250] sm:$0xff]
  %v90 = vld [vmem:[%s1 + $0x258] sm:$0xff]
  %v91 = vld [vmem:[%s1 + $0x260] sm:$0xff]
  %v92 = vld [vmem:[%s1 + $0x268] sm:$0xff]
  %v93 = vld [vmem:[%s1 + $0x270] sm:$0xff]
  %v94 = vld [vmem:[%s1 + $0x278] sm:$0xff]
  %v95 = vld [vmem:[%s1 + $0x280] sm:$0xff]
  %v96 = vld [vmem:[%s1 + $0x288] sm:$0xff]
  %v97 = vld [vmem:[%s1 + $0x290] sm:$0xff]
  %v98 = vld [vmem:[%s1 + $0x298] sm:$0xff]
  %v99 = vld [vmem:[%s1 + $0x2a0] sm:$0xff]
  %v100 = vld [vmem:[%s1 + $0x2a8] sm:$0xff]
  %v101 = vld [vmem:[%s1 + $0x2b0] sm:$0xff]
  %v102 = vld [vmem:[%s1 + $0x2b8] sm:$0xff]
  %v103 = vld [vmem:[%s1 + $0x2c0] sm:$0xff]
  %v104 = vld [vmem:[%s1 + $0x2c8] sm:$0xff]
  %v105 = vld [vmem:[%s1 + $0x2d0] sm:$0xff]
  %v106 = vld [vmem:[%s1 + $0x2d8] sm:$0xff]
  %v107 = vld [vmem:[%s1 + $0x2e0] sm:$0xff]
  %v108 = vld [vmem:[%s1 + $0x2e8] sm:$0xff]
  %v109 = vld [vmem:[%s1 + $0x2f0] sm:$0xff]
  %v110 = vld [vmem:[%s1 + $0x2f8] sm:$0xff]
  %v111 = vld [vmem:[%s1 + $0x300] sm:$0xff]
  %v112 = vld [vmem:[%s1 + $0x308] sm:$0xff]
  %v113 = vld [vmem:[%s1 + $0x310] sm:$0xff]
  %v114 = vld [vmem:[%s1 + $0x318] sm:$0xff]
  %v115 = vld [vmem:[%s1 + $0x320] sm:$0xff]
  %v116 = vld [vmem:[%s1 + $0x328] sm:$0xff]
  %v117 = vld [vmem:[%s1 + $0x330] sm:$0xff]
  %v118 = vld [vmem:[%s1 + $0x338] sm:$0xff]
  %v119 = vld [vmem:[%s1 + $0x340] sm:$0xff]
  %v120 = vld [vmem:[%s1 + $0x348] sm:$0xff]
  %v121 = vld [vmem:[%s1 + $0x350] sm:$0xff]
  %v122 = vld [vmem:[%s1 + $0x358] sm:$0xff]
  %v123 = vld [vmem:[%s1 + $0x360] sm:$0xff]
  %v124 = vld [vmem:[%s1 + $0x368] sm:$0xff]
  %v125 = vld [vmem:[%s1 + $0x370] sm:$0xff]
  %v126 = vld [vmem:[%s1 + $0x378] sm:$0xff]
  %v127 = vld [vmem:[%s1 + $0x380] sm:$0xff]
  %v128 = vld [vmem:[%s1 + $0x388] sm:$0xff]
  %v129 = vld [vmem:[%s1 + $0x390] sm:$0xff]
  %v130 = vld [vmem:[%s1 + $0x398] sm:$0xff]
  %v131 = vld [vmem:[%s1 + $0x3a0] sm:$0xff]
  %v132 = vld [vmem:[%s1 + $0x3a8] sm:$0xff]
  %v133 = vld [vmem:[%s1 + $0x3b0] sm:$0xff]
  %v134 = vld [vmem:[%s1 + $0x3b8] sm:$0xff]
  %v135 = vld [vmem:[%s1 + $0x3c0] sm:$0xff]
  %v136 = vld [vmem:[%s1 + $0x3c8] sm:$0xff]
  %v137 = vld [vmem:[%s1 + $0x3d0] sm:$0xff]
  %v138 = vld [vmem:[%s1 + $0x3d8] sm:$0xff]
  %v139 = vld [vmem:[%s1 + $0x3e0] sm:$0xff]
  %v140 = vld [vmem:[%s1 + $0x3e8] sm:$0xff]
  %v141 = vld [vmem:[%s1 + $0x3f0] sm:$0xff]
  %v142 = vld [vmem:[%s1 + $0x3f8] sm:$0xff]
  %v143 = vld [vmem:[%s1 + $0x400] sm:$0xff]
  %v144 = vld [vmem:[%s1 + $0x408] sm:$0xff]
  %v145 = vld [vmem:[%s1 + $0x410] sm:$0xff]
  %v146 = vld [vmem:[%s1 + $0x418] sm:$0xff]
  %v147 = vld [vmem:[%s1 + $0x420] sm:$0xff]
  %v148 = vld [vmem:[%s1 + $0x428] sm:$0xff]
  %v149 = vld [vmem:[%s1 + $0x430] sm:$0xff]
  %v150 = vld [vmem:[%s1 + $0x438] sm:$0xff]
  %v151 = vld [vmem:[%s1 + $0x440] sm:$0xff]
  %v152 = vld [vmem:[%s1 + $0x448] sm:$0xff]
  %v153 = vld [vmem:[%s1 + $0x450] sm:$0xff]
  %v154 = vld [vmem:[%s1 + $0x458] sm:$0xff]
  %v155 = vld [vmem:[%s1 + $0x460] sm:$0xff]
  %v156 = vld [vmem:[%s1 + $0x468] sm:$0xff]
  %v157 = vld [vmem:[%s1 + $0x470] sm:$0xff]
  %v158 = vld [vmem:[%s1 + $0x478] sm:$0xff]
  %v159 = vld [vmem:[%s2] sm:$0xf]
  %161 = vset.pattern.permute.xlu0 0
  %162 = vperm.xlu0 %161, %v159
  %v163 = vpop.permute.xlu0 %162
  %vm165 = vcmask 588800
  %v167 = vsel %vm165, %v14, 0
  %169 = vmatprep.subr.mxu0 %v16
  %170 = vmatpush1.msra.mxu0 %v15
  %171 = vmatprep.subr.mxu0 %v32
  %172 = vmatpush1.msra.mxu0 %v31
  %173 = vmatprep.subr.mxu0 %v48
  %174 = vmatpush1.msra.mxu0 %v47
  %175 = vmatprep.subr.mxu0 %v64
  %176 = vmatpush1.msra.mxu0 %v63
  %177 = vmatprep.subr.mxu0 %v80
  %178 = vmatpush1.msra.mxu0 %v79
  %179 = vmatprep.subr.mxu0 %v96
  %180 = vmatpush1.msra.mxu0 %v95
  %181 = vmatprep.subr.mxu0 %v112
  %182 = vmatpush1.msra.mxu0 %v111
  %183 = vmatprep.subr.mxu0 %v128
  %184 = vmatpush1.msra.mxu0 %v127
  %185 = vmatprep.subr.mxu0 %v144
  %186 = vmatpush1.msra.mxu0 %v143
  %187 = vmatprep.subr.mxu0 0.0
  %188 = vmatpush1.msra.mxu0 0.0
  %189 = vmatprep.subr.mxu0 0.0
  %190 = vmatpush1.msra.mxu0 0.0
  %191 = vmatprep.subr.mxu0 0.0
  %192 = vmatpush1.msra.mxu0 0.0
  %193 = vmatprep.subr.mxu0 0.0
  %194 = vmatpush1.msra.mxu0 0.0
  %195 = vmatprep.subr.mxu0 0.0
  %196 = vmatpush1.msra.mxu0 0.0
  %197 = vmatprep.subr.mxu0 0.0
  %198 = vmatpush1.msra.mxu0 0.0
  %199 = vmatprep.subr.mxu0 0.0
  %200 = vmatpush1.msra.mxu0 0.0
  %201 = vmatprep.subr.mxu0 0.0
  %202 = vmatpush1.msra.mxu0 0.0
  %203 = vmatprep.subr.mxu0 0.0
  %204 = vmatpush1.msra.mxu0 0.0
  %205 = vmatprep.subr.mxu0 0.0
  %206 = vmatpush1.msra.mxu0 0.0
  %207 = vmatprep.subr.mxu0 0.0
  %208 = vmatpush1.msra.mxu0 0.0
  %209 = vmatprep.subr.mxu0 0.0
  %210 = vmatpush1.msra.mxu0 0.0
  %211 = vmatprep.subr.mxu0 0.0
  %212 = vmatpush1.msra.mxu0 0.0
  %213 = vmatprep.subr.mxu0 0.0
  %214 = vmatpush1.msra.mxu0 0.0
  %215 = vmatprep.subr.mxu0 0.0
  %216 = vmatpush1.msra.mxu0 0.0
  %217 = vmatprep.subr.mxu0 0.0
  %218 = vmatpush1.msra.mxu0 0.0
  %219 = vmatprep.subr.mxu0 0.0
  %220 = vmatpush1.msra.mxu0 0.0
  %221 = vmatprep.subr.mxu0 0.0
  %222 = vmatpush1.msra.mxu0 0.0
  %223 = vmatprep.subr.mxu0 0.0
  %224 = vmatpush1.msra.mxu0 0.0
  %225 = vmatprep.subr.mxu0 0.0
  %226 = vmatpush1.msra.mxu0 0.0
  %227 = vmatprep.subr.mxu0 0.0
  %228 = vmatpush1.msra.mxu0 0.0
  %229 = vmatprep.subr.mxu0 0.0
  %230 = vmatpush1.msra.mxu0 0.0
  %231 = vmatprep.subr.mxu0 0.0
  %232 = vmatpush1.msra.mxu0 0.0
  %233 = vmatprep.mubr.f32.mxu0 0.0
  %234 = vmatmul.mubr.f32.gmra.mrb[0].mxu0 %v167
  %v235 = vpop.f32.mrb[0].mxu0
  %v236 = vadd.f32 %v163, %v235
  %v237 = vpop.f32.mrb[0].mxu0
  %v238 = vadd.f32 %v163, %v237
  %239 = vdwg.mxu0
  %240 = vmatprep.subr.mxu0 %v18
  %241 = vmatpush1.msra.mxu0 %v17
  %242 = vmatprep.subr.mxu0 %v34
  %243 = vmatpush1.msra.mxu0 %v33
  %244 = vmatprep.subr.mxu0 %v50
  %245 = vmatpush1.msra.mxu0 %v49
  %246 = vmatprep.subr.mxu0 %v66
  %247 = vmatpush1.msra.mxu0 %v65
  %248 = vmatprep.subr.mxu0 %v82
  %249 = vmatpush1.msra.mxu0 %v81
  %250 = vmatprep.subr.mxu0 %v98
  %251 = vmatpush1.msra.mxu0 %v97
  %252 = vmatprep.subr.mxu0 %v114
  %253 = vmatpush1.msra.mxu0 %v113
  %254 = vmatprep.subr.mxu0 %v130
  %255 = vmatpush1.msra.mxu0 %v129
  %256 = vmatprep.subr.mxu0 %v146
  %257 = vmatpush1.msra.mxu0 %v145
  %258 = vmatprep.subr.mxu0 0.0
  %259 = vmatpush1.msra.mxu0 0.0
  %260 = vmatprep.subr.mxu0 0.0
  %261 = vmatpush1.msra.mxu0 0.0
  %262 = vmatprep.subr.mxu0 0.0
  %263 = vmatpush1.msra.mxu0 0.0
  %264 = vmatprep.subr.mxu0 0.0
  %265 = vmatpush1.msra.mxu0 0.0
  %266 = vmatprep.subr.mxu0 0.0
  %267 = vmatpush1.msra.mxu0 0.0
  %268 = vmatprep.subr.mxu0 0.0
  %269 = vmatpush1.msra.mxu0 0.0
  %270 = vmatprep.subr.mxu0 0.0
  %271 = vmatpush1.msra.mxu0 0.0
  %272 = vmatprep.subr.mxu0 0.0
  %273 = vmatpush1.msra.mxu0 0.0
  %274 = vmatprep.subr.mxu0 0.0
  %275 = vmatpush1.msra.mxu0 0.0
  %276 = vmatprep.subr.mxu0 0.0
  %277 = vmatpush1.msra.mxu0 0.0
  %278 = vmatprep.subr.mxu0 0.0
  %279 = vmatpush1.msra.mxu0 0.0
  %280 = vmatprep.subr.mxu0 0.0
  %281 = vmatpush1.msra.mxu0 0.0
  %282 = vmatprep.subr.mxu0 0.0
  %283 = vmatpush1.msra.mxu0 0.0
  %284 = vmatprep.subr.mxu0 0.0
  %285 = vmatpush1.msra.mxu0 0.0
  %286 = vmatprep.subr.mxu0 0.0
  %287 = vmatpush1.msra.mxu0 0.0
  %288 = vmatprep.subr.mxu0 0.0
  %289 = vmatpush1.msra.mxu0 0.0
  %290 = vmatprep.subr.mxu0 0.0
  %291 = vmatpush1.msra.mxu0 0.0
  %292 = vmatprep.subr.mxu0 0.0
  %293 = vmatpush1.msra.mxu0 0.0
  %294 = vmatprep.subr.mxu0 0.0
  %295 = vmatpush1.msra.mxu0 0.0
  %296 = vmatprep.subr.mxu0 0.0
  %297 = vmatpush1.msra.mxu0 0.0
  %298 = vmatprep.subr.mxu0 0.0
  %299 = vmatpush1.msra.mxu0 0.0
  %300 = vmatprep.subr.mxu0 0.0
  %301 = vmatpush1.msra.mxu0 0.0
  %302 = vmatprep.subr.mxu0 0.0
  %303 = vmatpush1.msra.mxu0 0.0
  %304 = vmatprep.mubr.f32.mxu0 0.0
  %305 = vmatmul.mubr.f32.gmra.mrb[0].mxu0 %v167
  %v306 = vpop.f32.mrb[0].mxu0
  %v307 = vadd.f32 %v163, %v306
  %v308 = vpop.f32.mrb[0].mxu0
  %v309 = vadd.f32 %v163, %v308
  %310 = vdwg.mxu0
  %311 = vmatprep.subr.mxu0 %v20
  %312 = vmatpush1.msra.mxu0 %v19
  %313 = vmatprep.subr.mxu0 %v36
  %314 = vmatpush1.msra.mxu0 %v35
  %315 = vmatprep.subr.mxu0 %v52
  %316 = vmatpush1.msra.mxu0 %v51
  %317 = vmatprep.subr.mxu0 %v68
  %318 = vmatpush1.msra.mxu0 %v67
  %319 = vmatprep.subr.mxu0 %v84
  %320 = vmatpush1.msra.mxu0 %v83
  %321 = vmatprep.subr.mxu0 %v100
  %322 = vmatpush1.msra.mxu0 %v99
  %323 = vmatprep.subr.mxu0 %v116
  %324 = vmatpush1.msra.mxu0 %v115
  %325 = vmatprep.subr.mxu0 %v132
  %326 = vmatpush1.msra.mxu0 %v131
  %327 = vmatprep.subr.mxu0 %v148
  %328 = vmatpush1.msra.mxu0 %v147
  %329 = vmatprep.subr.mxu0 0.0
  %330 = vmatpush1.msra.mxu0 0.0
  %331 = vmatprep.subr.mxu0 0.0
  %332 = vmatpush1.msra.mxu0 0.0
  %333 = vmatprep.subr.mxu0 0.0
  %334 = vmatpush1.msra.mxu0 0.0
  %335 = vmatprep.subr.mxu0 0.0
  %336 = vmatpush1.msra.mxu0 0.0
  %337 = vmatprep.subr.mxu0 0.0
  %338 = vmatpush1.msra.mxu0 0.0
  %339 = vmatprep.subr.mxu0 0.0
  %340 = vmatpush1.msra.mxu0 0.0
  %341 = vmatprep.subr.mxu0 0.0
  %342 = vmatpush1.msra.mxu0 0.0
  %343 = vmatprep.subr.mxu0 0.0
  %344 = vmatpush1.msra.mxu0 0.0
  %345 = vmatprep.subr.mxu0 0.0
  %346 = vmatpush1.msra.mxu0 0.0
  %347 = vmatprep.subr.mxu0 0.0
  %348 = vmatpush1.msra.mxu0 0.0
  %349 = vmatprep.subr.mxu0 0.0
  %350 = vmatpush1.msra.mxu0 0.0
  %351 = vmatprep.subr.mxu0 0.0
  %352 = vmatpush1.msra.mxu0 0.0
  %353 = vmatprep.subr.mxu0 0.0
  %354 = vmatpush1.msra.mxu0 0.0
  %355 = vmatprep.subr.mxu0 0.0
  %356 = vmatpush1.msra.mxu0 0.0
  %357 = vmatprep.subr.mxu0 0.0
  %358 = vmatpush1.msra.mxu0 0.0
  %359 = vmatprep.subr.mxu0 0.0
  %360 = vmatpush1.msra.mxu0 0.0
  %361 = vmatprep.subr.mxu0 0.0
  %362 = vmatpush1.msra.mxu0 0.0
  %363 = vmatprep.subr.mxu0 0.0
  %364 = vmatpush1.msra.mxu0 0.0
  %365 = vmatprep.subr.mxu0 0.0
  %366 = vmatpush1.msra.mxu0 0.0
  %367 = vmatprep.subr.mxu0 0.0
  %368 = vmatpush1.msra.mxu0 0.0
  %369 = vmatprep.subr.mxu0 0.0
  %370 = vmatpush1.msra.mxu0 0.0
  %371 = vmatprep.subr.mxu0 0.0
  %372 = vmatpush1.msra.mxu0 0.0
  %373 = vmatprep.subr.mxu0 0.0
  %374 = vmatpush1.msra.mxu0 0.0
  %375 = vmatprep.mubr.f32.mxu0 0.0
  %376 = vmatmul.mubr.f32.gmra.mrb[0].mxu0 %v167
  %v377 = vpop.f32.mrb[0].mxu0
  %v378 = vadd.f32 %v163, %v377
  %v379 = vpop.f32.mrb[0].mxu0
  %v380 = vadd.f32 %v163, %v379
  %381 = vdwg.mxu0
  %382 = vmatprep.subr.mxu0 %v22
  %383 = vmatpush1.msra.mxu0 %v21
  %384 = vmatprep.subr.mxu0 %v38
  %385 = vmatpush1.msra.mxu0 %v37
  %386 = vmatprep.subr.mxu0 %v54
  %387 = vmatpush1.msra.mxu0 %v53
  %388 = vmatprep.subr.mxu0 %v70
  %389 = vmatpush1.msra.mxu0 %v69
  %390 = vmatprep.subr.mxu0 %v86
  %391 = vmatpush1.msra.mxu0 %v85
  %392 = vmatprep.subr.mxu0 %v102
  %393 = vmatpush1.msra.mxu0 %v101
  %394 = vmatprep.subr.mxu0 %v118
  %395 = vmatpush1.msra.mxu0 %v117
  %396 = vmatprep.subr.mxu0 %v134
  %397 = vmatpush1.msra.mxu0 %v133
  %398 = vmatprep.subr.mxu0 %v150
  %399 = vmatpush1.msra.mxu0 %v149
  %400 = vmatprep.subr.mxu0 0.0
  %401 = vmatpush1.msra.mxu0 0.0
  %402 = vmatprep.subr.mxu0 0.0
  %403 = vmatpush1.msra.mxu0 0.0
  %404 = vmatprep.subr.mxu0 0.0
  %405 = vmatpush1.msra.mxu0 0.0
  %406 = vmatprep.subr.mxu0 0.0
  %407 = vmatpush1.msra.mxu0 0.0
  %408 = vmatprep.subr.mxu0 0.0
  %409 = vmatpush1.msra.mxu0 0.0
  %410 = vmatprep.subr.mxu0 0.0
  %411 = vmatpush1.msra.mxu0 0.0
  %412 = vmatprep.subr.mxu0 0.0
  %413 = vmatpush1.msra.mxu0 0.0
  %414 = vmatprep.subr.mxu0 0.0
  %415 = vmatpush1.msra.mxu0 0.0
  %416 = vmatprep.subr.mxu0 0.0
  %417 = vmatpush1.msra.mxu0 0.0
  %418 = vmatprep.subr.mxu0 0.0
  %419 = vmatpush1.msra.mxu0 0.0
  %420 = vmatprep.subr.mxu0 0.0
  %421 = vmatpush1.msra.mxu0 0.0
  %422 = vmatprep.subr.mxu0 0.0
  %423 = vmatpush1.msra.mxu0 0.0
  %424 = vmatprep.subr.mxu0 0.0
  %425 = vmatpush1.msra.mxu0 0.0
  %426 = vmatprep.subr.mxu0 0.0
  %427 = vmatpush1.msra.mxu0 0.0
  %428 = vmatprep.subr.mxu0 0.0
  %429 = vmatpush1.msra.mxu0 0.0
  %430 = vmatprep.subr.mxu0 0.0
  %431 = vmatpush1.msra.mxu0 0.0
  %432 = vmatprep.subr.mxu0 0.0
  %433 = vmatpush1.msra.mxu0 0.0
  %434 = vmatprep.subr.mxu0 0.0
  %435 = vmatpush1.msra.mxu0 0.0
  %436 = vmatprep.subr.mxu0 0.0
  %437 = vmatpush1.msra.mxu0 0.0
  %438 = vmatprep.subr.mxu0 0.0
  %439 = vmatpush1.msra.mxu0 0.0
  %440 = vmatprep.subr.mxu0 0.0
  %441 = vmatpush1.msra.mxu0 0.0
  %442 = vmatprep.subr.mxu0 0.0
  %443 = vmatpush1.msra.mxu0 0.0
  %444 = vmatprep.subr.mxu0 0.0
  %445 = vmatpush1.msra.mxu0 0.0
  %446 = vmatprep.mubr.f32.mxu0 0.0
  %447 = vmatmul.mubr.f32.gmra.mrb[0].mxu0 %v167
  %v448 = vpop.f32.mrb[0].mxu0
  %v449 = vadd.f32 %v163, %v448
  %v450 = vpop.f32.mrb[0].mxu0
  %v451 = vadd.f32 %v163, %v450
  %452 = vdwg.mxu0
  %453 = vmatprep.subr.mxu0 %v24
  %454 = vmatpush1.msra.mxu0 %v23
  %455 = vmatprep.subr.mxu0 %v40
  %456 = vmatpush1.msra.mxu0 %v39
  %457 = vmatprep.subr.mxu0 %v56
  %458 = vmatpush1.msra.mxu0 %v55
  %459 = vmatprep.subr.mxu0 %v72
  %460 = vmatpush1.msra.mxu0 %v71
  %461 = vmatprep.subr.mxu0 %v88
  %462 = vmatpush1.msra.mxu0 %v87
  %463 = vmatprep.subr.mxu0 %v104
  %464 = vmatpush1.msra.mxu0 %v103
  %465 = vmatprep.subr.mxu0 %v120
  %466 = vmatpush1.msra.mxu0 %v119
  %467 = vmatprep.subr.mxu0 %v136
  %468 = vmatpush1.msra.mxu0 %v135
  %469 = vmatprep.subr.mxu0 %v152
  %470 = vmatpush1.msra.mxu0 %v151
  %471 = vmatprep.subr.mxu0 0.0
  %472 = vmatpush1.msra.mxu0 0.0
  %473 = vmatprep.subr.mxu0 0.0
  %474 = vmatpush1.msra.mxu0 0.0
  %475 = vmatprep.subr.mxu0 0.0
  %476 = vmatpush1.msra.mxu0 0.0
  %477 = vmatprep.subr.mxu0 0.0
  %478 = vmatpush1.msra.mxu0 0.0
  %479 = vmatprep.subr.mxu0 0.0
  %480 = vmatpush1.msra.mxu0 0.0
  %481 = vmatprep.subr.mxu0 0.0
  %482 = vmatpush1.msra.mxu0 0.0
  %483 = vmatprep.subr.mxu0 0.0
  %484 = vmatpush1.msra.mxu0 0.0
  %485 = vmatprep.subr.mxu0 0.0
  %486 = vmatpush1.msra.mxu0 0.0
  %487 = vmatprep.subr.mxu0 0.0
  %488 = vmatpush1.msra.mxu0 0.0
  %489 = vmatprep.subr.mxu0 0.0
  %490 = vmatpush1.msra.mxu0 0.0
  %491 = vmatprep.subr.mxu0 0.0
  %492 = vmatpush1.msra.mxu0 0.0
  %493 = vmatprep.subr.mxu0 0.0
  %494 = vmatpush1.msra.mxu0 0.0
  %495 = vmatprep.subr.mxu0 0.0
  %496 = vmatpush1.msra.mxu0 0.0
  %497 = vmatprep.subr.mxu0 0.0
  %498 = vmatpush1.msra.mxu0 0.0
  %499 = vmatprep.subr.mxu0 0.0
  %500 = vmatpush1.msra.mxu0 0.0
  %501 = vmatprep.subr.mxu0 0.0
  %502 = vmatpush1.msra.mxu0 0.0
  %503 = vmatprep.subr.mxu0 0.0
  %504 = vmatpush1.msra.mxu0 0.0
  %505 = vmatprep.subr.mxu0 0.0
  %506 = vmatpush1.msra.mxu0 0.0
  %507 = vmatprep.subr.mxu0 0.0
  %508 = vmatpush1.msra.mxu0 0.0
  %509 = vmatprep.subr.mxu0 0.0
  %510 = vmatpush1.msra.mxu0 0.0
  %511 = vmatprep.subr.mxu0 0.0
  %512 = vmatpush1.msra.mxu0 0.0
  %513 = vmatprep.subr.mxu0 0.0
  %514 = vmatpush1.msra.mxu0 0.0
  %515 = vmatprep.subr.mxu0 0.0
  %516 = vmatpush1.msra.mxu0 0.0
  %517 = vmatprep.mubr.f32.mxu0 0.0
  %518 = vmatmul.mubr.f32.gmra.mrb[0].mxu0 %v167
  %v519 = vpop.f32.mrb[0].mxu0
  %v520 = vadd.f32 %v163, %v519
  %v521 = vpop.f32.mrb[0].mxu0
  %v522 = vadd.f32 %v163, %v521
  %523 = vdwg.mxu0
  %524 = vmatprep.subr.mxu0 %v26
  %525 = vmatpush1.msra.mxu0 %v25
  %526 = vmatprep.subr.mxu0 %v42
  %527 = vmatpush1.msra.mxu0 %v41
  %528 = vmatprep.subr.mxu0 %v58
  %529 = vmatpush1.msra.mxu0 %v57
  %530 = vmatprep.subr.mxu0 %v74
  %531 = vmatpush1.msra.mxu0 %v73
  %532 = vmatprep.subr.mxu0 %v90
  %533 = vmatpush1.msra.mxu0 %v89
  %534 = vmatprep.subr.mxu0 %v106
  %535 = vmatpush1.msra.mxu0 %v105
  %536 = vmatprep.subr.mxu0 %v122
  %537 = vmatpush1.msra.mxu0 %v121
  %538 = vmatprep.subr.mxu0 %v138
  %539 = vmatpush1.msra.mxu0 %v137
  %540 = vmatprep.subr.mxu0 %v154
  %541 = vmatpush1.msra.mxu0 %v153
  %542 = vmatprep.subr.mxu0 0.0
  %543 = vmatpush1.msra.mxu0 0.0
  %544 = vmatprep.subr.mxu0 0.0
  %545 = vmatpush1.msra.mxu0 0.0
  %546 = vmatprep.subr.mxu0 0.0
  %547 = vmatpush1.msra.mxu0 0.0
  %548 = vmatprep.subr.mxu0 0.0
  %549 = vmatpush1.msra.mxu0 0.0
  %550 = vmatprep.subr.mxu0 0.0
  %551 = vmatpush1.msra.mxu0 0.0
  %552 = vmatprep.subr.mxu0 0.0
  %553 = vmatpush1.msra.mxu0 0.0
  %554 = vmatprep.subr.mxu0 0.0
  %555 = vmatpush1.msra.mxu0 0.0
  %556 = vmatprep.subr.mxu0 0.0
  %557 = vmatpush1.msra.mxu0 0.0
  %558 = vmatprep.subr.mxu0 0.0
  %559 = vmatpush1.msra.mxu0 0.0
  %560 = vmatprep.subr.mxu0 0.0
  %561 = vmatpush1.msra.mxu0 0.0
  %562 = vmatprep.subr.mxu0 0.0
  %563 = vmatpush1.msra.mxu0 0.0
  %564 = vmatprep.subr.mxu0 0.0
  %565 = vmatpush1.msra.mxu0 0.0
  %566 = vmatprep.subr.mxu0 0.0
  %567 = vmatpush1.msra.mxu0 0.0
  %568 = vmatprep.subr.mxu0 0.0
  %569 = vmatpush1.msra.mxu0 0.0
  %570 = vmatprep.subr.mxu0 0.0
  %571 = vmatpush1.msra.mxu0 0.0
  %572 = vmatprep.subr.mxu0 0.0
  %573 = vmatpush1.msra.mxu0 0.0
  %574 = vmatprep.subr.mxu0 0.0
  %575 = vmatpush1.msra.mxu0 0.0
  %576 = vmatprep.subr.mxu0 0.0
  %577 = vmatpush1.msra.mxu0 0.0
  %578 = vmatprep.subr.mxu0 0.0
  %579 = vmatpush1.msra.mxu0 0.0
  %580 = vmatprep.subr.mxu0 0.0
  %581 = vmatpush1.msra.mxu0 0.0
  %582 = vmatprep.subr.mxu0 0.0
  %583 = vmatpush1.msra.mxu0 0.0
  %584 = vmatprep.subr.mxu0 0.0
  %585 = vmatpush1.msra.mxu0 0.0
  %586 = vmatprep.subr.mxu0 0.0
  %587 = vmatpush1.msra.mxu0 0.0
  %588 = vmatprep.mubr.f32.mxu0 0.0
  %589 = vmatmul.mubr.f32.gmra.mrb[0].mxu0 %v167
  %v590 = vpop.f32.mrb[0].mxu0
  %v591 = vadd.f32 %v163, %v590
  %v592 = vpop.f32.mrb[0].mxu0
  %v593 = vadd.f32 %v163, %v592
  %594 = vdwg.mxu0
  %595 = vmatprep.subr.mxu0 %v28
  %596 = vmatpush1.msra.mxu0 %v27
  %597 = vmatprep.subr.mxu0 %v44
  %598 = vmatpush1.msra.mxu0 %v43
  %599 = vmatprep.subr.mxu0 %v60
  %600 = vmatpush1.msra.mxu0 %v59
  %601 = vmatprep.subr.mxu0 %v76
  %602 = vmatpush1.msra.mxu0 %v75
  %603 = vmatprep.subr.mxu0 %v92
  %604 = vmatpush1.msra.mxu0 %v91
  %605 = vmatprep.subr.mxu0 %v108
  %606 = vmatpush1.msra.mxu0 %v107
  %607 = vmatprep.subr.mxu0 %v124
  %608 = vmatpush1.msra.mxu0 %v123
  %609 = vmatprep.subr.mxu0 %v140
  %610 = vmatpush1.msra.mxu0 %v139
  %611 = vmatprep.subr.mxu0 %v156
  %612 = vmatpush1.msra.mxu0 %v155
  %613 = vmatprep.subr.mxu0 0.0
  %614 = vmatpush1.msra.mxu0 0.0
  %615 = vmatprep.subr.mxu0 0.0
  %616 = vmatpush1.msra.mxu0 0.0
  %617 = vmatprep.subr.mxu0 0.0
  %618 = vmatpush1.msra.mxu0 0.0
  %619 = vmatprep.subr.mxu0 0.0
  %620 = vmatpush1.msra.mxu0 0.0
  %621 = vmatprep.subr.mxu0 0.0
  %622 = vmatpush1.msra.mxu0 0.0
  %623 = vmatprep.subr.mxu0 0.0
  %624 = vmatpush1.msra.mxu0 0.0
  %625 = vmatprep.subr.mxu0 0.0
  %626 = vmatpush1.msra.mxu0 0.0
  %627 = vmatprep.subr.mxu0 0.0
  %628 = vmatpush1.msra.mxu0 0.0
  %629 = vmatprep.subr.mxu0 0.0
  %630 = vmatpush1.msra.mxu0 0.0
  %631 = vmatprep.subr.mxu0 0.0
  %632 = vmatpush1.msra.mxu0 0.0
  %633 = vmatprep.subr.mxu0 0.0
  %634 = vmatpush1.msra.mxu0 0.0
  %635 = vmatprep.subr.mxu0 0.0
  %636 = vmatpush1.msra.mxu0 0.0
  %637 = vmatprep.subr.mxu0 0.0
  %638 = vmatpush1.msra.mxu0 0.0
  %639 = vmatprep.subr.mxu0 0.0
  %640 = vmatpush1.msra.mxu0 0.0
  %641 = vmatprep.subr.mxu0 0.0
  %642 = vmatpush1.msra.mxu0 0.0
  %643 = vmatprep.subr.mxu0 0.0
  %644 = vmatpush1.msra.mxu0 0.0
  %645 = vmatprep.subr.mxu0 0.0
  %646 = vmatpush1.msra.mxu0 0.0
  %647 = vmatprep.subr.mxu0 0.0
  %648 = vmatpush1.msra.mxu0 0.0
  %649 = vmatprep.subr.mxu0 0.0
  %650 = vmatpush1.msra.mxu0 0.0
  %651 = vmatprep.subr.mxu0 0.0
  %652 = vmatpush1.msra.mxu0 0.0
  %653 = vmatprep.subr.mxu0 0.0
  %654 = vmatpush1.msra.mxu0 0.0
  %655 = vmatprep.subr.mxu0 0.0
  %656 = vmatpush1.msra.mxu0 0.0
  %657 = vmatprep.subr.mxu0 0.0
  %658 = vmatpush1.msra.mxu0 0.0
  %659 = vmatprep.mubr.f32.mxu0 0.0
  %660 = vmatmul.mubr.f32.gmra.mrb[0].mxu0 %v167
  %v661 = vpop.f32.mrb[0].mxu0
  %v662 = vadd.f32 %v163, %v661
  %v663 = vpop.f32.mrb[0].mxu0
  %v664 = vadd.f32 %v163, %v663
  %665 = vdwg.mxu0
  %666 = vmatprep.subr.mxu0 %v30
  %667 = vmatpush1.msra.mxu0 %v29
  %668 = vmatprep.subr.mxu0 %v46
  %669 = vmatpush1.msra.mxu0 %v45
  %670 = vmatprep.subr.mxu0 %v62
  %671 = vmatpush1.msra.mxu0 %v61
  %672 = vmatprep.subr.mxu0 %v78
  %673 = vmatpush1.msra.mxu0 %v77
  %674 = vmatprep.subr.mxu0 %v94
  %675 = vmatpush1.msra.mxu0 %v93
  %676 = vmatprep.subr.mxu0 %v110
  %677 = vmatpush1.msra.mxu0 %v109
  %678 = vmatprep.subr.mxu0 %v126
  %679 = vmatpush1.msra.mxu0 %v125
  %680 = vmatprep.subr.mxu0 %v142
  %681 = vmatpush1.msra.mxu0 %v141
  %682 = vmatprep.subr.mxu0 %v158
  %683 = vmatpush1.msra.mxu0 %v157
  %684 = vmatprep.subr.mxu0 0.0
  %685 = vmatpush1.msra.mxu0 0.0
  %686 = vmatprep.subr.mxu0 0.0
  %687 = vmatpush1.msra.mxu0 0.0
  %688 = vmatprep.subr.mxu0 0.0
  %689 = vmatpush1.msra.mxu0 0.0
  %690 = vmatprep.subr.mxu0 0.0
  %691 = vmatpush1.msra.mxu0 0.0
  %692 = vmatprep.subr.mxu0 0.0
  %693 = vmatpush1.msra.mxu0 0.0
  %694 = vmatprep.subr.mxu0 0.0
  %695 = vmatpush1.msra.mxu0 0.0
  %696 = vmatprep.subr.mxu0 0.0
  %697 = vmatpush1.msra.mxu0 0.0
  %698 = vmatprep.subr.mxu0 0.0
  %699 = vmatpush1.msra.mxu0 0.0
  %700 = vmatprep.subr.mxu0 0.0
  %701 = vmatpush1.msra.mxu0 0.0
  %702 = vmatprep.subr.mxu0 0.0
  %703 = vmatpush1.msra.mxu0 0.0
  %704 = vmatprep.subr.mxu0 0.0
  %705 = vmatpush1.msra.mxu0 0.0
  %706 = vmatprep.subr.mxu0 0.0
  %707 = vmatpush1.msra.mxu0 0.0
  %708 = vmatprep.subr.mxu0 0.0
  %709 = vmatpush1.msra.mxu0 0.0
  %710 = vmatprep.subr.mxu0 0.0
  %711 = vmatpush1.msra.mxu0 0.0
  %712 = vmatprep.subr.mxu0 0.0
  %713 = vmatpush1.msra.mxu0 0.0
  %714 = vmatprep.subr.mxu0 0.0
  %715 = vmatpush1.msra.mxu0 0.0
  %716 = vmatprep.subr.mxu0 0.0
  %717 = vmatpush1.msra.mxu0 0.0
  %718 = vmatprep.subr.mxu0 0.0
  %719 = vmatpush1.msra.mxu0 0.0
  %720 = vmatprep.subr.mxu0 0.0
  %721 = vmatpush1.msra.mxu0 0.0
  %722 = vmatprep.subr.mxu0 0.0
  %723 = vmatpush1.msra.mxu0 0.0
  %724 = vmatprep.subr.mxu0 0.0
  %725 = vmatpush1.msra.mxu0 0.0
  %726 = vmatprep.subr.mxu0 0.0
  %727 = vmatpush1.msra.mxu0 0.0
  %728 = vmatprep.subr.mxu0 0.0
  %729 = vmatpush1.msra.mxu0 0.0
  %730 = vmatprep.mubr.f32.mxu0 0.0
  %731 = vmatmul.mubr.f32.gmra.mrb[0].mxu0 %v167
  %v732 = vpop.f32.mrb[0].mxu0
  %v733 = vadd.f32 %v163, %v732
  %v734 = vpop.f32.mrb[0].mxu0
  %v735 = vadd.f32 %v163, %v734
  %736 = vdwg.mxu0
  %v753 = vcombine.low %v236, %v238
  %v754 = vcombine.low %v307, %v309
  %v755 = vcombine.low %v378, %v380
  %v756 = vcombine.low %v449, %v451
  %v757 = vcombine.low %v520, %v522
  %v758 = vcombine.low %v591, %v593
  %v759 = vcombine.low %v662, %v664
  %v760 = vcombine.low %v733, %v735
  %769 = vst [vmem:[%s3] sm:$0xff] %v753
  %770 = vst [vmem:[%s3 + $0x8] sm:$0xff] %v754
  %771 = vst [vmem:[%s3 + $0x10] sm:$0xff] %v755
  %772 = vst [vmem:[%s3 + $0x18] sm:$0xff] %v756
  %773 = vst [vmem:[%s3 + $0x20] sm:$0xff] %v757
  %774 = vst [vmem:[%s3 + $0x28] sm:$0xff] %v758
  %775 = vst [vmem:[%s3 + $0x30] sm:$0xff] %v759
  %776 = vst [vmem:[%s3 + $0x38] sm:$0xff] %v760
  // Predicated region
  $region14: #{net_forward_pallas.93} parent=0 // pred_check
    _
  $region15: #{net_forward_pallas.93} parent=0 // pred_check_branch
    %778 = sbr.rel (0) target = $region17
  $region16: #{net_forward_pallas.93} parent=0 // pred_region
    _
  $region17: #{net_forward_pallas.93} parent=0 // pred_fallthru
    _
  // Predicated region
  $region18: #{net_forward_pallas.93} parent=0 // pred_check
    _
  $region19: #{net_forward_pallas.93} parent=0 // pred_check_branch
    %780 = sbr.rel (0) target = $region21
  $region20: #{net_forward_pallas.93} parent=0 // pred_region
    _
  $region21: #{net_forward_pallas.93} parent=0 // pred_fallthru
    _

</llo_original>
